<compile_context>
chip_gen: v5e
topology: v5e:2x2
jax: 0.10.0
libtpu: 0.0.40
codegen_flags: <defaults>
</compile_context>

<pallas_src>
import jax
import jax.numpy as jnp
from jax.experimental import pallas as pl
from jax.experimental.pallas import tpu as pltpu


D_IN, D1, D2, D3, D_OUT = 4096, 1024, 256, 64, 3
D_OUT_PAD = 128     # lane-dense padded width of the final layer
TK = 2048           # layer-1 reduction tile -> 2 grid steps over K
TM_MAX = 256        # batch-tile cap: bounds VMEM, keeps MXU rows filled


def _round_up(x, m):
    return (x + m - 1) // m * m


def _fused_mlp_kernel(x_ref, w1_ref, b1_ref, w2_ref, b2_ref, w3_ref, b3_ref,
                      w4_ref, b4_ref, o_ref, acc_ref):
    k = pl.program_id(1)

    @pl.when(k == 0)
    def _():
        acc_ref[...] = jnp.zeros_like(acc_ref)

    # Layer 1 partial product, streamed over K.
    acc_ref[...] += jnp.dot(
        x_ref[...], w1_ref[...], preferred_element_type=jnp.float32
    )

    # Epilogue on the final reduction step: bias+ReLU for layer 1, then the
    # three small VMEM-resident layers; only the (TM, 128) result hits HBM.
    @pl.when(k == pl.num_programs(1) - 1)
    def _():
        h = jnp.maximum(acc_ref[...] + b1_ref[...], 0.0)           # (TM, 1024)
        h = jnp.dot(h.astype(w2_ref.dtype), w2_ref[...],
                    preferred_element_type=jnp.float32) + b2_ref[...]
        h = jnp.maximum(h, 0.0)                                    # (TM, 256)
        h = jnp.dot(h.astype(w3_ref.dtype), w3_ref[...],
                    preferred_element_type=jnp.float32) + b3_ref[...]
        h = jnp.maximum(h, 0.0)                                    # (TM, 64)
        y = jnp.dot(h.astype(w4_ref.dtype), w4_ref[...],
                    preferred_element_type=jnp.float32) + b4_ref[...]
        o_ref[...] = y.astype(o_ref.dtype)                         # (TM, 128)


def net_forward(x, params):
    """Fused forward pass of the 4-layer MLP. x: (M, 4096) float32."""
    (w1, b1), (w2, b2), (w3, b3), (w4, b4) = params
    M = x.shape[0]

    # Batch tiling: TM is a multiple of 16 (bf16 sublane packing), capped.
    tm = min(TM_MAX, _round_up(M, 16))
    m_pad = _round_up(M, tm)

    xb = x.astype(jnp.bfloat16)
    if m_pad != M:
        xb = jnp.pad(xb, ((0, m_pad - M), (0, 0)))

    # Pad the last layer to a lane-dense width; padded columns are zero and
    # are sliced off below.
    w4p = jnp.pad(w4, ((0, 0), (0, D_OUT_PAD - w4.shape[1])))
    b4p = jnp.pad(b4, ((0, 0), (0, D_OUT_PAD - b4.shape[1])))

    out = pl.pallas_call(
        _fused_mlp_kernel,
        out_shape=jax.ShapeDtypeStruct((m_pad, D_OUT_PAD), jnp.float32),
        grid_spec=pltpu.PrefetchScalarGridSpec(
            num_scalar_prefetch=0,
            grid=(m_pad // tm, D_IN // TK),
            in_specs=[
                pl.BlockSpec((tm, TK),          lambda m, k: (m, k)),  # x  (streamed)
                pl.BlockSpec((TK, D1),          lambda m, k: (k, 0)),  # W1 (streamed)
                pl.BlockSpec((1, D1),           lambda m, k: (0, 0)),  # b1 (resident)
                pl.BlockSpec((D1, D2),          lambda m, k: (0, 0)),  # W2 (resident)
                pl.BlockSpec((1, D2),           lambda m, k: (0, 0)),  # b2 (resident)
                pl.BlockSpec((D2, D3),          lambda m, k: (0, 0)),  # W3 (resident)
                pl.BlockSpec((1, D3),           lambda m, k: (0, 0)),  # b3 (resident)
                pl.BlockSpec((D3, D_OUT_PAD),   lambda m, k: (0, 0)),  # W4 (resident, padded)
                pl.BlockSpec((1, D_OUT_PAD),    lambda m, k: (0, 0)),  # b4 (resident, padded)
            ],
            out_specs=pl.BlockSpec((tm, D_OUT_PAD), lambda m, k: (m, 0)),
            scratch_shapes=[pltpu.VMEM((tm, D1), jnp.float32)],  # layer-1 f32 acc
        ),
        compiler_params=pltpu.CompilerParams(
            # batch tiles independent (megacore-shardable); K is a reduction.
            dimension_semantics=("parallel", "arbitrary"),
            vmem_limit_bytes=32 * 1024 * 1024,
        ),
    )(xb, w1, b1, w2, b2, w3, b3, w4p, b4p)

    return out[:M, :D_OUT]


def init_linear_params(key, in_features, out_features):
    """PyTorch nn.Linear-style uniform(+-1/sqrt(in)) init.

    Weights stored pre-transposed (in, out) in bf16; biases stored as (1, out)
    f32 so the kernel never reshapes at call time.
    """
    kw, kb = jax.random.split(key)
    bound = 1.0 / jnp.sqrt(in_features)
    w = jax.random.uniform(
        kw, (in_features, out_features), jnp.float32, -bound, bound
    ).astype(jnp.bfloat16)
    b = jax.random.uniform(kb, (1, out_features), jnp.float32, -bound, bound)
    return w, b


def ref_forward(x, params):
    """Plain-JAX reference using the same bf16 weights / f32 accumulation."""
    h = x.astype(jnp.bfloat16)
    for i, (w, b) in enumerate(params):
        h = jnp.dot(h, w, preferred_element_type=jnp.float32) + b
        if i < len(params) - 1:
            h = jnp.maximum(h, 0.0).astype(jnp.bfloat16)
    return h


if __name__ == "__main__":
    key = jax.random.PRNGKey(0)
    k_x, k1, k2, k3, k4 = jax.random.split(key, 5)

    batch = 8
    x = jax.random.normal(k_x, (batch, D_IN), jnp.float32)

    params = [
        init_linear_params(k1, D_IN, D1),
        init_linear_params(k2, D1, D2),
        init_linear_params(k3, D2, D3),
        init_linear_params(k4, D3, D_OUT),
    ]

    y = net_forward(x, params)
    jax.block_until_ready(y)
    assert y.shape == (batch, D_OUT)
    assert y.dtype == jnp.float32

    y_ref = ref_forward(x, params)
    max_err = float(jnp.max(jnp.abs(y - y_ref)))
    assert jnp.allclose(y, y_ref, atol=2e-3, rtol=2e-3), max_err

    print("KERNEL_OK")
</pallas_src>

<mosaic_0001>
module attributes {stable_mosaic.version = 11 : i64} {
  func.func @_fused_mlp_kernel(%arg0: i32, %arg1: i32, %arg2: memref<16x2048xbf16, #tpu.memory_space<vmem>>, %arg3: memref<2048x1024xbf16, #tpu.memory_space<vmem>>, %arg4: memref<1x1024xf32, #tpu.memory_space<vmem>>, %arg5: memref<1024x256xbf16, #tpu.memory_space<vmem>>, %arg6: memref<1x256xf32, #tpu.memory_space<vmem>>, %arg7: memref<256x64xbf16, #tpu.memory_space<vmem>>, %arg8: memref<1x64xf32, #tpu.memory_space<vmem>>, %arg9: memref<64x128xbf16, #tpu.memory_space<vmem>>, %arg10: memref<1x128xf32, #tpu.memory_space<vmem>>, %arg11: memref<16x128xf32, #tpu.memory_space<vmem>>, %arg12: memref<16x1024xf32, #tpu.memory_space<vmem>>) attributes {dimension_semantics = [#tpu.dimension_semantics<parallel>, #tpu.dimension_semantics<arbitrary>], iteration_bounds = array<i64: 1, 2>, scalar_prefetch = 0 : i64, scratch_operands = 1 : i64, tpu.core_type = #tpu.core_type<tc>, window_params = [{transform_indices = @transform_0, window_bounds = array<i64: 16, 2048>}, {transform_indices = @transform_1, window_bounds = array<i64: 2048, 1024>}, {pipeline_mode = #tpu.pipeline_mode<synchronous>, transform_indices = @transform_2, window_bounds = array<i64: 1, 1024>}, {pipeline_mode = #tpu.pipeline_mode<synchronous>, transform_indices = @transform_3, window_bounds = array<i64: 1024, 256>}, {pipeline_mode = #tpu.pipeline_mode<synchronous>, transform_indices = @transform_4, window_bounds = array<i64: 1, 256>}, {pipeline_mode = #tpu.pipeline_mode<synchronous>, transform_indices = @transform_5, window_bounds = array<i64: 256, 64>}, {pipeline_mode = #tpu.pipeline_mode<synchronous>, transform_indices = @transform_6, window_bounds = array<i64: 1, 64>}, {pipeline_mode = #tpu.pipeline_mode<synchronous>, transform_indices = @transform_7, window_bounds = array<i64: 64, 128>}, {pipeline_mode = #tpu.pipeline_mode<synchronous>, transform_indices = @transform_8, window_bounds = array<i64: 1, 128>}, {transform_indices = @transform_9, window_bounds = array<i64: 16, 128>}]} {
    %c0_i32 = arith.constant 0 : i32
    %0 = arith.cmpi eq, %arg1, %c0_i32 : i32
    %1 = arith.extui %0 : i1 to i32
    %c0_i32_0 = arith.constant 0 : i32
    %2 = arith.cmpi ne, %1, %c0_i32_0 : i32
    scf.if %2 {
      %cst_9 = arith.constant 0.000000e+00 : f32
      %12 = vector.broadcast %cst_9 : f32 to vector<16x1024xf32>
      %c0_10 = arith.constant 0 : index
      %c0_11 = arith.constant 0 : index
      %13 = vector.load %arg12[%c0_10, %c0_11] : memref<16x1024xf32, #tpu.memory_space<vmem>>, vector<16x1024xf32>
      tpu.vector_store %arg12[%c0_10, %c0_11], %12 {strides = array<i32>} : memref<16x1024xf32, #tpu.memory_space<vmem>>, vector<16x1024xf32>,
    } else {
    }
    %c0 = arith.constant 0 : index
    %c0_1 = arith.constant 0 : index
    %3 = vector.load %arg12[%c0, %c0_1] : memref<16x1024xf32, #tpu.memory_space<vmem>>, vector<16x1024xf32>
    %c0_2 = arith.constant 0 : index
    %c0_3 = arith.constant 0 : index
    %4 = vector.load %arg2[%c0_2, %c0_3] : memref<16x2048xbf16, #tpu.memory_space<vmem>>, vector<16x2048xbf16>
    %c0_4 = arith.constant 0 : index
    %c0_5 = arith.constant 0 : index
    %5 = vector.load %arg3[%c0_4, %c0_5] : memref<2048x1024xbf16, #tpu.memory_space<vmem>>, vector<2048x1024xbf16>
    %cst = arith.constant dense<0.000000e+00> : vector<16x1024xf32>
    %6 = tpu.matmul %4, %5, %cst {dimension_numbers = #tpu.dot_dimension_numbers<[1], [0], [0], [1], [0, 0, 1, 1], [], []>} : vector<16x2048xbf16>, vector<2048x1024xbf16>, vector<16x1024xf32> -> vector<16x1024xf32>
    %7 = arith.addf %3, %6 : vector<16x1024xf32>
    %c0_6 = arith.constant 0 : index
    %c0_7 = arith.constant 0 : index
    %8 = vector.load %arg12[%c0_6, %c0_7] : memref<16x1024xf32, #tpu.memory_space<vmem>>, vector<16x1024xf32>
    tpu.vector_store %arg12[%c0_6, %c0_7], %7 {strides = array<i32>} : memref<16x1024xf32, #tpu.memory_space<vmem>>, vector<16x1024xf32>,
    %c1_i32 = arith.constant 1 : i32
    %9 = arith.cmpi eq, %arg1, %c1_i32 : i32
    %10 = arith.extui %9 : i1 to i32
    %c0_i32_8 = arith.constant 0 : i32
    %11 = arith.cmpi ne, %10, %c0_i32_8 : i32
    scf.if %11 {
      %c0_9 = arith.constant 0 : index
      %c0_10 = arith.constant 0 : index
      %12 = vector.load %arg12[%c0_9, %c0_10] : memref<16x1024xf32, #tpu.memory_space<vmem>>, vector<16x1024xf32>
      %c0_11 = arith.constant 0 : index
      %c0_12 = arith.constant 0 : index
      %13 = vector.load %arg4[%c0_11, %c0_12] : memref<1x1024xf32, #tpu.memory_space<vmem>>, vector<1x1024xf32>
      %14 = vector.broadcast %13 : vector<1x1024xf32> to vector<16x1024xf32>
      %15 = arith.addf %12, %14 : vector<16x1024xf32>
      %cst_13 = arith.constant 0.000000e+00 : f32
      %16 = vector.broadcast %cst_13 : f32 to vector<16x1024xf32>
      %17 = arith.maximumf %15, %16 : vector<16x1024xf32>
      %18 = arith.truncf %17 : vector<16x1024xf32> to vector<16x1024xbf16>
      %c0_14 = arith.constant 0 : index
      %c0_15 = arith.constant 0 : index
      %19 = vector.load %arg5[%c0_14, %c0_15] : memref<1024x256xbf16, #tpu.memory_space<vmem>>, vector<1024x256xbf16>
      %cst_16 = arith.constant dense<0.000000e+00> : vector<16x256xf32>
      %20 = tpu.matmul %18, %19, %cst_16 {dimension_numbers = #tpu.dot_dimension_numbers<[1], [0], [0], [1], [0, 0, 1, 1], [], []>} : vector<16x1024xbf16>, vector<1024x256xbf16>, vector<16x256xf32> -> vector<16x256xf32>
      %c0_17 = arith.constant 0 : index
      %c0_18 = arith.constant 0 : index
      %21 = vector.load %arg6[%c0_17, %c0_18] : memref<1x256xf32, #tpu.memory_space<vmem>>, vector<1x256xf32>
      %22 = vector.broadcast %21 : vector<1x256xf32> to vector<16x256xf32>
      %23 = arith.addf %20, %22 : vector<16x256xf32>
      %cst_19 = arith.constant 0.000000e+00 : f32
      %24 = vector.broadcast %cst_19 : f32 to vector<16x256xf32>
      %25 = arith.maximumf %23, %24 : vector<16x256xf32>
      %26 = arith.truncf %25 : vector<16x256xf32> to vector<16x256xbf16>
      %c0_20 = arith.constant 0 : index
      %c0_21 = arith.constant 0 : index
      %27 = vector.load %arg7[%c0_20, %c0_21] : memref<256x64xbf16, #tpu.memory_space<vmem>>, vector<256x64xbf16>
      %cst_22 = arith.constant dense<0.000000e+00> : vector<16x64xf32>
      %28 = tpu.matmul %26, %27, %cst_22 {dimension_numbers = #tpu.dot_dimension_numbers<[1], [0], [0], [1], [0, 0, 1, 1], [], []>} : vector<16x256xbf16>, vector<256x64xbf16>, vector<16x64xf32> -> vector<16x64xf32>
      %c0_23 = arith.constant 0 : index
      %c0_24 = arith.constant 0 : index
      %29 = vector.load %arg8[%c0_23, %c0_24] : memref<1x64xf32, #tpu.memory_space<vmem>>, vector<1x64xf32>
      %30 = vector.broadcast %29 : vector<1x64xf32> to vector<16x64xf32>
      %31 = arith.addf %28, %30 : vector<16x64xf32>
      %cst_25 = arith.constant 0.000000e+00 : f32
      %32 = vector.broadcast %cst_25 : f32 to vector<16x64xf32>
      %33 = arith.maximumf %31, %32 : vector<16x64xf32>
      %34 = arith.truncf %33 : vector<16x64xf32> to vector<16x64xbf16>
      %c0_26 = arith.constant 0 : index
      %c0_27 = arith.constant 0 : index
      %35 = vector.load %arg9[%c0_26, %c0_27] : memref<64x128xbf16, #tpu.memory_space<vmem>>, vector<64x128xbf16>
      %cst_28 = arith.constant dense<0.000000e+00> : vector<16x128xf32>
      %36 = tpu.matmul %34, %35, %cst_28 {dimension_numbers = #tpu.dot_dimension_numbers<[1], [0], [0], [1], [0, 0, 1, 1], [], []>} : vector<16x64xbf16>, vector<64x128xbf16>, vector<16x128xf32> -> vector<16x128xf32>
      %c0_29 = arith.constant 0 : index
      %c0_30 = arith.constant 0 : index
      %37 = vector.load %arg10[%c0_29, %c0_30] : memref<1x128xf32, #tpu.memory_space<vmem>>, vector<1x128xf32>
      %38 = vector.broadcast %37 : vector<1x128xf32> to vector<16x128xf32>
      %39 = arith.addf %36, %38 : vector<16x128xf32>
      %c0_31 = arith.constant 0 : index
      %c0_32 = arith.constant 0 : index
      %40 = vector.load %arg11[%c0_31, %c0_32] : memref<16x128xf32, #tpu.memory_space<vmem>>, vector<16x128xf32>
      tpu.vector_store %arg11[%c0_31, %c0_32], %39 {strides = array<i32>} : memref<16x128xf32, #tpu.memory_space<vmem>>, vector<16x128xf32>,
    } else {
    }
    return
  }
  func.func @transform_0(%arg0: i32, %arg1: i32) -> (i32, i32) {
    %c0_i32 = arith.constant 0 : i32
    return %arg0, %arg1 : i32, i32
  }
  func.func @transform_1(%arg0: i32, %arg1: i32) -> (i32, i32) {
    %c0_i32 = arith.constant 0 : i32
    %c0_i32_0 = arith.constant 0 : i32
    return %arg1, %c0_i32 : i32, i32
  }
  func.func @transform_2(%arg0: i32, %arg1: i32) -> (i32, i32) {
    %c0_i32 = arith.constant 0 : i32
    %c0_i32_0 = arith.constant 0 : i32
    %c0_i32_1 = arith.constant 0 : i32
    return %c0_i32, %c0_i32_0 : i32, i32
  }
  func.func @transform_3(%arg0: i32, %arg1: i32) -> (i32, i32) {
    %c0_i32 = arith.constant 0 : i32
    %c0_i32_0 = arith.constant 0 : i32
    %c0_i32_1 = arith.constant 0 : i32
    return %c0_i32, %c0_i32_0 : i32, i32
  }
  func.func @transform_4(%arg0: i32, %arg1: i32) -> (i32, i32) {
    %c0_i32 = arith.constant 0 : i32
    %c0_i32_0 = arith.constant 0 : i32
    %c0_i32_1 = arith.constant 0 : i32
    return %c0_i32, %c0_i32_0 : i32, i32
  }
  func.func @transform_5(%arg0: i32, %arg1: i32) -> (i32, i32) {
    %c0_i32 = arith.constant 0 : i32
    %c0_i32_0 = arith.constant 0 : i32
    %c0_i32_1 = arith.constant 0 : i32
    return %c0_i32, %c0_i32_0 : i32, i32
  }
  func.func @transform_6(%arg0: i32, %arg1: i32) -> (i32, i32) {
    %c0_i32 = arith.constant 0 : i32
    %c0_i32_0 = arith.constant 0 : i32
    %c0_i32_1 = arith.constant 0 : i32
    return %c0_i32, %c0_i32_0 : i32, i32
  }
  func.func @transform_7(%arg0: i32, %arg1: i32) -> (i32, i32) {
    %c0_i32 = arith.constant 0 : i32
    %c0_i32_0 = arith.constant 0 : i32
    %c0_i32_1 = arith.constant 0 : i32
    return %c0_i32, %c0_i32_0 : i32, i32
  }
  func.func @transform_8(%arg0: i32, %arg1: i32) -> (i32, i32) {
    %c0_i32 = arith.constant 0 : i32
    %c0_i32_0 = arith.constant 0 : i32
    %c0_i32_1 = arith.constant 0 : i32
    return %c0_i32, %c0_i32_0 : i32, i32
  }
  func.func @transform_9(%arg0: i32, %arg1: i32) -> (i32, i32) {
    %c0_i32 = arith.constant 0 : i32
    %c0_i32_0 = arith.constant 0 : i32
    return %arg0, %c0_i32 : i32, i32
  }
}

</mosaic_0001>

<llo_original>
// kernel: tpu_custom_call.1
$region0: #{tpu_custom_call.1}
  #allocation0 [shape = 'u32[]', space=smem, size = 0x4, offset = 0x4, fixed_abs, tag = 'smem constant byte address 0x4 - core index']
  #allocation1 [shape = 'u32[72,128]{1,0:T(1,128)}', space=vmem, size = 0x9000, scoped, tag = 'internal scratch']
  #allocation2 [shape = 'f32[16,1024]{1,0:T(8,128)}', space=vmem, size = 0x10000, scoped, tag = 'scratch operand']
  %s0 = inlined_call_operand.hbm [shape: bf16[16,4096], index: 0, kind: input, shape index: {}]
  %s1 = inlined_call_operand.hbm [shape: bf16[4096,1024], index: 1, kind: input, shape index: {}]
  %s2 = inlined_call_operand.hbm [shape: f32[1,1024], index: 2, kind: input, shape index: {}]
  %s3 = inlined_call_operand.hbm [shape: bf16[1024,256], index: 3, kind: input, shape index: {}]
  %s4 = inlined_call_operand.hbm [shape: f32[1,256], index: 4, kind: input, shape index: {}]
  %s5 = inlined_call_operand.vmem [shape: bf16[256,64], index: 5, kind: input, shape index: {}]
  %s6 = inlined_call_operand.hbm [shape: f32[1,64], index: 6, kind: input, shape index: {}]
  %s7 = inlined_call_operand.hbm [shape: bf16[64,128], index: 7, kind: input, shape index: {}]
  %s8 = inlined_call_operand.hbm [shape: f32[1,128], index: 8, kind: input, shape index: {}]
  %s9 = inlined_call_operand.hbm [shape: f32[16,128], index: 9, kind: output, shape index: {}]
  %s10 = sld [smem:[#allocation0]]
  $region109: #{tpu_custom_call.1} parent=0
    _
  %s12 = ssub.s32 1, %s10
  %s13 = scalar_select 0, %s12, %s10
  $region1: #{tpu_custom_call.1} parent=0
    #allocation3 [shape = 'u8[131072]{0}', space=vmem, size = 0x20000, scoped, tag = 'input window, operand 0']
    #allocation4 [shape = 's32[2]{0}', space=sflag, size = 0x8, scoped, tag = 'scoped memory for tpu_custom_call.1']
    #allocation5 [shape = 's32[2]{0}', space=sflag, size = 0x8, scoped, tag = 'scoped memory for tpu_custom_call.1']
    #allocation6 [shape = 'u8[8388608]{0}', space=vmem, size = 0x800000, scoped, tag = 'input window, operand 1']
    #allocation7 [shape = 's32[2]{0}', space=sflag, size = 0x8, scoped, tag = 'scoped memory for tpu_custom_call.1']
    #allocation8 [shape = 'u8[4096]{0}', space=vmem, size = 0x1000, scoped, tag = 'input window, operand 2, single buffered']
    #allocation9 [shape = 'u8[524288]{0}', space=vmem, size = 0x80000, scoped, tag = 'input window, operand 3, single buffered']
    #allocation10 [shape = 's32[1]{0}', space=sflag, size = 0x4, scoped, tag = 'scoped memory for tpu_custom_call.1']
    #allocation11 [shape = 'u8[1024]{0}', space=vmem, size = 0x400, scoped, tag = 'input window, operand 4, single buffered']
    #allocation12 [shape = 'u8[512]{0}', space=vmem, size = 0x400, scoped, tag = 'input window, operand 6, single buffered']
    #allocation13 [shape = 's32[1]{0}', space=sflag, size = 0x4, scoped, tag = 'scoped memory for tpu_custom_call.1']
    #allocation14 [shape = 'u8[16384]{0}', space=vmem, size = 0x4000, scoped, tag = 'input window, operand 7, single buffered']
    #allocation15 [shape = 'u8[512]{0}', space=vmem, size = 0x400, scoped, tag = 'input window, operand 8, single buffered']
    #allocation16 [shape = 's32[1]{0}', space=sflag, size = 0x4, scoped, tag = 'scoped memory for tpu_custom_call.1']
    #allocation17 [shape = 'u8[8192]{0}', space=vmem, size = 0x2000, scoped, tag = 'output window, operand 0, single buffered']
    %14 = vsyncpa [#allocation4], 0
    %s15 = scalar_lea.sflag [#allocation4], 1
    %16 = vsyncpa %s15, 0
    %17 = vsyncpa [#allocation7], 0
    %s18 = scalar_lea.sflag [#allocation7], 1
    %19 = vsyncpa %s18, 0
    %20 = vsyncpa [#allocation10], 0
    %21 = vsyncpa [#allocation13], 0
    %22 = vsyncpa [#allocation16], 0
    %23 = vsyncpa [#allocation5], 0
    loop: start=0, step=1, limit=4
    $region2: #{tpu_custom_call.1} parent=1 // loop_pre_header
      _
    $region3: #{tpu_custom_call.1} parent=1 // loop_header
      %s25 = sphi 0, %s29
      %p26 = scmp.ge.s32.totalorder %s25, 4
      %s32 = sphi 0, %s44
      %s33 = sphi 0, %s40
      %s34 = sphi 0, %s32
      %s35 = sphi 0, %s33
      %s36 = sphi 0, %s34
      %s37 = sphi 0, %s35
      %s49 = sphi 0, %s51
      %s52 = sphi 0, %s49
      %s53 = sphi 0, %s52
      %s69 = sphi 0, %s53
      %s75 = sphi 0, %s77
      %s78 = sphi 0, %s75
      %s79 = sphi 0, %s78
      %s95 = sphi 0, %s79
      %s99 = sphi 0, %s99
      %s101 = sphi 0, %s99
      %s102 = sphi 0, %s101
      %s116 = sphi 0, %s102
      %s120 = sphi 0, %s120
      %s122 = sphi 0, %s120
      %s123 = sphi 0, %s122
      %s137 = sphi 0, %s123
      %s141 = sphi 0, %s141
      %s143 = sphi 0, %s141
      %s144 = sphi 0, %s143
      %s158 = sphi 0, %s144
      %s162 = sphi 0, %s162
      %s164 = sphi 0, %s162
      %s165 = sphi 0, %s164
      %s179 = sphi 0, %s165
      %s183 = sphi 0, %s183
      %s185 = sphi 0, %s183
      %s186 = sphi 0, %s185
      %s200 = sphi 0, %s186
      %s204 = sphi 0, %s204
      %s206 = sphi 0, %s204
      %s207 = sphi 0, %s206
      %s221 = sphi 0, %s207
      %s225 = sphi 0, %s225
      %s227 = sphi 0, %s225
      %s228 = sphi 0, %s227
      %s242 = sphi 0, %s228
      %s248 = sphi 0, %s250
      %s251 = sphi 0, %s248
      %s252 = sphi 0, %s251
      %s268 = sphi 0, %s252
    $region4: #{tpu_custom_call.1} parent=1 // loop_header_branch
      %28 = sbr.rel (%p26) target = $region8
    $region5: #{tpu_custom_call.1} parent=1 // loop_body
      %s30 = ssub.s32 %s25, 1
      %s31 = ssub.s32 %s25, 2
      %s38 = sadd.s32 1, %s33
      %p39 = scmp.ge.s32.totalorder %s38, 2
      %s40 = scalar_select %p39, 0, %s38
      %s41 = sadd.s32 1, %s32
      %s42 = scalar_select %p39, %s41, %s32
      %p43 = scmp.ge.s32.totalorder %s42, 1
      %s44 = scalar_select %p43, 0, %s42
      %s45 = ssub.s32 %s32, %s44
      %s46 = ssub.s32 %s33, %s40
      %s47 = sor.u32 %s45, %s46
      %p48 = scmp.eq.s32.totalorder %s47, 0
      %s50 = sadd.s32 %s49, 1
      %s51 = scalar_select %p48, %s49, %s50
      %p54 = pneg %p48
      %p55 = scmp.eq.s32.totalorder %s25, 1
      %p56 = por %p54, %p55
      %p57 = scmp.ne.s32.totalorder %s49, %s52
      %p58 = scmp.eq.s32.totalorder %s25, 0
      %p59 = por %p57, %p58
      %p60 = scmp.ne.s32.totalorder %s49, %s52
      %p61 = scmp.eq.s32.totalorder %s30, 1
      %p62 = por %p60, %p61
      %p63 = scmp.ne.s32.totalorder %s52, %s53
      %p64 = scmp.eq.s32.totalorder %s30, 0
      %p65 = por %p63, %p64
      %p66 = scmp.ne.s32.totalorder %s52, %s53
      %p67 = scmp.eq.s32.totalorder %s31, 1
      %p68 = por %p66, %p67
      %p70 = scmp.ne.s32.totalorder %s53, %s69
      %p71 = scmp.eq.s32.totalorder %s31, 0
      %p72 = por %p70, %p71
      %s73 = ssub.s32 %s33, %s40
      %p74 = scmp.eq.s32.totalorder %s73, 0
      %s76 = sadd.s32 %s75, 1
      %s77 = scalar_select %p74, %s75, %s76
      %p80 = pneg %p74
      %p81 = scmp.eq.s32.totalorder %s25, 1
      %p82 = por %p80, %p81
      %p83 = scmp.ne.s32.totalorder %s75, %s78
      %p84 = scmp.eq.s32.totalorder %s25, 0
      %p85 = por %p83, %p84
      %p86 = scmp.ne.s32.totalorder %s75, %s78
      %p87 = scmp.eq.s32.totalorder %s30, 1
      %p88 = por %p86, %p87
      %p89 = scmp.ne.s32.totalorder %s78, %s79
      %p90 = scmp.eq.s32.totalorder %s30, 0
      %p91 = por %p89, %p90
      %p92 = scmp.ne.s32.totalorder %s78, %s79
      %p93 = scmp.eq.s32.totalorder %s31, 1
      %p94 = por %p92, %p93
      %p96 = scmp.ne.s32.totalorder %s79, %s95
      %p97 = scmp.eq.s32.totalorder %s31, 0
      %p98 = por %p96, %p97
      %s100 = sadd.s32 %s99, 1
      %p103 = scmp.eq.s32.totalorder %s25, 1
      %p104 = scmp.ne.s32.totalorder %s99, %s101
      %p105 = scmp.eq.s32.totalorder %s25, 0
      %p106 = por %p104, %p105
      %p107 = scmp.ne.s32.totalorder %s99, %s101
      %p108 = scmp.eq.s32.totalorder %s30, 1
      %p109 = por %p107, %p108
      %p110 = scmp.ne.s32.totalorder %s101, %s102
      %p111 = scmp.eq.s32.totalorder %s30, 0
      %p112 = por %p110, %p111
      %p113 = scmp.ne.s32.totalorder %s101, %s102
      %p114 = scmp.eq.s32.totalorder %s31, 1
      %p115 = por %p113, %p114
      %p117 = scmp.ne.s32.totalorder %s102, %s116
      %p118 = scmp.eq.s32.totalorder %s31, 0
      %p119 = por %p117, %p118
      %s121 = sadd.s32 %s120, 1
      %p124 = scmp.eq.s32.totalorder %s25, 1
      %p125 = scmp.ne.s32.totalorder %s120, %s122
      %p126 = scmp.eq.s32.totalorder %s25, 0
      %p127 = por %p125, %p126
      %p128 = scmp.ne.s32.totalorder %s120, %s122
      %p129 = scmp.eq.s32.totalorder %s30, 1
      %p130 = por %p128, %p129
      %p131 = scmp.ne.s32.totalorder %s122, %s123
      %p132 = scmp.eq.s32.totalorder %s30, 0
      %p133 = por %p131, %p132
      %p134 = scmp.ne.s32.totalorder %s122, %s123
      %p135 = scmp.eq.s32.totalorder %s31, 1
      %p136 = por %p134, %p135
      %p138 = scmp.ne.s32.totalorder %s123, %s137
      %p139 = scmp.eq.s32.totalorder %s31, 0
      %p140 = por %p138, %p139
      %s142 = sadd.s32 %s141, 1
      %p145 = scmp.eq.s32.totalorder %s25, 1
      %p146 = scmp.ne.s32.totalorder %s141, %s143
      %p147 = scmp.eq.s32.totalorder %s25, 0
      %p148 = por %p146, %p147
      %p149 = scmp.ne.s32.totalorder %s141, %s143
      %p150 = scmp.eq.s32.totalorder %s30, 1
      %p151 = por %p149, %p150
      %p152 = scmp.ne.s32.totalorder %s143, %s144
      %p153 = scmp.eq.s32.totalorder %s30, 0
      %p154 = por %p152, %p153
      %p155 = scmp.ne.s32.totalorder %s143, %s144
      %p156 = scmp.eq.s32.totalorder %s31, 1
      %p157 = por %p155, %p156
      %p159 = scmp.ne.s32.totalorder %s144, %s158
      %p160 = scmp.eq.s32.totalorder %s31, 0
      %p161 = por %p159, %p160
      %s163 = sadd.s32 %s162, 1
      %p166 = scmp.eq.s32.totalorder %s25, 1
      %p167 = scmp.ne.s32.totalorder %s162, %s164
      %p168 = scmp.eq.s32.totalorder %s25, 0
      %p169 = por %p167, %p168
      %p170 = scmp.ne.s32.totalorder %s162, %s164
      %p171 = scmp.eq.s32.totalorder %s30, 1
      %p172 = por %p170, %p171
      %p173 = scmp.ne.s32.totalorder %s164, %s165
      %p174 = scmp.eq.s32.totalorder %s30, 0
      %p175 = por %p173, %p174
      %p176 = scmp.ne.s32.totalorder %s164, %s165
      %p177 = scmp.eq.s32.totalorder %s31, 1
      %p178 = por %p176, %p177
      %p180 = scmp.ne.s32.totalorder %s165, %s179
      %p181 = scmp.eq.s32.totalorder %s31, 0
      %p182 = por %p180, %p181
      %s184 = sadd.s32 %s183, 1
      %p187 = scmp.eq.s32.totalorder %s25, 1
      %p188 = scmp.ne.s32.totalorder %s183, %s185
      %p189 = scmp.eq.s32.totalorder %s25, 0
      %p190 = por %p188, %p189
      %p191 = scmp.ne.s32.totalorder %s183, %s185
      %p192 = scmp.eq.s32.totalorder %s30, 1
      %p193 = por %p191, %p192
      %p194 = scmp.ne.s32.totalorder %s185, %s186
      %p195 = scmp.eq.s32.totalorder %s30, 0
      %p196 = por %p194, %p195
      %p197 = scmp.ne.s32.totalorder %s185, %s186
      %p198 = scmp.eq.s32.totalorder %s31, 1
      %p199 = por %p197, %p198
      %p201 = scmp.ne.s32.totalorder %s186, %s200
      %p202 = scmp.eq.s32.totalorder %s31, 0
      %p203 = por %p201, %p202
      %s205 = sadd.s32 %s204, 1
      %p208 = scmp.eq.s32.totalorder %s25, 1
      %p209 = scmp.ne.s32.totalorder %s204, %s206
      %p210 = scmp.eq.s32.totalorder %s25, 0
      %p211 = por %p209, %p210
      %p212 = scmp.ne.s32.totalorder %s204, %s206
      %p213 = scmp.eq.s32.totalorder %s30, 1
      %p214 = por %p212, %p213
      %p215 = scmp.ne.s32.totalorder %s206, %s207
      %p216 = scmp.eq.s32.totalorder %s30, 0
      %p217 = por %p215, %p216
      %p218 = scmp.ne.s32.totalorder %s206, %s207
      %p219 = scmp.eq.s32.totalorder %s31, 1
      %p220 = por %p218, %p219
      %p222 = scmp.ne.s32.totalorder %s207, %s221
      %p223 = scmp.eq.s32.totalorder %s31, 0
      %p224 = por %p222, %p223
      %s226 = sadd.s32 %s225, 1
      %p229 = scmp.eq.s32.totalorder %s25, 1
      %p230 = scmp.ne.s32.totalorder %s225, %s227
      %p231 = scmp.eq.s32.totalorder %s25, 0
      %p232 = por %p230, %p231
      %p233 = scmp.ne.s32.totalorder %s225, %s227
      %p234 = scmp.eq.s32.totalorder %s30, 1
      %p235 = por %p233, %p234
      %p236 = scmp.ne.s32.totalorder %s227, %s228
      %p237 = scmp.eq.s32.totalorder %s30, 0
      %p238 = por %p236, %p237
      %p239 = scmp.ne.s32.totalorder %s227, %s228
      %p240 = scmp.eq.s32.totalorder %s31, 1
      %p241 = por %p239, %p240
      %p243 = scmp.ne.s32.totalorder %s228, %s242
      %p244 = scmp.eq.s32.totalorder %s31, 0
      %p245 = por %p243, %p244
      %s246 = ssub.s32 %s32, %s44
      %p247 = scmp.eq.s32.totalorder %s246, 0
      %s249 = sadd.s32 %s248, 1
      %s250 = scalar_select %p247, %s248, %s249
      %p253 = pneg %p247
      %p254 = scmp.eq.s32.totalorder %s25, 1
      %p255 = por %p253, %p254
      %p256 = scmp.ne.s32.totalorder %s248, %s251
      %p257 = scmp.eq.s32.totalorder %s25, 0
      %p258 = por %p256, %p257
      %p259 = scmp.ne.s32.totalorder %s248, %s251
      %p260 = scmp.eq.s32.totalorder %s30, 1
      %p261 = por %p259, %p260
      %p262 = scmp.ne.s32.totalorder %s251, %s252
      %p263 = scmp.eq.s32.totalorder %s30, 0
      %p264 = por %p262, %p263
      %p265 = scmp.ne.s32.totalorder %s251, %s252
      %p266 = scmp.eq.s32.totalorder %s31, 1
      %p267 = por %p265, %p266
      %p269 = scmp.ne.s32.totalorder %s252, %s268
      %p270 = scmp.eq.s32.totalorder %s31, 0
      %p271 = por %p269, %p270
      %p272 = scmp.le.s32.totalorder 1, %s25
      %p273 = scmp.lt.s32.totalorder %s25, 3
      %p274 = pnand %p272, %p273
      %p275 = pneg %p274
      // Predicated region
      $region9: #{tpu_custom_call.1} parent=5 // pred_check
        _
      $region10: #{tpu_custom_call.1} parent=5 // pred_check_branch
        %277 = sbr.rel (%p274) target = $region12
      $region11: #{tpu_custom_call.1} parent=5 // pred_region
        %s278 = ssub.s32 %s25, 1
        // Predicated region
        $region13: #{tpu_custom_call.1} parent=11 // pred_check
          %p279 = pneg %p112
        $region14: #{tpu_custom_call.1} parent=11 // pred_check_branch
          %281 = sbr.rel (%p279) target = $region16
        $region15: #{tpu_custom_call.1} parent=11 // pred_region
          %283 = vsyncadd [#allocation7], 0
          %s285 = sshll.u32 %s2, 4
          %s286 = int_to_ptr.hbm [resolvable:$true] %s285
          %s287 = sshll.u32 [#allocation8], 4
          %s288 = int_to_ptr.vmem [resolvable:$true] %s287
          %290 = dma.hbm_to_vmem [thread:$0]  %s286, 128, %s288, [#allocation7]
        $region16: #{tpu_custom_call.1} parent=11 // pred_fallthru
          _
        // Predicated region
        $region17: #{tpu_custom_call.1} parent=11 // pred_check
          %p291 = pneg %p133
        $region18: #{tpu_custom_call.1} parent=11 // pred_check_branch
          %293 = sbr.rel (%p291) target = $region20
        $region19: #{tpu_custom_call.1} parent=11 // pred_region
          %295 = vsyncadd [#allocation10], 0
          %s296 = sshll.u32 %s3, 4
          %s297 = int_to_ptr.hbm [resolvable:$true] %s296
          %s298 = sshll.u32 [#allocation9], 4
          %s299 = int_to_ptr.vmem [resolvable:$true] %s298
          %304 = dma.hbm_to_vmem [thread:$0]  %s297, 16384, %s299, [#allocation10], 128, 128, 8
        $region20: #{tpu_custom_call.1} parent=11 // pred_fallthru
          _
        // Predicated region
        $region21: #{tpu_custom_call.1} parent=11 // pred_check
          %p305 = pneg %p154
        $region22: #{tpu_custom_call.1} parent=11 // pred_check_branch
          %307 = sbr.rel (%p305) target = $region24
        $region23: #{tpu_custom_call.1} parent=11 // pred_region
          %309 = vsyncadd [#allocation10], 0
          %s311 = sshll.u32 %s4, 4
          %s312 = int_to_ptr.hbm [resolvable:$true] %s311
          %s313 = sshll.u32 [#allocation11], 4
          %s314 = int_to_ptr.vmem [resolvable:$true] %s313
          %316 = dma.hbm_to_vmem [thread:$0]  %s312, 32, %s314, [#allocation10]
        $region24: #{tpu_custom_call.1} parent=11 // pred_fallthru
          _
        // Predicated region
        $region25: #{tpu_custom_call.1} parent=11 // pred_check
          %p317 = pneg %p175
        $region26: #{tpu_custom_call.1} parent=11 // pred_check_branch
          %319 = sbr.rel (%p317) target = $region28
        $region27: #{tpu_custom_call.1} parent=11 // pred_region
          _
        $region28: #{tpu_custom_call.1} parent=11 // pred_fallthru
          _
        // Predicated region
        $region29: #{tpu_custom_call.1} parent=11 // pred_check
          %p320 = pneg %p196
        $region30: #{tpu_custom_call.1} parent=11 // pred_check_branch
          %322 = sbr.rel (%p320) target = $region32
        $region31: #{tpu_custom_call.1} parent=11 // pred_region
          %324 = vsyncadd [#allocation13], 0
          %s326 = sshll.u32 %s6, 4
          %s327 = int_to_ptr.hbm [resolvable:$true] %s326
          %s328 = sshll.u32 [#allocation12], 4
          %s329 = int_to_ptr.vmem [resolvable:$true] %s328
          %331 = dma.hbm_to_vmem [thread:$0]  %s327, 16, %s329, [#allocation13]
        $region32: #{tpu_custom_call.1} parent=11 // pred_fallthru
          _
        // Predicated region
        $region33: #{tpu_custom_call.1} parent=11 // pred_check
          %p332 = pneg %p217
        $region34: #{tpu_custom_call.1} parent=11 // pred_check_branch
          %334 = sbr.rel (%p332) target = $region36
        $region35: #{tpu_custom_call.1} parent=11 // pred_region
          %336 = vsyncadd [#allocation13], 0
          %s337 = sshll.u32 %s7, 4
          %s338 = int_to_ptr.hbm [resolvable:$true] %s337
          %s339 = sshll.u32 [#allocation14], 4
          %s340 = int_to_ptr.vmem [resolvable:$true] %s339
          %345 = dma.hbm_to_vmem [thread:$0]  %s338, 512, %s340, [#allocation13], 64, 64, 4
        $region36: #{tpu_custom_call.1} parent=11 // pred_fallthru
          _
        // Predicated region
        $region37: #{tpu_custom_call.1} parent=11 // pred_check
          %p346 = pneg %p238
        $region38: #{tpu_custom_call.1} parent=11 // pred_check_branch
          %348 = sbr.rel (%p346) target = $region40
        $region39: #{tpu_custom_call.1} parent=11 // pred_region
          %350 = vsyncadd [#allocation16], 0
          %s352 = sshll.u32 %s8, 4
          %s353 = int_to_ptr.hbm [resolvable:$true] %s352
          %s354 = sshll.u32 [#allocation15], 4
          %s355 = int_to_ptr.vmem [resolvable:$true] %s354
          %357 = dma.hbm_to_vmem [thread:$0]  %s353, 16, %s355, [#allocation16]
        $region40: #{tpu_custom_call.1} parent=11 // pred_fallthru
          _
      $region12: #{tpu_custom_call.1} parent=5 // pred_fallthru
        _
      %p358 = scmp.lt.s32.totalorder %s25, 2
      // Predicated region
      $region41: #{tpu_custom_call.1} parent=5 // pred_check
        %p359 = pneg %p358
      $region42: #{tpu_custom_call.1} parent=5 // pred_check_branch
        %361 = sbr.rel (%p359) target = $region44
      $region43: #{tpu_custom_call.1} parent=5 // pred_region
        // Predicated region
        $region45: #{tpu_custom_call.1} parent=43 // pred_check
          %p362 = pneg %p59
        $region46: #{tpu_custom_call.1} parent=43 // pred_check_branch
          %364 = sbr.rel (%p362) target = $region48
        $region47: #{tpu_custom_call.1} parent=43 // pred_region
          %s365 = sand.u32 %s49, 1
          %s366 = scalar_lea.sflag [#allocation4], %s365
          %s367 = sand.u32 %s49, 1
          %s368 = smul.addr %s367, 128
          %s369 = scalar_lea.vmem [#allocation3], %s368
          %s370 = smul.u32 2, %s32
          %s371 = smul.u32 16, %s33
          %373 = vsyncadd %s366, 0
          %s374 = smul.addr %s370, 32
          %s375 = sadd.s32 %s371, %s374
          %s376 = smul.addr %s375, 4
          %s377 = scalar_lea.hbm %s0, %s376
          %s378 = sshll.u32 %s377, 4
          %s379 = int_to_ptr.hbm [resolvable:$true] %s378
          %s380 = sshll.u32 %s369, 4
          %s381 = int_to_ptr.vmem [resolvable:$true] %s380
          %386 = dma.hbm_to_vmem [thread:$0]  %s379, 2048, %s381, %s366, 2048, 1024, 64
        $region48: #{tpu_custom_call.1} parent=43 // pred_fallthru
          _
        // Predicated region
        $region49: #{tpu_custom_call.1} parent=43 // pred_check
          %p387 = pneg %p85
        $region50: #{tpu_custom_call.1} parent=43 // pred_check_branch
          %389 = sbr.rel (%p387) target = $region52
        $region51: #{tpu_custom_call.1} parent=43 // pred_region
          %s390 = sand.u32 %s25, 1
          %s391 = scalar_lea.sflag [#allocation7], %s390
          %s392 = sand.u32 %s75, 1
          %s393 = smul.addr %s392, 8192
          %s394 = scalar_lea.vmem [#allocation6], %s393
          %s395 = smul.u32 256, %s33
          %397 = vsyncadd %s391, 0
          %s398 = smul.addr %s395, 8
          %s399 = smul.addr %s398, 4
          %s400 = scalar_lea.hbm %s1, %s399
          %s401 = sshll.u32 %s400, 4
          %s402 = int_to_ptr.hbm [resolvable:$true] %s401
          %s403 = sshll.u32 %s394, 4
          %s404 = int_to_ptr.vmem [resolvable:$true] %s403
          %409 = dma.hbm_to_vmem [thread:$0]  %s402, 131072, %s404, %s391, 512, 512, 32
        $region52: #{tpu_custom_call.1} parent=43 // pred_fallthru
          _
      $region44: #{tpu_custom_call.1} parent=5 // pred_fallthru
        _
      %p410 = scmp.le.s32.totalorder 1, %s25
      %p411 = scmp.lt.s32.totalorder %s25, 3
      %p412 = pnand %p410, %p411
      %p413 = pneg %p412
      // Predicated region
      $region53: #{tpu_custom_call.1} parent=5 // pred_check
        _
      $region54: #{tpu_custom_call.1} parent=5 // pred_check_branch
        %415 = sbr.rel (%p412) target = $region56
      $region55: #{tpu_custom_call.1} parent=5 // pred_region
        %s416 = ssub.s32 %s25, 1
        %s417 = sand.u32 %s52, 1
        %s418 = scalar_lea.sflag [#allocation4], %s417
        %s419 = sand.u32 %s52, 1
        %s420 = smul.addr %s419, 128
        %s421 = scalar_lea.vmem [#allocation3], %s420
        // Predicated region
        $region57: #{tpu_custom_call.1} parent=55 // pred_check
          %p422 = pneg %p65
        $region58: #{tpu_custom_call.1} parent=55 // pred_check_branch
          %424 = sbr.rel (%p422) target = $region60
        $region59: #{tpu_custom_call.1} parent=55 // pred_region
          %426 = dma.done %s418, 2048
        $region60: #{tpu_custom_call.1} parent=55 // pred_fallthru
          _
        %s427 = sand.u32 %s30, 1
        %s428 = scalar_lea.sflag [#allocation7], %s427
        %s429 = sand.u32 %s78, 1
        %s430 = smul.addr %s429, 8192
        %s431 = scalar_lea.vmem [#allocation6], %s430
        // Predicated region
        $region61: #{tpu_custom_call.1} parent=55 // pred_check
          %p432 = pneg %p91
        $region62: #{tpu_custom_call.1} parent=55 // pred_check_branch
          %434 = sbr.rel (%p432) target = $region64
        $region63: #{tpu_custom_call.1} parent=55 // pred_region
          %436 = dma.done %s428, 131072
        $region64: #{tpu_custom_call.1} parent=55 // pred_fallthru
          _
        // Predicated region
        $region65: #{tpu_custom_call.1} parent=55 // pred_check
          %p437 = pneg %p112
        $region66: #{tpu_custom_call.1} parent=55 // pred_check_branch
          %439 = sbr.rel (%p437) target = $region68
        $region67: #{tpu_custom_call.1} parent=55 // pred_region
          %441 = dma.done [#allocation7], 128
        $region68: #{tpu_custom_call.1} parent=55 // pred_fallthru
          _
        // Predicated region
        $region69: #{tpu_custom_call.1} parent=55 // pred_check
          %p442 = pneg %p133
        $region70: #{tpu_custom_call.1} parent=55 // pred_check_branch
          %444 = sbr.rel (%p442) target = $region72
        $region71: #{tpu_custom_call.1} parent=55 // pred_region
          %446 = dma.done [#allocation10], 16384
        $region72: #{tpu_custom_call.1} parent=55 // pred_fallthru
          _
        // Predicated region
        $region73: #{tpu_custom_call.1} parent=55 // pred_check
          %p447 = pneg %p154
        $region74: #{tpu_custom_call.1} parent=55 // pred_check_branch
          %449 = sbr.rel (%p447) target = $region76
        $region75: #{tpu_custom_call.1} parent=55 // pred_region
          %451 = dma.done [#allocation10], 32
        $region76: #{tpu_custom_call.1} parent=55 // pred_fallthru
          _
        // Predicated region
        $region77: #{tpu_custom_call.1} parent=55 // pred_check
          %p452 = pneg %p196
        $region78: #{tpu_custom_call.1} parent=55 // pred_check_branch
          %454 = sbr.rel (%p452) target = $region80
        $region79: #{tpu_custom_call.1} parent=55 // pred_region
          %456 = dma.done [#allocation13], 16
        $region80: #{tpu_custom_call.1} parent=55 // pred_fallthru
          _
        // Predicated region
        $region81: #{tpu_custom_call.1} parent=55 // pred_check
          %p457 = pneg %p217
        $region82: #{tpu_custom_call.1} parent=55 // pred_check_branch
          %459 = sbr.rel (%p457) target = $region84
        $region83: #{tpu_custom_call.1} parent=55 // pred_region
          %461 = dma.done [#allocation13], 512
        $region84: #{tpu_custom_call.1} parent=55 // pred_fallthru
          _
        // Predicated region
        $region85: #{tpu_custom_call.1} parent=55 // pred_check
          %p462 = pneg %p238
        $region86: #{tpu_custom_call.1} parent=55 // pred_check_branch
          %464 = sbr.rel (%p462) target = $region88
        $region87: #{tpu_custom_call.1} parent=55 // pred_region
          %466 = dma.done [#allocation16], 16
        $region88: #{tpu_custom_call.1} parent=55 // pred_fallthru
          _
        %s467 = sand.u32 %s52, 1
        %s468 = scalar_lea.sflag [#allocation4], %s467
        %s469 = sand.u32 %s52, 1
        %s470 = smul.addr %s469, 128
        %s471 = scalar_lea.vmem [#allocation3], %s470
        %p472 = pneg %p65
        %p473 = pneg %p62
        %s474 = sand.u32 %s30, 1
        %s475 = scalar_lea.sflag [#allocation7], %s474
        %s476 = sand.u32 %s78, 1
        %s477 = smul.addr %s476, 8192
        %s478 = scalar_lea.vmem [#allocation6], %s477
        %p479 = pneg %p91
        %p480 = pneg %p88
        %p481 = pneg %p112
        %p482 = pneg %p109
        %p483 = pneg %p133
        %p484 = pneg %p130
        %p485 = pneg %p154
        %p486 = pneg %p151
        %p487 = pneg %p175
        %p488 = pneg %p172
        %p489 = pneg %p196
        %p490 = pneg %p193
        %p491 = pneg %p217
        %p492 = pneg %p214
        %p493 = pneg %p238
        %p494 = pneg %p235
        %p495 = pneg %p264
        %p496 = pneg %p261
        %s497 = smul.u32 2, %s34
        %s498 = smul.u32 16, %s35
        %s499 = smul.u32 256, %s35
        %s500 = smul.u32 2, %s34
        %p502 = scmp.eq.s32.totalorder %s35, 0
        // Predicated region
        $region89: #{tpu_custom_call.1} parent=55 // pred_check
          %p503 = pneg %p502
        $region90: #{tpu_custom_call.1} parent=55 // pred_check_branch
          %505 = sbr.rel (%p503) target = $region92
        $region91: #{tpu_custom_call.1} parent=55 // pred_region
          %506 = vst [vmem:[#allocation2] sm:$0xff] 0.0
          %507 = vst [vmem:[#allocation2 + $0x8] sm:$0xff] 0.0
          %508 = vst [vmem:[#allocation2 + $0x10] sm:$0xff] 0.0
          %509 = vst [vmem:[#allocation2 + $0x18] sm:$0xff] 0.0
          %510 = vst [vmem:[#allocation2 + $0x20] sm:$0xff] 0.0
          %511 = vst [vmem:[#allocation2 + $0x28] sm:$0xff] 0.0
          %512 = vst [vmem:[#allocation2 + $0x30] sm:$0xff] 0.0
          %513 = vst [vmem:[#allocation2 + $0x38] sm:$0xff] 0.0
          %514 = vst [vmem:[#allocation2 + $0x40] sm:$0xff] 0.0
          %515 = vst [vmem:[#allocation2 + $0x48] sm:$0xff] 0.0
          %516 = vst [vmem:[#allocation2 + $0x50] sm:$0xff] 0.0
          %517 = vst [vmem:[#allocation2 + $0x58] sm:$0xff] 0.0
          %518 = vst [vmem:[#allocation2 + $0x60] sm:$0xff] 0.0
          %519 = vst [vmem:[#allocation2 + $0x68] sm:$0xff] 0.0
          %520 = vst [vmem:[#allocation2 + $0x70] sm:$0xff] 0.0
          %521 = vst [vmem:[#allocation2 + $0x78] sm:$0xff] 0.0
        $region92: #{tpu_custom_call.1} parent=55 // pred_fallthru
          _
        %v522 = vld [vmem:[#allocation2] sm:$0xff]
        %v523 = vld [vmem:[#allocation2 + $0x8] sm:$0xff]
        %v524 = vld [vmem:[#allocation2 + $0x10] sm:$0xff]
        %v525 = vld [vmem:[#allocation2 + $0x18] sm:$0xff]
        %v526 = vld [vmem:[#allocation2 + $0x20] sm:$0xff]
        %v527 = vld [vmem:[#allocation2 + $0x28] sm:$0xff]
        %v528 = vld [vmem:[#allocation2 + $0x30] sm:$0xff]
        %v529 = vld [vmem:[#allocation2 + $0x38] sm:$0xff]
        %v530 = vld [vmem:[#allocation2 + $0x40] sm:$0xff]
        %v531 = vld [vmem:[#allocation2 + $0x48] sm:$0xff]
        %v532 = vld [vmem:[#allocation2 + $0x50] sm:$0xff]
        %v533 = vld [vmem:[#allocation2 + $0x58] sm:$0xff]
        %v534 = vld [vmem:[#allocation2 + $0x60] sm:$0xff]
        %v535 = vld [vmem:[#allocation2 + $0x68] sm:$0xff]
        %v536 = vld [vmem:[#allocation2 + $0x70] sm:$0xff]
        %v537 = vld [vmem:[#allocation2 + $0x78] sm:$0xff]
        %v538 = vld [vmem:[%s421] sm:$0xff]
        %v539 = vld [vmem:[%s421 + $0x8] sm:$0xff]
        %v540 = vld [vmem:[%s421 + $0x10] sm:$0xff]
        %v541 = vld [vmem:[%s421 + $0x18] sm:$0xff]
        %v542 = vld [vmem:[%s421 + $0x20] sm:$0xff]
        %v543 = vld [vmem:[%s421 + $0x28] sm:$0xff]
        %v544 = vld [vmem:[%s421 + $0x30] sm:$0xff]
        %v545 = vld [vmem:[%s421 + $0x38] sm:$0xff]
        %v546 = vld [vmem:[%s421 + $0x40] sm:$0xff]
        %v547 = vld [vmem:[%s421 + $0x48] sm:$0xff]
        %v548 = vld [vmem:[%s421 + $0x50] sm:$0xff]
        %v549 = vld [vmem:[%s421 + $0x58] sm:$0xff]
        %v550 = vld [vmem:[%s421 + $0x60] sm:$0xff]
        %v551 = vld [vmem:[%s421 + $0x68] sm:$0xff]
        %v552 = vld [vmem:[%s421 + $0x70] sm:$0xff]
        %v553 = vld [vmem:[%s421 + $0x78] sm:$0xff]
        %v554 = vld [vmem:[%s431] sm:$0xff]
        %v555 = vld [vmem:[%s431 + $0x8] sm:$0xff]
        %v556 = vld [vmem:[%s431 + $0x10] sm:$0xff]
        %v557 = vld [vmem:[%s431 + $0x18] sm:$0xff]
        %v558 = vld [vmem:[%s431 + $0x20] sm:$0xff]
        %v559 = vld [vmem:[%s431 + $0x28] sm:$0xff]
        %v560 = vld [vmem:[%s431 + $0x30] sm:$0xff]
        %v561 = vld [vmem:[%s431 + $0x38] sm:$0xff]
        %v562 = vld [vmem:[%s431 + $0x40] sm:$0xff]
        %v563 = vld [vmem:[%s431 + $0x48] sm:$0xff]
        %v564 = vld [vmem:[%s431 + $0x50] sm:$0xff]
        %v565 = vld [vmem:[%s431 + $0x58] sm:$0xff]
        %v566 = vld [vmem:[%s431 + $0x60] sm:$0xff]
        %v567 = vld [vmem:[%s431 + $0x68] sm:$0xff]
        %v568 = vld [vmem:[%s431 + $0x70] sm:$0xff]
        %v569 = vld [vmem:[%s431 + $0x78] sm:$0xff]
        %v570 = vld [vmem:[%s431 + $0x80] sm:$0xff]
        %v571 = vld [vmem:[%s431 + $0x88] sm:$0xff]
        %v572 = vld [vmem:[%s431 + $0x90] sm:$0xff]
        %v573 = vld [vmem:[%s431 + $0x98] sm:$0xff]
        %v574 = vld [vmem:[%s431 + $0xa0] sm:$0xff]
        %v575 = vld [vmem:[%s431 + $0xa8] sm:$0xff]
        %v576 = vld [vmem:[%s431 + $0xb0] sm:$0xff]
        %v577 = vld [vmem:[%s431 + $0xb8] sm:$0xff]
        %v578 = vld [vmem:[%s431 + $0xc0] sm:$0xff]
        %v579 = vld [vmem:[%s431 + $0xc8] sm:$0xff]
        %v580 = vld [vmem:[%s431 + $0xd0] sm:$0xff]
        %v581 = vld [vmem:[%s431 + $0xd8] sm:$0xff]
        %v582 = vld [vmem:[%s431 + $0xe0] sm:$0xff]
        %v583 = vld [vmem:[%s431 + $0xe8] sm:$0xff]
        %v584 = vld [vmem:[%s431 + $0xf0] sm:$0xff]
        %v585 = vld [vmem:[%s431 + $0xf8] sm:$0xff]
        %v586 = vld [vmem:[%s431 + $0x100] sm:$0xff]
        %v587 = vld [vmem:[%s431 + $0x108] sm:$0xff]
        %v588 = vld [vmem:[%s431 + $0x110] sm:$0xff]
        %v589 = vld [vmem:[%s431 + $0x118] sm:$0xff]
        %v590 = vld [vmem:[%s431 + $0x120] sm:$0xff]
        %v591 = vld [vmem:[%s431 + $0x128] sm:$0xff]
        %v592 = vld [vmem:[%s431 + $0x130] sm:$0xff]
        %v593 = vld [vmem:[%s431 + $0x138] sm:$0xff]
        %v594 = vld [vmem:[%s431 + $0x140] sm:$0xff]
        %v595 = vld [vmem:[%s431 + $0x148] sm:$0xff]
        %v596 = vld [vmem:[%s431 + $0x150] sm:$0xff]
        %v597 = vld [vmem:[%s431 + $0x158] sm:$0xff]
        %v598 = vld [vmem:[%s431 + $0x160] sm:$0xff]
        %v599 = vld [vmem:[%s431 + $0x168] sm:$0xff]
        %v600 = vld [vmem:[%s431 + $0x170] sm:$0xff]
        %v601 = vld [vmem:[%s431 + $0x178] sm:$0xff]
        %v602 = vld [vmem:[%s431 + $0x180] sm:$0xff]
        %v603 = vld [vmem:[%s431 + $0x188] sm:$0xff]
        %v604 = vld [vmem:[%s431 + $0x190] sm:$0xff]
        %v605 = vld [vmem:[%s431 + $0x198] sm:$0xff]
        %v606 = vld [vmem:[%s431 + $0x1a0] sm:$0xff]
        %v607 = vld [vmem:[%s431 + $0x1a8] sm:$0xff]
        %v608 = vld [vmem:[%s431 + $0x1b0] sm:$0xff]
        %v609 = vld [vmem:[%s431 + $0x1b8] sm:$0xff]
        %v610 = vld [vmem:[%s431 + $0x1c0] sm:$0xff]
        %v611 = vld [vmem:[%s431 + $0x1c8] sm:$0xff]
        %v612 = vld [vmem:[%s431 + $0x1d0] sm:$0xff]
        %v613 = vld [vmem:[%s431 + $0x1d8] sm:$0xff]
        %v614 = vld [vmem:[%s431 + $0x1e0] sm:$0xff]
        %v615 = vld [vmem:[%s431 + $0x1e8] sm:$0xff]
        %v616 = vld [vmem:[%s431 + $0x1f0] sm:$0xff]
        %v617 = vld [vmem:[%s431 + $0x1f8] sm:$0xff]
        %v618 = vld [vmem:[%s431 + $0x200] sm:$0xff]
        %v619 = vld [vmem:[%s431 + $0x208] sm:$0xff]
        %v620 = vld [vmem:[%s431 + $0x210] sm:$0xff]
        %v621 = vld [vmem:[%s431 + $0x218] sm:$0xff]
        %v622 = vld [vmem:[%s431 + $0x220] sm:$0xff]
        %v623 = vld [vmem:[%s431 + $0x228] sm:$0xff]
        %v624 = vld [vmem:[%s431 + $0x230] sm:$0xff]
        %v625 = vld [vmem:[%s431 + $0x238] sm:$0xff]
        %v626 = vld [vmem:[%s431 + $0x240] sm:$0xff]
        %v627 = vld [vmem:[%s431 + $0x248] sm:$0xff]
        %v628 = vld [vmem:[%s431 + $0x250] sm:$0xff]
        %v629 = vld [vmem:[%s431 + $0x258] sm:$0xff]
        %v630 = vld [vmem:[%s431 + $0x260] sm:$0xff]
        %v631 = vld [vmem:[%s431 + $0x268] sm:$0xff]
        %v632 = vld [vmem:[%s431 + $0x270] sm:$0xff]
        %v633 = vld [vmem:[%s431 + $0x278] sm:$0xff]
        %v634 = vld [vmem:[%s431 + $0x280] sm:$0xff]
        %v635 = vld [vmem:[%s431 + $0x288] sm:$0xff]
        %v636 = vld [vmem:[%s431 + $0x290] sm:$0xff]
        %v637 = vld [vmem:[%s431 + $0x298] sm:$0xff]
        %v638 = vld [vmem:[%s431 + $0x2a0] sm:$0xff]
        %v639 = vld [vmem:[%s431 + $0x2a8] sm:$0xff]
        %v640 = vld [vmem:[%s431 + $0x2b0] sm:$0xff]
        %v641 = vld [vmem:[%s431 + $0x2b8] sm:$0xff]
        %v642 = vld [vmem:[%s431 + $0x2c0] sm:$0xff]
        %v643 = vld [vmem:[%s431 + $0x2c8] sm:$0xff]
        %v644 = vld [vmem:[%s431 + $0x2d0] sm:$0xff]
        %v645 = vld [vmem:[%s431 + $0x2d8] sm:$0xff]
        %v646 = vld [vmem:[%s431 + $0x2e0] sm:$0xff]
        %v647 = vld [vmem:[%s431 + $0x2e8] sm:$0xff]
        %v648 = vld [vmem:[%s431 + $0x2f0] sm:$0xff]
        %v649 = vld [vmem:[%s431 + $0x2f8] sm:$0xff]
        %v650 = vld [vmem:[%s431 + $0x300] sm:$0xff]
        %v651 = vld [vmem:[%s431 + $0x308] sm:$0xff]
        %v652 = vld [vmem:[%s431 + $0x310] sm:$0xff]
        %v653 = vld [vmem:[%s431 + $0x318] sm:$0xff]
        %v654 = vld [vmem:[%s431 + $0x320] sm:$0xff]
        %v655 = vld [vmem:[%s431 + $0x328] sm:$0xff]
        %v656 = vld [vmem:[%s431 + $0x330] sm:$0xff]
        %v657 = vld [vmem:[%s431 + $0x338] sm:$0xff]
        %v658 = vld [vmem:[%s431 + $0x340] sm:$0xff]
        %v659 = vld [vmem:[%s431 + $0x348] sm:$0xff]
        %v660 = vld [vmem:[%s431 + $0x350] sm:$0xff]
        %v661 = vld [vmem:[%s431 + $0x358] sm:$0xff]
        %v662 = vld [vmem:[%s431 + $0x360] sm:$0xff]
        %v663 = vld [vmem:[%s431 + $0x368] sm:$0xff]
        %v664 = vld [vmem:[%s431 + $0x370] sm:$0xff]
        %v665 = vld [vmem:[%s431 + $0x378] sm:$0xff]
        %v666 = vld [vmem:[%s431 + $0x380] sm:$0xff]
        %v667 = vld [vmem:[%s431 + $0x388] sm:$0xff]
        %v668 = vld [vmem:[%s431 + $0x390] sm:$0xff]
        %v669 = vld [vmem:[%s431 + $0x398] sm:$0xff]
        %v670 = vld [vmem:[%s431 + $0x3a0] sm:$0xff]
        %v671 = vld [vmem:[%s431 + $0x3a8] sm:$0xff]
        %v672 = vld [vmem:[%s431 + $0x3b0] sm:$0xff]
        %v673 = vld [vmem:[%s431 + $0x3b8] sm:$0xff]
        %v674 = vld [vmem:[%s431 + $0x3c0] sm:$0xff]
        %v675 = vld [vmem:[%s431 + $0x3c8] sm:$0xff]
        %v676 = vld [vmem:[%s431 + $0x3d0] sm:$0xff]
        %v677 = vld [vmem:[%s431 + $0x3d8] sm:$0xff]
        %v678 = vld [vmem:[%s431 + $0x3e0] sm:$0xff]
        %v679 = vld [vmem:[%s431 + $0x3e8] sm:$0xff]
        %v680 = vld [vmem:[%s431 + $0x3f0] sm:$0xff]
        %v681 = vld [vmem:[%s431 + $0x3f8] sm:$0xff]
        %v682 = vld [vmem:[%s431 + $0x400] sm:$0xff]
        %v683 = vld [vmem:[%s431 + $0x408] sm:$0xff]
        %v684 = vld [vmem:[%s431 + $0x410] sm:$0xff]
        %v685 = vld [vmem:[%s431 + $0x418] sm:$0xff]
        %v686 = vld [vmem:[%s431 + $0x420] sm:$0xff]
        %v687 = vld [vmem:[%s431 + $0x428] sm:$0xff]
        %v688 = vld [vmem:[%s431 + $0x430] sm:$0xff]
        %v689 = vld [vmem:[%s431 + $0x438] sm:$0xff]
        %v690 = vld [vmem:[%s431 + $0x440] sm:$0xff]
        %v691 = vld [vmem:[%s431 + $0x448] sm:$0xff]
        %v692 = vld [vmem:[%s431 + $0x450] sm:$0xff]
        %v693 = vld [vmem:[%s431 + $0x458] sm:$0xff]
        %v694 = vld [vmem:[%s431 + $0x460] sm:$0xff]
        %v695 = vld [vmem:[%s431 + $0x468] sm:$0xff]
        %v696 = vld [vmem:[%s431 + $0x470] sm:$0xff]
        %v697 = vld [vmem:[%s431 + $0x478] sm:$0xff]
        %v698 = vld [vmem:[%s431 + $0x480] sm:$0xff]
        %v699 = vld [vmem:[%s431 + $0x488] sm:$0xff]
        %v700 = vld [vmem:[%s431 + $0x490] sm:$0xff]
        %v701 = vld [vmem:[%s431 + $0x498] sm:$0xff]
        %v702 = vld [vmem:[%s431 + $0x4a0] sm:$0xff]
        %v703 = vld [vmem:[%s431 + $0x4a8] sm:$0xff]
        %v704 = vld [vmem:[%s431 + $0x4b0] sm:$0xff]
        %v705 = vld [vmem:[%s431 + $0x4b8] sm:$0xff]
        %v706 = vld [vmem:[%s431 + $0x4c0] sm:$0xff]
        %v707 = vld [vmem:[%s431 + $0x4c8] sm:$0xff]
        %v708 = vld [vmem:[%s431 + $0x4d0] sm:$0xff]
        %v709 = vld [vmem:[%s431 + $0x4d8] sm:$0xff]
        %v710 = vld [vmem:[%s431 + $0x4e0] sm:$0xff]
        %v711 = vld [vmem:[%s431 + $0x4e8] sm:$0xff]
        %v712 = vld [vmem:[%s431 + $0x4f0] sm:$0xff]
        %v713 = vld [vmem:[%s431 + $0x4f8] sm:$0xff]
        %v714 = vld [vmem:[%s431 + $0x500] sm:$0xff]
        %v715 = vld [vmem:[%s431 + $0x508] sm:$0xff]
        %v716 = vld [vmem:[%s431 + $0x510] sm:$0xff]
        %v717 = vld [vmem:[%s431 + $0x518] sm:$0xff]
        %v718 = vld [vmem:[%s431 + $0x520] sm:$0xff]
        %v719 = vld [vmem:[%s431 + $0x528] sm:$0xff]
        %v720 = vld [vmem:[%s431 + $0x530] sm:$0xff]
        %v721 = vld [vmem:[%s431 + $0x538] sm:$0xff]
        %v722 = vld [vmem:[%s431 + $0x540] sm:$0xff]
        %v723 = vld [vmem:[%s431 + $0x548] sm:$0xff]
        %v724 = vld [vmem:[%s431 + $0x550] sm:$0xff]
        %v725 = vld [vmem:[%s431 + $0x558] sm:$0xff]
        %v726 = vld [vmem:[%s431 + $0x560] sm:$0xff]
        %v727 = vld [vmem:[%s431 + $0x568] sm:$0xff]
        %v728 = vld [vmem:[%s431 + $0x570] sm:$0xff]
        %v729 = vld [vmem:[%s431 + $0x578] sm:$0xff]
        %v730 = vld [vmem:[%s431 + $0x580] sm:$0xff]
        %v731 = vld [vmem:[%s431 + $0x588] sm:$0xff]
        %v732 = vld [vmem:[%s431 + $0x590] sm:$0xff]
        %v733 = vld [vmem:[%s431 + $0x598] sm:$0xff]
        %v734 = vld [vmem:[%s431 + $0x5a0] sm:$0xff]
        %v735 = vld [vmem:[%s431 + $0x5a8] sm:$0xff]
        %v736 = vld [vmem:[%s431 + $0x5b0] sm:$0xff]
        %v737 = vld [vmem:[%s431 + $0x5b8] sm:$0xff]
        %v738 = vld [vmem:[%s431 + $0x5c0] sm:$0xff]
        %v739 = vld [vmem:[%s431 + $0x5c8] sm:$0xff]
        %v740 = vld [vmem:[%s431 + $0x5d0] sm:$0xff]
        %v741 = vld [vmem:[%s431 + $0x5d8] sm:$0xff]
        %v742 = vld [vmem:[%s431 + $0x5e0] sm:$0xff]
        %v743 = vld [vmem:[%s431 + $0x5e8] sm:$0xff]
        %v744 = vld [vmem:[%s431 + $0x5f0] sm:$0xff]
        %v745 = vld [vmem:[%s431 + $0x5f8] sm:$0xff]
        %v746 = vld [vmem:[%s431 + $0x600] sm:$0xff]
        %v747 = vld [vmem:[%s431 + $0x608] sm:$0xff]
        %v748 = vld [vmem:[%s431 + $0x610] sm:$0xff]
        %v749 = vld [vmem:[%s431 + $0x618] sm:$0xff]
        %v750 = vld [vmem:[%s431 + $0x620] sm:$0xff]
        %v751 = vld [vmem:[%s431 + $0x628] sm:$0xff]
        %v752 = vld [vmem:[%s431 + $0x630] sm:$0xff]
        %v753 = vld [vmem:[%s431 + $0x638] sm:$0xff]
        %v754 = vld [vmem:[%s431 + $0x640] sm:$0xff]
        %v755 = vld [vmem:[%s431 + $0x648] sm:$0xff]
        %v756 = vld [vmem:[%s431 + $0x650] sm:$0xff]
        %v757 = vld [vmem:[%s431 + $0x658] sm:$0xff]
        %v758 = vld [vmem:[%s431 + $0x660] sm:$0xff]
        %v759 = vld [vmem:[%s431 + $0x668] sm:$0xff]
        %v760 = vld [vmem:[%s431 + $0x670] sm:$0xff]
        %v761 = vld [vmem:[%s431 + $0x678] sm:$0xff]
        %v762 = vld [vmem:[%s431 + $0x680] sm:$0xff]
        %v763 = vld [vmem:[%s431 + $0x688] sm:$0xff]
        %v764 = vld [vmem:[%s431 + $0x690] sm:$0xff]
        %v765 = vld [vmem:[%s431 + $0x698] sm:$0xff]
        %v766 = vld [vmem:[%s431 + $0x6a0] sm:$0xff]
        %v767 = vld [vmem:[%s431 + $0x6a8] sm:$0xff]
        %v768 = vld [vmem:[%s431 + $0x6b0] sm:$0xff]
        %v769 = vld [vmem:[%s431 + $0x6b8] sm:$0xff]
        %v770 = vld [vmem:[%s431 + $0x6c0] sm:$0xff]
        %v771 = vld [vmem:[%s431 + $0x6c8] sm:$0xff]
        %v772 = vld [vmem:[%s431 + $0x6d0] sm:$0xff]
        %v773 = vld [vmem:[%s431 + $0x6d8] sm:$0xff]
        %v774 = vld [vmem:[%s431 + $0x6e0] sm:$0xff]
        %v775 = vld [vmem:[%s431 + $0x6e8] sm:$0xff]
        %v776 = vld [vmem:[%s431 + $0x6f0] sm:$0xff]
        %v777 = vld [vmem:[%s431 + $0x6f8] sm:$0xff]
        %v778 = vld [vmem:[%s431 + $0x700] sm:$0xff]
        %v779 = vld [vmem:[%s431 + $0x708] sm:$0xff]
        %v780 = vld [vmem:[%s431 + $0x710] sm:$0xff]
        %v781 = vld [vmem:[%s431 + $0x718] sm:$0xff]
        %v782 = vld [vmem:[%s431 + $0x720] sm:$0xff]
        %v783 = vld [vmem:[%s431 + $0x728] sm:$0xff]
        %v784 = vld [vmem:[%s431 + $0x730] sm:$0xff]
        %v785 = vld [vmem:[%s431 + $0x738] sm:$0xff]
        %v786 = vld [vmem:[%s431 + $0x740] sm:$0xff]
        %v787 = vld [vmem:[%s431 + $0x748] sm:$0xff]
        %v788 = vld [vmem:[%s431 + $0x750] sm:$0xff]
        %v789 = vld [vmem:[%s431 + $0x758] sm:$0xff]
        %v790 = vld [vmem:[%s431 + $0x760] sm:$0xff]
        %v791 = vld [vmem:[%s431 + $0x768] sm:$0xff]
        %v792 = vld [vmem:[%s431 + $0x770] sm:$0xff]
        %v793 = vld [vmem:[%s431 + $0x778] sm:$0xff]
        %v794 = vld [vmem:[%s431 + $0x780] sm:$0xff]
        %v795 = vld [vmem:[%s431 + $0x788] sm:$0xff]
        %v796 = vld [vmem:[%s431 + $0x790] sm:$0xff]
        %v797 = vld [vmem:[%s431 + $0x798] sm:$0xff]
        %v798 = vld [vmem:[%s431 + $0x7a0] sm:$0xff]
        %v799 = vld [vmem:[%s431 + $0x7a8] sm:$0xff]
        %v800 = vld [vmem:[%s431 + $0x7b0] sm:$0xff]
        %v801 = vld [vmem:[%s431 + $0x7b8] sm:$0xff]
        %v802 = vld [vmem:[%s431 + $0x7c0] sm:$0xff]
        %v803 = vld [vmem:[%s431 + $0x7c8] sm:$0xff]
        %v804 = vld [vmem:[%s431 + $0x7d0] sm:$0xff]
        %v805 = vld [vmem:[%s431 + $0x7d8] sm:$0xff]
        %v806 = vld [vmem:[%s431 + $0x7e0] sm:$0xff]
        %v807 = vld [vmem:[%s431 + $0x7e8] sm:$0xff]
        %v808 = vld [vmem:[%s431 + $0x7f0] sm:$0xff]
        %v809 = vld [vmem:[%s431 + $0x7f8] sm:$0xff]
        %v810 = vld [vmem:[%s431 + $0x800] sm:$0xff]
        %v811 = vld [vmem:[%s431 + $0x808] sm:$0xff]
        %v812 = vld [vmem:[%s431 + $0x810] sm:$0xff]
        %v813 = vld [vmem:[%s431 + $0x818] sm:$0xff]
        %v814 = vld [vmem:[%s431 + $0x820] sm:$0xff]
        %v815 = vld [vmem:[%s431 + $0x828] sm:$0xff]
        %v816 = vld [vmem:[%s431 + $0x830] sm:$0xff]
        %v817 = vld [vmem:[%s431 + $0x838] sm:$0xff]
        %v818 = vld [vmem:[%s431 + $0x840] sm:$0xff]
        %v819 = vld [vmem:[%s431 + $0x848] sm:$0xff]
        %v820 = vld [vmem:[%s431 + $0x850] sm:$0xff]
        %v821 = vld [vmem:[%s431 + $0x858] sm:$0xff]
        %v822 = vld [vmem:[%s431 + $0x860] sm:$0xff]
        %v823 = vld [vmem:[%s431 + $0x868] sm:$0xff]
        %v824 = vld [vmem:[%s431 + $0x870] sm:$0xff]
        %v825 = vld [vmem:[%s431 + $0x878] sm:$0xff]
        %v826 = vld [vmem:[%s431 + $0x880] sm:$0xff]
        %v827 = vld [vmem:[%s431 + $0x888] sm:$0xff]
        %v828 = vld [vmem:[%s431 + $0x890] sm:$0xff]
        %v829 = vld [vmem:[%s431 + $0x898] sm:$0xff]
        %v830 = vld [vmem:[%s431 + $0x8a0] sm:$0xff]
        %v831 = vld [vmem:[%s431 + $0x8a8] sm:$0xff]
        %v832 = vld [vmem:[%s431 + $0x8b0] sm:$0xff]
        %v833 = vld [vmem:[%s431 + $0x8b8] sm:$0xff]
        %v834 = vld [vmem:[%s431 + $0x8c0] sm:$0xff]
        %v835 = vld [vmem:[%s431 + $0x8c8] sm:$0xff]
        %v836 = vld [vmem:[%s431 + $0x8d0] sm:$0xff]
        %v837 = vld [vmem:[%s431 + $0x8d8] sm:$0xff]
        %v838 = vld [vmem:[%s431 + $0x8e0] sm:$0xff]
        %v839 = vld [vmem:[%s431 + $0x8e8] sm:$0xff]
        %v840 = vld [vmem:[%s431 + $0x8f0] sm:$0xff]
        %v841 = vld [vmem:[%s431 + $0x8f8] sm:$0xff]
        %v842 = vld [vmem:[%s431 + $0x900] sm:$0xff]
        %v843 = vld [vmem:[%s431 + $0x908] sm:$0xff]
        %v844 = vld [vmem:[%s431 + $0x910] sm:$0xff]
        %v845 = vld [vmem:[%s431 + $0x918] sm:$0xff]
        %v846 = vld [vmem:[%s431 + $0x920] sm:$0xff]
        %v847 = vld [vmem:[%s431 + $0x928] sm:$0xff]
        %v848 = vld [vmem:[%s431 + $0x930] sm:$0xff]
        %v849 = vld [vmem:[%s431 + $0x938] sm:$0xff]
        %v850 = vld [vmem:[%s431 + $0x940] sm:$0xff]
        %v851 = vld [vmem:[%s431 + $0x948] sm:$0xff]
        %v852 = vld [vmem:[%s431 + $0x950] sm:$0xff]
        %v853 = vld [vmem:[%s431 + $0x958] sm:$0xff]
        %v854 = vld [vmem:[%s431 + $0x960] sm:$0xff]
        %v855 = vld [vmem:[%s431 + $0x968] sm:$0xff]
        %v856 = vld [vmem:[%s431 + $0x970] sm:$0xff]
        %v857 = vld [vmem:[%s431 + $0x978] sm:$0xff]
        %v858 = vld [vmem:[%s431 + $0x980] sm:$0xff]
        %v859 = vld [vmem:[%s431 + $0x988] sm:$0xff]
        %v860 = vld [vmem:[%s431 + $0x990] sm:$0xff]
        %v861 = vld [vmem:[%s431 + $0x998] sm:$0xff]
        %v862 = vld [vmem:[%s431 + $0x9a0] sm:$0xff]
        %v863 = vld [vmem:[%s431 + $0x9a8] sm:$0xff]
        %v864 = vld [vmem:[%s431 + $0x9b0] sm:$0xff]
        %v865 = vld [vmem:[%s431 + $0x9b8] sm:$0xff]
        %v866 = vld [vmem:[%s431 + $0x9c0] sm:$0xff]
        %v867 = vld [vmem:[%s431 + $0x9c8] sm:$0xff]
        %v868 = vld [vmem:[%s431 + $0x9d0] sm:$0xff]
        %v869 = vld [vmem:[%s431 + $0x9d8] sm:$0xff]
        %v870 = vld [vmem:[%s431 + $0x9e0] sm:$0xff]
        %v871 = vld [vmem:[%s431 + $0x9e8] sm:$0xff]
        %v872 = vld [vmem:[%s431 + $0x9f0] sm:$0xff]
        %v873 = vld [vmem:[%s431 + $0x9f8] sm:$0xff]
        %v874 = vld [vmem:[%s431 + $0xa00] sm:$0xff]
        %v875 = vld [vmem:[%s431 + $0xa08] sm:$0xff]
        %v876 = vld [vmem:[%s431 + $0xa10] sm:$0xff]
        %v877 = vld [vmem:[%s431 + $0xa18] sm:$0xff]
        %v878 = vld [vmem:[%s431 + $0xa20] sm:$0xff]
        %v879 = vld [vmem:[%s431 + $0xa28] sm:$0xff]
        %v880 = vld [vmem:[%s431 + $0xa30] sm:$0xff]
        %v881 = vld [vmem:[%s431 + $0xa38] sm:$0xff]
        %v882 = vld [vmem:[%s431 + $0xa40] sm:$0xff]
        %v883 = vld [vmem:[%s431 + $0xa48] sm:$0xff]
        %v884 = vld [vmem:[%s431 + $0xa50] sm:$0xff]
        %v885 = vld [vmem:[%s431 + $0xa58] sm:$0xff]
        %v886 = vld [vmem:[%s431 + $0xa60] sm:$0xff]
        %v887 = vld [vmem:[%s431 + $0xa68] sm:$0xff]
        %v888 = vld [vmem:[%s431 + $0xa70] sm:$0xff]
        %v889 = vld [vmem:[%s431 + $0xa78] sm:$0xff]
        %v890 = vld [vmem:[%s431 + $0xa80] sm:$0xff]
        %v891 = vld [vmem:[%s431 + $0xa88] sm:$0xff]
        %v892 = vld [vmem:[%s431 + $0xa90] sm:$0xff]
        %v893 = vld [vmem:[%s431 + $0xa98] sm:$0xff]
        %v894 = vld [vmem:[%s431 + $0xaa0] sm:$0xff]
        %v895 = vld [vmem:[%s431 + $0xaa8] sm:$0xff]
        %v896 = vld [vmem:[%s431 + $0xab0] sm:$0xff]
        %v897 = vld [vmem:[%s431 + $0xab8] sm:$0xff]
        %v898 = vld [vmem:[%s431 + $0xac0] sm:$0xff]
        %v899 = vld [vmem:[%s431 + $0xac8] sm:$0xff]
        %v900 = vld [vmem:[%s431 + $0xad0] sm:$0xff]
        %v901 = vld [vmem:[%s431 + $0xad8] sm:$0xff]
        %v902 = vld [vmem:[%s431 + $0xae0] sm:$0xff]
        %v903 = vld [vmem:[%s431 + $0xae8] sm:$0xff]
        %v904 = vld [vmem:[%s431 + $0xaf0] sm:$0xff]
        %v905 = vld [vmem:[%s431 + $0xaf8] sm:$0xff]
        %v906 = vld [vmem:[%s431 + $0xb00] sm:$0xff]
        %v907 = vld [vmem:[%s431 + $0xb08] sm:$0xff]
        %v908 = vld [vmem:[%s431 + $0xb10] sm:$0xff]
        %v909 = vld [vmem:[%s431 + $0xb18] sm:$0xff]
        %v910 = vld [vmem:[%s431 + $0xb20] sm:$0xff]
        %v911 = vld [vmem:[%s431 + $0xb28] sm:$0xff]
        %v912 = vld [vmem:[%s431 + $0xb30] sm:$0xff]
        %v913 = vld [vmem:[%s431 + $0xb38] sm:$0xff]
        %v914 = vld [vmem:[%s431 + $0xb40] sm:$0xff]
        %v915 = vld [vmem:[%s431 + $0xb48] sm:$0xff]
        %v916 = vld [vmem:[%s431 + $0xb50] sm:$0xff]
        %v917 = vld [vmem:[%s431 + $0xb58] sm:$0xff]
        %v918 = vld [vmem:[%s431 + $0xb60] sm:$0xff]
        %v919 = vld [vmem:[%s431 + $0xb68] sm:$0xff]
        %v920 = vld [vmem:[%s431 + $0xb70] sm:$0xff]
        %v921 = vld [vmem:[%s431 + $0xb78] sm:$0xff]
        %v922 = vld [vmem:[%s431 + $0xb80] sm:$0xff]
        %v923 = vld [vmem:[%s431 + $0xb88] sm:$0xff]
        %v924 = vld [vmem:[%s431 + $0xb90] sm:$0xff]
        %v925 = vld [vmem:[%s431 + $0xb98] sm:$0xff]
        %v926 = vld [vmem:[%s431 + $0xba0] sm:$0xff]
        %v927 = vld [vmem:[%s431 + $0xba8] sm:$0xff]
        %v928 = vld [vmem:[%s431 + $0xbb0] sm:$0xff]
        %v929 = vld [vmem:[%s431 + $0xbb8] sm:$0xff]
        %v930 = vld [vmem:[%s431 + $0xbc0] sm:$0xff]
        %v931 = vld [vmem:[%s431 + $0xbc8] sm:$0xff]
        %v932 = vld [vmem:[%s431 + $0xbd0] sm:$0xff]
        %v933 = vld [vmem:[%s431 + $0xbd8] sm:$0xff]
        %v934 = vld [vmem:[%s431 + $0xbe0] sm:$0xff]
        %v935 = vld [vmem:[%s431 + $0xbe8] sm:$0xff]
        %v936 = vld [vmem:[%s431 + $0xbf0] sm:$0xff]
        %v937 = vld [vmem:[%s431 + $0xbf8] sm:$0xff]
        %v938 = vld [vmem:[%s431 + $0xc00] sm:$0xff]
        %v939 = vld [vmem:[%s431 + $0xc08] sm:$0xff]
        %v940 = vld [vmem:[%s431 + $0xc10] sm:$0xff]
        %v941 = vld [vmem:[%s431 + $0xc18] sm:$0xff]
        %v942 = vld [vmem:[%s431 + $0xc20] sm:$0xff]
        %v943 = vld [vmem:[%s431 + $0xc28] sm:$0xff]
        %v944 = vld [vmem:[%s431 + $0xc30] sm:$0xff]
        %v945 = vld [vmem:[%s431 + $0xc38] sm:$0xff]
        %v946 = vld [vmem:[%s431 + $0xc40] sm:$0xff]
        %v947 = vld [vmem:[%s431 + $0xc48] sm:$0xff]
        %v948 = vld [vmem:[%s431 + $0xc50] sm:$0xff]
        %v949 = vld [vmem:[%s431 + $0xc58] sm:$0xff]
        %v950 = vld [vmem:[%s431 + $0xc60] sm:$0xff]
        %v951 = vld [vmem:[%s431 + $0xc68] sm:$0xff]
        %v952 = vld [vmem:[%s431 + $0xc70] sm:$0xff]
        %v953 = vld [vmem:[%s431 + $0xc78] sm:$0xff]
        %v954 = vld [vmem:[%s431 + $0xc80] sm:$0xff]
        %v955 = vld [vmem:[%s431 + $0xc88] sm:$0xff]
        %v956 = vld [vmem:[%s431 + $0xc90] sm:$0xff]
        %v957 = vld [vmem:[%s431 + $0xc98] sm:$0xff]
        %v958 = vld [vmem:[%s431 + $0xca0] sm:$0xff]
        %v959 = vld [vmem:[%s431 + $0xca8] sm:$0xff]
        %v960 = vld [vmem:[%s431 + $0xcb0] sm:$0xff]
        %v961 = vld [vmem:[%s431 + $0xcb8] sm:$0xff]
        %v962 = vld [vmem:[%s431 + $0xcc0] sm:$0xff]
        %v963 = vld [vmem:[%s431 + $0xcc8] sm:$0xff]
        %v964 = vld [vmem:[%s431 + $0xcd0] sm:$0xff]
        %v965 = vld [vmem:[%s431 + $0xcd8] sm:$0xff]
        %v966 = vld [vmem:[%s431 + $0xce0] sm:$0xff]
        %v967 = vld [vmem:[%s431 + $0xce8] sm:$0xff]
        %v968 = vld [vmem:[%s431 + $0xcf0] sm:$0xff]
        %v969 = vld [vmem:[%s431 + $0xcf8] sm:$0xff]
        %v970 = vld [vmem:[%s431 + $0xd00] sm:$0xff]
        %v971 = vld [vmem:[%s431 + $0xd08] sm:$0xff]
        %v972 = vld [vmem:[%s431 + $0xd10] sm:$0xff]
        %v973 = vld [vmem:[%s431 + $0xd18] sm:$0xff]
        %v974 = vld [vmem:[%s431 + $0xd20] sm:$0xff]
        %v975 = vld [vmem:[%s431 + $0xd28] sm:$0xff]
        %v976 = vld [vmem:[%s431 + $0xd30] sm:$0xff]
        %v977 = vld [vmem:[%s431 + $0xd38] sm:$0xff]
        %v978 = vld [vmem:[%s431 + $0xd40] sm:$0xff]
        %v979 = vld [vmem:[%s431 + $0xd48] sm:$0xff]
        %v980 = vld [vmem:[%s431 + $0xd50] sm:$0xff]
        %v981 = vld [vmem:[%s431 + $0xd58] sm:$0xff]
        %v982 = vld [vmem:[%s431 + $0xd60] sm:$0xff]
        %v983 = vld [vmem:[%s431 + $0xd68] sm:$0xff]
        %v984 = vld [vmem:[%s431 + $0xd70] sm:$0xff]
        %v985 = vld [vmem:[%s431 + $0xd78] sm:$0xff]
        %v986 = vld [vmem:[%s431 + $0xd80] sm:$0xff]
        %v987 = vld [vmem:[%s431 + $0xd88] sm:$0xff]
        %v988 = vld [vmem:[%s431 + $0xd90] sm:$0xff]
        %v989 = vld [vmem:[%s431 + $0xd98] sm:$0xff]
        %v990 = vld [vmem:[%s431 + $0xda0] sm:$0xff]
        %v991 = vld [vmem:[%s431 + $0xda8] sm:$0xff]
        %v992 = vld [vmem:[%s431 + $0xdb0] sm:$0xff]
        %v993 = vld [vmem:[%s431 + $0xdb8] sm:$0xff]
        %v994 = vld [vmem:[%s431 + $0xdc0] sm:$0xff]
        %v995 = vld [vmem:[%s431 + $0xdc8] sm:$0xff]
        %v996 = vld [vmem:[%s431 + $0xdd0] sm:$0xff]
        %v997 = vld [vmem:[%s431 + $0xdd8] sm:$0xff]
        %v998 = vld [vmem:[%s431 + $0xde0] sm:$0xff]
        %v999 = vld [vmem:[%s431 + $0xde8] sm:$0xff]
        %v1000 = vld [vmem:[%s431 + $0xdf0] sm:$0xff]
        %v1001 = vld [vmem:[%s431 + $0xdf8] sm:$0xff]
        %v1002 = vld [vmem:[%s431 + $0xe00] sm:$0xff]
        %v1003 = vld [vmem:[%s431 + $0xe08] sm:$0xff]
        %v1004 = vld [vmem:[%s431 + $0xe10] sm:$0xff]
        %v1005 = vld [vmem:[%s431 + $0xe18] sm:$0xff]
        %v1006 = vld [vmem:[%s431 + $0xe20] sm:$0xff]
        %v1007 = vld [vmem:[%s431 + $0xe28] sm:$0xff]
        %v1008 = vld [vmem:[%s431 + $0xe30] sm:$0xff]
        %v1009 = vld [vmem:[%s431 + $0xe38] sm:$0xff]
        %v1010 = vld [vmem:[%s431 + $0xe40] sm:$0xff]
        %v1011 = vld [vmem:[%s431 + $0xe48] sm:$0xff]
        %v1012 = vld [vmem:[%s431 + $0xe50] sm:$0xff]
        %v1013 = vld [vmem:[%s431 + $0xe58] sm:$0xff]
        %v1014 = vld [vmem:[%s431 + $0xe60] sm:$0xff]
        %v1015 = vld [vmem:[%s431 + $0xe68] sm:$0xff]
        %v1016 = vld [vmem:[%s431 + $0xe70] sm:$0xff]
        %v1017 = vld [vmem:[%s431 + $0xe78] sm:$0xff]
        %v1018 = vld [vmem:[%s431 + $0xe80] sm:$0xff]
        %v1019 = vld [vmem:[%s431 + $0xe88] sm:$0xff]
        %v1020 = vld [vmem:[%s431 + $0xe90] sm:$0xff]
        %v1021 = vld [vmem:[%s431 + $0xe98] sm:$0xff]
        %v1022 = vld [vmem:[%s431 + $0xea0] sm:$0xff]
        %v1023 = vld [vmem:[%s431 + $0xea8] sm:$0xff]
        %v1024 = vld [vmem:[%s431 + $0xeb0] sm:$0xff]
        %v1025 = vld [vmem:[%s431 + $0xeb8] sm:$0xff]
        %v1026 = vld [vmem:[%s431 + $0xec0] sm:$0xff]
        %v1027 = vld [vmem:[%s431 + $0xec8] sm:$0xff]
        %v1028 = vld [vmem:[%s431 + $0xed0] sm:$0xff]
        %v1029 = vld [vmem:[%s431 + $0xed8] sm:$0xff]
        %v1030 = vld [vmem:[%s431 + $0xee0] sm:$0xff]
        %v1031 = vld [vmem:[%s431 + $0xee8] sm:$0xff]
        %v1032 = vld [vmem:[%s431 + $0xef0] sm:$0xff]
        %v1033 = vld [vmem:[%s431 + $0xef8] sm:$0xff]
        %v1034 = vld [vmem:[%s431 + $0xf00] sm:$0xff]
        %v1035 = vld [vmem:[%s431 + $0xf08] sm:$0xff]
        %v1036 = vld [vmem:[%s431 + $0xf10] sm:$0xff]
        %v1037 = vld [vmem:[%s431 + $0xf18] sm:$0xff]
        %v1038 = vld [vmem:[%s431 + $0xf20] sm:$0xff]
        %v1039 = vld [vmem:[%s431 + $0xf28] sm:$0xff]
        %v1040 = vld [vmem:[%s431 + $0xf30] sm:$0xff]
        %v1041 = vld [vmem:[%s431 + $0xf38] sm:$0xff]
        %v1042 = vld [vmem:[%s431 + $0xf40] sm:$0xff]
        %v1043 = vld [vmem:[%s431 + $0xf48] sm:$0xff]
        %v1044 = vld [vmem:[%s431 + $0xf50] sm:$0xff]
        %v1045 = vld [vmem:[%s431 + $0xf58] sm:$0xff]
        %v1046 = vld [vmem:[%s431 + $0xf60] sm:$0xff]
        %v1047 = vld [vmem:[%s431 + $0xf68] sm:$0xff]
        %v1048 = vld [vmem:[%s431 + $0xf70] sm:$0xff]
        %v1049 = vld [vmem:[%s431 + $0xf78] sm:$0xff]
        %v1050 = vld [vmem:[%s431 + $0xf80] sm:$0xff]
        %v1051 = vld [vmem:[%s431 + $0xf88] sm:$0xff]
        %v1052 = vld [vmem:[%s431 + $0xf90] sm:$0xff]
        %v1053 = vld [vmem:[%s431 + $0xf98] sm:$0xff]
        %v1054 = vld [vmem:[%s431 + $0xfa0] sm:$0xff]
        %v1055 = vld [vmem:[%s431 + $0xfa8] sm:$0xff]
        %v1056 = vld [vmem:[%s431 + $0xfb0] sm:$0xff]
        %v1057 = vld [vmem:[%s431 + $0xfb8] sm:$0xff]
        %v1058 = vld [vmem:[%s431 + $0xfc0] sm:$0xff]
        %v1059 = vld [vmem:[%s431 + $0xfc8] sm:$0xff]
        %v1060 = vld [vmem:[%s431 + $0xfd0] sm:$0xff]
        %v1061 = vld [vmem:[%s431 + $0xfd8] sm:$0xff]
        %v1062 = vld [vmem:[%s431 + $0xfe0] sm:$0xff]
        %v1063 = vld [vmem:[%s431 + $0xfe8] sm:$0xff]
        %v1064 = vld [vmem:[%s431 + $0xff0] sm:$0xff]
        %v1065 = vld [vmem:[%s431 + $0xff8] sm:$0xff]
        %v1066 = vld [vmem:[%s431 + $0x1000] sm:$0xff]
        %v1067 = vld [vmem:[%s431 + $0x1008] sm:$0xff]
        %v1068 = vld [vmem:[%s431 + $0x1010] sm:$0xff]
        %v1069 = vld [vmem:[%s431 + $0x1018] sm:$0xff]
        %v1070 = vld [vmem:[%s431 + $0x1020] sm:$0xff]
        %v1071 = vld [vmem:[%s431 + $0x1028] sm:$0xff]
        %v1072 = vld [vmem:[%s431 + $0x1030] sm:$0xff]
        %v1073 = vld [vmem:[%s431 + $0x1038] sm:$0xff]
        %v1074 = vld [vmem:[%s431 + $0x1040] sm:$0xff]
        %v1075 = vld [vmem:[%s431 + $0x1048] sm:$0xff]
        %v1076 = vld [vmem:[%s431 + $0x1050] sm:$0xff]
        %v1077 = vld [vmem:[%s431 + $0x1058] sm:$0xff]
        %v1078 = vld [vmem:[%s431 + $0x1060] sm:$0xff]
        %v1079 = vld [vmem:[%s431 + $0x1068] sm:$0xff]
        %v1080 = vld [vmem:[%s431 + $0x1070] sm:$0xff]
        %v1081 = vld [vmem:[%s431 + $0x1078] sm:$0xff]
        %v1082 = vld [vmem:[%s431 + $0x1080] sm:$0xff]
        %v1083 = vld [vmem:[%s431 + $0x1088] sm:$0xff]
        %v1084 = vld [vmem:[%s431 + $0x1090] sm:$0xff]
        %v1085 = vld [vmem:[%s431 + $0x1098] sm:$0xff]
        %v1086 = vld [vmem:[%s431 + $0x10a0] sm:$0xff]
        %v1087 = vld [vmem:[%s431 + $0x10a8] sm:$0xff]
        %v1088 = vld [vmem:[%s431 + $0x10b0] sm:$0xff]
        %v1089 = vld [vmem:[%s431 + $0x10b8] sm:$0xff]
        %v1090 = vld [vmem:[%s431 + $0x10c0] sm:$0xff]
        %v1091 = vld [vmem:[%s431 + $0x10c8] sm:$0xff]
        %v1092 = vld [vmem:[%s431 + $0x10d0] sm:$0xff]
        %v1093 = vld [vmem:[%s431 + $0x10d8] sm:$0xff]
        %v1094 = vld [vmem:[%s431 + $0x10e0] sm:$0xff]
        %v1095 = vld [vmem:[%s431 + $0x10e8] sm:$0xff]
        %v1096 = vld [vmem:[%s431 + $0x10f0] sm:$0xff]
        %v1097 = vld [vmem:[%s431 + $0x10f8] sm:$0xff]
        %v1098 = vld [vmem:[%s431 + $0x1100] sm:$0xff]
        %v1099 = vld [vmem:[%s431 + $0x1108] sm:$0xff]
        %v1100 = vld [vmem:[%s431 + $0x1110] sm:$0xff]
        %v1101 = vld [vmem:[%s431 + $0x1118] sm:$0xff]
        %v1102 = vld [vmem:[%s431 + $0x1120] sm:$0xff]
        %v1103 = vld [vmem:[%s431 + $0x1128] sm:$0xff]
        %v1104 = vld [vmem:[%s431 + $0x1130] sm:$0xff]
        %v1105 = vld [vmem:[%s431 + $0x1138] sm:$0xff]
        %v1106 = vld [vmem:[%s431 + $0x1140] sm:$0xff]
        %v1107 = vld [vmem:[%s431 + $0x1148] sm:$0xff]
        %v1108 = vld [vmem:[%s431 + $0x1150] sm:$0xff]
        %v1109 = vld [vmem:[%s431 + $0x1158] sm:$0xff]
        %v1110 = vld [vmem:[%s431 + $0x1160] sm:$0xff]
        %v1111 = vld [vmem:[%s431 + $0x1168] sm:$0xff]
        %v1112 = vld [vmem:[%s431 + $0x1170] sm:$0xff]
        %v1113 = vld [vmem:[%s431 + $0x1178] sm:$0xff]
        %v1114 = vld [vmem:[%s431 + $0x1180] sm:$0xff]
        %v1115 = vld [vmem:[%s431 + $0x1188] sm:$0xff]
        %v1116 = vld [vmem:[%s431 + $0x1190] sm:$0xff]
        %v1117 = vld [vmem:[%s431 + $0x1198] sm:$0xff]
        %v1118 = vld [vmem:[%s431 + $0x11a0] sm:$0xff]
        %v1119 = vld [vmem:[%s431 + $0x11a8] sm:$0xff]
        %v1120 = vld [vmem:[%s431 + $0x11b0] sm:$0xff]
        %v1121 = vld [vmem:[%s431 + $0x11b8] sm:$0xff]
        %v1122 = vld [vmem:[%s431 + $0x11c0] sm:$0xff]
        %v1123 = vld [vmem:[%s431 + $0x11c8] sm:$0xff]
        %v1124 = vld [vmem:[%s431 + $0x11d0] sm:$0xff]
        %v1125 = vld [vmem:[%s431 + $0x11d8] sm:$0xff]
        %v1126 = vld [vmem:[%s431 + $0x11e0] sm:$0xff]
        %v1127 = vld [vmem:[%s431 + $0x11e8] sm:$0xff]
        %v1128 = vld [vmem:[%s431 + $0x11f0] sm:$0xff]
        %v1129 = vld [vmem:[%s431 + $0x11f8] sm:$0xff]
        %v1130 = vld [vmem:[%s431 + $0x1200] sm:$0xff]
        %v1131 = vld [vmem:[%s431 + $0x1208] sm:$0xff]
        %v1132 = vld [vmem:[%s431 + $0x1210] sm:$0xff]
        %v1133 = vld [vmem:[%s431 + $0x1218] sm:$0xff]
        %v1134 = vld [vmem:[%s431 + $0x1220] sm:$0xff]
        %v1135 = vld [vmem:[%s431 + $0x1228] sm:$0xff]
        %v1136 = vld [vmem:[%s431 + $0x1230] sm:$0xff]
        %v1137 = vld [vmem:[%s431 + $0x1238] sm:$0xff]
        %v1138 = vld [vmem:[%s431 + $0x1240] sm:$0xff]
        %v1139 = vld [vmem:[%s431 + $0x1248] sm:$0xff]
        %v1140 = vld [vmem:[%s431 + $0x1250] sm:$0xff]
        %v1141 = vld [vmem:[%s431 + $0x1258] sm:$0xff]
        %v1142 = vld [vmem:[%s431 + $0x1260] sm:$0xff]
        %v1143 = vld [vmem:[%s431 + $0x1268] sm:$0xff]
        %v1144 = vld [vmem:[%s431 + $0x1270] sm:$0xff]
        %v1145 = vld [vmem:[%s431 + $0x1278] sm:$0xff]
        %v1146 = vld [vmem:[%s431 + $0x1280] sm:$0xff]
        %v1147 = vld [vmem:[%s431 + $0x1288] sm:$0xff]
        %v1148 = vld [vmem:[%s431 + $0x1290] sm:$0xff]
        %v1149 = vld [vmem:[%s431 + $0x1298] sm:$0xff]
        %v1150 = vld [vmem:[%s431 + $0x12a0] sm:$0xff]
        %v1151 = vld [vmem:[%s431 + $0x12a8] sm:$0xff]
        %v1152 = vld [vmem:[%s431 + $0x12b0] sm:$0xff]
        %v1153 = vld [vmem:[%s431 + $0x12b8] sm:$0xff]
        %v1154 = vld [vmem:[%s431 + $0x12c0] sm:$0xff]
        %v1155 = vld [vmem:[%s431 + $0x12c8] sm:$0xff]
        %v1156 = vld [vmem:[%s431 + $0x12d0] sm:$0xff]
        %v1157 = vld [vmem:[%s431 + $0x12d8] sm:$0xff]
        %v1158 = vld [vmem:[%s431 + $0x12e0] sm:$0xff]
        %v1159 = vld [vmem:[%s431 + $0x12e8] sm:$0xff]
        %v1160 = vld [vmem:[%s431 + $0x12f0] sm:$0xff]
        %v1161 = vld [vmem:[%s431 + $0x12f8] sm:$0xff]
        %v1162 = vld [vmem:[%s431 + $0x1300] sm:$0xff]
        %v1163 = vld [vmem:[%s431 + $0x1308] sm:$0xff]
        %v1164 = vld [vmem:[%s431 + $0x1310] sm:$0xff]
        %v1165 = vld [vmem:[%s431 + $0x1318] sm:$0xff]
        %v1166 = vld [vmem:[%s431 + $0x1320] sm:$0xff]
        %v1167 = vld [vmem:[%s431 + $0x1328] sm:$0xff]
        %v1168 = vld [vmem:[%s431 + $0x1330] sm:$0xff]
        %v1169 = vld [vmem:[%s431 + $0x1338] sm:$0xff]
        %v1170 = vld [vmem:[%s431 + $0x1340] sm:$0xff]
        %v1171 = vld [vmem:[%s431 + $0x1348] sm:$0xff]
        %v1172 = vld [vmem:[%s431 + $0x1350] sm:$0xff]
        %v1173 = vld [vmem:[%s431 + $0x1358] sm:$0xff]
        %v1174 = vld [vmem:[%s431 + $0x1360] sm:$0xff]
        %v1175 = vld [vmem:[%s431 + $0x1368] sm:$0xff]
        %v1176 = vld [vmem:[%s431 + $0x1370] sm:$0xff]
        %v1177 = vld [vmem:[%s431 + $0x1378] sm:$0xff]
        %v1178 = vld [vmem:[%s431 + $0x1380] sm:$0xff]
        %v1179 = vld [vmem:[%s431 + $0x1388] sm:$0xff]
        %v1180 = vld [vmem:[%s431 + $0x1390] sm:$0xff]
        %v1181 = vld [vmem:[%s431 + $0x1398] sm:$0xff]
        %v1182 = vld [vmem:[%s431 + $0x13a0] sm:$0xff]
        %v1183 = vld [vmem:[%s431 + $0x13a8] sm:$0xff]
        %v1184 = vld [vmem:[%s431 + $0x13b0] sm:$0xff]
        %v1185 = vld [vmem:[%s431 + $0x13b8] sm:$0xff]
        %v1186 = vld [vmem:[%s431 + $0x13c0] sm:$0xff]
        %v1187 = vld [vmem:[%s431 + $0x13c8] sm:$0xff]
        %v1188 = vld [vmem:[%s431 + $0x13d0] sm:$0xff]
        %v1189 = vld [vmem:[%s431 + $0x13d8] sm:$0xff]
        %v1190 = vld [vmem:[%s431 + $0x13e0] sm:$0xff]
        %v1191 = vld [vmem:[%s431 + $0x13e8] sm:$0xff]
        %v1192 = vld [vmem:[%s431 + $0x13f0] sm:$0xff]
        %v1193 = vld [vmem:[%s431 + $0x13f8] sm:$0xff]
        %v1194 = vld [vmem:[%s431 + $0x1400] sm:$0xff]
        %v1195 = vld [vmem:[%s431 + $0x1408] sm:$0xff]
        %v1196 = vld [vmem:[%s431 + $0x1410] sm:$0xff]
        %v1197 = vld [vmem:[%s431 + $0x1418] sm:$0xff]
        %v1198 = vld [vmem:[%s431 + $0x1420] sm:$0xff]
        %v1199 = vld [vmem:[%s431 + $0x1428] sm:$0xff]
        %v1200 = vld [vmem:[%s431 + $0x1430] sm:$0xff]
        %v1201 = vld [vmem:[%s431 + $0x1438] sm:$0xff]
        %v1202 = vld [vmem:[%s431 + $0x1440] sm:$0xff]
        %v1203 = vld [vmem:[%s431 + $0x1448] sm:$0xff]
        %v1204 = vld [vmem:[%s431 + $0x1450] sm:$0xff]
        %v1205 = vld [vmem:[%s431 + $0x1458] sm:$0xff]
        %v1206 = vld [vmem:[%s431 + $0x1460] sm:$0xff]
        %v1207 = vld [vmem:[%s431 + $0x1468] sm:$0xff]
        %v1208 = vld [vmem:[%s431 + $0x1470] sm:$0xff]
        %v1209 = vld [vmem:[%s431 + $0x1478] sm:$0xff]
        %v1210 = vld [vmem:[%s431 + $0x1480] sm:$0xff]
        %v1211 = vld [vmem:[%s431 + $0x1488] sm:$0xff]
        %v1212 = vld [vmem:[%s431 + $0x1490] sm:$0xff]
        %v1213 = vld [vmem:[%s431 + $0x1498] sm:$0xff]
        %v1214 = vld [vmem:[%s431 + $0x14a0] sm:$0xff]
        %v1215 = vld [vmem:[%s431 + $0x14a8] sm:$0xff]
        %v1216 = vld [vmem:[%s431 + $0x14b0] sm:$0xff]
        %v1217 = vld [vmem:[%s431 + $0x14b8] sm:$0xff]
        %v1218 = vld [vmem:[%s431 + $0x14c0] sm:$0xff]
        %v1219 = vld [vmem:[%s431 + $0x14c8] sm:$0xff]
        %v1220 = vld [vmem:[%s431 + $0x14d0] sm:$0xff]
        %v1221 = vld [vmem:[%s431 + $0x14d8] sm:$0xff]
        %v1222 = vld [vmem:[%s431 + $0x14e0] sm:$0xff]
        %v1223 = vld [vmem:[%s431 + $0x14e8] sm:$0xff]
        %v1224 = vld [vmem:[%s431 + $0x14f0] sm:$0xff]
        %v1225 = vld [vmem:[%s431 + $0x14f8] sm:$0xff]
        %v1226 = vld [vmem:[%s431 + $0x1500] sm:$0xff]
        %v1227 = vld [vmem:[%s431 + $0x1508] sm:$0xff]
        %v1228 = vld [vmem:[%s431 + $0x1510] sm:$0xff]
        %v1229 = vld [vmem:[%s431 + $0x1518] sm:$0xff]
        %v1230 = vld [vmem:[%s431 + $0x1520] sm:$0xff]
        %v1231 = vld [vmem:[%s431 + $0x1528] sm:$0xff]
        %v1232 = vld [vmem:[%s431 + $0x1530] sm:$0xff]
        %v1233 = vld [vmem:[%s431 + $0x1538] sm:$0xff]
        %v1234 = vld [vmem:[%s431 + $0x1540] sm:$0xff]
        %v1235 = vld [vmem:[%s431 + $0x1548] sm:$0xff]
        %v1236 = vld [vmem:[%s431 + $0x1550] sm:$0xff]
        %v1237 = vld [vmem:[%s431 + $0x1558] sm:$0xff]
        %v1238 = vld [vmem:[%s431 + $0x1560] sm:$0xff]
        %v1239 = vld [vmem:[%s431 + $0x1568] sm:$0xff]
        %v1240 = vld [vmem:[%s431 + $0x1570] sm:$0xff]
        %v1241 = vld [vmem:[%s431 + $0x1578] sm:$0xff]
        %v1242 = vld [vmem:[%s431 + $0x1580] sm:$0xff]
        %v1243 = vld [vmem:[%s431 + $0x1588] sm:$0xff]
        %v1244 = vld [vmem:[%s431 + $0x1590] sm:$0xff]
        %v1245 = vld [vmem:[%s431 + $0x1598] sm:$0xff]
        %v1246 = vld [vmem:[%s431 + $0x15a0] sm:$0xff]
        %v1247 = vld [vmem:[%s431 + $0x15a8] sm:$0xff]
        %v1248 = vld [vmem:[%s431 + $0x15b0] sm:$0xff]
        %v1249 = vld [vmem:[%s431 + $0x15b8] sm:$0xff]
        %v1250 = vld [vmem:[%s431 + $0x15c0] sm:$0xff]
        %v1251 = vld [vmem:[%s431 + $0x15c8] sm:$0xff]
        %v1252 = vld [vmem:[%s431 + $0x15d0] sm:$0xff]
        %v1253 = vld [vmem:[%s431 + $0x15d8] sm:$0xff]
        %v1254 = vld [vmem:[%s431 + $0x15e0] sm:$0xff]
        %v1255 = vld [vmem:[%s431 + $0x15e8] sm:$0xff]
        %v1256 = vld [vmem:[%s431 + $0x15f0] sm:$0xff]
        %v1257 = vld [vmem:[%s431 + $0x15f8] sm:$0xff]
        %v1258 = vld [vmem:[%s431 + $0x1600] sm:$0xff]
        %v1259 = vld [vmem:[%s431 + $0x1608] sm:$0xff]
        %v1260 = vld [vmem:[%s431 + $0x1610] sm:$0xff]
        %v1261 = vld [vmem:[%s431 + $0x1618] sm:$0xff]
        %v1262 = vld [vmem:[%s431 + $0x1620] sm:$0xff]
        %v1263 = vld [vmem:[%s431 + $0x1628] sm:$0xff]
        %v1264 = vld [vmem:[%s431 + $0x1630] sm:$0xff]
        %v1265 = vld [vmem:[%s431 + $0x1638] sm:$0xff]
        %v1266 = vld [vmem:[%s431 + $0x1640] sm:$0xff]
        %v1267 = vld [vmem:[%s431 + $0x1648] sm:$0xff]
        %v1268 = vld [vmem:[%s431 + $0x1650] sm:$0xff]
        %v1269 = vld [vmem:[%s431 + $0x1658] sm:$0xff]
        %v1270 = vld [vmem:[%s431 + $0x1660] sm:$0xff]
        %v1271 = vld [vmem:[%s431 + $0x1668] sm:$0xff]
        %v1272 = vld [vmem:[%s431 + $0x1670] sm:$0xff]
        %v1273 = vld [vmem:[%s431 + $0x1678] sm:$0xff]
        %v1274 = vld [vmem:[%s431 + $0x1680] sm:$0xff]
        %v1275 = vld [vmem:[%s431 + $0x1688] sm:$0xff]
        %v1276 = vld [vmem:[%s431 + $0x1690] sm:$0xff]
        %v1277 = vld [vmem:[%s431 + $0x1698] sm:$0xff]
        %v1278 = vld [vmem:[%s431 + $0x16a0] sm:$0xff]
        %v1279 = vld [vmem:[%s431 + $0x16a8] sm:$0xff]
        %v1280 = vld [vmem:[%s431 + $0x16b0] sm:$0xff]
        %v1281 = vld [vmem:[%s431 + $0x16b8] sm:$0xff]
        %v1282 = vld [vmem:[%s431 + $0x16c0] sm:$0xff]
        %v1283 = vld [vmem:[%s431 + $0x16c8] sm:$0xff]
        %v1284 = vld [vmem:[%s431 + $0x16d0] sm:$0xff]
        %v1285 = vld [vmem:[%s431 + $0x16d8] sm:$0xff]
        %v1286 = vld [vmem:[%s431 + $0x16e0] sm:$0xff]
        %v1287 = vld [vmem:[%s431 + $0x16e8] sm:$0xff]
        %v1288 = vld [vmem:[%s431 + $0x16f0] sm:$0xff]
        %v1289 = vld [vmem:[%s431 + $0x16f8] sm:$0xff]
        %v1290 = vld [vmem:[%s431 + $0x1700] sm:$0xff]
        %v1291 = vld [vmem:[%s431 + $0x1708] sm:$0xff]
        %v1292 = vld [vmem:[%s431 + $0x1710] sm:$0xff]
        %v1293 = vld [vmem:[%s431 + $0x1718] sm:$0xff]
        %v1294 = vld [vmem:[%s431 + $0x1720] sm:$0xff]
        %v1295 = vld [vmem:[%s431 + $0x1728] sm:$0xff]
        %v1296 = vld [vmem:[%s431 + $0x1730] sm:$0xff]
        %v1297 = vld [vmem:[%s431 + $0x1738] sm:$0xff]
        %v1298 = vld [vmem:[%s431 + $0x1740] sm:$0xff]
        %v1299 = vld [vmem:[%s431 + $0x1748] sm:$0xff]
        %v1300 = vld [vmem:[%s431 + $0x1750] sm:$0xff]
        %v1301 = vld [vmem:[%s431 + $0x1758] sm:$0xff]
        %v1302 = vld [vmem:[%s431 + $0x1760] sm:$0xff]
        %v1303 = vld [vmem:[%s431 + $0x1768] sm:$0xff]
        %v1304 = vld [vmem:[%s431 + $0x1770] sm:$0xff]
        %v1305 = vld [vmem:[%s431 + $0x1778] sm:$0xff]
        %v1306 = vld [vmem:[%s431 + $0x1780] sm:$0xff]
        %v1307 = vld [vmem:[%s431 + $0x1788] sm:$0xff]
        %v1308 = vld [vmem:[%s431 + $0x1790] sm:$0xff]
        %v1309 = vld [vmem:[%s431 + $0x1798] sm:$0xff]
        %v1310 = vld [vmem:[%s431 + $0x17a0] sm:$0xff]
        %v1311 = vld [vmem:[%s431 + $0x17a8] sm:$0xff]
        %v1312 = vld [vmem:[%s431 + $0x17b0] sm:$0xff]
        %v1313 = vld [vmem:[%s431 + $0x17b8] sm:$0xff]
        %v1314 = vld [vmem:[%s431 + $0x17c0] sm:$0xff]
        %v1315 = vld [vmem:[%s431 + $0x17c8] sm:$0xff]
        %v1316 = vld [vmem:[%s431 + $0x17d0] sm:$0xff]
        %v1317 = vld [vmem:[%s431 + $0x17d8] sm:$0xff]
        %v1318 = vld [vmem:[%s431 + $0x17e0] sm:$0xff]
        %v1319 = vld [vmem:[%s431 + $0x17e8] sm:$0xff]
        %v1320 = vld [vmem:[%s431 + $0x17f0] sm:$0xff]
        %v1321 = vld [vmem:[%s431 + $0x17f8] sm:$0xff]
        %v1322 = vld [vmem:[%s431 + $0x1800] sm:$0xff]
        %v1323 = vld [vmem:[%s431 + $0x1808] sm:$0xff]
        %v1324 = vld [vmem:[%s431 + $0x1810] sm:$0xff]
        %v1325 = vld [vmem:[%s431 + $0x1818] sm:$0xff]
        %v1326 = vld [vmem:[%s431 + $0x1820] sm:$0xff]
        %v1327 = vld [vmem:[%s431 + $0x1828] sm:$0xff]
        %v1328 = vld [vmem:[%s431 + $0x1830] sm:$0xff]
        %v1329 = vld [vmem:[%s431 + $0x1838] sm:$0xff]
        %v1330 = vld [vmem:[%s431 + $0x1840] sm:$0xff]
        %v1331 = vld [vmem:[%s431 + $0x1848] sm:$0xff]
        %v1332 = vld [vmem:[%s431 + $0x1850] sm:$0xff]
        %v1333 = vld [vmem:[%s431 + $0x1858] sm:$0xff]
        %v1334 = vld [vmem:[%s431 + $0x1860] sm:$0xff]
        %v1335 = vld [vmem:[%s431 + $0x1868] sm:$0xff]
        %v1336 = vld [vmem:[%s431 + $0x1870] sm:$0xff]
        %v1337 = vld [vmem:[%s431 + $0x1878] sm:$0xff]
        %v1338 = vld [vmem:[%s431 + $0x1880] sm:$0xff]
        %v1339 = vld [vmem:[%s431 + $0x1888] sm:$0xff]
        %v1340 = vld [vmem:[%s431 + $0x1890] sm:$0xff]
        %v1341 = vld [vmem:[%s431 + $0x1898] sm:$0xff]
        %v1342 = vld [vmem:[%s431 + $0x18a0] sm:$0xff]
        %v1343 = vld [vmem:[%s431 + $0x18a8] sm:$0xff]
        %v1344 = vld [vmem:[%s431 + $0x18b0] sm:$0xff]
        %v1345 = vld [vmem:[%s431 + $0x18b8] sm:$0xff]
        %v1346 = vld [vmem:[%s431 + $0x18c0] sm:$0xff]
        %v1347 = vld [vmem:[%s431 + $0x18c8] sm:$0xff]
        %v1348 = vld [vmem:[%s431 + $0x18d0] sm:$0xff]
        %v1349 = vld [vmem:[%s431 + $0x18d8] sm:$0xff]
        %v1350 = vld [vmem:[%s431 + $0x18e0] sm:$0xff]
        %v1351 = vld [vmem:[%s431 + $0x18e8] sm:$0xff]
        %v1352 = vld [vmem:[%s431 + $0x18f0] sm:$0xff]
        %v1353 = vld [vmem:[%s431 + $0x18f8] sm:$0xff]
        %v1354 = vld [vmem:[%s431 + $0x1900] sm:$0xff]
        %v1355 = vld [vmem:[%s431 + $0x1908] sm:$0xff]
        %v1356 = vld [vmem:[%s431 + $0x1910] sm:$0xff]
        %v1357 = vld [vmem:[%s431 + $0x1918] sm:$0xff]
        %v1358 = vld [vmem:[%s431 + $0x1920] sm:$0xff]
        %v1359 = vld [vmem:[%s431 + $0x1928] sm:$0xff]
        %v1360 = vld [vmem:[%s431 + $0x1930] sm:$0xff]
        %v1361 = vld [vmem:[%s431 + $0x1938] sm:$0xff]
        %v1362 = vld [vmem:[%s431 + $0x1940] sm:$0xff]
        %v1363 = vld [vmem:[%s431 + $0x1948] sm:$0xff]
        %v1364 = vld [vmem:[%s431 + $0x1950] sm:$0xff]
        %v1365 = vld [vmem:[%s431 + $0x1958] sm:$0xff]
        %v1366 = vld [vmem:[%s431 + $0x1960] sm:$0xff]
        %v1367 = vld [vmem:[%s431 + $0x1968] sm:$0xff]
        %v1368 = vld [vmem:[%s431 + $0x1970] sm:$0xff]
        %v1369 = vld [vmem:[%s431 + $0x1978] sm:$0xff]
        %v1370 = vld [vmem:[%s431 + $0x1980] sm:$0xff]
        %v1371 = vld [vmem:[%s431 + $0x1988] sm:$0xff]
        %v1372 = vld [vmem:[%s431 + $0x1990] sm:$0xff]
        %v1373 = vld [vmem:[%s431 + $0x1998] sm:$0xff]
        %v1374 = vld [vmem:[%s431 + $0x19a0] sm:$0xff]
        %v1375 = vld [vmem:[%s431 + $0x19a8] sm:$0xff]
        %v1376 = vld [vmem:[%s431 + $0x19b0] sm:$0xff]
        %v1377 = vld [vmem:[%s431 + $0x19b8] sm:$0xff]
        %v1378 = vld [vmem:[%s431 + $0x19c0] sm:$0xff]
        %v1379 = vld [vmem:[%s431 + $0x19c8] sm:$0xff]
        %v1380 = vld [vmem:[%s431 + $0x19d0] sm:$0xff]
        %v1381 = vld [vmem:[%s431 + $0x19d8] sm:$0xff]
        %v1382 = vld [vmem:[%s431 + $0x19e0] sm:$0xff]
        %v1383 = vld [vmem:[%s431 + $0x19e8] sm:$0xff]
        %v1384 = vld [vmem:[%s431 + $0x19f0] sm:$0xff]
        %v1385 = vld [vmem:[%s431 + $0x19f8] sm:$0xff]
        %v1386 = vld [vmem:[%s431 + $0x1a00] sm:$0xff]
        %v1387 = vld [vmem:[%s431 + $0x1a08] sm:$0xff]
        %v1388 = vld [vmem:[%s431 + $0x1a10] sm:$0xff]
        %v1389 = vld [vmem:[%s431 + $0x1a18] sm:$0xff]
        %v1390 = vld [vmem:[%s431 + $0x1a20] sm:$0xff]
        %v1391 = vld [vmem:[%s431 + $0x1a28] sm:$0xff]
        %v1392 = vld [vmem:[%s431 + $0x1a30] sm:$0xff]
        %v1393 = vld [vmem:[%s431 + $0x1a38] sm:$0xff]
        %v1394 = vld [vmem:[%s431 + $0x1a40] sm:$0xff]
        %v1395 = vld [vmem:[%s431 + $0x1a48] sm:$0xff]
        %v1396 = vld [vmem:[%s431 + $0x1a50] sm:$0xff]
        %v1397 = vld [vmem:[%s431 + $0x1a58] sm:$0xff]
        %v1398 = vld [vmem:[%s431 + $0x1a60] sm:$0xff]
        %v1399 = vld [vmem:[%s431 + $0x1a68] sm:$0xff]
        %v1400 = vld [vmem:[%s431 + $0x1a70] sm:$0xff]
        %v1401 = vld [vmem:[%s431 + $0x1a78] sm:$0xff]
        %v1402 = vld [vmem:[%s431 + $0x1a80] sm:$0xff]
        %v1403 = vld [vmem:[%s431 + $0x1a88] sm:$0xff]
        %v1404 = vld [vmem:[%s431 + $0x1a90] sm:$0xff]
        %v1405 = vld [vmem:[%s431 + $0x1a98] sm:$0xff]
        %v1406 = vld [vmem:[%s431 + $0x1aa0] sm:$0xff]
        %v1407 = vld [vmem:[%s431 + $0x1aa8] sm:$0xff]
        %v1408 = vld [vmem:[%s431 + $0x1ab0] sm:$0xff]
        %v1409 = vld [vmem:[%s431 + $0x1ab8] sm:$0xff]
        %v1410 = vld [vmem:[%s431 + $0x1ac0] sm:$0xff]
        %v1411 = vld [vmem:[%s431 + $0x1ac8] sm:$0xff]
        %v1412 = vld [vmem:[%s431 + $0x1ad0] sm:$0xff]
        %v1413 = vld [vmem:[%s431 + $0x1ad8] sm:$0xff]
        %v1414 = vld [vmem:[%s431 + $0x1ae0] sm:$0xff]
        %v1415 = vld [vmem:[%s431 + $0x1ae8] sm:$0xff]
        %v1416 = vld [vmem:[%s431 + $0x1af0] sm:$0xff]
        %v1417 = vld [vmem:[%s431 + $0x1af8] sm:$0xff]
        %v1418 = vld [vmem:[%s431 + $0x1b00] sm:$0xff]
        %v1419 = vld [vmem:[%s431 + $0x1b08] sm:$0xff]
        %v1420 = vld [vmem:[%s431 + $0x1b10] sm:$0xff]
        %v1421 = vld [vmem:[%s431 + $0x1b18] sm:$0xff]
        %v1422 = vld [vmem:[%s431 + $0x1b20] sm:$0xff]
        %v1423 = vld [vmem:[%s431 + $0x1b28] sm:$0xff]
        %v1424 = vld [vmem:[%s431 + $0x1b30] sm:$0xff]
        %v1425 = vld [vmem:[%s431 + $0x1b38] sm:$0xff]
        %v1426 = vld [vmem:[%s431 + $0x1b40] sm:$0xff]
        %v1427 = vld [vmem:[%s431 + $0x1b48] sm:$0xff]
        %v1428 = vld [vmem:[%s431 + $0x1b50] sm:$0xff]
        %v1429 = vld [vmem:[%s431 + $0x1b58] sm:$0xff]
        %v1430 = vld [vmem:[%s431 + $0x1b60] sm:$0xff]
        %v1431 = vld [vmem:[%s431 + $0x1b68] sm:$0xff]
        %v1432 = vld [vmem:[%s431 + $0x1b70] sm:$0xff]
        %v1433 = vld [vmem:[%s431 + $0x1b78] sm:$0xff]
        %v1434 = vld [vmem:[%s431 + $0x1b80] sm:$0xff]
        %v1435 = vld [vmem:[%s431 + $0x1b88] sm:$0xff]
        %v1436 = vld [vmem:[%s431 + $0x1b90] sm:$0xff]
        %v1437 = vld [vmem:[%s431 + $0x1b98] sm:$0xff]
        %v1438 = vld [vmem:[%s431 + $0x1ba0] sm:$0xff]
        %v1439 = vld [vmem:[%s431 + $0x1ba8] sm:$0xff]
        %v1440 = vld [vmem:[%s431 + $0x1bb0] sm:$0xff]
        %v1441 = vld [vmem:[%s431 + $0x1bb8] sm:$0xff]
        %v1442 = vld [vmem:[%s431 + $0x1bc0] sm:$0xff]
        %v1443 = vld [vmem:[%s431 + $0x1bc8] sm:$0xff]
        %v1444 = vld [vmem:[%s431 + $0x1bd0] sm:$0xff]
        %v1445 = vld [vmem:[%s431 + $0x1bd8] sm:$0xff]
        %v1446 = vld [vmem:[%s431 + $0x1be0] sm:$0xff]
        %v1447 = vld [vmem:[%s431 + $0x1be8] sm:$0xff]
        %v1448 = vld [vmem:[%s431 + $0x1bf0] sm:$0xff]
        %v1449 = vld [vmem:[%s431 + $0x1bf8] sm:$0xff]
        %v1450 = vld [vmem:[%s431 + $0x1c00] sm:$0xff]
        %v1451 = vld [vmem:[%s431 + $0x1c08] sm:$0xff]
        %v1452 = vld [vmem:[%s431 + $0x1c10] sm:$0xff]
        %v1453 = vld [vmem:[%s431 + $0x1c18] sm:$0xff]
        %v1454 = vld [vmem:[%s431 + $0x1c20] sm:$0xff]
        %v1455 = vld [vmem:[%s431 + $0x1c28] sm:$0xff]
        %v1456 = vld [vmem:[%s431 + $0x1c30] sm:$0xff]
        %v1457 = vld [vmem:[%s431 + $0x1c38] sm:$0xff]
        %v1458 = vld [vmem:[%s431 + $0x1c40] sm:$0xff]
        %v1459 = vld [vmem:[%s431 + $0x1c48] sm:$0xff]
        %v1460 = vld [vmem:[%s431 + $0x1c50] sm:$0xff]
        %v1461 = vld [vmem:[%s431 + $0x1c58] sm:$0xff]
        %v1462 = vld [vmem:[%s431 + $0x1c60] sm:$0xff]
        %v1463 = vld [vmem:[%s431 + $0x1c68] sm:$0xff]
        %v1464 = vld [vmem:[%s431 + $0x1c70] sm:$0xff]
        %v1465 = vld [vmem:[%s431 + $0x1c78] sm:$0xff]
        %v1466 = vld [vmem:[%s431 + $0x1c80] sm:$0xff]
        %v1467 = vld [vmem:[%s431 + $0x1c88] sm:$0xff]
        %v1468 = vld [vmem:[%s431 + $0x1c90] sm:$0xff]
        %v1469 = vld [vmem:[%s431 + $0x1c98] sm:$0xff]
        %v1470 = vld [vmem:[%s431 + $0x1ca0] sm:$0xff]
        %v1471 = vld [vmem:[%s431 + $0x1ca8] sm:$0xff]
        %v1472 = vld [vmem:[%s431 + $0x1cb0] sm:$0xff]
        %v1473 = vld [vmem:[%s431 + $0x1cb8] sm:$0xff]
        %v1474 = vld [vmem:[%s431 + $0x1cc0] sm:$0xff]
        %v1475 = vld [vmem:[%s431 + $0x1cc8] sm:$0xff]
        %v1476 = vld [vmem:[%s431 + $0x1cd0] sm:$0xff]
        %v1477 = vld [vmem:[%s431 + $0x1cd8] sm:$0xff]
        %v1478 = vld [vmem:[%s431 + $0x1ce0] sm:$0xff]
        %v1479 = vld [vmem:[%s431 + $0x1ce8] sm:$0xff]
        %v1480 = vld [vmem:[%s431 + $0x1cf0] sm:$0xff]
        %v1481 = vld [vmem:[%s431 + $0x1cf8] sm:$0xff]
        %v1482 = vld [vmem:[%s431 + $0x1d00] sm:$0xff]
        %v1483 = vld [vmem:[%s431 + $0x1d08] sm:$0xff]
        %v1484 = vld [vmem:[%s431 + $0x1d10] sm:$0xff]
        %v1485 = vld [vmem:[%s431 + $0x1d18] sm:$0xff]
        %v1486 = vld [vmem:[%s431 + $0x1d20] sm:$0xff]
        %v1487 = vld [vmem:[%s431 + $0x1d28] sm:$0xff]
        %v1488 = vld [vmem:[%s431 + $0x1d30] sm:$0xff]
        %v1489 = vld [vmem:[%s431 + $0x1d38] sm:$0xff]
        %v1490 = vld [vmem:[%s431 + $0x1d40] sm:$0xff]
        %v1491 = vld [vmem:[%s431 + $0x1d48] sm:$0xff]
        %v1492 = vld [vmem:[%s431 + $0x1d50] sm:$0xff]
        %v1493 = vld [vmem:[%s431 + $0x1d58] sm:$0xff]
        %v1494 = vld [vmem:[%s431 + $0x1d60] sm:$0xff]
        %v1495 = vld [vmem:[%s431 + $0x1d68] sm:$0xff]
        %v1496 = vld [vmem:[%s431 + $0x1d70] sm:$0xff]
        %v1497 = vld [vmem:[%s431 + $0x1d78] sm:$0xff]
        %v1498 = vld [vmem:[%s431 + $0x1d80] sm:$0xff]
        %v1499 = vld [vmem:[%s431 + $0x1d88] sm:$0xff]
        %v1500 = vld [vmem:[%s431 + $0x1d90] sm:$0xff]
        %v1501 = vld [vmem:[%s431 + $0x1d98] sm:$0xff]
        %v1502 = vld [vmem:[%s431 + $0x1da0] sm:$0xff]
        %v1503 = vld [vmem:[%s431 + $0x1da8] sm:$0xff]
        %v1504 = vld [vmem:[%s431 + $0x1db0] sm:$0xff]
        %v1505 = vld [vmem:[%s431 + $0x1db8] sm:$0xff]
        %v1506 = vld [vmem:[%s431 + $0x1dc0] sm:$0xff]
        %v1507 = vld [vmem:[%s431 + $0x1dc8] sm:$0xff]
        %v1508 = vld [vmem:[%s431 + $0x1dd0] sm:$0xff]
        %v1509 = vld [vmem:[%s431 + $0x1dd8] sm:$0xff]
        %v1510 = vld [vmem:[%s431 + $0x1de0] sm:$0xff]
        %v1511 = vld [vmem:[%s431 + $0x1de8] sm:$0xff]
        %v1512 = vld [vmem:[%s431 + $0x1df0] sm:$0xff]
        %v1513 = vld [vmem:[%s431 + $0x1df8] sm:$0xff]
        %v1514 = vld [vmem:[%s431 + $0x1e00] sm:$0xff]
        %v1515 = vld [vmem:[%s431 + $0x1e08] sm:$0xff]
        %v1516 = vld [vmem:[%s431 + $0x1e10] sm:$0xff]
        %v1517 = vld [vmem:[%s431 + $0x1e18] sm:$0xff]
        %v1518 = vld [vmem:[%s431 + $0x1e20] sm:$0xff]
        %v1519 = vld [vmem:[%s431 + $0x1e28] sm:$0xff]
        %v1520 = vld [vmem:[%s431 + $0x1e30] sm:$0xff]
        %v1521 = vld [vmem:[%s431 + $0x1e38] sm:$0xff]
        %v1522 = vld [vmem:[%s431 + $0x1e40] sm:$0xff]
        %v1523 = vld [vmem:[%s431 + $0x1e48] sm:$0xff]
        %v1524 = vld [vmem:[%s431 + $0x1e50] sm:$0xff]
        %v1525 = vld [vmem:[%s431 + $0x1e58] sm:$0xff]
        %v1526 = vld [vmem:[%s431 + $0x1e60] sm:$0xff]
        %v1527 = vld [vmem:[%s431 + $0x1e68] sm:$0xff]
        %v1528 = vld [vmem:[%s431 + $0x1e70] sm:$0xff]
        %v1529 = vld [vmem:[%s431 + $0x1e78] sm:$0xff]
        %v1530 = vld [vmem:[%s431 + $0x1e80] sm:$0xff]
        %v1531 = vld [vmem:[%s431 + $0x1e88] sm:$0xff]
        %v1532 = vld [vmem:[%s431 + $0x1e90] sm:$0xff]
        %v1533 = vld [vmem:[%s431 + $0x1e98] sm:$0xff]
        %v1534 = vld [vmem:[%s431 + $0x1ea0] sm:$0xff]
        %v1535 = vld [vmem:[%s431 + $0x1ea8] sm:$0xff]
        %v1536 = vld [vmem:[%s431 + $0x1eb0] sm:$0xff]
        %v1537 = vld [vmem:[%s431 + $0x1eb8] sm:$0xff]
        %v1538 = vld [vmem:[%s431 + $0x1ec0] sm:$0xff]
        %v1539 = vld [vmem:[%s431 + $0x1ec8] sm:$0xff]
        %v1540 = vld [vmem:[%s431 + $0x1ed0] sm:$0xff]
        %v1541 = vld [vmem:[%s431 + $0x1ed8] sm:$0xff]
        %v1542 = vld [vmem:[%s431 + $0x1ee0] sm:$0xff]
        %v1543 = vld [vmem:[%s431 + $0x1ee8] sm:$0xff]
        %v1544 = vld [vmem:[%s431 + $0x1ef0] sm:$0xff]
        %v1545 = vld [vmem:[%s431 + $0x1ef8] sm:$0xff]
        %v1546 = vld [vmem:[%s431 + $0x1f00] sm:$0xff]
        %v1547 = vld [vmem:[%s431 + $0x1f08] sm:$0xff]
        %v1548 = vld [vmem:[%s431 + $0x1f10] sm:$0xff]
        %v1549 = vld [vmem:[%s431 + $0x1f18] sm:$0xff]
        %v1550 = vld [vmem:[%s431 + $0x1f20] sm:$0xff]
        %v1551 = vld [vmem:[%s431 + $0x1f28] sm:$0xff]
        %v1552 = vld [vmem:[%s431 + $0x1f30] sm:$0xff]
        %v1553 = vld [vmem:[%s431 + $0x1f38] sm:$0xff]
        %v1554 = vld [vmem:[%s431 + $0x1f40] sm:$0xff]
        %v1555 = vld [vmem:[%s431 + $0x1f48] sm:$0xff]
        %v1556 = vld [vmem:[%s431 + $0x1f50] sm:$0xff]
        %v1557 = vld [vmem:[%s431 + $0x1f58] sm:$0xff]
        %v1558 = vld [vmem:[%s431 + $0x1f60] sm:$0xff]
        %v1559 = vld [vmem:[%s431 + $0x1f68] sm:$0xff]
        %v1560 = vld [vmem:[%s431 + $0x1f70] sm:$0xff]
        %v1561 = vld [vmem:[%s431 + $0x1f78] sm:$0xff]
        %v1562 = vld [vmem:[%s431 + $0x1f80] sm:$0xff]
        %v1563 = vld [vmem:[%s431 + $0x1f88] sm:$0xff]
        %v1564 = vld [vmem:[%s431 + $0x1f90] sm:$0xff]
        %v1565 = vld [vmem:[%s431 + $0x1f98] sm:$0xff]
        %v1566 = vld [vmem:[%s431 + $0x1fa0] sm:$0xff]
        %v1567 = vld [vmem:[%s431 + $0x1fa8] sm:$0xff]
        %v1568 = vld [vmem:[%s431 + $0x1fb0] sm:$0xff]
        %v1569 = vld [vmem:[%s431 + $0x1fb8] sm:$0xff]
        %v1570 = vld [vmem:[%s431 + $0x1fc0] sm:$0xff]
        %v1571 = vld [vmem:[%s431 + $0x1fc8] sm:$0xff]
        %v1572 = vld [vmem:[%s431 + $0x1fd0] sm:$0xff]
        %v1573 = vld [vmem:[%s431 + $0x1fd8] sm:$0xff]
        %v1574 = vld [vmem:[%s431 + $0x1fe0] sm:$0xff]
        %v1575 = vld [vmem:[%s431 + $0x1fe8] sm:$0xff]
        %v1576 = vld [vmem:[%s431 + $0x1ff0] sm:$0xff]
        %v1577 = vld [vmem:[%s431 + $0x1ff8] sm:$0xff]
        %v1594 = vunpack.c.l.b16 %v538
        %v1595 = vunpack.c.h.b16 %v538
        %v1596 = vunpack.c.l.b16 %v539
        %v1597 = vunpack.c.h.b16 %v539
        %v1598 = vunpack.c.l.b16 %v540
        %v1599 = vunpack.c.h.b16 %v540
        %v1600 = vunpack.c.l.b16 %v541
        %v1601 = vunpack.c.h.b16 %v541
        %v1602 = vunpack.c.l.b16 %v542
        %v1603 = vunpack.c.h.b16 %v542
        %v1604 = vunpack.c.l.b16 %v543
        %v1605 = vunpack.c.h.b16 %v543
        %v1606 = vunpack.c.l.b16 %v544
        %v1607 = vunpack.c.h.b16 %v544
        %v1608 = vunpack.c.l.b16 %v545
        %v1609 = vunpack.c.h.b16 %v545
        %v1610 = vunpack.c.l.b16 %v546
        %v1611 = vunpack.c.h.b16 %v546
        %v1612 = vunpack.c.l.b16 %v547
        %v1613 = vunpack.c.h.b16 %v547
        %v1614 = vunpack.c.l.b16 %v548
        %v1615 = vunpack.c.h.b16 %v548
        %v1616 = vunpack.c.l.b16 %v549
        %v1617 = vunpack.c.h.b16 %v549
        %v1618 = vunpack.c.l.b16 %v550
        %v1619 = vunpack.c.h.b16 %v550
        %v1620 = vunpack.c.l.b16 %v551
        %v1621 = vunpack.c.h.b16 %v551
        %v1622 = vunpack.c.l.b16 %v552
        %v1623 = vunpack.c.h.b16 %v552
        %v1624 = vunpack.c.l.b16 %v553
        %v1625 = vunpack.c.h.b16 %v553
        %v1626 = vpack.c.b16 %v1610, %v1594
        %v1627 = vpack.c.b16 %v1611, %v1595
        %v1628 = vpack.c.b16 %v1612, %v1596
        %v1629 = vpack.c.b16 %v1613, %v1597
        %v1630 = vpack.c.b16 %v1614, %v1598
        %v1631 = vpack.c.b16 %v1615, %v1599
        %v1632 = vpack.c.b16 %v1616, %v1600
        %v1633 = vpack.c.b16 %v1617, %v1601
        %v1634 = vpack.c.b16 %v1618, %v1602
        %v1635 = vpack.c.b16 %v1619, %v1603
        %v1636 = vpack.c.b16 %v1620, %v1604
        %v1637 = vpack.c.b16 %v1621, %v1605
        %v1638 = vpack.c.b16 %v1622, %v1606
        %v1639 = vpack.c.b16 %v1623, %v1607
        %v1640 = vpack.c.b16 %v1624, %v1608
        %v1641 = vpack.c.b16 %v1625, %v1609
        %v2682 = vunpack.c.l.b16 %v554
        %v2683 = vunpack.c.h.b16 %v554
        %v2684 = vunpack.c.l.b16 %v555
        %v2685 = vunpack.c.h.b16 %v555
        %v2686 = vunpack.c.l.b16 %v556
        %v2687 = vunpack.c.h.b16 %v556
        %v2688 = vunpack.c.l.b16 %v557
        %v2689 = vunpack.c.h.b16 %v557
        %v2690 = vunpack.c.l.b16 %v558
        %v2691 = vunpack.c.h.b16 %v558
        %v2692 = vunpack.c.l.b16 %v559
        %v2693 = vunpack.c.h.b16 %v559
        %v2694 = vunpack.c.l.b16 %v560
        %v2695 = vunpack.c.h.b16 %v560
        %v2696 = vunpack.c.l.b16 %v561
        %v2697 = vunpack.c.h.b16 %v561
        %v2698 = vunpack.c.l.b16 %v562
        %v2699 = vunpack.c.h.b16 %v562
        %v2700 = vunpack.c.l.b16 %v563
        %v2701 = vunpack.c.h.b16 %v563
        %v2702 = vunpack.c.l.b16 %v564
        %v2703 = vunpack.c.h.b16 %v564
        %v2704 = vunpack.c.l.b16 %v565
        %v2705 = vunpack.c.h.b16 %v565
        %v2706 = vunpack.c.l.b16 %v566
        %v2707 = vunpack.c.h.b16 %v566
        %v2708 = vunpack.c.l.b16 %v567
        %v2709 = vunpack.c.h.b16 %v567
        %v2710 = vunpack.c.l.b16 %v568
        %v2711 = vunpack.c.h.b16 %v568
        %v2712 = vunpack.c.l.b16 %v569
        %v2713 = vunpack.c.h.b16 %v569
        %v2714 = vunpack.c.l.b16 %v570
        %v2715 = vunpack.c.h.b16 %v570
        %v2716 = vunpack.c.l.b16 %v571
        %v2717 = vunpack.c.h.b16 %v571
        %v2718 = vunpack.c.l.b16 %v572
        %v2719 = vunpack.c.h.b16 %v572
        %v2720 = vunpack.c.l.b16 %v573
        %v2721 = vunpack.c.h.b16 %v573
        %v2722 = vunpack.c.l.b16 %v574
        %v2723 = vunpack.c.h.b16 %v574
        %v2724 = vunpack.c.l.b16 %v575
        %v2725 = vunpack.c.h.b16 %v575
        %v2726 = vunpack.c.l.b16 %v576
        %v2727 = vunpack.c.h.b16 %v576
        %v2728 = vunpack.c.l.b16 %v577
        %v2729 = vunpack.c.h.b16 %v577
        %v2730 = vunpack.c.l.b16 %v578
        %v2731 = vunpack.c.h.b16 %v578
        %v2732 = vunpack.c.l.b16 %v579
        %v2733 = vunpack.c.h.b16 %v579
        %v2734 = vunpack.c.l.b16 %v580
        %v2735 = vunpack.c.h.b16 %v580
        %v2736 = vunpack.c.l.b16 %v581
        %v2737 = vunpack.c.h.b16 %v581
        %v2738 = vunpack.c.l.b16 %v582
        %v2739 = vunpack.c.h.b16 %v582
        %v2740 = vunpack.c.l.b16 %v583
        %v2741 = vunpack.c.h.b16 %v583
        %v2742 = vunpack.c.l.b16 %v584
        %v2743 = vunpack.c.h.b16 %v584
        %v2744 = vunpack.c.l.b16 %v585
        %v2745 = vunpack.c.h.b16 %v585
        %v2746 = vunpack.c.l.b16 %v586
        %v2747 = vunpack.c.h.b16 %v586
        %v2748 = vunpack.c.l.b16 %v587
        %v2749 = vunpack.c.h.b16 %v587
        %v2750 = vunpack.c.l.b16 %v588
        %v2751 = vunpack.c.h.b16 %v588
        %v2752 = vunpack.c.l.b16 %v589
        %v2753 = vunpack.c.h.b16 %v589
        %v2754 = vunpack.c.l.b16 %v590
        %v2755 = vunpack.c.h.b16 %v590
        %v2756 = vunpack.c.l.b16 %v591
        %v2757 = vunpack.c.h.b16 %v591
        %v2758 = vunpack.c.l.b16 %v592
        %v2759 = vunpack.c.h.b16 %v592
        %v2760 = vunpack.c.l.b16 %v593
        %v2761 = vunpack.c.h.b16 %v593
        %v2762 = vunpack.c.l.b16 %v594
        %v2763 = vunpack.c.h.b16 %v594
        %v2764 = vunpack.c.l.b16 %v595
        %v2765 = vunpack.c.h.b16 %v595
        %v2766 = vunpack.c.l.b16 %v596
        %v2767 = vunpack.c.h.b16 %v596
        %v2768 = vunpack.c.l.b16 %v597
        %v2769 = vunpack.c.h.b16 %v597
        %v2770 = vunpack.c.l.b16 %v598
        %v2771 = vunpack.c.h.b16 %v598
        %v2772 = vunpack.c.l.b16 %v599
        %v2773 = vunpack.c.h.b16 %v599
        %v2774 = vunpack.c.l.b16 %v600
        %v2775 = vunpack.c.h.b16 %v600
        %v2776 = vunpack.c.l.b16 %v601
        %v2777 = vunpack.c.h.b16 %v601
        %v2778 = vunpack.c.l.b16 %v602
        %v2779 = vunpack.c.h.b16 %v602
        %v2780 = vunpack.c.l.b16 %v603
        %v2781 = vunpack.c.h.b16 %v603
        %v2782 = vunpack.c.l.b16 %v604
        %v2783 = vunpack.c.h.b16 %v604
        %v2784 = vunpack.c.l.b16 %v605
        %v2785 = vunpack.c.h.b16 %v605
        %v2786 = vunpack.c.l.b16 %v606
        %v2787 = vunpack.c.h.b16 %v606
        %v2788 = vunpack.c.l.b16 %v607
        %v2789 = vunpack.c.h.b16 %v607
        %v2790 = vunpack.c.l.b16 %v608
        %v2791 = vunpack.c.h.b16 %v608
        %v2792 = vunpack.c.l.b16 %v609
        %v2793 = vunpack.c.h.b16 %v609
        %v2794 = vunpack.c.l.b16 %v610
        %v2795 = vunpack.c.h.b16 %v610
        %v2796 = vunpack.c.l.b16 %v611
        %v2797 = vunpack.c.h.b16 %v611
        %v2798 = vunpack.c.l.b16 %v612
        %v2799 = vunpack.c.h.b16 %v612
        %v2800 = vunpack.c.l.b16 %v613
        %v2801 = vunpack.c.h.b16 %v613
        %v2802 = vunpack.c.l.b16 %v614
        %v2803 = vunpack.c.h.b16 %v614
        %v2804 = vunpack.c.l.b16 %v615
        %v2805 = vunpack.c.h.b16 %v615
        %v2806 = vunpack.c.l.b16 %v616
        %v2807 = vunpack.c.h.b16 %v616
        %v2808 = vunpack.c.l.b16 %v617
        %v2809 = vunpack.c.h.b16 %v617
        %v2810 = vunpack.c.l.b16 %v618
        %v2811 = vunpack.c.h.b16 %v618
        %v2812 = vunpack.c.l.b16 %v619
        %v2813 = vunpack.c.h.b16 %v619
        %v2814 = vunpack.c.l.b16 %v620
        %v2815 = vunpack.c.h.b16 %v620
        %v2816 = vunpack.c.l.b16 %v621
        %v2817 = vunpack.c.h.b16 %v621
        %v2818 = vunpack.c.l.b16 %v622
        %v2819 = vunpack.c.h.b16 %v622
        %v2820 = vunpack.c.l.b16 %v623
        %v2821 = vunpack.c.h.b16 %v623
        %v2822 = vunpack.c.l.b16 %v624
        %v2823 = vunpack.c.h.b16 %v624
        %v2824 = vunpack.c.l.b16 %v625
        %v2825 = vunpack.c.h.b16 %v625
        %v2826 = vunpack.c.l.b16 %v626
        %v2827 = vunpack.c.h.b16 %v626
        %v2828 = vunpack.c.l.b16 %v627
        %v2829 = vunpack.c.h.b16 %v627
        %v2830 = vunpack.c.l.b16 %v628
        %v2831 = vunpack.c.h.b16 %v628
        %v2832 = vunpack.c.l.b16 %v629
        %v2833 = vunpack.c.h.b16 %v629
        %v2834 = vunpack.c.l.b16 %v630
        %v2835 = vunpack.c.h.b16 %v630
        %v2836 = vunpack.c.l.b16 %v631
        %v2837 = vunpack.c.h.b16 %v631
        %v2838 = vunpack.c.l.b16 %v632
        %v2839 = vunpack.c.h.b16 %v632
        %v2840 = vunpack.c.l.b16 %v633
        %v2841 = vunpack.c.h.b16 %v633
        %v2842 = vunpack.c.l.b16 %v634
        %v2843 = vunpack.c.h.b16 %v634
        %v2844 = vunpack.c.l.b16 %v635
        %v2845 = vunpack.c.h.b16 %v635
        %v2846 = vunpack.c.l.b16 %v636
        %v2847 = vunpack.c.h.b16 %v636
        %v2848 = vunpack.c.l.b16 %v637
        %v2849 = vunpack.c.h.b16 %v637
        %v2850 = vunpack.c.l.b16 %v638
        %v2851 = vunpack.c.h.b16 %v638
        %v2852 = vunpack.c.l.b16 %v639
        %v2853 = vunpack.c.h.b16 %v639
        %v2854 = vunpack.c.l.b16 %v640
        %v2855 = vunpack.c.h.b16 %v640
        %v2856 = vunpack.c.l.b16 %v641
        %v2857 = vunpack.c.h.b16 %v641
        %v2858 = vunpack.c.l.b16 %v642
        %v2859 = vunpack.c.h.b16 %v642
        %v2860 = vunpack.c.l.b16 %v643
        %v2861 = vunpack.c.h.b16 %v643
        %v2862 = vunpack.c.l.b16 %v644
        %v2863 = vunpack.c.h.b16 %v644
        %v2864 = vunpack.c.l.b16 %v645
        %v2865 = vunpack.c.h.b16 %v645
        %v2866 = vunpack.c.l.b16 %v646
        %v2867 = vunpack.c.h.b16 %v646
        %v2868 = vunpack.c.l.b16 %v647
        %v2869 = vunpack.c.h.b16 %v647
        %v2870 = vunpack.c.l.b16 %v648
        %v2871 = vunpack.c.h.b16 %v648
        %v2872 = vunpack.c.l.b16 %v649
        %v2873 = vunpack.c.h.b16 %v649
        %v2874 = vunpack.c.l.b16 %v650
        %v2875 = vunpack.c.h.b16 %v650
        %v2876 = vunpack.c.l.b16 %v651
        %v2877 = vunpack.c.h.b16 %v651
        %v2878 = vunpack.c.l.b16 %v652
        %v2879 = vunpack.c.h.b16 %v652
        %v2880 = vunpack.c.l.b16 %v653
        %v2881 = vunpack.c.h.b16 %v653
        %v2882 = vunpack.c.l.b16 %v654
        %v2883 = vunpack.c.h.b16 %v654
        %v2884 = vunpack.c.l.b16 %v655
        %v2885 = vunpack.c.h.b16 %v655
        %v2886 = vunpack.c.l.b16 %v656
        %v2887 = vunpack.c.h.b16 %v656
        %v2888 = vunpack.c.l.b16 %v657
        %v2889 = vunpack.c.h.b16 %v657
        %v2890 = vunpack.c.l.b16 %v658
        %v2891 = vunpack.c.h.b16 %v658
        %v2892 = vunpack.c.l.b16 %v659
        %v2893 = vunpack.c.h.b16 %v659
        %v2894 = vunpack.c.l.b16 %v660
        %v2895 = vunpack.c.h.b16 %v660
        %v2896 = vunpack.c.l.b16 %v661
        %v2897 = vunpack.c.h.b16 %v661
        %v2898 = vunpack.c.l.b16 %v662
        %v2899 = vunpack.c.h.b16 %v662
        %v2900 = vunpack.c.l.b16 %v663
        %v2901 = vunpack.c.h.b16 %v663
        %v2902 = vunpack.c.l.b16 %v664
        %v2903 = vunpack.c.h.b16 %v664
        %v2904 = vunpack.c.l.b16 %v665
        %v2905 = vunpack.c.h.b16 %v665
        %v2906 = vunpack.c.l.b16 %v666
        %v2907 = vunpack.c.h.b16 %v666
        %v2908 = vunpack.c.l.b16 %v667
        %v2909 = vunpack.c.h.b16 %v667
        %v2910 = vunpack.c.l.b16 %v668
        %v2911 = vunpack.c.h.b16 %v668
        %v2912 = vunpack.c.l.b16 %v669
        %v2913 = vunpack.c.h.b16 %v669
        %v2914 = vunpack.c.l.b16 %v670
        %v2915 = vunpack.c.h.b16 %v670
        %v2916 = vunpack.c.l.b16 %v671
        %v2917 = vunpack.c.h.b16 %v671
        %v2918 = vunpack.c.l.b16 %v672
        %v2919 = vunpack.c.h.b16 %v672
        %v2920 = vunpack.c.l.b16 %v673
        %v2921 = vunpack.c.h.b16 %v673
        %v2922 = vunpack.c.l.b16 %v674
        %v2923 = vunpack.c.h.b16 %v674
        %v2924 = vunpack.c.l.b16 %v675
        %v2925 = vunpack.c.h.b16 %v675
        %v2926 = vunpack.c.l.b16 %v676
        %v2927 = vunpack.c.h.b16 %v676
        %v2928 = vunpack.c.l.b16 %v677
        %v2929 = vunpack.c.h.b16 %v677
        %v2930 = vunpack.c.l.b16 %v678
        %v2931 = vunpack.c.h.b16 %v678
        %v2932 = vunpack.c.l.b16 %v679
        %v2933 = vunpack.c.h.b16 %v679
        %v2934 = vunpack.c.l.b16 %v680
        %v2935 = vunpack.c.h.b16 %v680
        %v2936 = vunpack.c.l.b16 %v681
        %v2937 = vunpack.c.h.b16 %v681
        %v2938 = vunpack.c.l.b16 %v682
        %v2939 = vunpack.c.h.b16 %v682
        %v2940 = vunpack.c.l.b16 %v683
        %v2941 = vunpack.c.h.b16 %v683
        %v2942 = vunpack.c.l.b16 %v684
        %v2943 = vunpack.c.h.b16 %v684
        %v2944 = vunpack.c.l.b16 %v685
        %v2945 = vunpack.c.h.b16 %v685
        %v2946 = vunpack.c.l.b16 %v686
        %v2947 = vunpack.c.h.b16 %v686
        %v2948 = vunpack.c.l.b16 %v687
        %v2949 = vunpack.c.h.b16 %v687
        %v2950 = vunpack.c.l.b16 %v688
        %v2951 = vunpack.c.h.b16 %v688
        %v2952 = vunpack.c.l.b16 %v689
        %v2953 = vunpack.c.h.b16 %v689
        %v2954 = vunpack.c.l.b16 %v690
        %v2955 = vunpack.c.h.b16 %v690
        %v2956 = vunpack.c.l.b16 %v691
        %v2957 = vunpack.c.h.b16 %v691
        %v2958 = vunpack.c.l.b16 %v692
        %v2959 = vunpack.c.h.b16 %v692
        %v2960 = vunpack.c.l.b16 %v693
        %v2961 = vunpack.c.h.b16 %v693
        %v2962 = vunpack.c.l.b16 %v694
        %v2963 = vunpack.c.h.b16 %v694
        %v2964 = vunpack.c.l.b16 %v695
        %v2965 = vunpack.c.h.b16 %v695
        %v2966 = vunpack.c.l.b16 %v696
        %v2967 = vunpack.c.h.b16 %v696
        %v2968 = vunpack.c.l.b16 %v697
        %v2969 = vunpack.c.h.b16 %v697
        %v2970 = vunpack.c.l.b16 %v698
        %v2971 = vunpack.c.h.b16 %v698
        %v2972 = vunpack.c.l.b16 %v699
        %v2973 = vunpack.c.h.b16 %v699
        %v2974 = vunpack.c.l.b16 %v700
        %v2975 = vunpack.c.h.b16 %v700
        %v2976 = vunpack.c.l.b16 %v701
        %v2977 = vunpack.c.h.b16 %v701
        %v2978 = vunpack.c.l.b16 %v702
        %v2979 = vunpack.c.h.b16 %v702
        %v2980 = vunpack.c.l.b16 %v703
        %v2981 = vunpack.c.h.b16 %v703
        %v2982 = vunpack.c.l.b16 %v704
        %v2983 = vunpack.c.h.b16 %v704
        %v2984 = vunpack.c.l.b16 %v705
        %v2985 = vunpack.c.h.b16 %v705
        %v2986 = vunpack.c.l.b16 %v706
        %v2987 = vunpack.c.h.b16 %v706
        %v2988 = vunpack.c.l.b16 %v707
        %v2989 = vunpack.c.h.b16 %v707
        %v2990 = vunpack.c.l.b16 %v708
        %v2991 = vunpack.c.h.b16 %v708
        %v2992 = vunpack.c.l.b16 %v709
        %v2993 = vunpack.c.h.b16 %v709
        %v2994 = vunpack.c.l.b16 %v710
        %v2995 = vunpack.c.h.b16 %v710
        %v2996 = vunpack.c.l.b16 %v711
        %v2997 = vunpack.c.h.b16 %v711
        %v2998 = vunpack.c.l.b16 %v712
        %v2999 = vunpack.c.h.b16 %v712
        %v3000 = vunpack.c.l.b16 %v713
        %v3001 = vunpack.c.h.b16 %v713
        %v3002 = vunpack.c.l.b16 %v714
        %v3003 = vunpack.c.h.b16 %v714
        %v3004 = vunpack.c.l.b16 %v715
        %v3005 = vunpack.c.h.b16 %v715
        %v3006 = vunpack.c.l.b16 %v716
        %v3007 = vunpack.c.h.b16 %v716
        %v3008 = vunpack.c.l.b16 %v717
        %v3009 = vunpack.c.h.b16 %v717
        %v3010 = vunpack.c.l.b16 %v718
        %v3011 = vunpack.c.h.b16 %v718
        %v3012 = vunpack.c.l.b16 %v719
        %v3013 = vunpack.c.h.b16 %v719
        %v3014 = vunpack.c.l.b16 %v720
        %v3015 = vunpack.c.h.b16 %v720
        %v3016 = vunpack.c.l.b16 %v721
        %v3017 = vunpack.c.h.b16 %v721
        %v3018 = vunpack.c.l.b16 %v722
        %v3019 = vunpack.c.h.b16 %v722
        %v3020 = vunpack.c.l.b16 %v723
        %v3021 = vunpack.c.h.b16 %v723
        %v3022 = vunpack.c.l.b16 %v724
        %v3023 = vunpack.c.h.b16 %v724
        %v3024 = vunpack.c.l.b16 %v725
        %v3025 = vunpack.c.h.b16 %v725
        %v3026 = vunpack.c.l.b16 %v726
        %v3027 = vunpack.c.h.b16 %v726
        %v3028 = vunpack.c.l.b16 %v727
        %v3029 = vunpack.c.h.b16 %v727
        %v3030 = vunpack.c.l.b16 %v728
        %v3031 = vunpack.c.h.b16 %v728
        %v3032 = vunpack.c.l.b16 %v729
        %v3033 = vunpack.c.h.b16 %v729
        %v3034 = vunpack.c.l.b16 %v730
        %v3035 = vunpack.c.h.b16 %v730
        %v3036 = vunpack.c.l.b16 %v731
        %v3037 = vunpack.c.h.b16 %v731
        %v3038 = vunpack.c.l.b16 %v732
        %v3039 = vunpack.c.h.b16 %v732
        %v3040 = vunpack.c.l.b16 %v733
        %v3041 = vunpack.c.h.b16 %v733
        %v3042 = vunpack.c.l.b16 %v734
        %v3043 = vunpack.c.h.b16 %v734
        %v3044 = vunpack.c.l.b16 %v735
        %v3045 = vunpack.c.h.b16 %v735
        %v3046 = vunpack.c.l.b16 %v736
        %v3047 = vunpack.c.h.b16 %v736
        %v3048 = vunpack.c.l.b16 %v737
        %v3049 = vunpack.c.h.b16 %v737
        %v3050 = vunpack.c.l.b16 %v738
        %v3051 = vunpack.c.h.b16 %v738
        %v3052 = vunpack.c.l.b16 %v739
        %v3053 = vunpack.c.h.b16 %v739
        %v3054 = vunpack.c.l.b16 %v740
        %v3055 = vunpack.c.h.b16 %v740
        %v3056 = vunpack.c.l.b16 %v741
        %v3057 = vunpack.c.h.b16 %v741
        %v3058 = vunpack.c.l.b16 %v742
        %v3059 = vunpack.c.h.b16 %v742
        %v3060 = vunpack.c.l.b16 %v743
        %v3061 = vunpack.c.h.b16 %v743
        %v3062 = vunpack.c.l.b16 %v744
        %v3063 = vunpack.c.h.b16 %v744
        %v3064 = vunpack.c.l.b16 %v745
        %v3065 = vunpack.c.h.b16 %v745
        %v3066 = vunpack.c.l.b16 %v746
        %v3067 = vunpack.c.h.b16 %v746
        %v3068 = vunpack.c.l.b16 %v747
        %v3069 = vunpack.c.h.b16 %v747
        %v3070 = vunpack.c.l.b16 %v748
        %v3071 = vunpack.c.h.b16 %v748
        %v3072 = vunpack.c.l.b16 %v749
        %v3073 = vunpack.c.h.b16 %v749
        %v3074 = vunpack.c.l.b16 %v750
        %v3075 = vunpack.c.h.b16 %v750
        %v3076 = vunpack.c.l.b16 %v751
        %v3077 = vunpack.c.h.b16 %v751
        %v3078 = vunpack.c.l.b16 %v752
        %v3079 = vunpack.c.h.b16 %v752
        %v3080 = vunpack.c.l.b16 %v753
        %v3081 = vunpack.c.h.b16 %v753
        %v3082 = vunpack.c.l.b16 %v754
        %v3083 = vunpack.c.h.b16 %v754
        %v3084 = vunpack.c.l.b16 %v755
        %v3085 = vunpack.c.h.b16 %v755
        %v3086 = vunpack.c.l.b16 %v756
        %v3087 = vunpack.c.h.b16 %v756
        %v3088 = vunpack.c.l.b16 %v757
        %v3089 = vunpack.c.h.b16 %v757
        %v3090 = vunpack.c.l.b16 %v758
        %v3091 = vunpack.c.h.b16 %v758
        %v3092 = vunpack.c.l.b16 %v759
        %v3093 = vunpack.c.h.b16 %v759
        %v3094 = vunpack.c.l.b16 %v760
        %v3095 = vunpack.c.h.b16 %v760
        %v3096 = vunpack.c.l.b16 %v761
        %v3097 = vunpack.c.h.b16 %v761
        %v3098 = vunpack.c.l.b16 %v762
        %v3099 = vunpack.c.h.b16 %v762
        %v3100 = vunpack.c.l.b16 %v763
        %v3101 = vunpack.c.h.b16 %v763
        %v3102 = vunpack.c.l.b16 %v764
        %v3103 = vunpack.c.h.b16 %v764
        %v3104 = vunpack.c.l.b16 %v765
        %v3105 = vunpack.c.h.b16 %v765
        %v3106 = vunpack.c.l.b16 %v766
        %v3107 = vunpack.c.h.b16 %v766
        %v3108 = vunpack.c.l.b16 %v767
        %v3109 = vunpack.c.h.b16 %v767
        %v3110 = vunpack.c.l.b16 %v768
        %v3111 = vunpack.c.h.b16 %v768
        %v3112 = vunpack.c.l.b16 %v769
        %v3113 = vunpack.c.h.b16 %v769
        %v3114 = vunpack.c.l.b16 %v770
        %v3115 = vunpack.c.h.b16 %v770
        %v3116 = vunpack.c.l.b16 %v771
        %v3117 = vunpack.c.h.b16 %v771
        %v3118 = vunpack.c.l.b16 %v772
        %v3119 = vunpack.c.h.b16 %v772
        %v3120 = vunpack.c.l.b16 %v773
        %v3121 = vunpack.c.h.b16 %v773
        %v3122 = vunpack.c.l.b16 %v774
        %v3123 = vunpack.c.h.b16 %v774
        %v3124 = vunpack.c.l.b16 %v775
        %v3125 = vunpack.c.h.b16 %v775
        %v3126 = vunpack.c.l.b16 %v776
        %v3127 = vunpack.c.h.b16 %v776
        %v3128 = vunpack.c.l.b16 %v777
        %v3129 = vunpack.c.h.b16 %v777
        %v3130 = vunpack.c.l.b16 %v778
        %v3131 = vunpack.c.h.b16 %v778
        %v3132 = vunpack.c.l.b16 %v779
        %v3133 = vunpack.c.h.b16 %v779
        %v3134 = vunpack.c.l.b16 %v780
        %v3135 = vunpack.c.h.b16 %v780
        %v3136 = vunpack.c.l.b16 %v781
        %v3137 = vunpack.c.h.b16 %v781
        %v3138 = vunpack.c.l.b16 %v782
        %v3139 = vunpack.c.h.b16 %v782
        %v3140 = vunpack.c.l.b16 %v783
        %v3141 = vunpack.c.h.b16 %v783
        %v3142 = vunpack.c.l.b16 %v784
        %v3143 = vunpack.c.h.b16 %v784
        %v3144 = vunpack.c.l.b16 %v785
        %v3145 = vunpack.c.h.b16 %v785
        %v3146 = vunpack.c.l.b16 %v786
        %v3147 = vunpack.c.h.b16 %v786
        %v3148 = vunpack.c.l.b16 %v787
        %v3149 = vunpack.c.h.b16 %v787
        %v3150 = vunpack.c.l.b16 %v788
        %v3151 = vunpack.c.h.b16 %v788
        %v3152 = vunpack.c.l.b16 %v789
        %v3153 = vunpack.c.h.b16 %v789
        %v3154 = vunpack.c.l.b16 %v790
        %v3155 = vunpack.c.h.b16 %v790
        %v3156 = vunpack.c.l.b16 %v791
        %v3157 = vunpack.c.h.b16 %v791
        %v3158 = vunpack.c.l.b16 %v792
        %v3159 = vunpack.c.h.b16 %v792
        %v3160 = vunpack.c.l.b16 %v793
        %v3161 = vunpack.c.h.b16 %v793
        %v3162 = vunpack.c.l.b16 %v794
        %v3163 = vunpack.c.h.b16 %v794
        %v3164 = vunpack.c.l.b16 %v795
        %v3165 = vunpack.c.h.b16 %v795
        %v3166 = vunpack.c.l.b16 %v796
        %v3167 = vunpack.c.h.b16 %v796
        %v3168 = vunpack.c.l.b16 %v797
        %v3169 = vunpack.c.h.b16 %v797
        %v3170 = vunpack.c.l.b16 %v798
        %v3171 = vunpack.c.h.b16 %v798
        %v3172 = vunpack.c.l.b16 %v799
        %v3173 = vunpack.c.h.b16 %v799
        %v3174 = vunpack.c.l.b16 %v800
        %v3175 = vunpack.c.h.b16 %v800
        %v3176 = vunpack.c.l.b16 %v801
        %v3177 = vunpack.c.h.b16 %v801
        %v3178 = vunpack.c.l.b16 %v802
        %v3179 = vunpack.c.h.b16 %v802
        %v3180 = vunpack.c.l.b16 %v803
        %v3181 = vunpack.c.h.b16 %v803
        %v3182 = vunpack.c.l.b16 %v804
        %v3183 = vunpack.c.h.b16 %v804
        %v3184 = vunpack.c.l.b16 %v805
        %v3185 = vunpack.c.h.b16 %v805
        %v3186 = vunpack.c.l.b16 %v806
        %v3187 = vunpack.c.h.b16 %v806
        %v3188 = vunpack.c.l.b16 %v807
        %v3189 = vunpack.c.h.b16 %v807
        %v3190 = vunpack.c.l.b16 %v808
        %v3191 = vunpack.c.h.b16 %v808
        %v3192 = vunpack.c.l.b16 %v809
        %v3193 = vunpack.c.h.b16 %v809
        %v3194 = vunpack.c.l.b16 %v810
        %v3195 = vunpack.c.h.b16 %v810
        %v3196 = vunpack.c.l.b16 %v811
        %v3197 = vunpack.c.h.b16 %v811
        %v3198 = vunpack.c.l.b16 %v812
        %v3199 = vunpack.c.h.b16 %v812
        %v3200 = vunpack.c.l.b16 %v813
        %v3201 = vunpack.c.h.b16 %v813
        %v3202 = vunpack.c.l.b16 %v814
        %v3203 = vunpack.c.h.b16 %v814
        %v3204 = vunpack.c.l.b16 %v815
        %v3205 = vunpack.c.h.b16 %v815
        %v3206 = vunpack.c.l.b16 %v816
        %v3207 = vunpack.c.h.b16 %v816
        %v3208 = vunpack.c.l.b16 %v817
        %v3209 = vunpack.c.h.b16 %v817
        %v3210 = vunpack.c.l.b16 %v818
        %v3211 = vunpack.c.h.b16 %v818
        %v3212 = vunpack.c.l.b16 %v819
        %v3213 = vunpack.c.h.b16 %v819
        %v3214 = vunpack.c.l.b16 %v820
        %v3215 = vunpack.c.h.b16 %v820
        %v3216 = vunpack.c.l.b16 %v821
        %v3217 = vunpack.c.h.b16 %v821
        %v3218 = vunpack.c.l.b16 %v822
        %v3219 = vunpack.c.h.b16 %v822
        %v3220 = vunpack.c.l.b16 %v823
        %v3221 = vunpack.c.h.b16 %v823
        %v3222 = vunpack.c.l.b16 %v824
        %v3223 = vunpack.c.h.b16 %v824
        %v3224 = vunpack.c.l.b16 %v825
        %v3225 = vunpack.c.h.b16 %v825
        %v3226 = vunpack.c.l.b16 %v826
        %v3227 = vunpack.c.h.b16 %v826
        %v3228 = vunpack.c.l.b16 %v827
        %v3229 = vunpack.c.h.b16 %v827
        %v3230 = vunpack.c.l.b16 %v828
        %v3231 = vunpack.c.h.b16 %v828
        %v3232 = vunpack.c.l.b16 %v829
        %v3233 = vunpack.c.h.b16 %v829
        %v3234 = vunpack.c.l.b16 %v830
        %v3235 = vunpack.c.h.b16 %v830
        %v3236 = vunpack.c.l.b16 %v831
        %v3237 = vunpack.c.h.b16 %v831
        %v3238 = vunpack.c.l.b16 %v832
        %v3239 = vunpack.c.h.b16 %v832
        %v3240 = vunpack.c.l.b16 %v833
        %v3241 = vunpack.c.h.b16 %v833
        %v3242 = vunpack.c.l.b16 %v834
        %v3243 = vunpack.c.h.b16 %v834
        %v3244 = vunpack.c.l.b16 %v835
        %v3245 = vunpack.c.h.b16 %v835
        %v3246 = vunpack.c.l.b16 %v836
        %v3247 = vunpack.c.h.b16 %v836
        %v3248 = vunpack.c.l.b16 %v837
        %v3249 = vunpack.c.h.b16 %v837
        %v3250 = vunpack.c.l.b16 %v838
        %v3251 = vunpack.c.h.b16 %v838
        %v3252 = vunpack.c.l.b16 %v839
        %v3253 = vunpack.c.h.b16 %v839
        %v3254 = vunpack.c.l.b16 %v840
        %v3255 = vunpack.c.h.b16 %v840
        %v3256 = vunpack.c.l.b16 %v841
        %v3257 = vunpack.c.h.b16 %v841
        %v3258 = vunpack.c.l.b16 %v842
        %v3259 = vunpack.c.h.b16 %v842
        %v3260 = vunpack.c.l.b16 %v843
        %v3261 = vunpack.c.h.b16 %v843
        %v3262 = vunpack.c.l.b16 %v844
        %v3263 = vunpack.c.h.b16 %v844
        %v3264 = vunpack.c.l.b16 %v845
        %v3265 = vunpack.c.h.b16 %v845
        %v3266 = vunpack.c.l.b16 %v846
        %v3267 = vunpack.c.h.b16 %v846
        %v3268 = vunpack.c.l.b16 %v847
        %v3269 = vunpack.c.h.b16 %v847
        %v3270 = vunpack.c.l.b16 %v848
        %v3271 = vunpack.c.h.b16 %v848
        %v3272 = vunpack.c.l.b16 %v849
        %v3273 = vunpack.c.h.b16 %v849
        %v3274 = vunpack.c.l.b16 %v850
        %v3275 = vunpack.c.h.b16 %v850
        %v3276 = vunpack.c.l.b16 %v851
        %v3277 = vunpack.c.h.b16 %v851
        %v3278 = vunpack.c.l.b16 %v852
        %v3279 = vunpack.c.h.b16 %v852
        %v3280 = vunpack.c.l.b16 %v853
        %v3281 = vunpack.c.h.b16 %v853
        %v3282 = vunpack.c.l.b16 %v854
        %v3283 = vunpack.c.h.b16 %v854
        %v3284 = vunpack.c.l.b16 %v855
        %v3285 = vunpack.c.h.b16 %v855
        %v3286 = vunpack.c.l.b16 %v856
        %v3287 = vunpack.c.h.b16 %v856
        %v3288 = vunpack.c.l.b16 %v857
        %v3289 = vunpack.c.h.b16 %v857
        %v3290 = vunpack.c.l.b16 %v858
        %v3291 = vunpack.c.h.b16 %v858
        %v3292 = vunpack.c.l.b16 %v859
        %v3293 = vunpack.c.h.b16 %v859
        %v3294 = vunpack.c.l.b16 %v860
        %v3295 = vunpack.c.h.b16 %v860
        %v3296 = vunpack.c.l.b16 %v861
        %v3297 = vunpack.c.h.b16 %v861
        %v3298 = vunpack.c.l.b16 %v862
        %v3299 = vunpack.c.h.b16 %v862
        %v3300 = vunpack.c.l.b16 %v863
        %v3301 = vunpack.c.h.b16 %v863
        %v3302 = vunpack.c.l.b16 %v864
        %v3303 = vunpack.c.h.b16 %v864
        %v3304 = vunpack.c.l.b16 %v865
        %v3305 = vunpack.c.h.b16 %v865
        %v3306 = vunpack.c.l.b16 %v866
        %v3307 = vunpack.c.h.b16 %v866
        %v3308 = vunpack.c.l.b16 %v867
        %v3309 = vunpack.c.h.b16 %v867
        %v3310 = vunpack.c.l.b16 %v868
        %v3311 = vunpack.c.h.b16 %v868
        %v3312 = vunpack.c.l.b16 %v869
        %v3313 = vunpack.c.h.b16 %v869
        %v3314 = vunpack.c.l.b16 %v870
        %v3315 = vunpack.c.h.b16 %v870
        %v3316 = vunpack.c.l.b16 %v871
        %v3317 = vunpack.c.h.b16 %v871
        %v3318 = vunpack.c.l.b16 %v872
        %v3319 = vunpack.c.h.b16 %v872
        %v3320 = vunpack.c.l.b16 %v873
        %v3321 = vunpack.c.h.b16 %v873
        %v3322 = vunpack.c.l.b16 %v874
        %v3323 = vunpack.c.h.b16 %v874
        %v3324 = vunpack.c.l.b16 %v875
        %v3325 = vunpack.c.h.b16 %v875
        %v3326 = vunpack.c.l.b16 %v876
        %v3327 = vunpack.c.h.b16 %v876
        %v3328 = vunpack.c.l.b16 %v877
        %v3329 = vunpack.c.h.b16 %v877
        %v3330 = vunpack.c.l.b16 %v878
        %v3331 = vunpack.c.h.b16 %v878
        %v3332 = vunpack.c.l.b16 %v879
        %v3333 = vunpack.c.h.b16 %v879
        %v3334 = vunpack.c.l.b16 %v880
        %v3335 = vunpack.c.h.b16 %v880
        %v3336 = vunpack.c.l.b16 %v881
        %v3337 = vunpack.c.h.b16 %v881
        %v3338 = vunpack.c.l.b16 %v882
        %v3339 = vunpack.c.h.b16 %v882
        %v3340 = vunpack.c.l.b16 %v883
        %v3341 = vunpack.c.h.b16 %v883
        %v3342 = vunpack.c.l.b16 %v884
        %v3343 = vunpack.c.h.b16 %v884
        %v3344 = vunpack.c.l.b16 %v885
        %v3345 = vunpack.c.h.b16 %v885
        %v3346 = vunpack.c.l.b16 %v886
        %v3347 = vunpack.c.h.b16 %v886
        %v3348 = vunpack.c.l.b16 %v887
        %v3349 = vunpack.c.h.b16 %v887
        %v3350 = vunpack.c.l.b16 %v888
        %v3351 = vunpack.c.h.b16 %v888
        %v3352 = vunpack.c.l.b16 %v889
        %v3353 = vunpack.c.h.b16 %v889
        %v3354 = vunpack.c.l.b16 %v890
        %v3355 = vunpack.c.h.b16 %v890
        %v3356 = vunpack.c.l.b16 %v891
        %v3357 = vunpack.c.h.b16 %v891
        %v3358 = vunpack.c.l.b16 %v892
        %v3359 = vunpack.c.h.b16 %v892
        %v3360 = vunpack.c.l.b16 %v893
        %v3361 = vunpack.c.h.b16 %v893
        %v3362 = vunpack.c.l.b16 %v894
        %v3363 = vunpack.c.h.b16 %v894
        %v3364 = vunpack.c.l.b16 %v895
        %v3365 = vunpack.c.h.b16 %v895
        %v3366 = vunpack.c.l.b16 %v896
        %v3367 = vunpack.c.h.b16 %v896
        %v3368 = vunpack.c.l.b16 %v897
        %v3369 = vunpack.c.h.b16 %v897
        %v3370 = vunpack.c.l.b16 %v898
        %v3371 = vunpack.c.h.b16 %v898
        %v3372 = vunpack.c.l.b16 %v899
        %v3373 = vunpack.c.h.b16 %v899
        %v3374 = vunpack.c.l.b16 %v900
        %v3375 = vunpack.c.h.b16 %v900
        %v3376 = vunpack.c.l.b16 %v901
        %v3377 = vunpack.c.h.b16 %v901
        %v3378 = vunpack.c.l.b16 %v902
        %v3379 = vunpack.c.h.b16 %v902
        %v3380 = vunpack.c.l.b16 %v903
        %v3381 = vunpack.c.h.b16 %v903
        %v3382 = vunpack.c.l.b16 %v904
        %v3383 = vunpack.c.h.b16 %v904
        %v3384 = vunpack.c.l.b16 %v905
        %v3385 = vunpack.c.h.b16 %v905
        %v3386 = vunpack.c.l.b16 %v906
        %v3387 = vunpack.c.h.b16 %v906
        %v3388 = vunpack.c.l.b16 %v907
        %v3389 = vunpack.c.h.b16 %v907
        %v3390 = vunpack.c.l.b16 %v908
        %v3391 = vunpack.c.h.b16 %v908
        %v3392 = vunpack.c.l.b16 %v909
        %v3393 = vunpack.c.h.b16 %v909
        %v3394 = vunpack.c.l.b16 %v910
        %v3395 = vunpack.c.h.b16 %v910
        %v3396 = vunpack.c.l.b16 %v911
        %v3397 = vunpack.c.h.b16 %v911
        %v3398 = vunpack.c.l.b16 %v912
        %v3399 = vunpack.c.h.b16 %v912
        %v3400 = vunpack.c.l.b16 %v913
        %v3401 = vunpack.c.h.b16 %v913
        %v3402 = vunpack.c.l.b16 %v914
        %v3403 = vunpack.c.h.b16 %v914
        %v3404 = vunpack.c.l.b16 %v915
        %v3405 = vunpack.c.h.b16 %v915
        %v3406 = vunpack.c.l.b16 %v916
        %v3407 = vunpack.c.h.b16 %v916
        %v3408 = vunpack.c.l.b16 %v917
        %v3409 = vunpack.c.h.b16 %v917
        %v3410 = vunpack.c.l.b16 %v918
        %v3411 = vunpack.c.h.b16 %v918
        %v3412 = vunpack.c.l.b16 %v919
        %v3413 = vunpack.c.h.b16 %v919
        %v3414 = vunpack.c.l.b16 %v920
        %v3415 = vunpack.c.h.b16 %v920
        %v3416 = vunpack.c.l.b16 %v921
        %v3417 = vunpack.c.h.b16 %v921
        %v3418 = vunpack.c.l.b16 %v922
        %v3419 = vunpack.c.h.b16 %v922
        %v3420 = vunpack.c.l.b16 %v923
        %v3421 = vunpack.c.h.b16 %v923
        %v3422 = vunpack.c.l.b16 %v924
        %v3423 = vunpack.c.h.b16 %v924
        %v3424 = vunpack.c.l.b16 %v925
        %v3425 = vunpack.c.h.b16 %v925
        %v3426 = vunpack.c.l.b16 %v926
        %v3427 = vunpack.c.h.b16 %v926
        %v3428 = vunpack.c.l.b16 %v927
        %v3429 = vunpack.c.h.b16 %v927
        %v3430 = vunpack.c.l.b16 %v928
        %v3431 = vunpack.c.h.b16 %v928
        %v3432 = vunpack.c.l.b16 %v929
        %v3433 = vunpack.c.h.b16 %v929
        %v3434 = vunpack.c.l.b16 %v930
        %v3435 = vunpack.c.h.b16 %v930
        %v3436 = vunpack.c.l.b16 %v931
        %v3437 = vunpack.c.h.b16 %v931
        %v3438 = vunpack.c.l.b16 %v932
        %v3439 = vunpack.c.h.b16 %v932
        %v3440 = vunpack.c.l.b16 %v933
        %v3441 = vunpack.c.h.b16 %v933
        %v3442 = vunpack.c.l.b16 %v934
        %v3443 = vunpack.c.h.b16 %v934
        %v3444 = vunpack.c.l.b16 %v935
        %v3445 = vunpack.c.h.b16 %v935
        %v3446 = vunpack.c.l.b16 %v936
        %v3447 = vunpack.c.h.b16 %v936
        %v3448 = vunpack.c.l.b16 %v937
        %v3449 = vunpack.c.h.b16 %v937
        %v3450 = vunpack.c.l.b16 %v938
        %v3451 = vunpack.c.h.b16 %v938
        %v3452 = vunpack.c.l.b16 %v939
        %v3453 = vunpack.c.h.b16 %v939
        %v3454 = vunpack.c.l.b16 %v940
        %v3455 = vunpack.c.h.b16 %v940
        %v3456 = vunpack.c.l.b16 %v941
        %v3457 = vunpack.c.h.b16 %v941
        %v3458 = vunpack.c.l.b16 %v942
        %v3459 = vunpack.c.h.b16 %v942
        %v3460 = vunpack.c.l.b16 %v943
        %v3461 = vunpack.c.h.b16 %v943
        %v3462 = vunpack.c.l.b16 %v944
        %v3463 = vunpack.c.h.b16 %v944
        %v3464 = vunpack.c.l.b16 %v945
        %v3465 = vunpack.c.h.b16 %v945
        %v3466 = vunpack.c.l.b16 %v946
        %v3467 = vunpack.c.h.b16 %v946
        %v3468 = vunpack.c.l.b16 %v947
        %v3469 = vunpack.c.h.b16 %v947
        %v3470 = vunpack.c.l.b16 %v948
        %v3471 = vunpack.c.h.b16 %v948
        %v3472 = vunpack.c.l.b16 %v949
        %v3473 = vunpack.c.h.b16 %v949
        %v3474 = vunpack.c.l.b16 %v950
        %v3475 = vunpack.c.h.b16 %v950
        %v3476 = vunpack.c.l.b16 %v951
        %v3477 = vunpack.c.h.b16 %v951
        %v3478 = vunpack.c.l.b16 %v952
        %v3479 = vunpack.c.h.b16 %v952
        %v3480 = vunpack.c.l.b16 %v953
        %v3481 = vunpack.c.h.b16 %v953
        %v3482 = vunpack.c.l.b16 %v954
        %v3483 = vunpack.c.h.b16 %v954
        %v3484 = vunpack.c.l.b16 %v955
        %v3485 = vunpack.c.h.b16 %v955
        %v3486 = vunpack.c.l.b16 %v956
        %v3487 = vunpack.c.h.b16 %v956
        %v3488 = vunpack.c.l.b16 %v957
        %v3489 = vunpack.c.h.b16 %v957
        %v3490 = vunpack.c.l.b16 %v958
        %v3491 = vunpack.c.h.b16 %v958
        %v3492 = vunpack.c.l.b16 %v959
        %v3493 = vunpack.c.h.b16 %v959
        %v3494 = vunpack.c.l.b16 %v960
        %v3495 = vunpack.c.h.b16 %v960
        %v3496 = vunpack.c.l.b16 %v961
        %v3497 = vunpack.c.h.b16 %v961
        %v3498 = vunpack.c.l.b16 %v962
        %v3499 = vunpack.c.h.b16 %v962
        %v3500 = vunpack.c.l.b16 %v963
        %v3501 = vunpack.c.h.b16 %v963
        %v3502 = vunpack.c.l.b16 %v964
        %v3503 = vunpack.c.h.b16 %v964
        %v3504 = vunpack.c.l.b16 %v965
        %v3505 = vunpack.c.h.b16 %v965
        %v3506 = vunpack.c.l.b16 %v966
        %v3507 = vunpack.c.h.b16 %v966
        %v3508 = vunpack.c.l.b16 %v967
        %v3509 = vunpack.c.h.b16 %v967
        %v3510 = vunpack.c.l.b16 %v968
        %v3511 = vunpack.c.h.b16 %v968
        %v3512 = vunpack.c.l.b16 %v969
        %v3513 = vunpack.c.h.b16 %v969
        %v3514 = vunpack.c.l.b16 %v970
        %v3515 = vunpack.c.h.b16 %v970
        %v3516 = vunpack.c.l.b16 %v971
        %v3517 = vunpack.c.h.b16 %v971
        %v3518 = vunpack.c.l.b16 %v972
        %v3519 = vunpack.c.h.b16 %v972
        %v3520 = vunpack.c.l.b16 %v973
        %v3521 = vunpack.c.h.b16 %v973
        %v3522 = vunpack.c.l.b16 %v974
        %v3523 = vunpack.c.h.b16 %v974
        %v3524 = vunpack.c.l.b16 %v975
        %v3525 = vunpack.c.h.b16 %v975
        %v3526 = vunpack.c.l.b16 %v976
        %v3527 = vunpack.c.h.b16 %v976
        %v3528 = vunpack.c.l.b16 %v977
        %v3529 = vunpack.c.h.b16 %v977
        %v3530 = vunpack.c.l.b16 %v978
        %v3531 = vunpack.c.h.b16 %v978
        %v3532 = vunpack.c.l.b16 %v979
        %v3533 = vunpack.c.h.b16 %v979
        %v3534 = vunpack.c.l.b16 %v980
        %v3535 = vunpack.c.h.b16 %v980
        %v3536 = vunpack.c.l.b16 %v981
        %v3537 = vunpack.c.h.b16 %v981
        %v3538 = vunpack.c.l.b16 %v982
        %v3539 = vunpack.c.h.b16 %v982
        %v3540 = vunpack.c.l.b16 %v983
        %v3541 = vunpack.c.h.b16 %v983
        %v3542 = vunpack.c.l.b16 %v984
        %v3543 = vunpack.c.h.b16 %v984
        %v3544 = vunpack.c.l.b16 %v985
        %v3545 = vunpack.c.h.b16 %v985
        %v3546 = vunpack.c.l.b16 %v986
        %v3547 = vunpack.c.h.b16 %v986
        %v3548 = vunpack.c.l.b16 %v987
        %v3549 = vunpack.c.h.b16 %v987
        %v3550 = vunpack.c.l.b16 %v988
        %v3551 = vunpack.c.h.b16 %v988
        %v3552 = vunpack.c.l.b16 %v989
        %v3553 = vunpack.c.h.b16 %v989
        %v3554 = vunpack.c.l.b16 %v990
        %v3555 = vunpack.c.h.b16 %v990
        %v3556 = vunpack.c.l.b16 %v991
        %v3557 = vunpack.c.h.b16 %v991
        %v3558 = vunpack.c.l.b16 %v992
        %v3559 = vunpack.c.h.b16 %v992
        %v3560 = vunpack.c.l.b16 %v993
        %v3561 = vunpack.c.h.b16 %v993
        %v3562 = vunpack.c.l.b16 %v994
        %v3563 = vunpack.c.h.b16 %v994
        %v3564 = vunpack.c.l.b16 %v995
        %v3565 = vunpack.c.h.b16 %v995
        %v3566 = vunpack.c.l.b16 %v996
        %v3567 = vunpack.c.h.b16 %v996
        %v3568 = vunpack.c.l.b16 %v997
        %v3569 = vunpack.c.h.b16 %v997
        %v3570 = vunpack.c.l.b16 %v998
        %v3571 = vunpack.c.h.b16 %v998
        %v3572 = vunpack.c.l.b16 %v999
        %v3573 = vunpack.c.h.b16 %v999
        %v3574 = vunpack.c.l.b16 %v1000
        %v3575 = vunpack.c.h.b16 %v1000
        %v3576 = vunpack.c.l.b16 %v1001
        %v3577 = vunpack.c.h.b16 %v1001
        %v3578 = vunpack.c.l.b16 %v1002
        %v3579 = vunpack.c.h.b16 %v1002
        %v3580 = vunpack.c.l.b16 %v1003
        %v3581 = vunpack.c.h.b16 %v1003
        %v3582 = vunpack.c.l.b16 %v1004
        %v3583 = vunpack.c.h.b16 %v1004
        %v3584 = vunpack.c.l.b16 %v1005
        %v3585 = vunpack.c.h.b16 %v1005
        %v3586 = vunpack.c.l.b16 %v1006
        %v3587 = vunpack.c.h.b16 %v1006
        %v3588 = vunpack.c.l.b16 %v1007
        %v3589 = vunpack.c.h.b16 %v1007
        %v3590 = vunpack.c.l.b16 %v1008
        %v3591 = vunpack.c.h.b16 %v1008
        %v3592 = vunpack.c.l.b16 %v1009
        %v3593 = vunpack.c.h.b16 %v1009
        %v3594 = vunpack.c.l.b16 %v1010
        %v3595 = vunpack.c.h.b16 %v1010
        %v3596 = vunpack.c.l.b16 %v1011
        %v3597 = vunpack.c.h.b16 %v1011
        %v3598 = vunpack.c.l.b16 %v1012
        %v3599 = vunpack.c.h.b16 %v1012
        %v3600 = vunpack.c.l.b16 %v1013
        %v3601 = vunpack.c.h.b16 %v1013
        %v3602 = vunpack.c.l.b16 %v1014
        %v3603 = vunpack.c.h.b16 %v1014
        %v3604 = vunpack.c.l.b16 %v1015
        %v3605 = vunpack.c.h.b16 %v1015
        %v3606 = vunpack.c.l.b16 %v1016
        %v3607 = vunpack.c.h.b16 %v1016
        %v3608 = vunpack.c.l.b16 %v1017
        %v3609 = vunpack.c.h.b16 %v1017
        %v3610 = vunpack.c.l.b16 %v1018
        %v3611 = vunpack.c.h.b16 %v1018
        %v3612 = vunpack.c.l.b16 %v1019
        %v3613 = vunpack.c.h.b16 %v1019
        %v3614 = vunpack.c.l.b16 %v1020
        %v3615 = vunpack.c.h.b16 %v1020
        %v3616 = vunpack.c.l.b16 %v1021
        %v3617 = vunpack.c.h.b16 %v1021
        %v3618 = vunpack.c.l.b16 %v1022
        %v3619 = vunpack.c.h.b16 %v1022
        %v3620 = vunpack.c.l.b16 %v1023
        %v3621 = vunpack.c.h.b16 %v1023
        %v3622 = vunpack.c.l.b16 %v1024
        %v3623 = vunpack.c.h.b16 %v1024
        %v3624 = vunpack.c.l.b16 %v1025
        %v3625 = vunpack.c.h.b16 %v1025
        %v3626 = vunpack.c.l.b16 %v1026
        %v3627 = vunpack.c.h.b16 %v1026
        %v3628 = vunpack.c.l.b16 %v1027
        %v3629 = vunpack.c.h.b16 %v1027
        %v3630 = vunpack.c.l.b16 %v1028
        %v3631 = vunpack.c.h.b16 %v1028
        %v3632 = vunpack.c.l.b16 %v1029
        %v3633 = vunpack.c.h.b16 %v1029
        %v3634 = vunpack.c.l.b16 %v1030
        %v3635 = vunpack.c.h.b16 %v1030
        %v3636 = vunpack.c.l.b16 %v1031
        %v3637 = vunpack.c.h.b16 %v1031
        %v3638 = vunpack.c.l.b16 %v1032
        %v3639 = vunpack.c.h.b16 %v1032
        %v3640 = vunpack.c.l.b16 %v1033
        %v3641 = vunpack.c.h.b16 %v1033
        %v3642 = vunpack.c.l.b16 %v1034
        %v3643 = vunpack.c.h.b16 %v1034
        %v3644 = vunpack.c.l.b16 %v1035
        %v3645 = vunpack.c.h.b16 %v1035
        %v3646 = vunpack.c.l.b16 %v1036
        %v3647 = vunpack.c.h.b16 %v1036
        %v3648 = vunpack.c.l.b16 %v1037
        %v3649 = vunpack.c.h.b16 %v1037
        %v3650 = vunpack.c.l.b16 %v1038
        %v3651 = vunpack.c.h.b16 %v1038
        %v3652 = vunpack.c.l.b16 %v1039
        %v3653 = vunpack.c.h.b16 %v1039
        %v3654 = vunpack.c.l.b16 %v1040
        %v3655 = vunpack.c.h.b16 %v1040
        %v3656 = vunpack.c.l.b16 %v1041
        %v3657 = vunpack.c.h.b16 %v1041
        %v3658 = vunpack.c.l.b16 %v1042
        %v3659 = vunpack.c.h.b16 %v1042
        %v3660 = vunpack.c.l.b16 %v1043
        %v3661 = vunpack.c.h.b16 %v1043
        %v3662 = vunpack.c.l.b16 %v1044
        %v3663 = vunpack.c.h.b16 %v1044
        %v3664 = vunpack.c.l.b16 %v1045
        %v3665 = vunpack.c.h.b16 %v1045
        %v3666 = vunpack.c.l.b16 %v1046
        %v3667 = vunpack.c.h.b16 %v1046
        %v3668 = vunpack.c.l.b16 %v1047
        %v3669 = vunpack.c.h.b16 %v1047
        %v3670 = vunpack.c.l.b16 %v1048
        %v3671 = vunpack.c.h.b16 %v1048
        %v3672 = vunpack.c.l.b16 %v1049
        %v3673 = vunpack.c.h.b16 %v1049
        %v3674 = vunpack.c.l.b16 %v1050
        %v3675 = vunpack.c.h.b16 %v1050
        %v3676 = vunpack.c.l.b16 %v1051
        %v3677 = vunpack.c.h.b16 %v1051
        %v3678 = vunpack.c.l.b16 %v1052
        %v3679 = vunpack.c.h.b16 %v1052
        %v3680 = vunpack.c.l.b16 %v1053
        %v3681 = vunpack.c.h.b16 %v1053
        %v3682 = vunpack.c.l.b16 %v1054
        %v3683 = vunpack.c.h.b16 %v1054
        %v3684 = vunpack.c.l.b16 %v1055
        %v3685 = vunpack.c.h.b16 %v1055
        %v3686 = vunpack.c.l.b16 %v1056
        %v3687 = vunpack.c.h.b16 %v1056
        %v3688 = vunpack.c.l.b16 %v1057
        %v3689 = vunpack.c.h.b16 %v1057
        %v3690 = vunpack.c.l.b16 %v1058
        %v3691 = vunpack.c.h.b16 %v1058
        %v3692 = vunpack.c.l.b16 %v1059
        %v3693 = vunpack.c.h.b16 %v1059
        %v3694 = vunpack.c.l.b16 %v1060
        %v3695 = vunpack.c.h.b16 %v1060
        %v3696 = vunpack.c.l.b16 %v1061
        %v3697 = vunpack.c.h.b16 %v1061
        %v3698 = vunpack.c.l.b16 %v1062
        %v3699 = vunpack.c.h.b16 %v1062
        %v3700 = vunpack.c.l.b16 %v1063
        %v3701 = vunpack.c.h.b16 %v1063
        %v3702 = vunpack.c.l.b16 %v1064
        %v3703 = vunpack.c.h.b16 %v1064
        %v3704 = vunpack.c.l.b16 %v1065
        %v3705 = vunpack.c.h.b16 %v1065
        %v3706 = vunpack.c.l.b16 %v1066
        %v3707 = vunpack.c.h.b16 %v1066
        %v3708 = vunpack.c.l.b16 %v1067
        %v3709 = vunpack.c.h.b16 %v1067
        %v3710 = vunpack.c.l.b16 %v1068
        %v3711 = vunpack.c.h.b16 %v1068
        %v3712 = vunpack.c.l.b16 %v1069
        %v3713 = vunpack.c.h.b16 %v1069
        %v3714 = vunpack.c.l.b16 %v1070
        %v3715 = vunpack.c.h.b16 %v1070
        %v3716 = vunpack.c.l.b16 %v1071
        %v3717 = vunpack.c.h.b16 %v1071
        %v3718 = vunpack.c.l.b16 %v1072
        %v3719 = vunpack.c.h.b16 %v1072
        %v3720 = vunpack.c.l.b16 %v1073
        %v3721 = vunpack.c.h.b16 %v1073
        %v3722 = vunpack.c.l.b16 %v1074
        %v3723 = vunpack.c.h.b16 %v1074
        %v3724 = vunpack.c.l.b16 %v1075
        %v3725 = vunpack.c.h.b16 %v1075
        %v3726 = vunpack.c.l.b16 %v1076
        %v3727 = vunpack.c.h.b16 %v1076
        %v3728 = vunpack.c.l.b16 %v1077
        %v3729 = vunpack.c.h.b16 %v1077
        %v3730 = vunpack.c.l.b16 %v1078
        %v3731 = vunpack.c.h.b16 %v1078
        %v3732 = vunpack.c.l.b16 %v1079
        %v3733 = vunpack.c.h.b16 %v1079
        %v3734 = vunpack.c.l.b16 %v1080
        %v3735 = vunpack.c.h.b16 %v1080
        %v3736 = vunpack.c.l.b16 %v1081
        %v3737 = vunpack.c.h.b16 %v1081
        %v3738 = vunpack.c.l.b16 %v1082
        %v3739 = vunpack.c.h.b16 %v1082
        %v3740 = vunpack.c.l.b16 %v1083
        %v3741 = vunpack.c.h.b16 %v1083
        %v3742 = vunpack.c.l.b16 %v1084
        %v3743 = vunpack.c.h.b16 %v1084
        %v3744 = vunpack.c.l.b16 %v1085
        %v3745 = vunpack.c.h.b16 %v1085
        %v3746 = vunpack.c.l.b16 %v1086
        %v3747 = vunpack.c.h.b16 %v1086
        %v3748 = vunpack.c.l.b16 %v1087
        %v3749 = vunpack.c.h.b16 %v1087
        %v3750 = vunpack.c.l.b16 %v1088
        %v3751 = vunpack.c.h.b16 %v1088
        %v3752 = vunpack.c.l.b16 %v1089
        %v3753 = vunpack.c.h.b16 %v1089
        %v3754 = vunpack.c.l.b16 %v1090
        %v3755 = vunpack.c.h.b16 %v1090
        %v3756 = vunpack.c.l.b16 %v1091
        %v3757 = vunpack.c.h.b16 %v1091
        %v3758 = vunpack.c.l.b16 %v1092
        %v3759 = vunpack.c.h.b16 %v1092
        %v3760 = vunpack.c.l.b16 %v1093
        %v3761 = vunpack.c.h.b16 %v1093
        %v3762 = vunpack.c.l.b16 %v1094
        %v3763 = vunpack.c.h.b16 %v1094
        %v3764 = vunpack.c.l.b16 %v1095
        %v3765 = vunpack.c.h.b16 %v1095
        %v3766 = vunpack.c.l.b16 %v1096
        %v3767 = vunpack.c.h.b16 %v1096
        %v3768 = vunpack.c.l.b16 %v1097
        %v3769 = vunpack.c.h.b16 %v1097
        %v3770 = vunpack.c.l.b16 %v1098
        %v3771 = vunpack.c.h.b16 %v1098
        %v3772 = vunpack.c.l.b16 %v1099
        %v3773 = vunpack.c.h.b16 %v1099
        %v3774 = vunpack.c.l.b16 %v1100
        %v3775 = vunpack.c.h.b16 %v1100
        %v3776 = vunpack.c.l.b16 %v1101
        %v3777 = vunpack.c.h.b16 %v1101
        %v3778 = vunpack.c.l.b16 %v1102
        %v3779 = vunpack.c.h.b16 %v1102
        %v3780 = vunpack.c.l.b16 %v1103
        %v3781 = vunpack.c.h.b16 %v1103
        %v3782 = vunpack.c.l.b16 %v1104
        %v3783 = vunpack.c.h.b16 %v1104
        %v3784 = vunpack.c.l.b16 %v1105
        %v3785 = vunpack.c.h.b16 %v1105
        %v3786 = vunpack.c.l.b16 %v1106
        %v3787 = vunpack.c.h.b16 %v1106
        %v3788 = vunpack.c.l.b16 %v1107
        %v3789 = vunpack.c.h.b16 %v1107
        %v3790 = vunpack.c.l.b16 %v1108
        %v3791 = vunpack.c.h.b16 %v1108
        %v3792 = vunpack.c.l.b16 %v1109
        %v3793 = vunpack.c.h.b16 %v1109
        %v3794 = vunpack.c.l.b16 %v1110
        %v3795 = vunpack.c.h.b16 %v1110
        %v3796 = vunpack.c.l.b16 %v1111
        %v3797 = vunpack.c.h.b16 %v1111
        %v3798 = vunpack.c.l.b16 %v1112
        %v3799 = vunpack.c.h.b16 %v1112
        %v3800 = vunpack.c.l.b16 %v1113
        %v3801 = vunpack.c.h.b16 %v1113
        %v3802 = vunpack.c.l.b16 %v1114
        %v3803 = vunpack.c.h.b16 %v1114
        %v3804 = vunpack.c.l.b16 %v1115
        %v3805 = vunpack.c.h.b16 %v1115
        %v3806 = vunpack.c.l.b16 %v1116
        %v3807 = vunpack.c.h.b16 %v1116
        %v3808 = vunpack.c.l.b16 %v1117
        %v3809 = vunpack.c.h.b16 %v1117
        %v3810 = vunpack.c.l.b16 %v1118
        %v3811 = vunpack.c.h.b16 %v1118
        %v3812 = vunpack.c.l.b16 %v1119
        %v3813 = vunpack.c.h.b16 %v1119
        %v3814 = vunpack.c.l.b16 %v1120
        %v3815 = vunpack.c.h.b16 %v1120
        %v3816 = vunpack.c.l.b16 %v1121
        %v3817 = vunpack.c.h.b16 %v1121
        %v3818 = vunpack.c.l.b16 %v1122
        %v3819 = vunpack.c.h.b16 %v1122
        %v3820 = vunpack.c.l.b16 %v1123
        %v3821 = vunpack.c.h.b16 %v1123
        %v3822 = vunpack.c.l.b16 %v1124
        %v3823 = vunpack.c.h.b16 %v1124
        %v3824 = vunpack.c.l.b16 %v1125
        %v3825 = vunpack.c.h.b16 %v1125
        %v3826 = vunpack.c.l.b16 %v1126
        %v3827 = vunpack.c.h.b16 %v1126
        %v3828 = vunpack.c.l.b16 %v1127
        %v3829 = vunpack.c.h.b16 %v1127
        %v3830 = vunpack.c.l.b16 %v1128
        %v3831 = vunpack.c.h.b16 %v1128
        %v3832 = vunpack.c.l.b16 %v1129
        %v3833 = vunpack.c.h.b16 %v1129
        %v3834 = vunpack.c.l.b16 %v1130
        %v3835 = vunpack.c.h.b16 %v1130
        %v3836 = vunpack.c.l.b16 %v1131
        %v3837 = vunpack.c.h.b16 %v1131
        %v3838 = vunpack.c.l.b16 %v1132
        %v3839 = vunpack.c.h.b16 %v1132
        %v3840 = vunpack.c.l.b16 %v1133
        %v3841 = vunpack.c.h.b16 %v1133
        %v3842 = vunpack.c.l.b16 %v1134
        %v3843 = vunpack.c.h.b16 %v1134
        %v3844 = vunpack.c.l.b16 %v1135
        %v3845 = vunpack.c.h.b16 %v1135
        %v3846 = vunpack.c.l.b16 %v1136
        %v3847 = vunpack.c.h.b16 %v1136
        %v3848 = vunpack.c.l.b16 %v1137
        %v3849 = vunpack.c.h.b16 %v1137
        %v3850 = vunpack.c.l.b16 %v1138
        %v3851 = vunpack.c.h.b16 %v1138
        %v3852 = vunpack.c.l.b16 %v1139
        %v3853 = vunpack.c.h.b16 %v1139
        %v3854 = vunpack.c.l.b16 %v1140
        %v3855 = vunpack.c.h.b16 %v1140
        %v3856 = vunpack.c.l.b16 %v1141
        %v3857 = vunpack.c.h.b16 %v1141
        %v3858 = vunpack.c.l.b16 %v1142
        %v3859 = vunpack.c.h.b16 %v1142
        %v3860 = vunpack.c.l.b16 %v1143
        %v3861 = vunpack.c.h.b16 %v1143
        %v3862 = vunpack.c.l.b16 %v1144
        %v3863 = vunpack.c.h.b16 %v1144
        %v3864 = vunpack.c.l.b16 %v1145
        %v3865 = vunpack.c.h.b16 %v1145
        %v3866 = vunpack.c.l.b16 %v1146
        %v3867 = vunpack.c.h.b16 %v1146
        %v3868 = vunpack.c.l.b16 %v1147
        %v3869 = vunpack.c.h.b16 %v1147
        %v3870 = vunpack.c.l.b16 %v1148
        %v3871 = vunpack.c.h.b16 %v1148
        %v3872 = vunpack.c.l.b16 %v1149
        %v3873 = vunpack.c.h.b16 %v1149
        %v3874 = vunpack.c.l.b16 %v1150
        %v3875 = vunpack.c.h.b16 %v1150
        %v3876 = vunpack.c.l.b16 %v1151
        %v3877 = vunpack.c.h.b16 %v1151
        %v3878 = vunpack.c.l.b16 %v1152
        %v3879 = vunpack.c.h.b16 %v1152
        %v3880 = vunpack.c.l.b16 %v1153
        %v3881 = vunpack.c.h.b16 %v1153
        %v3882 = vunpack.c.l.b16 %v1154
        %v3883 = vunpack.c.h.b16 %v1154
        %v3884 = vunpack.c.l.b16 %v1155
        %v3885 = vunpack.c.h.b16 %v1155
        %v3886 = vunpack.c.l.b16 %v1156
        %v3887 = vunpack.c.h.b16 %v1156
        %v3888 = vunpack.c.l.b16 %v1157
        %v3889 = vunpack.c.h.b16 %v1157
        %v3890 = vunpack.c.l.b16 %v1158
        %v3891 = vunpack.c.h.b16 %v1158
        %v3892 = vunpack.c.l.b16 %v1159
        %v3893 = vunpack.c.h.b16 %v1159
        %v3894 = vunpack.c.l.b16 %v1160
        %v3895 = vunpack.c.h.b16 %v1160
        %v3896 = vunpack.c.l.b16 %v1161
        %v3897 = vunpack.c.h.b16 %v1161
        %v3898 = vunpack.c.l.b16 %v1162
        %v3899 = vunpack.c.h.b16 %v1162
        %v3900 = vunpack.c.l.b16 %v1163
        %v3901 = vunpack.c.h.b16 %v1163
        %v3902 = vunpack.c.l.b16 %v1164
        %v3903 = vunpack.c.h.b16 %v1164
        %v3904 = vunpack.c.l.b16 %v1165
        %v3905 = vunpack.c.h.b16 %v1165
        %v3906 = vunpack.c.l.b16 %v1166
        %v3907 = vunpack.c.h.b16 %v1166
        %v3908 = vunpack.c.l.b16 %v1167
        %v3909 = vunpack.c.h.b16 %v1167
        %v3910 = vunpack.c.l.b16 %v1168
        %v3911 = vunpack.c.h.b16 %v1168
        %v3912 = vunpack.c.l.b16 %v1169
        %v3913 = vunpack.c.h.b16 %v1169
        %v3914 = vunpack.c.l.b16 %v1170
        %v3915 = vunpack.c.h.b16 %v1170
        %v3916 = vunpack.c.l.b16 %v1171
        %v3917 = vunpack.c.h.b16 %v1171
        %v3918 = vunpack.c.l.b16 %v1172
        %v3919 = vunpack.c.h.b16 %v1172
        %v3920 = vunpack.c.l.b16 %v1173
        %v3921 = vunpack.c.h.b16 %v1173
        %v3922 = vunpack.c.l.b16 %v1174
        %v3923 = vunpack.c.h.b16 %v1174
        %v3924 = vunpack.c.l.b16 %v1175
        %v3925 = vunpack.c.h.b16 %v1175
        %v3926 = vunpack.c.l.b16 %v1176
        %v3927 = vunpack.c.h.b16 %v1176
        %v3928 = vunpack.c.l.b16 %v1177
        %v3929 = vunpack.c.h.b16 %v1177
        %v3930 = vunpack.c.l.b16 %v1178
        %v3931 = vunpack.c.h.b16 %v1178
        %v3932 = vunpack.c.l.b16 %v1179
        %v3933 = vunpack.c.h.b16 %v1179
        %v3934 = vunpack.c.l.b16 %v1180
        %v3935 = vunpack.c.h.b16 %v1180
        %v3936 = vunpack.c.l.b16 %v1181
        %v3937 = vunpack.c.h.b16 %v1181
        %v3938 = vunpack.c.l.b16 %v1182
        %v3939 = vunpack.c.h.b16 %v1182
        %v3940 = vunpack.c.l.b16 %v1183
        %v3941 = vunpack.c.h.b16 %v1183
        %v3942 = vunpack.c.l.b16 %v1184
        %v3943 = vunpack.c.h.b16 %v1184
        %v3944 = vunpack.c.l.b16 %v1185
        %v3945 = vunpack.c.h.b16 %v1185
        %v3946 = vunpack.c.l.b16 %v1186
        %v3947 = vunpack.c.h.b16 %v1186
        %v3948 = vunpack.c.l.b16 %v1187
        %v3949 = vunpack.c.h.b16 %v1187
        %v3950 = vunpack.c.l.b16 %v1188
        %v3951 = vunpack.c.h.b16 %v1188
        %v3952 = vunpack.c.l.b16 %v1189
        %v3953 = vunpack.c.h.b16 %v1189
        %v3954 = vunpack.c.l.b16 %v1190
        %v3955 = vunpack.c.h.b16 %v1190
        %v3956 = vunpack.c.l.b16 %v1191
        %v3957 = vunpack.c.h.b16 %v1191
        %v3958 = vunpack.c.l.b16 %v1192
        %v3959 = vunpack.c.h.b16 %v1192
        %v3960 = vunpack.c.l.b16 %v1193
        %v3961 = vunpack.c.h.b16 %v1193
        %v3962 = vunpack.c.l.b16 %v1194
        %v3963 = vunpack.c.h.b16 %v1194
        %v3964 = vunpack.c.l.b16 %v1195
        %v3965 = vunpack.c.h.b16 %v1195
        %v3966 = vunpack.c.l.b16 %v1196
        %v3967 = vunpack.c.h.b16 %v1196
        %v3968 = vunpack.c.l.b16 %v1197
        %v3969 = vunpack.c.h.b16 %v1197
        %v3970 = vunpack.c.l.b16 %v1198
        %v3971 = vunpack.c.h.b16 %v1198
        %v3972 = vunpack.c.l.b16 %v1199
        %v3973 = vunpack.c.h.b16 %v1199
        %v3974 = vunpack.c.l.b16 %v1200
        %v3975 = vunpack.c.h.b16 %v1200
        %v3976 = vunpack.c.l.b16 %v1201
        %v3977 = vunpack.c.h.b16 %v1201
        %v3978 = vunpack.c.l.b16 %v1202
        %v3979 = vunpack.c.h.b16 %v1202
        %v3980 = vunpack.c.l.b16 %v1203
        %v3981 = vunpack.c.h.b16 %v1203
        %v3982 = vunpack.c.l.b16 %v1204
        %v3983 = vunpack.c.h.b16 %v1204
        %v3984 = vunpack.c.l.b16 %v1205
        %v3985 = vunpack.c.h.b16 %v1205
        %v3986 = vunpack.c.l.b16 %v1206
        %v3987 = vunpack.c.h.b16 %v1206
        %v3988 = vunpack.c.l.b16 %v1207
        %v3989 = vunpack.c.h.b16 %v1207
        %v3990 = vunpack.c.l.b16 %v1208
        %v3991 = vunpack.c.h.b16 %v1208
        %v3992 = vunpack.c.l.b16 %v1209
        %v3993 = vunpack.c.h.b16 %v1209
        %v3994 = vunpack.c.l.b16 %v1210
        %v3995 = vunpack.c.h.b16 %v1210
        %v3996 = vunpack.c.l.b16 %v1211
        %v3997 = vunpack.c.h.b16 %v1211
        %v3998 = vunpack.c.l.b16 %v1212
        %v3999 = vunpack.c.h.b16 %v1212
        %v4000 = vunpack.c.l.b16 %v1213
        %v4001 = vunpack.c.h.b16 %v1213
        %v4002 = vunpack.c.l.b16 %v1214
        %v4003 = vunpack.c.h.b16 %v1214
        %v4004 = vunpack.c.l.b16 %v1215
        %v4005 = vunpack.c.h.b16 %v1215
        %v4006 = vunpack.c.l.b16 %v1216
        %v4007 = vunpack.c.h.b16 %v1216
        %v4008 = vunpack.c.l.b16 %v1217
        %v4009 = vunpack.c.h.b16 %v1217
        %v4010 = vunpack.c.l.b16 %v1218
        %v4011 = vunpack.c.h.b16 %v1218
        %v4012 = vunpack.c.l.b16 %v1219
        %v4013 = vunpack.c.h.b16 %v1219
        %v4014 = vunpack.c.l.b16 %v1220
        %v4015 = vunpack.c.h.b16 %v1220
        %v4016 = vunpack.c.l.b16 %v1221
        %v4017 = vunpack.c.h.b16 %v1221
        %v4018 = vunpack.c.l.b16 %v1222
        %v4019 = vunpack.c.h.b16 %v1222
        %v4020 = vunpack.c.l.b16 %v1223
        %v4021 = vunpack.c.h.b16 %v1223
        %v4022 = vunpack.c.l.b16 %v1224
        %v4023 = vunpack.c.h.b16 %v1224
        %v4024 = vunpack.c.l.b16 %v1225
        %v4025 = vunpack.c.h.b16 %v1225
        %v4026 = vunpack.c.l.b16 %v1226
        %v4027 = vunpack.c.h.b16 %v1226
        %v4028 = vunpack.c.l.b16 %v1227
        %v4029 = vunpack.c.h.b16 %v1227
        %v4030 = vunpack.c.l.b16 %v1228
        %v4031 = vunpack.c.h.b16 %v1228
        %v4032 = vunpack.c.l.b16 %v1229
        %v4033 = vunpack.c.h.b16 %v1229
        %v4034 = vunpack.c.l.b16 %v1230
        %v4035 = vunpack.c.h.b16 %v1230
        %v4036 = vunpack.c.l.b16 %v1231
        %v4037 = vunpack.c.h.b16 %v1231
        %v4038 = vunpack.c.l.b16 %v1232
        %v4039 = vunpack.c.h.b16 %v1232
        %v4040 = vunpack.c.l.b16 %v1233
        %v4041 = vunpack.c.h.b16 %v1233
        %v4042 = vunpack.c.l.b16 %v1234
        %v4043 = vunpack.c.h.b16 %v1234
        %v4044 = vunpack.c.l.b16 %v1235
        %v4045 = vunpack.c.h.b16 %v1235
        %v4046 = vunpack.c.l.b16 %v1236
        %v4047 = vunpack.c.h.b16 %v1236
        %v4048 = vunpack.c.l.b16 %v1237
        %v4049 = vunpack.c.h.b16 %v1237
        %v4050 = vunpack.c.l.b16 %v1238
        %v4051 = vunpack.c.h.b16 %v1238
        %v4052 = vunpack.c.l.b16 %v1239
        %v4053 = vunpack.c.h.b16 %v1239
        %v4054 = vunpack.c.l.b16 %v1240
        %v4055 = vunpack.c.h.b16 %v1240
        %v4056 = vunpack.c.l.b16 %v1241
        %v4057 = vunpack.c.h.b16 %v1241
        %v4058 = vunpack.c.l.b16 %v1242
        %v4059 = vunpack.c.h.b16 %v1242
        %v4060 = vunpack.c.l.b16 %v1243
        %v4061 = vunpack.c.h.b16 %v1243
        %v4062 = vunpack.c.l.b16 %v1244
        %v4063 = vunpack.c.h.b16 %v1244
        %v4064 = vunpack.c.l.b16 %v1245
        %v4065 = vunpack.c.h.b16 %v1245
        %v4066 = vunpack.c.l.b16 %v1246
        %v4067 = vunpack.c.h.b16 %v1246
        %v4068 = vunpack.c.l.b16 %v1247
        %v4069 = vunpack.c.h.b16 %v1247
        %v4070 = vunpack.c.l.b16 %v1248
        %v4071 = vunpack.c.h.b16 %v1248
        %v4072 = vunpack.c.l.b16 %v1249
        %v4073 = vunpack.c.h.b16 %v1249
        %v4074 = vunpack.c.l.b16 %v1250
        %v4075 = vunpack.c.h.b16 %v1250
        %v4076 = vunpack.c.l.b16 %v1251
        %v4077 = vunpack.c.h.b16 %v1251
        %v4078 = vunpack.c.l.b16 %v1252
        %v4079 = vunpack.c.h.b16 %v1252
        %v4080 = vunpack.c.l.b16 %v1253
        %v4081 = vunpack.c.h.b16 %v1253
        %v4082 = vunpack.c.l.b16 %v1254
        %v4083 = vunpack.c.h.b16 %v1254
        %v4084 = vunpack.c.l.b16 %v1255
        %v4085 = vunpack.c.h.b16 %v1255
        %v4086 = vunpack.c.l.b16 %v1256
        %v4087 = vunpack.c.h.b16 %v1256
        %v4088 = vunpack.c.l.b16 %v1257
        %v4089 = vunpack.c.h.b16 %v1257
        %v4090 = vunpack.c.l.b16 %v1258
        %v4091 = vunpack.c.h.b16 %v1258
        %v4092 = vunpack.c.l.b16 %v1259
        %v4093 = vunpack.c.h.b16 %v1259
        %v4094 = vunpack.c.l.b16 %v1260
        %v4095 = vunpack.c.h.b16 %v1260
        %v4096 = vunpack.c.l.b16 %v1261
        %v4097 = vunpack.c.h.b16 %v1261
        %v4098 = vunpack.c.l.b16 %v1262
        %v4099 = vunpack.c.h.b16 %v1262
        %v4100 = vunpack.c.l.b16 %v1263
        %v4101 = vunpack.c.h.b16 %v1263
        %v4102 = vunpack.c.l.b16 %v1264
        %v4103 = vunpack.c.h.b16 %v1264
        %v4104 = vunpack.c.l.b16 %v1265
        %v4105 = vunpack.c.h.b16 %v1265
        %v4106 = vunpack.c.l.b16 %v1266
        %v4107 = vunpack.c.h.b16 %v1266
        %v4108 = vunpack.c.l.b16 %v1267
        %v4109 = vunpack.c.h.b16 %v1267
        %v4110 = vunpack.c.l.b16 %v1268
        %v4111 = vunpack.c.h.b16 %v1268
        %v4112 = vunpack.c.l.b16 %v1269
        %v4113 = vunpack.c.h.b16 %v1269
        %v4114 = vunpack.c.l.b16 %v1270
        %v4115 = vunpack.c.h.b16 %v1270
        %v4116 = vunpack.c.l.b16 %v1271
        %v4117 = vunpack.c.h.b16 %v1271
        %v4118 = vunpack.c.l.b16 %v1272
        %v4119 = vunpack.c.h.b16 %v1272
        %v4120 = vunpack.c.l.b16 %v1273
        %v4121 = vunpack.c.h.b16 %v1273
        %v4122 = vunpack.c.l.b16 %v1274
        %v4123 = vunpack.c.h.b16 %v1274
        %v4124 = vunpack.c.l.b16 %v1275
        %v4125 = vunpack.c.h.b16 %v1275
        %v4126 = vunpack.c.l.b16 %v1276
        %v4127 = vunpack.c.h.b16 %v1276
        %v4128 = vunpack.c.l.b16 %v1277
        %v4129 = vunpack.c.h.b16 %v1277
        %v4130 = vunpack.c.l.b16 %v1278
        %v4131 = vunpack.c.h.b16 %v1278
        %v4132 = vunpack.c.l.b16 %v1279
        %v4133 = vunpack.c.h.b16 %v1279
        %v4134 = vunpack.c.l.b16 %v1280
        %v4135 = vunpack.c.h.b16 %v1280
        %v4136 = vunpack.c.l.b16 %v1281
        %v4137 = vunpack.c.h.b16 %v1281
        %v4138 = vunpack.c.l.b16 %v1282
        %v4139 = vunpack.c.h.b16 %v1282
        %v4140 = vunpack.c.l.b16 %v1283
        %v4141 = vunpack.c.h.b16 %v1283
        %v4142 = vunpack.c.l.b16 %v1284
        %v4143 = vunpack.c.h.b16 %v1284
        %v4144 = vunpack.c.l.b16 %v1285
        %v4145 = vunpack.c.h.b16 %v1285
        %v4146 = vunpack.c.l.b16 %v1286
        %v4147 = vunpack.c.h.b16 %v1286
        %v4148 = vunpack.c.l.b16 %v1287
        %v4149 = vunpack.c.h.b16 %v1287
        %v4150 = vunpack.c.l.b16 %v1288
        %v4151 = vunpack.c.h.b16 %v1288
        %v4152 = vunpack.c.l.b16 %v1289
        %v4153 = vunpack.c.h.b16 %v1289
        %v4154 = vunpack.c.l.b16 %v1290
        %v4155 = vunpack.c.h.b16 %v1290
        %v4156 = vunpack.c.l.b16 %v1291
        %v4157 = vunpack.c.h.b16 %v1291
        %v4158 = vunpack.c.l.b16 %v1292
        %v4159 = vunpack.c.h.b16 %v1292
        %v4160 = vunpack.c.l.b16 %v1293
        %v4161 = vunpack.c.h.b16 %v1293
        %v4162 = vunpack.c.l.b16 %v1294
        %v4163 = vunpack.c.h.b16 %v1294
        %v4164 = vunpack.c.l.b16 %v1295
        %v4165 = vunpack.c.h.b16 %v1295
        %v4166 = vunpack.c.l.b16 %v1296
        %v4167 = vunpack.c.h.b16 %v1296
        %v4168 = vunpack.c.l.b16 %v1297
        %v4169 = vunpack.c.h.b16 %v1297
        %v4170 = vunpack.c.l.b16 %v1298
        %v4171 = vunpack.c.h.b16 %v1298
        %v4172 = vunpack.c.l.b16 %v1299
        %v4173 = vunpack.c.h.b16 %v1299
        %v4174 = vunpack.c.l.b16 %v1300
        %v4175 = vunpack.c.h.b16 %v1300
        %v4176 = vunpack.c.l.b16 %v1301
        %v4177 = vunpack.c.h.b16 %v1301
        %v4178 = vunpack.c.l.b16 %v1302
        %v4179 = vunpack.c.h.b16 %v1302
        %v4180 = vunpack.c.l.b16 %v1303
        %v4181 = vunpack.c.h.b16 %v1303
        %v4182 = vunpack.c.l.b16 %v1304
        %v4183 = vunpack.c.h.b16 %v1304
        %v4184 = vunpack.c.l.b16 %v1305
        %v4185 = vunpack.c.h.b16 %v1305
        %v4186 = vunpack.c.l.b16 %v1306
        %v4187 = vunpack.c.h.b16 %v1306
        %v4188 = vunpack.c.l.b16 %v1307
        %v4189 = vunpack.c.h.b16 %v1307
        %v4190 = vunpack.c.l.b16 %v1308
        %v4191 = vunpack.c.h.b16 %v1308
        %v4192 = vunpack.c.l.b16 %v1309
        %v4193 = vunpack.c.h.b16 %v1309
        %v4194 = vunpack.c.l.b16 %v1310
        %v4195 = vunpack.c.h.b16 %v1310
        %v4196 = vunpack.c.l.b16 %v1311
        %v4197 = vunpack.c.h.b16 %v1311
        %v4198 = vunpack.c.l.b16 %v1312
        %v4199 = vunpack.c.h.b16 %v1312
        %v4200 = vunpack.c.l.b16 %v1313
        %v4201 = vunpack.c.h.b16 %v1313
        %v4202 = vunpack.c.l.b16 %v1314
        %v4203 = vunpack.c.h.b16 %v1314
        %v4204 = vunpack.c.l.b16 %v1315
        %v4205 = vunpack.c.h.b16 %v1315
        %v4206 = vunpack.c.l.b16 %v1316
        %v4207 = vunpack.c.h.b16 %v1316
        %v4208 = vunpack.c.l.b16 %v1317
        %v4209 = vunpack.c.h.b16 %v1317
        %v4210 = vunpack.c.l.b16 %v1318
        %v4211 = vunpack.c.h.b16 %v1318
        %v4212 = vunpack.c.l.b16 %v1319
        %v4213 = vunpack.c.h.b16 %v1319
        %v4214 = vunpack.c.l.b16 %v1320
        %v4215 = vunpack.c.h.b16 %v1320
        %v4216 = vunpack.c.l.b16 %v1321
        %v4217 = vunpack.c.h.b16 %v1321
        %v4218 = vunpack.c.l.b16 %v1322
        %v4219 = vunpack.c.h.b16 %v1322
        %v4220 = vunpack.c.l.b16 %v1323
        %v4221 = vunpack.c.h.b16 %v1323
        %v4222 = vunpack.c.l.b16 %v1324
        %v4223 = vunpack.c.h.b16 %v1324
        %v4224 = vunpack.c.l.b16 %v1325
        %v4225 = vunpack.c.h.b16 %v1325
        %v4226 = vunpack.c.l.b16 %v1326
        %v4227 = vunpack.c.h.b16 %v1326
        %v4228 = vunpack.c.l.b16 %v1327
        %v4229 = vunpack.c.h.b16 %v1327
        %v4230 = vunpack.c.l.b16 %v1328
        %v4231 = vunpack.c.h.b16 %v1328
        %v4232 = vunpack.c.l.b16 %v1329
        %v4233 = vunpack.c.h.b16 %v1329
        %v4234 = vunpack.c.l.b16 %v1330
        %v4235 = vunpack.c.h.b16 %v1330
        %v4236 = vunpack.c.l.b16 %v1331
        %v4237 = vunpack.c.h.b16 %v1331
        %v4238 = vunpack.c.l.b16 %v1332
        %v4239 = vunpack.c.h.b16 %v1332
        %v4240 = vunpack.c.l.b16 %v1333
        %v4241 = vunpack.c.h.b16 %v1333
        %v4242 = vunpack.c.l.b16 %v1334
        %v4243 = vunpack.c.h.b16 %v1334
        %v4244 = vunpack.c.l.b16 %v1335
        %v4245 = vunpack.c.h.b16 %v1335
        %v4246 = vunpack.c.l.b16 %v1336
        %v4247 = vunpack.c.h.b16 %v1336
        %v4248 = vunpack.c.l.b16 %v1337
        %v4249 = vunpack.c.h.b16 %v1337
        %v4250 = vunpack.c.l.b16 %v1338
        %v4251 = vunpack.c.h.b16 %v1338
        %v4252 = vunpack.c.l.b16 %v1339
        %v4253 = vunpack.c.h.b16 %v1339
        %v4254 = vunpack.c.l.b16 %v1340
        %v4255 = vunpack.c.h.b16 %v1340
        %v4256 = vunpack.c.l.b16 %v1341
        %v4257 = vunpack.c.h.b16 %v1341
        %v4258 = vunpack.c.l.b16 %v1342
        %v4259 = vunpack.c.h.b16 %v1342
        %v4260 = vunpack.c.l.b16 %v1343
        %v4261 = vunpack.c.h.b16 %v1343
        %v4262 = vunpack.c.l.b16 %v1344
        %v4263 = vunpack.c.h.b16 %v1344
        %v4264 = vunpack.c.l.b16 %v1345
        %v4265 = vunpack.c.h.b16 %v1345
        %v4266 = vunpack.c.l.b16 %v1346
        %v4267 = vunpack.c.h.b16 %v1346
        %v4268 = vunpack.c.l.b16 %v1347
        %v4269 = vunpack.c.h.b16 %v1347
        %v4270 = vunpack.c.l.b16 %v1348
        %v4271 = vunpack.c.h.b16 %v1348
        %v4272 = vunpack.c.l.b16 %v1349
        %v4273 = vunpack.c.h.b16 %v1349
        %v4274 = vunpack.c.l.b16 %v1350
        %v4275 = vunpack.c.h.b16 %v1350
        %v4276 = vunpack.c.l.b16 %v1351
        %v4277 = vunpack.c.h.b16 %v1351
        %v4278 = vunpack.c.l.b16 %v1352
        %v4279 = vunpack.c.h.b16 %v1352
        %v4280 = vunpack.c.l.b16 %v1353
        %v4281 = vunpack.c.h.b16 %v1353
        %v4282 = vunpack.c.l.b16 %v1354
        %v4283 = vunpack.c.h.b16 %v1354
        %v4284 = vunpack.c.l.b16 %v1355
        %v4285 = vunpack.c.h.b16 %v1355
        %v4286 = vunpack.c.l.b16 %v1356
        %v4287 = vunpack.c.h.b16 %v1356
        %v4288 = vunpack.c.l.b16 %v1357
        %v4289 = vunpack.c.h.b16 %v1357
        %v4290 = vunpack.c.l.b16 %v1358
        %v4291 = vunpack.c.h.b16 %v1358
        %v4292 = vunpack.c.l.b16 %v1359
        %v4293 = vunpack.c.h.b16 %v1359
        %v4294 = vunpack.c.l.b16 %v1360
        %v4295 = vunpack.c.h.b16 %v1360
        %v4296 = vunpack.c.l.b16 %v1361
        %v4297 = vunpack.c.h.b16 %v1361
        %v4298 = vunpack.c.l.b16 %v1362
        %v4299 = vunpack.c.h.b16 %v1362
        %v4300 = vunpack.c.l.b16 %v1363
        %v4301 = vunpack.c.h.b16 %v1363
        %v4302 = vunpack.c.l.b16 %v1364
        %v4303 = vunpack.c.h.b16 %v1364
        %v4304 = vunpack.c.l.b16 %v1365
        %v4305 = vunpack.c.h.b16 %v1365
        %v4306 = vunpack.c.l.b16 %v1366
        %v4307 = vunpack.c.h.b16 %v1366
        %v4308 = vunpack.c.l.b16 %v1367
        %v4309 = vunpack.c.h.b16 %v1367
        %v4310 = vunpack.c.l.b16 %v1368
        %v4311 = vunpack.c.h.b16 %v1368
        %v4312 = vunpack.c.l.b16 %v1369
        %v4313 = vunpack.c.h.b16 %v1369
        %v4314 = vunpack.c.l.b16 %v1370
        %v4315 = vunpack.c.h.b16 %v1370
        %v4316 = vunpack.c.l.b16 %v1371
        %v4317 = vunpack.c.h.b16 %v1371
        %v4318 = vunpack.c.l.b16 %v1372
        %v4319 = vunpack.c.h.b16 %v1372
        %v4320 = vunpack.c.l.b16 %v1373
        %v4321 = vunpack.c.h.b16 %v1373
        %v4322 = vunpack.c.l.b16 %v1374
        %v4323 = vunpack.c.h.b16 %v1374
        %v4324 = vunpack.c.l.b16 %v1375
        %v4325 = vunpack.c.h.b16 %v1375
        %v4326 = vunpack.c.l.b16 %v1376
        %v4327 = vunpack.c.h.b16 %v1376
        %v4328 = vunpack.c.l.b16 %v1377
        %v4329 = vunpack.c.h.b16 %v1377
        %v4330 = vunpack.c.l.b16 %v1378
        %v4331 = vunpack.c.h.b16 %v1378
        %v4332 = vunpack.c.l.b16 %v1379
        %v4333 = vunpack.c.h.b16 %v1379
        %v4334 = vunpack.c.l.b16 %v1380
        %v4335 = vunpack.c.h.b16 %v1380
        %v4336 = vunpack.c.l.b16 %v1381
        %v4337 = vunpack.c.h.b16 %v1381
        %v4338 = vunpack.c.l.b16 %v1382
        %v4339 = vunpack.c.h.b16 %v1382
        %v4340 = vunpack.c.l.b16 %v1383
        %v4341 = vunpack.c.h.b16 %v1383
        %v4342 = vunpack.c.l.b16 %v1384
        %v4343 = vunpack.c.h.b16 %v1384
        %v4344 = vunpack.c.l.b16 %v1385
        %v4345 = vunpack.c.h.b16 %v1385
        %v4346 = vunpack.c.l.b16 %v1386
        %v4347 = vunpack.c.h.b16 %v1386
        %v4348 = vunpack.c.l.b16 %v1387
        %v4349 = vunpack.c.h.b16 %v1387
        %v4350 = vunpack.c.l.b16 %v1388
        %v4351 = vunpack.c.h.b16 %v1388
        %v4352 = vunpack.c.l.b16 %v1389
        %v4353 = vunpack.c.h.b16 %v1389
        %v4354 = vunpack.c.l.b16 %v1390
        %v4355 = vunpack.c.h.b16 %v1390
        %v4356 = vunpack.c.l.b16 %v1391
        %v4357 = vunpack.c.h.b16 %v1391
        %v4358 = vunpack.c.l.b16 %v1392
        %v4359 = vunpack.c.h.b16 %v1392
        %v4360 = vunpack.c.l.b16 %v1393
        %v4361 = vunpack.c.h.b16 %v1393
        %v4362 = vunpack.c.l.b16 %v1394
        %v4363 = vunpack.c.h.b16 %v1394
        %v4364 = vunpack.c.l.b16 %v1395
        %v4365 = vunpack.c.h.b16 %v1395
        %v4366 = vunpack.c.l.b16 %v1396
        %v4367 = vunpack.c.h.b16 %v1396
        %v4368 = vunpack.c.l.b16 %v1397
        %v4369 = vunpack.c.h.b16 %v1397
        %v4370 = vunpack.c.l.b16 %v1398
        %v4371 = vunpack.c.h.b16 %v1398
        %v4372 = vunpack.c.l.b16 %v1399
        %v4373 = vunpack.c.h.b16 %v1399
        %v4374 = vunpack.c.l.b16 %v1400
        %v4375 = vunpack.c.h.b16 %v1400
        %v4376 = vunpack.c.l.b16 %v1401
        %v4377 = vunpack.c.h.b16 %v1401
        %v4378 = vunpack.c.l.b16 %v1402
        %v4379 = vunpack.c.h.b16 %v1402
        %v4380 = vunpack.c.l.b16 %v1403
        %v4381 = vunpack.c.h.b16 %v1403
        %v4382 = vunpack.c.l.b16 %v1404
        %v4383 = vunpack.c.h.b16 %v1404
        %v4384 = vunpack.c.l.b16 %v1405
        %v4385 = vunpack.c.h.b16 %v1405
        %v4386 = vunpack.c.l.b16 %v1406
        %v4387 = vunpack.c.h.b16 %v1406
        %v4388 = vunpack.c.l.b16 %v1407
        %v4389 = vunpack.c.h.b16 %v1407
        %v4390 = vunpack.c.l.b16 %v1408
        %v4391 = vunpack.c.h.b16 %v1408
        %v4392 = vunpack.c.l.b16 %v1409
        %v4393 = vunpack.c.h.b16 %v1409
        %v4394 = vunpack.c.l.b16 %v1410
        %v4395 = vunpack.c.h.b16 %v1410
        %v4396 = vunpack.c.l.b16 %v1411
        %v4397 = vunpack.c.h.b16 %v1411
        %v4398 = vunpack.c.l.b16 %v1412
        %v4399 = vunpack.c.h.b16 %v1412
        %v4400 = vunpack.c.l.b16 %v1413
        %v4401 = vunpack.c.h.b16 %v1413
        %v4402 = vunpack.c.l.b16 %v1414
        %v4403 = vunpack.c.h.b16 %v1414
        %v4404 = vunpack.c.l.b16 %v1415
        %v4405 = vunpack.c.h.b16 %v1415
        %v4406 = vunpack.c.l.b16 %v1416
        %v4407 = vunpack.c.h.b16 %v1416
        %v4408 = vunpack.c.l.b16 %v1417
        %v4409 = vunpack.c.h.b16 %v1417
        %v4410 = vunpack.c.l.b16 %v1418
        %v4411 = vunpack.c.h.b16 %v1418
        %v4412 = vunpack.c.l.b16 %v1419
        %v4413 = vunpack.c.h.b16 %v1419
        %v4414 = vunpack.c.l.b16 %v1420
        %v4415 = vunpack.c.h.b16 %v1420
        %v4416 = vunpack.c.l.b16 %v1421
        %v4417 = vunpack.c.h.b16 %v1421
        %v4418 = vunpack.c.l.b16 %v1422
        %v4419 = vunpack.c.h.b16 %v1422
        %v4420 = vunpack.c.l.b16 %v1423
        %v4421 = vunpack.c.h.b16 %v1423
        %v4422 = vunpack.c.l.b16 %v1424
        %v4423 = vunpack.c.h.b16 %v1424
        %v4424 = vunpack.c.l.b16 %v1425
        %v4425 = vunpack.c.h.b16 %v1425
        %v4426 = vunpack.c.l.b16 %v1426
        %v4427 = vunpack.c.h.b16 %v1426
        %v4428 = vunpack.c.l.b16 %v1427
        %v4429 = vunpack.c.h.b16 %v1427
        %v4430 = vunpack.c.l.b16 %v1428
        %v4431 = vunpack.c.h.b16 %v1428
        %v4432 = vunpack.c.l.b16 %v1429
        %v4433 = vunpack.c.h.b16 %v1429
        %v4434 = vunpack.c.l.b16 %v1430
        %v4435 = vunpack.c.h.b16 %v1430
        %v4436 = vunpack.c.l.b16 %v1431
        %v4437 = vunpack.c.h.b16 %v1431
        %v4438 = vunpack.c.l.b16 %v1432
        %v4439 = vunpack.c.h.b16 %v1432
        %v4440 = vunpack.c.l.b16 %v1433
        %v4441 = vunpack.c.h.b16 %v1433
        %v4442 = vunpack.c.l.b16 %v1434
        %v4443 = vunpack.c.h.b16 %v1434
        %v4444 = vunpack.c.l.b16 %v1435
        %v4445 = vunpack.c.h.b16 %v1435
        %v4446 = vunpack.c.l.b16 %v1436
        %v4447 = vunpack.c.h.b16 %v1436
        %v4448 = vunpack.c.l.b16 %v1437
        %v4449 = vunpack.c.h.b16 %v1437
        %v4450 = vunpack.c.l.b16 %v1438
        %v4451 = vunpack.c.h.b16 %v1438
        %v4452 = vunpack.c.l.b16 %v1439
        %v4453 = vunpack.c.h.b16 %v1439
        %v4454 = vunpack.c.l.b16 %v1440
        %v4455 = vunpack.c.h.b16 %v1440
        %v4456 = vunpack.c.l.b16 %v1441
        %v4457 = vunpack.c.h.b16 %v1441
        %v4458 = vunpack.c.l.b16 %v1442
        %v4459 = vunpack.c.h.b16 %v1442
        %v4460 = vunpack.c.l.b16 %v1443
        %v4461 = vunpack.c.h.b16 %v1443
        %v4462 = vunpack.c.l.b16 %v1444
        %v4463 = vunpack.c.h.b16 %v1444
        %v4464 = vunpack.c.l.b16 %v1445
        %v4465 = vunpack.c.h.b16 %v1445
        %v4466 = vunpack.c.l.b16 %v1446
        %v4467 = vunpack.c.h.b16 %v1446
        %v4468 = vunpack.c.l.b16 %v1447
        %v4469 = vunpack.c.h.b16 %v1447
        %v4470 = vunpack.c.l.b16 %v1448
        %v4471 = vunpack.c.h.b16 %v1448
        %v4472 = vunpack.c.l.b16 %v1449
        %v4473 = vunpack.c.h.b16 %v1449
        %v4474 = vunpack.c.l.b16 %v1450
        %v4475 = vunpack.c.h.b16 %v1450
        %v4476 = vunpack.c.l.b16 %v1451
        %v4477 = vunpack.c.h.b16 %v1451
        %v4478 = vunpack.c.l.b16 %v1452
        %v4479 = vunpack.c.h.b16 %v1452
        %v4480 = vunpack.c.l.b16 %v1453
        %v4481 = vunpack.c.h.b16 %v1453
        %v4482 = vunpack.c.l.b16 %v1454
        %v4483 = vunpack.c.h.b16 %v1454
        %v4484 = vunpack.c.l.b16 %v1455
        %v4485 = vunpack.c.h.b16 %v1455
        %v4486 = vunpack.c.l.b16 %v1456
        %v4487 = vunpack.c.h.b16 %v1456
        %v4488 = vunpack.c.l.b16 %v1457
        %v4489 = vunpack.c.h.b16 %v1457
        %v4490 = vunpack.c.l.b16 %v1458
        %v4491 = vunpack.c.h.b16 %v1458
        %v4492 = vunpack.c.l.b16 %v1459
        %v4493 = vunpack.c.h.b16 %v1459
        %v4494 = vunpack.c.l.b16 %v1460
        %v4495 = vunpack.c.h.b16 %v1460
        %v4496 = vunpack.c.l.b16 %v1461
        %v4497 = vunpack.c.h.b16 %v1461
        %v4498 = vunpack.c.l.b16 %v1462
        %v4499 = vunpack.c.h.b16 %v1462
        %v4500 = vunpack.c.l.b16 %v1463
        %v4501 = vunpack.c.h.b16 %v1463
        %v4502 = vunpack.c.l.b16 %v1464
        %v4503 = vunpack.c.h.b16 %v1464
        %v4504 = vunpack.c.l.b16 %v1465
        %v4505 = vunpack.c.h.b16 %v1465
        %v4506 = vunpack.c.l.b16 %v1466
        %v4507 = vunpack.c.h.b16 %v1466
        %v4508 = vunpack.c.l.b16 %v1467
        %v4509 = vunpack.c.h.b16 %v1467
        %v4510 = vunpack.c.l.b16 %v1468
        %v4511 = vunpack.c.h.b16 %v1468
        %v4512 = vunpack.c.l.b16 %v1469
        %v4513 = vunpack.c.h.b16 %v1469
        %v4514 = vunpack.c.l.b16 %v1470
        %v4515 = vunpack.c.h.b16 %v1470
        %v4516 = vunpack.c.l.b16 %v1471
        %v4517 = vunpack.c.h.b16 %v1471
        %v4518 = vunpack.c.l.b16 %v1472
        %v4519 = vunpack.c.h.b16 %v1472
        %v4520 = vunpack.c.l.b16 %v1473
        %v4521 = vunpack.c.h.b16 %v1473
        %v4522 = vunpack.c.l.b16 %v1474
        %v4523 = vunpack.c.h.b16 %v1474
        %v4524 = vunpack.c.l.b16 %v1475
        %v4525 = vunpack.c.h.b16 %v1475
        %v4526 = vunpack.c.l.b16 %v1476
        %v4527 = vunpack.c.h.b16 %v1476
        %v4528 = vunpack.c.l.b16 %v1477
        %v4529 = vunpack.c.h.b16 %v1477
        %v4530 = vunpack.c.l.b16 %v1478
        %v4531 = vunpack.c.h.b16 %v1478
        %v4532 = vunpack.c.l.b16 %v1479
        %v4533 = vunpack.c.h.b16 %v1479
        %v4534 = vunpack.c.l.b16 %v1480
        %v4535 = vunpack.c.h.b16 %v1480
        %v4536 = vunpack.c.l.b16 %v1481
        %v4537 = vunpack.c.h.b16 %v1481
        %v4538 = vunpack.c.l.b16 %v1482
        %v4539 = vunpack.c.h.b16 %v1482
        %v4540 = vunpack.c.l.b16 %v1483
        %v4541 = vunpack.c.h.b16 %v1483
        %v4542 = vunpack.c.l.b16 %v1484
        %v4543 = vunpack.c.h.b16 %v1484
        %v4544 = vunpack.c.l.b16 %v1485
        %v4545 = vunpack.c.h.b16 %v1485
        %v4546 = vunpack.c.l.b16 %v1486
        %v4547 = vunpack.c.h.b16 %v1486
        %v4548 = vunpack.c.l.b16 %v1487
        %v4549 = vunpack.c.h.b16 %v1487
        %v4550 = vunpack.c.l.b16 %v1488
        %v4551 = vunpack.c.h.b16 %v1488
        %v4552 = vunpack.c.l.b16 %v1489
        %v4553 = vunpack.c.h.b16 %v1489
        %v4554 = vunpack.c.l.b16 %v1490
        %v4555 = vunpack.c.h.b16 %v1490
        %v4556 = vunpack.c.l.b16 %v1491
        %v4557 = vunpack.c.h.b16 %v1491
        %v4558 = vunpack.c.l.b16 %v1492
        %v4559 = vunpack.c.h.b16 %v1492
        %v4560 = vunpack.c.l.b16 %v1493
        %v4561 = vunpack.c.h.b16 %v1493
        %v4562 = vunpack.c.l.b16 %v1494
        %v4563 = vunpack.c.h.b16 %v1494
        %v4564 = vunpack.c.l.b16 %v1495
        %v4565 = vunpack.c.h.b16 %v1495
        %v4566 = vunpack.c.l.b16 %v1496
        %v4567 = vunpack.c.h.b16 %v1496
        %v4568 = vunpack.c.l.b16 %v1497
        %v4569 = vunpack.c.h.b16 %v1497
        %v4570 = vunpack.c.l.b16 %v1498
        %v4571 = vunpack.c.h.b16 %v1498
        %v4572 = vunpack.c.l.b16 %v1499
        %v4573 = vunpack.c.h.b16 %v1499
        %v4574 = vunpack.c.l.b16 %v1500
        %v4575 = vunpack.c.h.b16 %v1500
        %v4576 = vunpack.c.l.b16 %v1501
        %v4577 = vunpack.c.h.b16 %v1501
        %v4578 = vunpack.c.l.b16 %v1502
        %v4579 = vunpack.c.h.b16 %v1502
        %v4580 = vunpack.c.l.b16 %v1503
        %v4581 = vunpack.c.h.b16 %v1503
        %v4582 = vunpack.c.l.b16 %v1504
        %v4583 = vunpack.c.h.b16 %v1504
        %v4584 = vunpack.c.l.b16 %v1505
        %v4585 = vunpack.c.h.b16 %v1505
        %v4586 = vunpack.c.l.b16 %v1506
        %v4587 = vunpack.c.h.b16 %v1506
        %v4588 = vunpack.c.l.b16 %v1507
        %v4589 = vunpack.c.h.b16 %v1507
        %v4590 = vunpack.c.l.b16 %v1508
        %v4591 = vunpack.c.h.b16 %v1508
        %v4592 = vunpack.c.l.b16 %v1509
        %v4593 = vunpack.c.h.b16 %v1509
        %v4594 = vunpack.c.l.b16 %v1510
        %v4595 = vunpack.c.h.b16 %v1510
        %v4596 = vunpack.c.l.b16 %v1511
        %v4597 = vunpack.c.h.b16 %v1511
        %v4598 = vunpack.c.l.b16 %v1512
        %v4599 = vunpack.c.h.b16 %v1512
        %v4600 = vunpack.c.l.b16 %v1513
        %v4601 = vunpack.c.h.b16 %v1513
        %v4602 = vunpack.c.l.b16 %v1514
        %v4603 = vunpack.c.h.b16 %v1514
        %v4604 = vunpack.c.l.b16 %v1515
        %v4605 = vunpack.c.h.b16 %v1515
        %v4606 = vunpack.c.l.b16 %v1516
        %v4607 = vunpack.c.h.b16 %v1516
        %v4608 = vunpack.c.l.b16 %v1517
        %v4609 = vunpack.c.h.b16 %v1517
        %v4610 = vunpack.c.l.b16 %v1518
        %v4611 = vunpack.c.h.b16 %v1518
        %v4612 = vunpack.c.l.b16 %v1519
        %v4613 = vunpack.c.h.b16 %v1519
        %v4614 = vunpack.c.l.b16 %v1520
        %v4615 = vunpack.c.h.b16 %v1520
        %v4616 = vunpack.c.l.b16 %v1521
        %v4617 = vunpack.c.h.b16 %v1521
        %v4618 = vunpack.c.l.b16 %v1522
        %v4619 = vunpack.c.h.b16 %v1522
        %v4620 = vunpack.c.l.b16 %v1523
        %v4621 = vunpack.c.h.b16 %v1523
        %v4622 = vunpack.c.l.b16 %v1524
        %v4623 = vunpack.c.h.b16 %v1524
        %v4624 = vunpack.c.l.b16 %v1525
        %v4625 = vunpack.c.h.b16 %v1525
        %v4626 = vunpack.c.l.b16 %v1526
        %v4627 = vunpack.c.h.b16 %v1526
        %v4628 = vunpack.c.l.b16 %v1527
        %v4629 = vunpack.c.h.b16 %v1527
        %v4630 = vunpack.c.l.b16 %v1528
        %v4631 = vunpack.c.h.b16 %v1528
        %v4632 = vunpack.c.l.b16 %v1529
        %v4633 = vunpack.c.h.b16 %v1529
        %v4634 = vunpack.c.l.b16 %v1530
        %v4635 = vunpack.c.h.b16 %v1530
        %v4636 = vunpack.c.l.b16 %v1531
        %v4637 = vunpack.c.h.b16 %v1531
        %v4638 = vunpack.c.l.b16 %v1532
        %v4639 = vunpack.c.h.b16 %v1532
        %v4640 = vunpack.c.l.b16 %v1533
        %v4641 = vunpack.c.h.b16 %v1533
        %v4642 = vunpack.c.l.b16 %v1534
        %v4643 = vunpack.c.h.b16 %v1534
        %v4644 = vunpack.c.l.b16 %v1535
        %v4645 = vunpack.c.h.b16 %v1535
        %v4646 = vunpack.c.l.b16 %v1536
        %v4647 = vunpack.c.h.b16 %v1536
        %v4648 = vunpack.c.l.b16 %v1537
        %v4649 = vunpack.c.h.b16 %v1537
        %v4650 = vunpack.c.l.b16 %v1538
        %v4651 = vunpack.c.h.b16 %v1538
        %v4652 = vunpack.c.l.b16 %v1539
        %v4653 = vunpack.c.h.b16 %v1539
        %v4654 = vunpack.c.l.b16 %v1540
        %v4655 = vunpack.c.h.b16 %v1540
        %v4656 = vunpack.c.l.b16 %v1541
        %v4657 = vunpack.c.h.b16 %v1541
        %v4658 = vunpack.c.l.b16 %v1542
        %v4659 = vunpack.c.h.b16 %v1542
        %v4660 = vunpack.c.l.b16 %v1543
        %v4661 = vunpack.c.h.b16 %v1543
        %v4662 = vunpack.c.l.b16 %v1544
        %v4663 = vunpack.c.h.b16 %v1544
        %v4664 = vunpack.c.l.b16 %v1545
        %v4665 = vunpack.c.h.b16 %v1545
        %v4666 = vunpack.c.l.b16 %v1546
        %v4667 = vunpack.c.h.b16 %v1546
        %v4668 = vunpack.c.l.b16 %v1547
        %v4669 = vunpack.c.h.b16 %v1547
        %v4670 = vunpack.c.l.b16 %v1548
        %v4671 = vunpack.c.h.b16 %v1548
        %v4672 = vunpack.c.l.b16 %v1549
        %v4673 = vunpack.c.h.b16 %v1549
        %v4674 = vunpack.c.l.b16 %v1550
        %v4675 = vunpack.c.h.b16 %v1550
        %v4676 = vunpack.c.l.b16 %v1551
        %v4677 = vunpack.c.h.b16 %v1551
        %v4678 = vunpack.c.l.b16 %v1552
        %v4679 = vunpack.c.h.b16 %v1552
        %v4680 = vunpack.c.l.b16 %v1553
        %v4681 = vunpack.c.h.b16 %v1553
        %v4682 = vunpack.c.l.b16 %v1554
        %v4683 = vunpack.c.h.b16 %v1554
        %v4684 = vunpack.c.l.b16 %v1555
        %v4685 = vunpack.c.h.b16 %v1555
        %v4686 = vunpack.c.l.b16 %v1556
        %v4687 = vunpack.c.h.b16 %v1556
        %v4688 = vunpack.c.l.b16 %v1557
        %v4689 = vunpack.c.h.b16 %v1557
        %v4690 = vunpack.c.l.b16 %v1558
        %v4691 = vunpack.c.h.b16 %v1558
        %v4692 = vunpack.c.l.b16 %v1559
        %v4693 = vunpack.c.h.b16 %v1559
        %v4694 = vunpack.c.l.b16 %v1560
        %v4695 = vunpack.c.h.b16 %v1560
        %v4696 = vunpack.c.l.b16 %v1561
        %v4697 = vunpack.c.h.b16 %v1561
        %v4698 = vunpack.c.l.b16 %v1562
        %v4699 = vunpack.c.h.b16 %v1562
        %v4700 = vunpack.c.l.b16 %v1563
        %v4701 = vunpack.c.h.b16 %v1563
        %v4702 = vunpack.c.l.b16 %v1564
        %v4703 = vunpack.c.h.b16 %v1564
        %v4704 = vunpack.c.l.b16 %v1565
        %v4705 = vunpack.c.h.b16 %v1565
        %v4706 = vunpack.c.l.b16 %v1566
        %v4707 = vunpack.c.h.b16 %v1566
        %v4708 = vunpack.c.l.b16 %v1567
        %v4709 = vunpack.c.h.b16 %v1567
        %v4710 = vunpack.c.l.b16 %v1568
        %v4711 = vunpack.c.h.b16 %v1568
        %v4712 = vunpack.c.l.b16 %v1569
        %v4713 = vunpack.c.h.b16 %v1569
        %v4714 = vunpack.c.l.b16 %v1570
        %v4715 = vunpack.c.h.b16 %v1570
        %v4716 = vunpack.c.l.b16 %v1571
        %v4717 = vunpack.c.h.b16 %v1571
        %v4718 = vunpack.c.l.b16 %v1572
        %v4719 = vunpack.c.h.b16 %v1572
        %v4720 = vunpack.c.l.b16 %v1573
        %v4721 = vunpack.c.h.b16 %v1573
        %v4722 = vunpack.c.l.b16 %v1574
        %v4723 = vunpack.c.h.b16 %v1574
        %v4724 = vunpack.c.l.b16 %v1575
        %v4725 = vunpack.c.h.b16 %v1575
        %v4726 = vunpack.c.l.b16 %v1576
        %v4727 = vunpack.c.h.b16 %v1576
        %v4728 = vunpack.c.l.b16 %v1577
        %v4729 = vunpack.c.h.b16 %v1577
        %v4730 = vpack.c.b16 %v2690, %v2682
        %v4731 = vpack.c.b16 %v2691, %v2683
        %v4732 = vpack.c.b16 %v2692, %v2684
        %v4733 = vpack.c.b16 %v2693, %v2685
        %v4734 = vpack.c.b16 %v2694, %v2686
        %v4735 = vpack.c.b16 %v2695, %v2687
        %v4736 = vpack.c.b16 %v2696, %v2688
        %v4737 = vpack.c.b16 %v2697, %v2689
        %v4738 = vpack.c.b16 %v2706, %v2698
        %v4739 = vpack.c.b16 %v2707, %v2699
        %v4740 = vpack.c.b16 %v2708, %v2700
        %v4741 = vpack.c.b16 %v2709, %v2701
        %v4742 = vpack.c.b16 %v2710, %v2702
        %v4743 = vpack.c.b16 %v2711, %v2703
        %v4744 = vpack.c.b16 %v2712, %v2704
        %v4745 = vpack.c.b16 %v2713, %v2705
        %v4746 = vpack.c.b16 %v2722, %v2714
        %v4747 = vpack.c.b16 %v2723, %v2715
        %v4748 = vpack.c.b16 %v2724, %v2716
        %v4749 = vpack.c.b16 %v2725, %v2717
        %v4750 = vpack.c.b16 %v2726, %v2718
        %v4751 = vpack.c.b16 %v2727, %v2719
        %v4752 = vpack.c.b16 %v2728, %v2720
        %v4753 = vpack.c.b16 %v2729, %v2721
        %v4754 = vpack.c.b16 %v2738, %v2730
        %v4755 = vpack.c.b16 %v2739, %v2731
        %v4756 = vpack.c.b16 %v2740, %v2732
        %v4757 = vpack.c.b16 %v2741, %v2733
        %v4758 = vpack.c.b16 %v2742, %v2734
        %v4759 = vpack.c.b16 %v2743, %v2735
        %v4760 = vpack.c.b16 %v2744, %v2736
        %v4761 = vpack.c.b16 %v2745, %v2737
        %v4762 = vpack.c.b16 %v2754, %v2746
        %v4763 = vpack.c.b16 %v2755, %v2747
        %v4764 = vpack.c.b16 %v2756, %v2748
        %v4765 = vpack.c.b16 %v2757, %v2749
        %v4766 = vpack.c.b16 %v2758, %v2750
        %v4767 = vpack.c.b16 %v2759, %v2751
        %v4768 = vpack.c.b16 %v2760, %v2752
        %v4769 = vpack.c.b16 %v2761, %v2753
        %v4770 = vpack.c.b16 %v2770, %v2762
        %v4771 = vpack.c.b16 %v2771, %v2763
        %v4772 = vpack.c.b16 %v2772, %v2764
        %v4773 = vpack.c.b16 %v2773, %v2765
        %v4774 = vpack.c.b16 %v2774, %v2766
        %v4775 = vpack.c.b16 %v2775, %v2767
        %v4776 = vpack.c.b16 %v2776, %v2768
        %v4777 = vpack.c.b16 %v2777, %v2769
        %v4778 = vpack.c.b16 %v2786, %v2778
        %v4779 = vpack.c.b16 %v2787, %v2779
        %v4780 = vpack.c.b16 %v2788, %v2780
        %v4781 = vpack.c.b16 %v2789, %v2781
        %v4782 = vpack.c.b16 %v2790, %v2782
        %v4783 = vpack.c.b16 %v2791, %v2783
        %v4784 = vpack.c.b16 %v2792, %v2784
        %v4785 = vpack.c.b16 %v2793, %v2785
        %v4786 = vpack.c.b16 %v2802, %v2794
        %v4787 = vpack.c.b16 %v2803, %v2795
        %v4788 = vpack.c.b16 %v2804, %v2796
        %v4789 = vpack.c.b16 %v2805, %v2797
        %v4790 = vpack.c.b16 %v2806, %v2798
        %v4791 = vpack.c.b16 %v2807, %v2799
        %v4792 = vpack.c.b16 %v2808, %v2800
        %v4793 = vpack.c.b16 %v2809, %v2801
        %v4794 = vpack.c.b16 %v2818, %v2810
        %v4795 = vpack.c.b16 %v2819, %v2811
        %v4796 = vpack.c.b16 %v2820, %v2812
        %v4797 = vpack.c.b16 %v2821, %v2813
        %v4798 = vpack.c.b16 %v2822, %v2814
        %v4799 = vpack.c.b16 %v2823, %v2815
        %v4800 = vpack.c.b16 %v2824, %v2816
        %v4801 = vpack.c.b16 %v2825, %v2817
        %v4802 = vpack.c.b16 %v2834, %v2826
        %v4803 = vpack.c.b16 %v2835, %v2827
        %v4804 = vpack.c.b16 %v2836, %v2828
        %v4805 = vpack.c.b16 %v2837, %v2829
        %v4806 = vpack.c.b16 %v2838, %v2830
        %v4807 = vpack.c.b16 %v2839, %v2831
        %v4808 = vpack.c.b16 %v2840, %v2832
        %v4809 = vpack.c.b16 %v2841, %v2833
        %v4810 = vpack.c.b16 %v2850, %v2842
        %v4811 = vpack.c.b16 %v2851, %v2843
        %v4812 = vpack.c.b16 %v2852, %v2844
        %v4813 = vpack.c.b16 %v2853, %v2845
        %v4814 = vpack.c.b16 %v2854, %v2846
        %v4815 = vpack.c.b16 %v2855, %v2847
        %v4816 = vpack.c.b16 %v2856, %v2848
        %v4817 = vpack.c.b16 %v2857, %v2849
        %v4818 = vpack.c.b16 %v2866, %v2858
        %v4819 = vpack.c.b16 %v2867, %v2859
        %v4820 = vpack.c.b16 %v2868, %v2860
        %v4821 = vpack.c.b16 %v2869, %v2861
        %v4822 = vpack.c.b16 %v2870, %v2862
        %v4823 = vpack.c.b16 %v2871, %v2863
        %v4824 = vpack.c.b16 %v2872, %v2864
        %v4825 = vpack.c.b16 %v2873, %v2865
        %v4826 = vpack.c.b16 %v2882, %v2874
        %v4827 = vpack.c.b16 %v2883, %v2875
        %v4828 = vpack.c.b16 %v2884, %v2876
        %v4829 = vpack.c.b16 %v2885, %v2877
        %v4830 = vpack.c.b16 %v2886, %v2878
        %v4831 = vpack.c.b16 %v2887, %v2879
        %v4832 = vpack.c.b16 %v2888, %v2880
        %v4833 = vpack.c.b16 %v2889, %v2881
        %v4834 = vpack.c.b16 %v2898, %v2890
        %v4835 = vpack.c.b16 %v2899, %v2891
        %v4836 = vpack.c.b16 %v2900, %v2892
        %v4837 = vpack.c.b16 %v2901, %v2893
        %v4838 = vpack.c.b16 %v2902, %v2894
        %v4839 = vpack.c.b16 %v2903, %v2895
        %v4840 = vpack.c.b16 %v2904, %v2896
        %v4841 = vpack.c.b16 %v2905, %v2897
        %v4842 = vpack.c.b16 %v2914, %v2906
        %v4843 = vpack.c.b16 %v2915, %v2907
        %v4844 = vpack.c.b16 %v2916, %v2908
        %v4845 = vpack.c.b16 %v2917, %v2909
        %v4846 = vpack.c.b16 %v2918, %v2910
        %v4847 = vpack.c.b16 %v2919, %v2911
        %v4848 = vpack.c.b16 %v2920, %v2912
        %v4849 = vpack.c.b16 %v2921, %v2913
        %v4850 = vpack.c.b16 %v2930, %v2922
        %v4851 = vpack.c.b16 %v2931, %v2923
        %v4852 = vpack.c.b16 %v2932, %v2924
        %v4853 = vpack.c.b16 %v2933, %v2925
        %v4854 = vpack.c.b16 %v2934, %v2926
        %v4855 = vpack.c.b16 %v2935, %v2927
        %v4856 = vpack.c.b16 %v2936, %v2928
        %v4857 = vpack.c.b16 %v2937, %v2929
        %v4858 = vpack.c.b16 %v2946, %v2938
        %v4859 = vpack.c.b16 %v2947, %v2939
        %v4860 = vpack.c.b16 %v2948, %v2940
        %v4861 = vpack.c.b16 %v2949, %v2941
        %v4862 = vpack.c.b16 %v2950, %v2942
        %v4863 = vpack.c.b16 %v2951, %v2943
        %v4864 = vpack.c.b16 %v2952, %v2944
        %v4865 = vpack.c.b16 %v2953, %v2945
        %v4866 = vpack.c.b16 %v2962, %v2954
        %v4867 = vpack.c.b16 %v2963, %v2955
        %v4868 = vpack.c.b16 %v2964, %v2956
        %v4869 = vpack.c.b16 %v2965, %v2957
        %v4870 = vpack.c.b16 %v2966, %v2958
        %v4871 = vpack.c.b16 %v2967, %v2959
        %v4872 = vpack.c.b16 %v2968, %v2960
        %v4873 = vpack.c.b16 %v2969, %v2961
        %v4874 = vpack.c.b16 %v2978, %v2970
        %v4875 = vpack.c.b16 %v2979, %v2971
        %v4876 = vpack.c.b16 %v2980, %v2972
        %v4877 = vpack.c.b16 %v2981, %v2973
        %v4878 = vpack.c.b16 %v2982, %v2974
        %v4879 = vpack.c.b16 %v2983, %v2975
        %v4880 = vpack.c.b16 %v2984, %v2976
        %v4881 = vpack.c.b16 %v2985, %v2977
        %v4882 = vpack.c.b16 %v2994, %v2986
        %v4883 = vpack.c.b16 %v2995, %v2987
        %v4884 = vpack.c.b16 %v2996, %v2988
        %v4885 = vpack.c.b16 %v2997, %v2989
        %v4886 = vpack.c.b16 %v2998, %v2990
        %v4887 = vpack.c.b16 %v2999, %v2991
        %v4888 = vpack.c.b16 %v3000, %v2992
        %v4889 = vpack.c.b16 %v3001, %v2993
        %v4890 = vpack.c.b16 %v3010, %v3002
        %v4891 = vpack.c.b16 %v3011, %v3003
        %v4892 = vpack.c.b16 %v3012, %v3004
        %v4893 = vpack.c.b16 %v3013, %v3005
        %v4894 = vpack.c.b16 %v3014, %v3006
        %v4895 = vpack.c.b16 %v3015, %v3007
        %v4896 = vpack.c.b16 %v3016, %v3008
        %v4897 = vpack.c.b16 %v3017, %v3009
        %v4898 = vpack.c.b16 %v3026, %v3018
        %v4899 = vpack.c.b16 %v3027, %v3019
        %v4900 = vpack.c.b16 %v3028, %v3020
        %v4901 = vpack.c.b16 %v3029, %v3021
        %v4902 = vpack.c.b16 %v3030, %v3022
        %v4903 = vpack.c.b16 %v3031, %v3023
        %v4904 = vpack.c.b16 %v3032, %v3024
        %v4905 = vpack.c.b16 %v3033, %v3025
        %v4906 = vpack.c.b16 %v3042, %v3034
        %v4907 = vpack.c.b16 %v3043, %v3035
        %v4908 = vpack.c.b16 %v3044, %v3036
        %v4909 = vpack.c.b16 %v3045, %v3037
        %v4910 = vpack.c.b16 %v3046, %v3038
        %v4911 = vpack.c.b16 %v3047, %v3039
        %v4912 = vpack.c.b16 %v3048, %v3040
        %v4913 = vpack.c.b16 %v3049, %v3041
        %v4914 = vpack.c.b16 %v3058, %v3050
        %v4915 = vpack.c.b16 %v3059, %v3051
        %v4916 = vpack.c.b16 %v3060, %v3052
        %v4917 = vpack.c.b16 %v3061, %v3053
        %v4918 = vpack.c.b16 %v3062, %v3054
        %v4919 = vpack.c.b16 %v3063, %v3055
        %v4920 = vpack.c.b16 %v3064, %v3056
        %v4921 = vpack.c.b16 %v3065, %v3057
        %v4922 = vpack.c.b16 %v3074, %v3066
        %v4923 = vpack.c.b16 %v3075, %v3067
        %v4924 = vpack.c.b16 %v3076, %v3068
        %v4925 = vpack.c.b16 %v3077, %v3069
        %v4926 = vpack.c.b16 %v3078, %v3070
        %v4927 = vpack.c.b16 %v3079, %v3071
        %v4928 = vpack.c.b16 %v3080, %v3072
        %v4929 = vpack.c.b16 %v3081, %v3073
        %v4930 = vpack.c.b16 %v3090, %v3082
        %v4931 = vpack.c.b16 %v3091, %v3083
        %v4932 = vpack.c.b16 %v3092, %v3084
        %v4933 = vpack.c.b16 %v3093, %v3085
        %v4934 = vpack.c.b16 %v3094, %v3086
        %v4935 = vpack.c.b16 %v3095, %v3087
        %v4936 = vpack.c.b16 %v3096, %v3088
        %v4937 = vpack.c.b16 %v3097, %v3089
        %v4938 = vpack.c.b16 %v3106, %v3098
        %v4939 = vpack.c.b16 %v3107, %v3099
        %v4940 = vpack.c.b16 %v3108, %v3100
        %v4941 = vpack.c.b16 %v3109, %v3101
        %v4942 = vpack.c.b16 %v3110, %v3102
        %v4943 = vpack.c.b16 %v3111, %v3103
        %v4944 = vpack.c.b16 %v3112, %v3104
        %v4945 = vpack.c.b16 %v3113, %v3105
        %v4946 = vpack.c.b16 %v3122, %v3114
        %v4947 = vpack.c.b16 %v3123, %v3115
        %v4948 = vpack.c.b16 %v3124, %v3116
        %v4949 = vpack.c.b16 %v3125, %v3117
        %v4950 = vpack.c.b16 %v3126, %v3118
        %v4951 = vpack.c.b16 %v3127, %v3119
        %v4952 = vpack.c.b16 %v3128, %v3120
        %v4953 = vpack.c.b16 %v3129, %v3121
        %v4954 = vpack.c.b16 %v3138, %v3130
        %v4955 = vpack.c.b16 %v3139, %v3131
        %v4956 = vpack.c.b16 %v3140, %v3132
        %v4957 = vpack.c.b16 %v3141, %v3133
        %v4958 = vpack.c.b16 %v3142, %v3134
        %v4959 = vpack.c.b16 %v3143, %v3135
        %v4960 = vpack.c.b16 %v3144, %v3136
        %v4961 = vpack.c.b16 %v3145, %v3137
        %v4962 = vpack.c.b16 %v3154, %v3146
        %v4963 = vpack.c.b16 %v3155, %v3147
        %v4964 = vpack.c.b16 %v3156, %v3148
        %v4965 = vpack.c.b16 %v3157, %v3149
        %v4966 = vpack.c.b16 %v3158, %v3150
        %v4967 = vpack.c.b16 %v3159, %v3151
        %v4968 = vpack.c.b16 %v3160, %v3152
        %v4969 = vpack.c.b16 %v3161, %v3153
        %v4970 = vpack.c.b16 %v3170, %v3162
        %v4971 = vpack.c.b16 %v3171, %v3163
        %v4972 = vpack.c.b16 %v3172, %v3164
        %v4973 = vpack.c.b16 %v3173, %v3165
        %v4974 = vpack.c.b16 %v3174, %v3166
        %v4975 = vpack.c.b16 %v3175, %v3167
        %v4976 = vpack.c.b16 %v3176, %v3168
        %v4977 = vpack.c.b16 %v3177, %v3169
        %v4978 = vpack.c.b16 %v3186, %v3178
        %v4979 = vpack.c.b16 %v3187, %v3179
        %v4980 = vpack.c.b16 %v3188, %v3180
        %v4981 = vpack.c.b16 %v3189, %v3181
        %v4982 = vpack.c.b16 %v3190, %v3182
        %v4983 = vpack.c.b16 %v3191, %v3183
        %v4984 = vpack.c.b16 %v3192, %v3184
        %v4985 = vpack.c.b16 %v3193, %v3185
        %v4986 = vpack.c.b16 %v3202, %v3194
        %v4987 = vpack.c.b16 %v3203, %v3195
        %v4988 = vpack.c.b16 %v3204, %v3196
        %v4989 = vpack.c.b16 %v3205, %v3197
        %v4990 = vpack.c.b16 %v3206, %v3198
        %v4991 = vpack.c.b16 %v3207, %v3199
        %v4992 = vpack.c.b16 %v3208, %v3200
        %v4993 = vpack.c.b16 %v3209, %v3201
        %v4994 = vpack.c.b16 %v3218, %v3210
        %v4995 = vpack.c.b16 %v3219, %v3211
        %v4996 = vpack.c.b16 %v3220, %v3212
        %v4997 = vpack.c.b16 %v3221, %v3213
        %v4998 = vpack.c.b16 %v3222, %v3214
        %v4999 = vpack.c.b16 %v3223, %v3215
        %v5000 = vpack.c.b16 %v3224, %v3216
        %v5001 = vpack.c.b16 %v3225, %v3217
        %v5002 = vpack.c.b16 %v3234, %v3226
        %v5003 = vpack.c.b16 %v3235, %v3227
        %v5004 = vpack.c.b16 %v3236, %v3228
        %v5005 = vpack.c.b16 %v3237, %v3229
        %v5006 = vpack.c.b16 %v3238, %v3230
        %v5007 = vpack.c.b16 %v3239, %v3231
        %v5008 = vpack.c.b16 %v3240, %v3232
        %v5009 = vpack.c.b16 %v3241, %v3233
        %v5010 = vpack.c.b16 %v3250, %v3242
        %v5011 = vpack.c.b16 %v3251, %v3243
        %v5012 = vpack.c.b16 %v3252, %v3244
        %v5013 = vpack.c.b16 %v3253, %v3245
        %v5014 = vpack.c.b16 %v3254, %v3246
        %v5015 = vpack.c.b16 %v3255, %v3247
        %v5016 = vpack.c.b16 %v3256, %v3248
        %v5017 = vpack.c.b16 %v3257, %v3249
        %v5018 = vpack.c.b16 %v3266, %v3258
        %v5019 = vpack.c.b16 %v3267, %v3259
        %v5020 = vpack.c.b16 %v3268, %v3260
        %v5021 = vpack.c.b16 %v3269, %v3261
        %v5022 = vpack.c.b16 %v3270, %v3262
        %v5023 = vpack.c.b16 %v3271, %v3263
        %v5024 = vpack.c.b16 %v3272, %v3264
        %v5025 = vpack.c.b16 %v3273, %v3265
        %v5026 = vpack.c.b16 %v3282, %v3274
        %v5027 = vpack.c.b16 %v3283, %v3275
        %v5028 = vpack.c.b16 %v3284, %v3276
        %v5029 = vpack.c.b16 %v3285, %v3277
        %v5030 = vpack.c.b16 %v3286, %v3278
        %v5031 = vpack.c.b16 %v3287, %v3279
        %v5032 = vpack.c.b16 %v3288, %v3280
        %v5033 = vpack.c.b16 %v3289, %v3281
        %v5034 = vpack.c.b16 %v3298, %v3290
        %v5035 = vpack.c.b16 %v3299, %v3291
        %v5036 = vpack.c.b16 %v3300, %v3292
        %v5037 = vpack.c.b16 %v3301, %v3293
        %v5038 = vpack.c.b16 %v3302, %v3294
        %v5039 = vpack.c.b16 %v3303, %v3295
        %v5040 = vpack.c.b16 %v3304, %v3296
        %v5041 = vpack.c.b16 %v3305, %v3297
        %v5042 = vpack.c.b16 %v3314, %v3306
        %v5043 = vpack.c.b16 %v3315, %v3307
        %v5044 = vpack.c.b16 %v3316, %v3308
        %v5045 = vpack.c.b16 %v3317, %v3309
        %v5046 = vpack.c.b16 %v3318, %v3310
        %v5047 = vpack.c.b16 %v3319, %v3311
        %v5048 = vpack.c.b16 %v3320, %v3312
        %v5049 = vpack.c.b16 %v3321, %v3313
        %v5050 = vpack.c.b16 %v3330, %v3322
        %v5051 = vpack.c.b16 %v3331, %v3323
        %v5052 = vpack.c.b16 %v3332, %v3324
        %v5053 = vpack.c.b16 %v3333, %v3325
        %v5054 = vpack.c.b16 %v3334, %v3326
        %v5055 = vpack.c.b16 %v3335, %v3327
        %v5056 = vpack.c.b16 %v3336, %v3328
        %v5057 = vpack.c.b16 %v3337, %v3329
        %v5058 = vpack.c.b16 %v3346, %v3338
        %v5059 = vpack.c.b16 %v3347, %v3339
        %v5060 = vpack.c.b16 %v3348, %v3340
        %v5061 = vpack.c.b16 %v3349, %v3341
        %v5062 = vpack.c.b16 %v3350, %v3342
        %v5063 = vpack.c.b16 %v3351, %v3343
        %v5064 = vpack.c.b16 %v3352, %v3344
        %v5065 = vpack.c.b16 %v3353, %v3345
        %v5066 = vpack.c.b16 %v3362, %v3354
        %v5067 = vpack.c.b16 %v3363, %v3355
        %v5068 = vpack.c.b16 %v3364, %v3356
        %v5069 = vpack.c.b16 %v3365, %v3357
        %v5070 = vpack.c.b16 %v3366, %v3358
        %v5071 = vpack.c.b16 %v3367, %v3359
        %v5072 = vpack.c.b16 %v3368, %v3360
        %v5073 = vpack.c.b16 %v3369, %v3361
        %v5074 = vpack.c.b16 %v3378, %v3370
        %v5075 = vpack.c.b16 %v3379, %v3371
        %v5076 = vpack.c.b16 %v3380, %v3372
        %v5077 = vpack.c.b16 %v3381, %v3373
        %v5078 = vpack.c.b16 %v3382, %v3374
        %v5079 = vpack.c.b16 %v3383, %v3375
        %v5080 = vpack.c.b16 %v3384, %v3376
        %v5081 = vpack.c.b16 %v3385, %v3377
        %v5082 = vpack.c.b16 %v3394, %v3386
        %v5083 = vpack.c.b16 %v3395, %v3387
        %v5084 = vpack.c.b16 %v3396, %v3388
        %v5085 = vpack.c.b16 %v3397, %v3389
        %v5086 = vpack.c.b16 %v3398, %v3390
        %v5087 = vpack.c.b16 %v3399, %v3391
        %v5088 = vpack.c.b16 %v3400, %v3392
        %v5089 = vpack.c.b16 %v3401, %v3393
        %v5090 = vpack.c.b16 %v3410, %v3402
        %v5091 = vpack.c.b16 %v3411, %v3403
        %v5092 = vpack.c.b16 %v3412, %v3404
        %v5093 = vpack.c.b16 %v3413, %v3405
        %v5094 = vpack.c.b16 %v3414, %v3406
        %v5095 = vpack.c.b16 %v3415, %v3407
        %v5096 = vpack.c.b16 %v3416, %v3408
        %v5097 = vpack.c.b16 %v3417, %v3409
        %v5098 = vpack.c.b16 %v3426, %v3418
        %v5099 = vpack.c.b16 %v3427, %v3419
        %v5100 = vpack.c.b16 %v3428, %v3420
        %v5101 = vpack.c.b16 %v3429, %v3421
        %v5102 = vpack.c.b16 %v3430, %v3422
        %v5103 = vpack.c.b16 %v3431, %v3423
        %v5104 = vpack.c.b16 %v3432, %v3424
        %v5105 = vpack.c.b16 %v3433, %v3425
        %v5106 = vpack.c.b16 %v3442, %v3434
        %v5107 = vpack.c.b16 %v3443, %v3435
        %v5108 = vpack.c.b16 %v3444, %v3436
        %v5109 = vpack.c.b16 %v3445, %v3437
        %v5110 = vpack.c.b16 %v3446, %v3438
        %v5111 = vpack.c.b16 %v3447, %v3439
        %v5112 = vpack.c.b16 %v3448, %v3440
        %v5113 = vpack.c.b16 %v3449, %v3441
        %v5114 = vpack.c.b16 %v3458, %v3450
        %v5115 = vpack.c.b16 %v3459, %v3451
        %v5116 = vpack.c.b16 %v3460, %v3452
        %v5117 = vpack.c.b16 %v3461, %v3453
        %v5118 = vpack.c.b16 %v3462, %v3454
        %v5119 = vpack.c.b16 %v3463, %v3455
        %v5120 = vpack.c.b16 %v3464, %v3456
        %v5121 = vpack.c.b16 %v3465, %v3457
        %v5122 = vpack.c.b16 %v3474, %v3466
        %v5123 = vpack.c.b16 %v3475, %v3467
        %v5124 = vpack.c.b16 %v3476, %v3468
        %v5125 = vpack.c.b16 %v3477, %v3469
        %v5126 = vpack.c.b16 %v3478, %v3470
        %v5127 = vpack.c.b16 %v3479, %v3471
        %v5128 = vpack.c.b16 %v3480, %v3472
        %v5129 = vpack.c.b16 %v3481, %v3473
        %v5130 = vpack.c.b16 %v3490, %v3482
        %v5131 = vpack.c.b16 %v3491, %v3483
        %v5132 = vpack.c.b16 %v3492, %v3484
        %v5133 = vpack.c.b16 %v3493, %v3485
        %v5134 = vpack.c.b16 %v3494, %v3486
        %v5135 = vpack.c.b16 %v3495, %v3487
        %v5136 = vpack.c.b16 %v3496, %v3488
        %v5137 = vpack.c.b16 %v3497, %v3489
        %v5138 = vpack.c.b16 %v3506, %v3498
        %v5139 = vpack.c.b16 %v3507, %v3499
        %v5140 = vpack.c.b16 %v3508, %v3500
        %v5141 = vpack.c.b16 %v3509, %v3501
        %v5142 = vpack.c.b16 %v3510, %v3502
        %v5143 = vpack.c.b16 %v3511, %v3503
        %v5144 = vpack.c.b16 %v3512, %v3504
        %v5145 = vpack.c.b16 %v3513, %v3505
        %v5146 = vpack.c.b16 %v3522, %v3514
        %v5147 = vpack.c.b16 %v3523, %v3515
        %v5148 = vpack.c.b16 %v3524, %v3516
        %v5149 = vpack.c.b16 %v3525, %v3517
        %v5150 = vpack.c.b16 %v3526, %v3518
        %v5151 = vpack.c.b16 %v3527, %v3519
        %v5152 = vpack.c.b16 %v3528, %v3520
        %v5153 = vpack.c.b16 %v3529, %v3521
        %v5154 = vpack.c.b16 %v3538, %v3530
        %v5155 = vpack.c.b16 %v3539, %v3531
        %v5156 = vpack.c.b16 %v3540, %v3532
        %v5157 = vpack.c.b16 %v3541, %v3533
        %v5158 = vpack.c.b16 %v3542, %v3534
        %v5159 = vpack.c.b16 %v3543, %v3535
        %v5160 = vpack.c.b16 %v3544, %v3536
        %v5161 = vpack.c.b16 %v3545, %v3537
        %v5162 = vpack.c.b16 %v3554, %v3546
        %v5163 = vpack.c.b16 %v3555, %v3547
        %v5164 = vpack.c.b16 %v3556, %v3548
        %v5165 = vpack.c.b16 %v3557, %v3549
        %v5166 = vpack.c.b16 %v3558, %v3550
        %v5167 = vpack.c.b16 %v3559, %v3551
        %v5168 = vpack.c.b16 %v3560, %v3552
        %v5169 = vpack.c.b16 %v3561, %v3553
        %v5170 = vpack.c.b16 %v3570, %v3562
        %v5171 = vpack.c.b16 %v3571, %v3563
        %v5172 = vpack.c.b16 %v3572, %v3564
        %v5173 = vpack.c.b16 %v3573, %v3565
        %v5174 = vpack.c.b16 %v3574, %v3566
        %v5175 = vpack.c.b16 %v3575, %v3567
        %v5176 = vpack.c.b16 %v3576, %v3568
        %v5177 = vpack.c.b16 %v3577, %v3569
        %v5178 = vpack.c.b16 %v3586, %v3578
        %v5179 = vpack.c.b16 %v3587, %v3579
        %v5180 = vpack.c.b16 %v3588, %v3580
        %v5181 = vpack.c.b16 %v3589, %v3581
        %v5182 = vpack.c.b16 %v3590, %v3582
        %v5183 = vpack.c.b16 %v3591, %v3583
        %v5184 = vpack.c.b16 %v3592, %v3584
        %v5185 = vpack.c.b16 %v3593, %v3585
        %v5186 = vpack.c.b16 %v3602, %v3594
        %v5187 = vpack.c.b16 %v3603, %v3595
        %v5188 = vpack.c.b16 %v3604, %v3596
        %v5189 = vpack.c.b16 %v3605, %v3597
        %v5190 = vpack.c.b16 %v3606, %v3598
        %v5191 = vpack.c.b16 %v3607, %v3599
        %v5192 = vpack.c.b16 %v3608, %v3600
        %v5193 = vpack.c.b16 %v3609, %v3601
        %v5194 = vpack.c.b16 %v3618, %v3610
        %v5195 = vpack.c.b16 %v3619, %v3611
        %v5196 = vpack.c.b16 %v3620, %v3612
        %v5197 = vpack.c.b16 %v3621, %v3613
        %v5198 = vpack.c.b16 %v3622, %v3614
        %v5199 = vpack.c.b16 %v3623, %v3615
        %v5200 = vpack.c.b16 %v3624, %v3616
        %v5201 = vpack.c.b16 %v3625, %v3617
        %v5202 = vpack.c.b16 %v3634, %v3626
        %v5203 = vpack.c.b16 %v3635, %v3627
        %v5204 = vpack.c.b16 %v3636, %v3628
        %v5205 = vpack.c.b16 %v3637, %v3629
        %v5206 = vpack.c.b16 %v3638, %v3630
        %v5207 = vpack.c.b16 %v3639, %v3631
        %v5208 = vpack.c.b16 %v3640, %v3632
        %v5209 = vpack.c.b16 %v3641, %v3633
        %v5210 = vpack.c.b16 %v3650, %v3642
        %v5211 = vpack.c.b16 %v3651, %v3643
        %v5212 = vpack.c.b16 %v3652, %v3644
        %v5213 = vpack.c.b16 %v3653, %v3645
        %v5214 = vpack.c.b16 %v3654, %v3646
        %v5215 = vpack.c.b16 %v3655, %v3647
        %v5216 = vpack.c.b16 %v3656, %v3648
        %v5217 = vpack.c.b16 %v3657, %v3649
        %v5218 = vpack.c.b16 %v3666, %v3658
        %v5219 = vpack.c.b16 %v3667, %v3659
        %v5220 = vpack.c.b16 %v3668, %v3660
        %v5221 = vpack.c.b16 %v3669, %v3661
        %v5222 = vpack.c.b16 %v3670, %v3662
        %v5223 = vpack.c.b16 %v3671, %v3663
        %v5224 = vpack.c.b16 %v3672, %v3664
        %v5225 = vpack.c.b16 %v3673, %v3665
        %v5226 = vpack.c.b16 %v3682, %v3674
        %v5227 = vpack.c.b16 %v3683, %v3675
        %v5228 = vpack.c.b16 %v3684, %v3676
        %v5229 = vpack.c.b16 %v3685, %v3677
        %v5230 = vpack.c.b16 %v3686, %v3678
        %v5231 = vpack.c.b16 %v3687, %v3679
        %v5232 = vpack.c.b16 %v3688, %v3680
        %v5233 = vpack.c.b16 %v3689, %v3681
        %v5234 = vpack.c.b16 %v3698, %v3690
        %v5235 = vpack.c.b16 %v3699, %v3691
        %v5236 = vpack.c.b16 %v3700, %v3692
        %v5237 = vpack.c.b16 %v3701, %v3693
        %v5238 = vpack.c.b16 %v3702, %v3694
        %v5239 = vpack.c.b16 %v3703, %v3695
        %v5240 = vpack.c.b16 %v3704, %v3696
        %v5241 = vpack.c.b16 %v3705, %v3697
        %v5242 = vpack.c.b16 %v3714, %v3706
        %v5243 = vpack.c.b16 %v3715, %v3707
        %v5244 = vpack.c.b16 %v3716, %v3708
        %v5245 = vpack.c.b16 %v3717, %v3709
        %v5246 = vpack.c.b16 %v3718, %v3710
        %v5247 = vpack.c.b16 %v3719, %v3711
        %v5248 = vpack.c.b16 %v3720, %v3712
        %v5249 = vpack.c.b16 %v3721, %v3713
        %v5250 = vpack.c.b16 %v3730, %v3722
        %v5251 = vpack.c.b16 %v3731, %v3723
        %v5252 = vpack.c.b16 %v3732, %v3724
        %v5253 = vpack.c.b16 %v3733, %v3725
        %v5254 = vpack.c.b16 %v3734, %v3726
        %v5255 = vpack.c.b16 %v3735, %v3727
        %v5256 = vpack.c.b16 %v3736, %v3728
        %v5257 = vpack.c.b16 %v3737, %v3729
        %v5258 = vpack.c.b16 %v3746, %v3738
        %v5259 = vpack.c.b16 %v3747, %v3739
        %v5260 = vpack.c.b16 %v3748, %v3740
        %v5261 = vpack.c.b16 %v3749, %v3741
        %v5262 = vpack.c.b16 %v3750, %v3742
        %v5263 = vpack.c.b16 %v3751, %v3743
        %v5264 = vpack.c.b16 %v3752, %v3744
        %v5265 = vpack.c.b16 %v3753, %v3745
        %v5266 = vpack.c.b16 %v3762, %v3754
        %v5267 = vpack.c.b16 %v3763, %v3755
        %v5268 = vpack.c.b16 %v3764, %v3756
        %v5269 = vpack.c.b16 %v3765, %v3757
        %v5270 = vpack.c.b16 %v3766, %v3758
        %v5271 = vpack.c.b16 %v3767, %v3759
        %v5272 = vpack.c.b16 %v3768, %v3760
        %v5273 = vpack.c.b16 %v3769, %v3761
        %v5274 = vpack.c.b16 %v3778, %v3770
        %v5275 = vpack.c.b16 %v3779, %v3771
        %v5276 = vpack.c.b16 %v3780, %v3772
        %v5277 = vpack.c.b16 %v3781, %v3773
        %v5278 = vpack.c.b16 %v3782, %v3774
        %v5279 = vpack.c.b16 %v3783, %v3775
        %v5280 = vpack.c.b16 %v3784, %v3776
        %v5281 = vpack.c.b16 %v3785, %v3777
        %v5282 = vpack.c.b16 %v3794, %v3786
        %v5283 = vpack.c.b16 %v3795, %v3787
        %v5284 = vpack.c.b16 %v3796, %v3788
        %v5285 = vpack.c.b16 %v3797, %v3789
        %v5286 = vpack.c.b16 %v3798, %v3790
        %v5287 = vpack.c.b16 %v3799, %v3791
        %v5288 = vpack.c.b16 %v3800, %v3792
        %v5289 = vpack.c.b16 %v3801, %v3793
        %v5290 = vpack.c.b16 %v3810, %v3802
        %v5291 = vpack.c.b16 %v3811, %v3803
        %v5292 = vpack.c.b16 %v3812, %v3804
        %v5293 = vpack.c.b16 %v3813, %v3805
        %v5294 = vpack.c.b16 %v3814, %v3806
        %v5295 = vpack.c.b16 %v3815, %v3807
        %v5296 = vpack.c.b16 %v3816, %v3808
        %v5297 = vpack.c.b16 %v3817, %v3809
        %v5298 = vpack.c.b16 %v3826, %v3818
        %v5299 = vpack.c.b16 %v3827, %v3819
        %v5300 = vpack.c.b16 %v3828, %v3820
        %v5301 = vpack.c.b16 %v3829, %v3821
        %v5302 = vpack.c.b16 %v3830, %v3822
        %v5303 = vpack.c.b16 %v3831, %v3823
        %v5304 = vpack.c.b16 %v3832, %v3824
        %v5305 = vpack.c.b16 %v3833, %v3825
        %v5306 = vpack.c.b16 %v3842, %v3834
        %v5307 = vpack.c.b16 %v3843, %v3835
        %v5308 = vpack.c.b16 %v3844, %v3836
        %v5309 = vpack.c.b16 %v3845, %v3837
        %v5310 = vpack.c.b16 %v3846, %v3838
        %v5311 = vpack.c.b16 %v3847, %v3839
        %v5312 = vpack.c.b16 %v3848, %v3840
        %v5313 = vpack.c.b16 %v3849, %v3841
        %v5314 = vpack.c.b16 %v3858, %v3850
        %v5315 = vpack.c.b16 %v3859, %v3851
        %v5316 = vpack.c.b16 %v3860, %v3852
        %v5317 = vpack.c.b16 %v3861, %v3853
        %v5318 = vpack.c.b16 %v3862, %v3854
        %v5319 = vpack.c.b16 %v3863, %v3855
        %v5320 = vpack.c.b16 %v3864, %v3856
        %v5321 = vpack.c.b16 %v3865, %v3857
        %v5322 = vpack.c.b16 %v3874, %v3866
        %v5323 = vpack.c.b16 %v3875, %v3867
        %v5324 = vpack.c.b16 %v3876, %v3868
        %v5325 = vpack.c.b16 %v3877, %v3869
        %v5326 = vpack.c.b16 %v3878, %v3870
        %v5327 = vpack.c.b16 %v3879, %v3871
        %v5328 = vpack.c.b16 %v3880, %v3872
        %v5329 = vpack.c.b16 %v3881, %v3873
        %v5330 = vpack.c.b16 %v3890, %v3882
        %v5331 = vpack.c.b16 %v3891, %v3883
        %v5332 = vpack.c.b16 %v3892, %v3884
        %v5333 = vpack.c.b16 %v3893, %v3885
        %v5334 = vpack.c.b16 %v3894, %v3886
        %v5335 = vpack.c.b16 %v3895, %v3887
        %v5336 = vpack.c.b16 %v3896, %v3888
        %v5337 = vpack.c.b16 %v3897, %v3889
        %v5338 = vpack.c.b16 %v3906, %v3898
        %v5339 = vpack.c.b16 %v3907, %v3899
        %v5340 = vpack.c.b16 %v3908, %v3900
        %v5341 = vpack.c.b16 %v3909, %v3901
        %v5342 = vpack.c.b16 %v3910, %v3902
        %v5343 = vpack.c.b16 %v3911, %v3903
        %v5344 = vpack.c.b16 %v3912, %v3904
        %v5345 = vpack.c.b16 %v3913, %v3905
        %v5346 = vpack.c.b16 %v3922, %v3914
        %v5347 = vpack.c.b16 %v3923, %v3915
        %v5348 = vpack.c.b16 %v3924, %v3916
        %v5349 = vpack.c.b16 %v3925, %v3917
        %v5350 = vpack.c.b16 %v3926, %v3918
        %v5351 = vpack.c.b16 %v3927, %v3919
        %v5352 = vpack.c.b16 %v3928, %v3920
        %v5353 = vpack.c.b16 %v3929, %v3921
        %v5354 = vpack.c.b16 %v3938, %v3930
        %v5355 = vpack.c.b16 %v3939, %v3931
        %v5356 = vpack.c.b16 %v3940, %v3932
        %v5357 = vpack.c.b16 %v3941, %v3933
        %v5358 = vpack.c.b16 %v3942, %v3934
        %v5359 = vpack.c.b16 %v3943, %v3935
        %v5360 = vpack.c.b16 %v3944, %v3936
        %v5361 = vpack.c.b16 %v3945, %v3937
        %v5362 = vpack.c.b16 %v3954, %v3946
        %v5363 = vpack.c.b16 %v3955, %v3947
        %v5364 = vpack.c.b16 %v3956, %v3948
        %v5365 = vpack.c.b16 %v3957, %v3949
        %v5366 = vpack.c.b16 %v3958, %v3950
        %v5367 = vpack.c.b16 %v3959, %v3951
        %v5368 = vpack.c.b16 %v3960, %v3952
        %v5369 = vpack.c.b16 %v3961, %v3953
        %v5370 = vpack.c.b16 %v3970, %v3962
        %v5371 = vpack.c.b16 %v3971, %v3963
        %v5372 = vpack.c.b16 %v3972, %v3964
        %v5373 = vpack.c.b16 %v3973, %v3965
        %v5374 = vpack.c.b16 %v3974, %v3966
        %v5375 = vpack.c.b16 %v3975, %v3967
        %v5376 = vpack.c.b16 %v3976, %v3968
        %v5377 = vpack.c.b16 %v3977, %v3969
        %v5378 = vpack.c.b16 %v3986, %v3978
        %v5379 = vpack.c.b16 %v3987, %v3979
        %v5380 = vpack.c.b16 %v3988, %v3980
        %v5381 = vpack.c.b16 %v3989, %v3981
        %v5382 = vpack.c.b16 %v3990, %v3982
        %v5383 = vpack.c.b16 %v3991, %v3983
        %v5384 = vpack.c.b16 %v3992, %v3984
        %v5385 = vpack.c.b16 %v3993, %v3985
        %v5386 = vpack.c.b16 %v4002, %v3994
        %v5387 = vpack.c.b16 %v4003, %v3995
        %v5388 = vpack.c.b16 %v4004, %v3996
        %v5389 = vpack.c.b16 %v4005, %v3997
        %v5390 = vpack.c.b16 %v4006, %v3998
        %v5391 = vpack.c.b16 %v4007, %v3999
        %v5392 = vpack.c.b16 %v4008, %v4000
        %v5393 = vpack.c.b16 %v4009, %v4001
        %v5394 = vpack.c.b16 %v4018, %v4010
        %v5395 = vpack.c.b16 %v4019, %v4011
        %v5396 = vpack.c.b16 %v4020, %v4012
        %v5397 = vpack.c.b16 %v4021, %v4013
        %v5398 = vpack.c.b16 %v4022, %v4014
        %v5399 = vpack.c.b16 %v4023, %v4015
        %v5400 = vpack.c.b16 %v4024, %v4016
        %v5401 = vpack.c.b16 %v4025, %v4017
        %v5402 = vpack.c.b16 %v4034, %v4026
        %v5403 = vpack.c.b16 %v4035, %v4027
        %v5404 = vpack.c.b16 %v4036, %v4028
        %v5405 = vpack.c.b16 %v4037, %v4029
        %v5406 = vpack.c.b16 %v4038, %v4030
        %v5407 = vpack.c.b16 %v4039, %v4031
        %v5408 = vpack.c.b16 %v4040, %v4032
        %v5409 = vpack.c.b16 %v4041, %v4033
        %v5410 = vpack.c.b16 %v4050, %v4042
        %v5411 = vpack.c.b16 %v4051, %v4043
        %v5412 = vpack.c.b16 %v4052, %v4044
        %v5413 = vpack.c.b16 %v4053, %v4045
        %v5414 = vpack.c.b16 %v4054, %v4046
        %v5415 = vpack.c.b16 %v4055, %v4047
        %v5416 = vpack.c.b16 %v4056, %v4048
        %v5417 = vpack.c.b16 %v4057, %v4049
        %v5418 = vpack.c.b16 %v4066, %v4058
        %v5419 = vpack.c.b16 %v4067, %v4059
        %v5420 = vpack.c.b16 %v4068, %v4060
        %v5421 = vpack.c.b16 %v4069, %v4061
        %v5422 = vpack.c.b16 %v4070, %v4062
        %v5423 = vpack.c.b16 %v4071, %v4063
        %v5424 = vpack.c.b16 %v4072, %v4064
        %v5425 = vpack.c.b16 %v4073, %v4065
        %v5426 = vpack.c.b16 %v4082, %v4074
        %v5427 = vpack.c.b16 %v4083, %v4075
        %v5428 = vpack.c.b16 %v4084, %v4076
        %v5429 = vpack.c.b16 %v4085, %v4077
        %v5430 = vpack.c.b16 %v4086, %v4078
        %v5431 = vpack.c.b16 %v4087, %v4079
        %v5432 = vpack.c.b16 %v4088, %v4080
        %v5433 = vpack.c.b16 %v4089, %v4081
        %v5434 = vpack.c.b16 %v4098, %v4090
        %v5435 = vpack.c.b16 %v4099, %v4091
        %v5436 = vpack.c.b16 %v4100, %v4092
        %v5437 = vpack.c.b16 %v4101, %v4093
        %v5438 = vpack.c.b16 %v4102, %v4094
        %v5439 = vpack.c.b16 %v4103, %v4095
        %v5440 = vpack.c.b16 %v4104, %v4096
        %v5441 = vpack.c.b16 %v4105, %v4097
        %v5442 = vpack.c.b16 %v4114, %v4106
        %v5443 = vpack.c.b16 %v4115, %v4107
        %v5444 = vpack.c.b16 %v4116, %v4108
        %v5445 = vpack.c.b16 %v4117, %v4109
        %v5446 = vpack.c.b16 %v4118, %v4110
        %v5447 = vpack.c.b16 %v4119, %v4111
        %v5448 = vpack.c.b16 %v4120, %v4112
        %v5449 = vpack.c.b16 %v4121, %v4113
        %v5450 = vpack.c.b16 %v4130, %v4122
        %v5451 = vpack.c.b16 %v4131, %v4123
        %v5452 = vpack.c.b16 %v4132, %v4124
        %v5453 = vpack.c.b16 %v4133, %v4125
        %v5454 = vpack.c.b16 %v4134, %v4126
        %v5455 = vpack.c.b16 %v4135, %v4127
        %v5456 = vpack.c.b16 %v4136, %v4128
        %v5457 = vpack.c.b16 %v4137, %v4129
        %v5458 = vpack.c.b16 %v4146, %v4138
        %v5459 = vpack.c.b16 %v4147, %v4139
        %v5460 = vpack.c.b16 %v4148, %v4140
        %v5461 = vpack.c.b16 %v4149, %v4141
        %v5462 = vpack.c.b16 %v4150, %v4142
        %v5463 = vpack.c.b16 %v4151, %v4143
        %v5464 = vpack.c.b16 %v4152, %v4144
        %v5465 = vpack.c.b16 %v4153, %v4145
        %v5466 = vpack.c.b16 %v4162, %v4154
        %v5467 = vpack.c.b16 %v4163, %v4155
        %v5468 = vpack.c.b16 %v4164, %v4156
        %v5469 = vpack.c.b16 %v4165, %v4157
        %v5470 = vpack.c.b16 %v4166, %v4158
        %v5471 = vpack.c.b16 %v4167, %v4159
        %v5472 = vpack.c.b16 %v4168, %v4160
        %v5473 = vpack.c.b16 %v4169, %v4161
        %v5474 = vpack.c.b16 %v4178, %v4170
        %v5475 = vpack.c.b16 %v4179, %v4171
        %v5476 = vpack.c.b16 %v4180, %v4172
        %v5477 = vpack.c.b16 %v4181, %v4173
        %v5478 = vpack.c.b16 %v4182, %v4174
        %v5479 = vpack.c.b16 %v4183, %v4175
        %v5480 = vpack.c.b16 %v4184, %v4176
        %v5481 = vpack.c.b16 %v4185, %v4177
        %v5482 = vpack.c.b16 %v4194, %v4186
        %v5483 = vpack.c.b16 %v4195, %v4187
        %v5484 = vpack.c.b16 %v4196, %v4188
        %v5485 = vpack.c.b16 %v4197, %v4189
        %v5486 = vpack.c.b16 %v4198, %v4190
        %v5487 = vpack.c.b16 %v4199, %v4191
        %v5488 = vpack.c.b16 %v4200, %v4192
        %v5489 = vpack.c.b16 %v4201, %v4193
        %v5490 = vpack.c.b16 %v4210, %v4202
        %v5491 = vpack.c.b16 %v4211, %v4203
        %v5492 = vpack.c.b16 %v4212, %v4204
        %v5493 = vpack.c.b16 %v4213, %v4205
        %v5494 = vpack.c.b16 %v4214, %v4206
        %v5495 = vpack.c.b16 %v4215, %v4207
        %v5496 = vpack.c.b16 %v4216, %v4208
        %v5497 = vpack.c.b16 %v4217, %v4209
        %v5498 = vpack.c.b16 %v4226, %v4218
        %v5499 = vpack.c.b16 %v4227, %v4219
        %v5500 = vpack.c.b16 %v4228, %v4220
        %v5501 = vpack.c.b16 %v4229, %v4221
        %v5502 = vpack.c.b16 %v4230, %v4222
        %v5503 = vpack.c.b16 %v4231, %v4223
        %v5504 = vpack.c.b16 %v4232, %v4224
        %v5505 = vpack.c.b16 %v4233, %v4225
        %v5506 = vpack.c.b16 %v4242, %v4234
        %v5507 = vpack.c.b16 %v4243, %v4235
        %v5508 = vpack.c.b16 %v4244, %v4236
        %v5509 = vpack.c.b16 %v4245, %v4237
        %v5510 = vpack.c.b16 %v4246, %v4238
        %v5511 = vpack.c.b16 %v4247, %v4239
        %v5512 = vpack.c.b16 %v4248, %v4240
        %v5513 = vpack.c.b16 %v4249, %v4241
        %v5514 = vpack.c.b16 %v4258, %v4250
        %v5515 = vpack.c.b16 %v4259, %v4251
        %v5516 = vpack.c.b16 %v4260, %v4252
        %v5517 = vpack.c.b16 %v4261, %v4253
        %v5518 = vpack.c.b16 %v4262, %v4254
        %v5519 = vpack.c.b16 %v4263, %v4255
        %v5520 = vpack.c.b16 %v4264, %v4256
        %v5521 = vpack.c.b16 %v4265, %v4257
        %v5522 = vpack.c.b16 %v4274, %v4266
        %v5523 = vpack.c.b16 %v4275, %v4267
        %v5524 = vpack.c.b16 %v4276, %v4268
        %v5525 = vpack.c.b16 %v4277, %v4269
        %v5526 = vpack.c.b16 %v4278, %v4270
        %v5527 = vpack.c.b16 %v4279, %v4271
        %v5528 = vpack.c.b16 %v4280, %v4272
        %v5529 = vpack.c.b16 %v4281, %v4273
        %v5530 = vpack.c.b16 %v4290, %v4282
        %v5531 = vpack.c.b16 %v4291, %v4283
        %v5532 = vpack.c.b16 %v4292, %v4284
        %v5533 = vpack.c.b16 %v4293, %v4285
        %v5534 = vpack.c.b16 %v4294, %v4286
        %v5535 = vpack.c.b16 %v4295, %v4287
        %v5536 = vpack.c.b16 %v4296, %v4288
        %v5537 = vpack.c.b16 %v4297, %v4289
        %v5538 = vpack.c.b16 %v4306, %v4298
        %v5539 = vpack.c.b16 %v4307, %v4299
        %v5540 = vpack.c.b16 %v4308, %v4300
        %v5541 = vpack.c.b16 %v4309, %v4301
        %v5542 = vpack.c.b16 %v4310, %v4302
        %v5543 = vpack.c.b16 %v4311, %v4303
        %v5544 = vpack.c.b16 %v4312, %v4304
        %v5545 = vpack.c.b16 %v4313, %v4305
        %v5546 = vpack.c.b16 %v4322, %v4314
        %v5547 = vpack.c.b16 %v4323, %v4315
        %v5548 = vpack.c.b16 %v4324, %v4316
        %v5549 = vpack.c.b16 %v4325, %v4317
        %v5550 = vpack.c.b16 %v4326, %v4318
        %v5551 = vpack.c.b16 %v4327, %v4319
        %v5552 = vpack.c.b16 %v4328, %v4320
        %v5553 = vpack.c.b16 %v4329, %v4321
        %v5554 = vpack.c.b16 %v4338, %v4330
        %v5555 = vpack.c.b16 %v4339, %v4331
        %v5556 = vpack.c.b16 %v4340, %v4332
        %v5557 = vpack.c.b16 %v4341, %v4333
        %v5558 = vpack.c.b16 %v4342, %v4334
        %v5559 = vpack.c.b16 %v4343, %v4335
        %v5560 = vpack.c.b16 %v4344, %v4336
        %v5561 = vpack.c.b16 %v4345, %v4337
        %v5562 = vpack.c.b16 %v4354, %v4346
        %v5563 = vpack.c.b16 %v4355, %v4347
        %v5564 = vpack.c.b16 %v4356, %v4348
        %v5565 = vpack.c.b16 %v4357, %v4349
        %v5566 = vpack.c.b16 %v4358, %v4350
        %v5567 = vpack.c.b16 %v4359, %v4351
        %v5568 = vpack.c.b16 %v4360, %v4352
        %v5569 = vpack.c.b16 %v4361, %v4353
        %v5570 = vpack.c.b16 %v4370, %v4362
        %v5571 = vpack.c.b16 %v4371, %v4363
        %v5572 = vpack.c.b16 %v4372, %v4364
        %v5573 = vpack.c.b16 %v4373, %v4365
        %v5574 = vpack.c.b16 %v4374, %v4366
        %v5575 = vpack.c.b16 %v4375, %v4367
        %v5576 = vpack.c.b16 %v4376, %v4368
        %v5577 = vpack.c.b16 %v4377, %v4369
        %v5578 = vpack.c.b16 %v4386, %v4378
        %v5579 = vpack.c.b16 %v4387, %v4379
        %v5580 = vpack.c.b16 %v4388, %v4380
        %v5581 = vpack.c.b16 %v4389, %v4381
        %v5582 = vpack.c.b16 %v4390, %v4382
        %v5583 = vpack.c.b16 %v4391, %v4383
        %v5584 = vpack.c.b16 %v4392, %v4384
        %v5585 = vpack.c.b16 %v4393, %v4385
        %v5586 = vpack.c.b16 %v4402, %v4394
        %v5587 = vpack.c.b16 %v4403, %v4395
        %v5588 = vpack.c.b16 %v4404, %v4396
        %v5589 = vpack.c.b16 %v4405, %v4397
        %v5590 = vpack.c.b16 %v4406, %v4398
        %v5591 = vpack.c.b16 %v4407, %v4399
        %v5592 = vpack.c.b16 %v4408, %v4400
        %v5593 = vpack.c.b16 %v4409, %v4401
        %v5594 = vpack.c.b16 %v4418, %v4410
        %v5595 = vpack.c.b16 %v4419, %v4411
        %v5596 = vpack.c.b16 %v4420, %v4412
        %v5597 = vpack.c.b16 %v4421, %v4413
        %v5598 = vpack.c.b16 %v4422, %v4414
        %v5599 = vpack.c.b16 %v4423, %v4415
        %v5600 = vpack.c.b16 %v4424, %v4416
        %v5601 = vpack.c.b16 %v4425, %v4417
        %v5602 = vpack.c.b16 %v4434, %v4426
        %v5603 = vpack.c.b16 %v4435, %v4427
        %v5604 = vpack.c.b16 %v4436, %v4428
        %v5605 = vpack.c.b16 %v4437, %v4429
        %v5606 = vpack.c.b16 %v4438, %v4430
        %v5607 = vpack.c.b16 %v4439, %v4431
        %v5608 = vpack.c.b16 %v4440, %v4432
        %v5609 = vpack.c.b16 %v4441, %v4433
        %v5610 = vpack.c.b16 %v4450, %v4442
        %v5611 = vpack.c.b16 %v4451, %v4443
        %v5612 = vpack.c.b16 %v4452, %v4444
        %v5613 = vpack.c.b16 %v4453, %v4445
        %v5614 = vpack.c.b16 %v4454, %v4446
        %v5615 = vpack.c.b16 %v4455, %v4447
        %v5616 = vpack.c.b16 %v4456, %v4448
        %v5617 = vpack.c.b16 %v4457, %v4449
        %v5618 = vpack.c.b16 %v4466, %v4458
        %v5619 = vpack.c.b16 %v4467, %v4459
        %v5620 = vpack.c.b16 %v4468, %v4460
        %v5621 = vpack.c.b16 %v4469, %v4461
        %v5622 = vpack.c.b16 %v4470, %v4462
        %v5623 = vpack.c.b16 %v4471, %v4463
        %v5624 = vpack.c.b16 %v4472, %v4464
        %v5625 = vpack.c.b16 %v4473, %v4465
        %v5626 = vpack.c.b16 %v4482, %v4474
        %v5627 = vpack.c.b16 %v4483, %v4475
        %v5628 = vpack.c.b16 %v4484, %v4476
        %v5629 = vpack.c.b16 %v4485, %v4477
        %v5630 = vpack.c.b16 %v4486, %v4478
        %v5631 = vpack.c.b16 %v4487, %v4479
        %v5632 = vpack.c.b16 %v4488, %v4480
        %v5633 = vpack.c.b16 %v4489, %v4481
        %v5634 = vpack.c.b16 %v4498, %v4490
        %v5635 = vpack.c.b16 %v4499, %v4491
        %v5636 = vpack.c.b16 %v4500, %v4492
        %v5637 = vpack.c.b16 %v4501, %v4493
        %v5638 = vpack.c.b16 %v4502, %v4494
        %v5639 = vpack.c.b16 %v4503, %v4495
        %v5640 = vpack.c.b16 %v4504, %v4496
        %v5641 = vpack.c.b16 %v4505, %v4497
        %v5642 = vpack.c.b16 %v4514, %v4506
        %v5643 = vpack.c.b16 %v4515, %v4507
        %v5644 = vpack.c.b16 %v4516, %v4508
        %v5645 = vpack.c.b16 %v4517, %v4509
        %v5646 = vpack.c.b16 %v4518, %v4510
        %v5647 = vpack.c.b16 %v4519, %v4511
        %v5648 = vpack.c.b16 %v4520, %v4512
        %v5649 = vpack.c.b16 %v4521, %v4513
        %v5650 = vpack.c.b16 %v4530, %v4522
        %v5651 = vpack.c.b16 %v4531, %v4523
        %v5652 = vpack.c.b16 %v4532, %v4524
        %v5653 = vpack.c.b16 %v4533, %v4525
        %v5654 = vpack.c.b16 %v4534, %v4526
        %v5655 = vpack.c.b16 %v4535, %v4527
        %v5656 = vpack.c.b16 %v4536, %v4528
        %v5657 = vpack.c.b16 %v4537, %v4529
        %v5658 = vpack.c.b16 %v4546, %v4538
        %v5659 = vpack.c.b16 %v4547, %v4539
        %v5660 = vpack.c.b16 %v4548, %v4540
        %v5661 = vpack.c.b16 %v4549, %v4541
        %v5662 = vpack.c.b16 %v4550, %v4542
        %v5663 = vpack.c.b16 %v4551, %v4543
        %v5664 = vpack.c.b16 %v4552, %v4544
        %v5665 = vpack.c.b16 %v4553, %v4545
        %v5666 = vpack.c.b16 %v4562, %v4554
        %v5667 = vpack.c.b16 %v4563, %v4555
        %v5668 = vpack.c.b16 %v4564, %v4556
        %v5669 = vpack.c.b16 %v4565, %v4557
        %v5670 = vpack.c.b16 %v4566, %v4558
        %v5671 = vpack.c.b16 %v4567, %v4559
        %v5672 = vpack.c.b16 %v4568, %v4560
        %v5673 = vpack.c.b16 %v4569, %v4561
        %v5674 = vpack.c.b16 %v4578, %v4570
        %v5675 = vpack.c.b16 %v4579, %v4571
        %v5676 = vpack.c.b16 %v4580, %v4572
        %v5677 = vpack.c.b16 %v4581, %v4573
        %v5678 = vpack.c.b16 %v4582, %v4574
        %v5679 = vpack.c.b16 %v4583, %v4575
        %v5680 = vpack.c.b16 %v4584, %v4576
        %v5681 = vpack.c.b16 %v4585, %v4577
        %v5682 = vpack.c.b16 %v4594, %v4586
        %v5683 = vpack.c.b16 %v4595, %v4587
        %v5684 = vpack.c.b16 %v4596, %v4588
        %v5685 = vpack.c.b16 %v4597, %v4589
        %v5686 = vpack.c.b16 %v4598, %v4590
        %v5687 = vpack.c.b16 %v4599, %v4591
        %v5688 = vpack.c.b16 %v4600, %v4592
        %v5689 = vpack.c.b16 %v4601, %v4593
        %v5690 = vpack.c.b16 %v4610, %v4602
        %v5691 = vpack.c.b16 %v4611, %v4603
        %v5692 = vpack.c.b16 %v4612, %v4604
        %v5693 = vpack.c.b16 %v4613, %v4605
        %v5694 = vpack.c.b16 %v4614, %v4606
        %v5695 = vpack.c.b16 %v4615, %v4607
        %v5696 = vpack.c.b16 %v4616, %v4608
        %v5697 = vpack.c.b16 %v4617, %v4609
        %v5698 = vpack.c.b16 %v4626, %v4618
        %v5699 = vpack.c.b16 %v4627, %v4619
        %v5700 = vpack.c.b16 %v4628, %v4620
        %v5701 = vpack.c.b16 %v4629, %v4621
        %v5702 = vpack.c.b16 %v4630, %v4622
        %v5703 = vpack.c.b16 %v4631, %v4623
        %v5704 = vpack.c.b16 %v4632, %v4624
        %v5705 = vpack.c.b16 %v4633, %v4625
        %v5706 = vpack.c.b16 %v4642, %v4634
        %v5707 = vpack.c.b16 %v4643, %v4635
        %v5708 = vpack.c.b16 %v4644, %v4636
        %v5709 = vpack.c.b16 %v4645, %v4637
        %v5710 = vpack.c.b16 %v4646, %v4638
        %v5711 = vpack.c.b16 %v4647, %v4639
        %v5712 = vpack.c.b16 %v4648, %v4640
        %v5713 = vpack.c.b16 %v4649, %v4641
        %v5714 = vpack.c.b16 %v4658, %v4650
        %v5715 = vpack.c.b16 %v4659, %v4651
        %v5716 = vpack.c.b16 %v4660, %v4652
        %v5717 = vpack.c.b16 %v4661, %v4653
        %v5718 = vpack.c.b16 %v4662, %v4654
        %v5719 = vpack.c.b16 %v4663, %v4655
        %v5720 = vpack.c.b16 %v4664, %v4656
        %v5721 = vpack.c.b16 %v4665, %v4657
        %v5722 = vpack.c.b16 %v4674, %v4666
        %v5723 = vpack.c.b16 %v4675, %v4667
        %v5724 = vpack.c.b16 %v4676, %v4668
        %v5725 = vpack.c.b16 %v4677, %v4669
        %v5726 = vpack.c.b16 %v4678, %v4670
        %v5727 = vpack.c.b16 %v4679, %v4671
        %v5728 = vpack.c.b16 %v4680, %v4672
        %v5729 = vpack.c.b16 %v4681, %v4673
        %v5730 = vpack.c.b16 %v4690, %v4682
        %v5731 = vpack.c.b16 %v4691, %v4683
        %v5732 = vpack.c.b16 %v4692, %v4684
        %v5733 = vpack.c.b16 %v4693, %v4685
        %v5734 = vpack.c.b16 %v4694, %v4686
        %v5735 = vpack.c.b16 %v4695, %v4687
        %v5736 = vpack.c.b16 %v4696, %v4688
        %v5737 = vpack.c.b16 %v4697, %v4689
        %v5738 = vpack.c.b16 %v4706, %v4698
        %v5739 = vpack.c.b16 %v4707, %v4699
        %v5740 = vpack.c.b16 %v4708, %v4700
        %v5741 = vpack.c.b16 %v4709, %v4701
        %v5742 = vpack.c.b16 %v4710, %v4702
        %v5743 = vpack.c.b16 %v4711, %v4703
        %v5744 = vpack.c.b16 %v4712, %v4704
        %v5745 = vpack.c.b16 %v4713, %v4705
        %v5746 = vpack.c.b16 %v4722, %v4714
        %v5747 = vpack.c.b16 %v4723, %v4715
        %v5748 = vpack.c.b16 %v4724, %v4716
        %v5749 = vpack.c.b16 %v4725, %v4717
        %v5750 = vpack.c.b16 %v4726, %v4718
        %v5751 = vpack.c.b16 %v4727, %v4719
        %v5752 = vpack.c.b16 %v4728, %v4720
        %v5753 = vpack.c.b16 %v4729, %v4721
        %6778 = vmatpush.bf16.msra.mxu0 %v4786
        %6779 = vmatpush.bf16.msra.mxu0 %v4778
        %6780 = vmatpush.bf16.msra.mxu0 %v4770
        %6781 = vmatpush.bf16.msra.mxu0 %v4762
        %6782 = vmatpush.bf16.msra.mxu0 %v4754
        %6783 = vmatpush.bf16.msra.mxu0 %v4746
        %6784 = vmatpush.bf16.msra.mxu0 %v4738
        %6785 = vmatpush.bf16.msra.mxu0 %v4730
        %6786 = vmatmul.bf16.gmra.mxu0 %v1626
        %v6787 = vpop.f32.mrf.mxu0
        %v6788 = vadd.f32 0.0, %v6787
        %v6789 = vpop.f32.mrf.mxu0
        %v6790 = vadd.f32 0.0, %v6789
        %6791 = vdwg.mxu0
        %6792 = vmatpush.bf16.msra.mxu0 %v4850
        %6793 = vmatpush.bf16.msra.mxu0 %v4842
        %6794 = vmatpush.bf16.msra.mxu0 %v4834
        %6795 = vmatpush.bf16.msra.mxu0 %v4826
        %6796 = vmatpush.bf16.msra.mxu0 %v4818
        %6797 = vmatpush.bf16.msra.mxu0 %v4810
        %6798 = vmatpush.bf16.msra.mxu0 %v4802
        %6799 = vmatpush.bf16.msra.mxu0 %v4794
        %6800 = vmatmul.bf16.gmra.mxu0 %v1627
        %v6801 = vpop.f32.mrf.mxu0
        %v6802 = vadd.f32 %v6788, %v6801
        %v6803 = vpop.f32.mrf.mxu0
        %v6804 = vadd.f32 %v6790, %v6803
        %6805 = vdwg.mxu0
        %6806 = vmatpush.bf16.msra.mxu0 %v4914
        %6807 = vmatpush.bf16.msra.mxu0 %v4906
        %6808 = vmatpush.bf16.msra.mxu0 %v4898
        %6809 = vmatpush.bf16.msra.mxu0 %v4890
        %6810 = vmatpush.bf16.msra.mxu0 %v4882
        %6811 = vmatpush.bf16.msra.mxu0 %v4874
        %6812 = vmatpush.bf16.msra.mxu0 %v4866
        %6813 = vmatpush.bf16.msra.mxu0 %v4858
        %6814 = vmatmul.bf16.gmra.mxu0 %v1628
        %v6815 = vpop.f32.mrf.mxu0
        %v6816 = vadd.f32 %v6802, %v6815
        %v6817 = vpop.f32.mrf.mxu0
        %v6818 = vadd.f32 %v6804, %v6817
        %6819 = vdwg.mxu0
        %6820 = vmatpush.bf16.msra.mxu0 %v4978
        %6821 = vmatpush.bf16.msra.mxu0 %v4970
        %6822 = vmatpush.bf16.msra.mxu0 %v4962
        %6823 = vmatpush.bf16.msra.mxu0 %v4954
        %6824 = vmatpush.bf16.msra.mxu0 %v4946
        %6825 = vmatpush.bf16.msra.mxu0 %v4938
        %6826 = vmatpush.bf16.msra.mxu0 %v4930
        %6827 = vmatpush.bf16.msra.mxu0 %v4922
        %6828 = vmatmul.bf16.gmra.mxu0 %v1629
        %v6829 = vpop.f32.mrf.mxu0
        %v6830 = vadd.f32 %v6816, %v6829
        %v6831 = vpop.f32.mrf.mxu0
        %v6832 = vadd.f32 %v6818, %v6831
        %6833 = vdwg.mxu0
        %6834 = vmatpush.bf16.msra.mxu0 %v5042
        %6835 = vmatpush.bf16.msra.mxu0 %v5034
        %6836 = vmatpush.bf16.msra.mxu0 %v5026
        %6837 = vmatpush.bf16.msra.mxu0 %v5018
        %6838 = vmatpush.bf16.msra.mxu0 %v5010
        %6839 = vmatpush.bf16.msra.mxu0 %v5002
        %6840 = vmatpush.bf16.msra.mxu0 %v4994
        %6841 = vmatpush.bf16.msra.mxu0 %v4986
        %6842 = vmatmul.bf16.gmra.mxu0 %v1630
        %v6843 = vpop.f32.mrf.mxu0
        %v6844 = vadd.f32 %v6830, %v6843
        %v6845 = vpop.f32.mrf.mxu0
        %v6846 = vadd.f32 %v6832, %v6845
        %6847 = vdwg.mxu0
        %6848 = vmatpush.bf16.msra.mxu0 %v5106
        %6849 = vmatpush.bf16.msra.mxu0 %v5098
        %6850 = vmatpush.bf16.msra.mxu0 %v5090
        %6851 = vmatpush.bf16.msra.mxu0 %v5082
        %6852 = vmatpush.bf16.msra.mxu0 %v5074
        %6853 = vmatpush.bf16.msra.mxu0 %v5066
        %6854 = vmatpush.bf16.msra.mxu0 %v5058
        %6855 = vmatpush.bf16.msra.mxu0 %v5050
        %6856 = vmatmul.bf16.gmra.mxu0 %v1631
        %v6857 = vpop.f32.mrf.mxu0
        %v6858 = vadd.f32 %v6844, %v6857
        %v6859 = vpop.f32.mrf.mxu0
        %v6860 = vadd.f32 %v6846, %v6859
        %6861 = vdwg.mxu0
        %6862 = vmatpush.bf16.msra.mxu0 %v5170
        %6863 = vmatpush.bf16.msra.mxu0 %v5162
        %6864 = vmatpush.bf16.msra.mxu0 %v5154
        %6865 = vmatpush.bf16.msra.mxu0 %v5146
        %6866 = vmatpush.bf16.msra.mxu0 %v5138
        %6867 = vmatpush.bf16.msra.mxu0 %v5130
        %6868 = vmatpush.bf16.msra.mxu0 %v5122
        %6869 = vmatpush.bf16.msra.mxu0 %v5114
        %6870 = vmatmul.bf16.gmra.mxu0 %v1632
        %v6871 = vpop.f32.mrf.mxu0
        %v6872 = vadd.f32 %v6858, %v6871
        %v6873 = vpop.f32.mrf.mxu0
        %v6874 = vadd.f32 %v6860, %v6873
        %6875 = vdwg.mxu0
        %6876 = vmatpush.bf16.msra.mxu0 %v5234
        %6877 = vmatpush.bf16.msra.mxu0 %v5226
        %6878 = vmatpush.bf16.msra.mxu0 %v5218
        %6879 = vmatpush.bf16.msra.mxu0 %v5210
        %6880 = vmatpush.bf16.msra.mxu0 %v5202
        %6881 = vmatpush.bf16.msra.mxu0 %v5194
        %6882 = vmatpush.bf16.msra.mxu0 %v5186
        %6883 = vmatpush.bf16.msra.mxu0 %v5178
        %6884 = vmatmul.bf16.gmra.mxu0 %v1633
        %v6885 = vpop.f32.mrf.mxu0
        %v6886 = vadd.f32 %v6872, %v6885
        %v6887 = vpop.f32.mrf.mxu0
        %v6888 = vadd.f32 %v6874, %v6887
        %6889 = vdwg.mxu0
        %6890 = vmatpush.bf16.msra.mxu0 %v5298
        %6891 = vmatpush.bf16.msra.mxu0 %v5290
        %6892 = vmatpush.bf16.msra.mxu0 %v5282
        %6893 = vmatpush.bf16.msra.mxu0 %v5274
        %6894 = vmatpush.bf16.msra.mxu0 %v5266
        %6895 = vmatpush.bf16.msra.mxu0 %v5258
        %6896 = vmatpush.bf16.msra.mxu0 %v5250
        %6897 = vmatpush.bf16.msra.mxu0 %v5242
        %6898 = vmatmul.bf16.gmra.mxu0 %v1634
        %v6899 = vpop.f32.mrf.mxu0
        %v6900 = vadd.f32 %v6886, %v6899
        %v6901 = vpop.f32.mrf.mxu0
        %v6902 = vadd.f32 %v6888, %v6901
        %6903 = vdwg.mxu0
        %6904 = vmatpush.bf16.msra.mxu0 %v5362
        %6905 = vmatpush.bf16.msra.mxu0 %v5354
        %6906 = vmatpush.bf16.msra.mxu0 %v5346
        %6907 = vmatpush.bf16.msra.mxu0 %v5338
        %6908 = vmatpush.bf16.msra.mxu0 %v5330
        %6909 = vmatpush.bf16.msra.mxu0 %v5322
        %6910 = vmatpush.bf16.msra.mxu0 %v5314
        %6911 = vmatpush.bf16.msra.mxu0 %v5306
        %6912 = vmatmul.bf16.gmra.mxu0 %v1635
        %v6913 = vpop.f32.mrf.mxu0
        %v6914 = vadd.f32 %v6900, %v6913
        %v6915 = vpop.f32.mrf.mxu0
        %v6916 = vadd.f32 %v6902, %v6915
        %6917 = vdwg.mxu0
        %6918 = vmatpush.bf16.msra.mxu0 %v5426
        %6919 = vmatpush.bf16.msra.mxu0 %v5418
        %6920 = vmatpush.bf16.msra.mxu0 %v5410
        %6921 = vmatpush.bf16.msra.mxu0 %v5402
        %6922 = vmatpush.bf16.msra.mxu0 %v5394
        %6923 = vmatpush.bf16.msra.mxu0 %v5386
        %6924 = vmatpush.bf16.msra.mxu0 %v5378
        %6925 = vmatpush.bf16.msra.mxu0 %v5370
        %6926 = vmatmul.bf16.gmra.mxu0 %v1636
        %v6927 = vpop.f32.mrf.mxu0
        %v6928 = vadd.f32 %v6914, %v6927
        %v6929 = vpop.f32.mrf.mxu0
        %v6930 = vadd.f32 %v6916, %v6929
        %6931 = vdwg.mxu0
        %6932 = vmatpush.bf16.msra.mxu0 %v5490
        %6933 = vmatpush.bf16.msra.mxu0 %v5482
        %6934 = vmatpush.bf16.msra.mxu0 %v5474
        %6935 = vmatpush.bf16.msra.mxu0 %v5466
        %6936 = vmatpush.bf16.msra.mxu0 %v5458
        %6937 = vmatpush.bf16.msra.mxu0 %v5450
        %6938 = vmatpush.bf16.msra.mxu0 %v5442
        %6939 = vmatpush.bf16.msra.mxu0 %v5434
        %6940 = vmatmul.bf16.gmra.mxu0 %v1637
        %v6941 = vpop.f32.mrf.mxu0
        %v6942 = vadd.f32 %v6928, %v6941
        %v6943 = vpop.f32.mrf.mxu0
        %v6944 = vadd.f32 %v6930, %v6943
        %6945 = vdwg.mxu0
        %6946 = vmatpush.bf16.msra.mxu0 %v5554
        %6947 = vmatpush.bf16.msra.mxu0 %v5546
        %6948 = vmatpush.bf16.msra.mxu0 %v5538
        %6949 = vmatpush.bf16.msra.mxu0 %v5530
        %6950 = vmatpush.bf16.msra.mxu0 %v5522
        %6951 = vmatpush.bf16.msra.mxu0 %v5514
        %6952 = vmatpush.bf16.msra.mxu0 %v5506
        %6953 = vmatpush.bf16.msra.mxu0 %v5498
        %6954 = vmatmul.bf16.gmra.mxu0 %v1638
        %v6955 = vpop.f32.mrf.mxu0
        %v6956 = vadd.f32 %v6942, %v6955
        %v6957 = vpop.f32.mrf.mxu0
        %v6958 = vadd.f32 %v6944, %v6957
        %6959 = vdwg.mxu0
        %6960 = vmatpush.bf16.msra.mxu0 %v5618
        %6961 = vmatpush.bf16.msra.mxu0 %v5610
        %6962 = vmatpush.bf16.msra.mxu0 %v5602
        %6963 = vmatpush.bf16.msra.mxu0 %v5594
        %6964 = vmatpush.bf16.msra.mxu0 %v5586
        %6965 = vmatpush.bf16.msra.mxu0 %v5578
        %6966 = vmatpush.bf16.msra.mxu0 %v5570
        %6967 = vmatpush.bf16.msra.mxu0 %v5562
        %6968 = vmatmul.bf16.gmra.mxu0 %v1639
        %v6969 = vpop.f32.mrf.mxu0
        %v6970 = vadd.f32 %v6956, %v6969
        %v6971 = vpop.f32.mrf.mxu0
        %v6972 = vadd.f32 %v6958, %v6971
        %6973 = vdwg.mxu0
        %6974 = vmatpush.bf16.msra.mxu0 %v5682
        %6975 = vmatpush.bf16.msra.mxu0 %v5674
        %6976 = vmatpush.bf16.msra.mxu0 %v5666
        %6977 = vmatpush.bf16.msra.mxu0 %v5658
        %6978 = vmatpush.bf16.msra.mxu0 %v5650
        %6979 = vmatpush.bf16.msra.mxu0 %v5642
        %6980 = vmatpush.bf16.msra.mxu0 %v5634
        %6981 = vmatpush.bf16.msra.mxu0 %v5626
        %6982 = vmatmul.bf16.gmra.mxu0 %v1640
        %v6983 = vpop.f32.mrf.mxu0
        %v6984 = vadd.f32 %v6970, %v6983
        %v6985 = vpop.f32.mrf.mxu0
        %v6986 = vadd.f32 %v6972, %v6985
        %6987 = vdwg.mxu0
        %6988 = vmatpush.bf16.msra.mxu0 %v5746
        %6989 = vmatpush.bf16.msra.mxu0 %v5738
        %6990 = vmatpush.bf16.msra.mxu0 %v5730
        %6991 = vmatpush.bf16.msra.mxu0 %v5722
        %6992 = vmatpush.bf16.msra.mxu0 %v5714
        %6993 = vmatpush.bf16.msra.mxu0 %v5706
        %6994 = vmatpush.bf16.msra.mxu0 %v5698
        %6995 = vmatpush.bf16.msra.mxu0 %v5690
        %6996 = vmatmul.bf16.gmra.mxu0 %v1641
        %v6997 = vpop.f32.mrf.mxu0
        %v6998 = vadd.f32 %v6984, %v6997
        %v6999 = vpop.f32.mrf.mxu0
        %v7000 = vadd.f32 %v6986, %v6999
        %7001 = vdwg.mxu0
        %7002 = vmatpush.bf16.msra.mxu0 %v4787
        %7003 = vmatpush.bf16.msra.mxu0 %v4779
        %7004 = vmatpush.bf16.msra.mxu0 %v4771
        %7005 = vmatpush.bf16.msra.mxu0 %v4763
        %7006 = vmatpush.bf16.msra.mxu0 %v4755
        %7007 = vmatpush.bf16.msra.mxu0 %v4747
        %7008 = vmatpush.bf16.msra.mxu0 %v4739
        %7009 = vmatpush.bf16.msra.mxu0 %v4731
        %7010 = vmatmul.bf16.gmra.mxu0 %v1626
        %v7011 = vpop.f32.mrf.mxu0
        %v7012 = vadd.f32 0.0, %v7011
        %v7013 = vpop.f32.mrf.mxu0
        %v7014 = vadd.f32 0.0, %v7013
        %7015 = vdwg.mxu0
        %7016 = vmatpush.bf16.msra.mxu0 %v4851
        %7017 = vmatpush.bf16.msra.mxu0 %v4843
        %7018 = vmatpush.bf16.msra.mxu0 %v4835
        %7019 = vmatpush.bf16.msra.mxu0 %v4827
        %7020 = vmatpush.bf16.msra.mxu0 %v4819
        %7021 = vmatpush.bf16.msra.mxu0 %v4811
        %7022 = vmatpush.bf16.msra.mxu0 %v4803
        %7023 = vmatpush.bf16.msra.mxu0 %v4795
        %7024 = vmatmul.bf16.gmra.mxu0 %v1627
        %v7025 = vpop.f32.mrf.mxu0
        %v7026 = vadd.f32 %v7012, %v7025
        %v7027 = vpop.f32.mrf.mxu0
        %v7028 = vadd.f32 %v7014, %v7027
        %7029 = vdwg.mxu0
        %7030 = vmatpush.bf16.msra.mxu0 %v4915
        %7031 = vmatpush.bf16.msra.mxu0 %v4907
        %7032 = vmatpush.bf16.msra.mxu0 %v4899
        %7033 = vmatpush.bf16.msra.mxu0 %v4891
        %7034 = vmatpush.bf16.msra.mxu0 %v4883
        %7035 = vmatpush.bf16.msra.mxu0 %v4875
        %7036 = vmatpush.bf16.msra.mxu0 %v4867
        %7037 = vmatpush.bf16.msra.mxu0 %v4859
        %7038 = vmatmul.bf16.gmra.mxu0 %v1628
        %v7039 = vpop.f32.mrf.mxu0
        %v7040 = vadd.f32 %v7026, %v7039
        %v7041 = vpop.f32.mrf.mxu0
        %v7042 = vadd.f32 %v7028, %v7041
        %7043 = vdwg.mxu0
        %7044 = vmatpush.bf16.msra.mxu0 %v4979
        %7045 = vmatpush.bf16.msra.mxu0 %v4971
        %7046 = vmatpush.bf16.msra.mxu0 %v4963
        %7047 = vmatpush.bf16.msra.mxu0 %v4955
        %7048 = vmatpush.bf16.msra.mxu0 %v4947
        %7049 = vmatpush.bf16.msra.mxu0 %v4939
        %7050 = vmatpush.bf16.msra.mxu0 %v4931
        %7051 = vmatpush.bf16.msra.mxu0 %v4923
        %7052 = vmatmul.bf16.gmra.mxu0 %v1629
        %v7053 = vpop.f32.mrf.mxu0
        %v7054 = vadd.f32 %v7040, %v7053
        %v7055 = vpop.f32.mrf.mxu0
        %v7056 = vadd.f32 %v7042, %v7055
        %7057 = vdwg.mxu0
        %7058 = vmatpush.bf16.msra.mxu0 %v5043
        %7059 = vmatpush.bf16.msra.mxu0 %v5035
        %7060 = vmatpush.bf16.msra.mxu0 %v5027
        %7061 = vmatpush.bf16.msra.mxu0 %v5019
        %7062 = vmatpush.bf16.msra.mxu0 %v5011
        %7063 = vmatpush.bf16.msra.mxu0 %v5003
        %7064 = vmatpush.bf16.msra.mxu0 %v4995
        %7065 = vmatpush.bf16.msra.mxu0 %v4987
        %7066 = vmatmul.bf16.gmra.mxu0 %v1630
        %v7067 = vpop.f32.mrf.mxu0
        %v7068 = vadd.f32 %v7054, %v7067
        %v7069 = vpop.f32.mrf.mxu0
        %v7070 = vadd.f32 %v7056, %v7069
        %7071 = vdwg.mxu0
        %7072 = vmatpush.bf16.msra.mxu0 %v5107
        %7073 = vmatpush.bf16.msra.mxu0 %v5099
        %7074 = vmatpush.bf16.msra.mxu0 %v5091
        %7075 = vmatpush.bf16.msra.mxu0 %v5083
        %7076 = vmatpush.bf16.msra.mxu0 %v5075
        %7077 = vmatpush.bf16.msra.mxu0 %v5067
        %7078 = vmatpush.bf16.msra.mxu0 %v5059
        %7079 = vmatpush.bf16.msra.mxu0 %v5051
        %7080 = vmatmul.bf16.gmra.mxu0 %v1631
        %v7081 = vpop.f32.mrf.mxu0
        %v7082 = vadd.f32 %v7068, %v7081
        %v7083 = vpop.f32.mrf.mxu0
        %v7084 = vadd.f32 %v7070, %v7083
        %7085 = vdwg.mxu0
        %7086 = vmatpush.bf16.msra.mxu0 %v5171
        %7087 = vmatpush.bf16.msra.mxu0 %v5163
        %7088 = vmatpush.bf16.msra.mxu0 %v5155
        %7089 = vmatpush.bf16.msra.mxu0 %v5147
        %7090 = vmatpush.bf16.msra.mxu0 %v5139
        %7091 = vmatpush.bf16.msra.mxu0 %v5131
        %7092 = vmatpush.bf16.msra.mxu0 %v5123
        %7093 = vmatpush.bf16.msra.mxu0 %v5115
        %7094 = vmatmul.bf16.gmra.mxu0 %v1632
        %v7095 = vpop.f32.mrf.mxu0
        %v7096 = vadd.f32 %v7082, %v7095
        %v7097 = vpop.f32.mrf.mxu0
        %v7098 = vadd.f32 %v7084, %v7097
        %7099 = vdwg.mxu0
        %7100 = vmatpush.bf16.msra.mxu0 %v5235
        %7101 = vmatpush.bf16.msra.mxu0 %v5227
        %7102 = vmatpush.bf16.msra.mxu0 %v5219
        %7103 = vmatpush.bf16.msra.mxu0 %v5211
        %7104 = vmatpush.bf16.msra.mxu0 %v5203
        %7105 = vmatpush.bf16.msra.mxu0 %v5195
        %7106 = vmatpush.bf16.msra.mxu0 %v5187
        %7107 = vmatpush.bf16.msra.mxu0 %v5179
        %7108 = vmatmul.bf16.gmra.mxu0 %v1633
        %v7109 = vpop.f32.mrf.mxu0
        %v7110 = vadd.f32 %v7096, %v7109
        %v7111 = vpop.f32.mrf.mxu0
        %v7112 = vadd.f32 %v7098, %v7111
        %7113 = vdwg.mxu0
        %7114 = vmatpush.bf16.msra.mxu0 %v5299
        %7115 = vmatpush.bf16.msra.mxu0 %v5291
        %7116 = vmatpush.bf16.msra.mxu0 %v5283
        %7117 = vmatpush.bf16.msra.mxu0 %v5275
        %7118 = vmatpush.bf16.msra.mxu0 %v5267
        %7119 = vmatpush.bf16.msra.mxu0 %v5259
        %7120 = vmatpush.bf16.msra.mxu0 %v5251
        %7121 = vmatpush.bf16.msra.mxu0 %v5243
        %7122 = vmatmul.bf16.gmra.mxu0 %v1634
        %v7123 = vpop.f32.mrf.mxu0
        %v7124 = vadd.f32 %v7110, %v7123
        %v7125 = vpop.f32.mrf.mxu0
        %v7126 = vadd.f32 %v7112, %v7125
        %7127 = vdwg.mxu0
        %7128 = vmatpush.bf16.msra.mxu0 %v5363
        %7129 = vmatpush.bf16.msra.mxu0 %v5355
        %7130 = vmatpush.bf16.msra.mxu0 %v5347
        %7131 = vmatpush.bf16.msra.mxu0 %v5339
        %7132 = vmatpush.bf16.msra.mxu0 %v5331
        %7133 = vmatpush.bf16.msra.mxu0 %v5323
        %7134 = vmatpush.bf16.msra.mxu0 %v5315
        %7135 = vmatpush.bf16.msra.mxu0 %v5307
        %7136 = vmatmul.bf16.gmra.mxu0 %v1635
        %v7137 = vpop.f32.mrf.mxu0
        %v7138 = vadd.f32 %v7124, %v7137
        %v7139 = vpop.f32.mrf.mxu0
        %v7140 = vadd.f32 %v7126, %v7139
        %7141 = vdwg.mxu0
        %7142 = vmatpush.bf16.msra.mxu0 %v5427
        %7143 = vmatpush.bf16.msra.mxu0 %v5419
        %7144 = vmatpush.bf16.msra.mxu0 %v5411
        %7145 = vmatpush.bf16.msra.mxu0 %v5403
        %7146 = vmatpush.bf16.msra.mxu0 %v5395
        %7147 = vmatpush.bf16.msra.mxu0 %v5387
        %7148 = vmatpush.bf16.msra.mxu0 %v5379
        %7149 = vmatpush.bf16.msra.mxu0 %v5371
        %7150 = vmatmul.bf16.gmra.mxu0 %v1636
        %v7151 = vpop.f32.mrf.mxu0
        %v7152 = vadd.f32 %v7138, %v7151
        %v7153 = vpop.f32.mrf.mxu0
        %v7154 = vadd.f32 %v7140, %v7153
        %7155 = vdwg.mxu0
        %7156 = vmatpush.bf16.msra.mxu0 %v5491
        %7157 = vmatpush.bf16.msra.mxu0 %v5483
        %7158 = vmatpush.bf16.msra.mxu0 %v5475
        %7159 = vmatpush.bf16.msra.mxu0 %v5467
        %7160 = vmatpush.bf16.msra.mxu0 %v5459
        %7161 = vmatpush.bf16.msra.mxu0 %v5451
        %7162 = vmatpush.bf16.msra.mxu0 %v5443
        %7163 = vmatpush.bf16.msra.mxu0 %v5435
        %7164 = vmatmul.bf16.gmra.mxu0 %v1637
        %v7165 = vpop.f32.mrf.mxu0
        %v7166 = vadd.f32 %v7152, %v7165
        %v7167 = vpop.f32.mrf.mxu0
        %v7168 = vadd.f32 %v7154, %v7167
        %7169 = vdwg.mxu0
        %7170 = vmatpush.bf16.msra.mxu0 %v5555
        %7171 = vmatpush.bf16.msra.mxu0 %v5547
        %7172 = vmatpush.bf16.msra.mxu0 %v5539
        %7173 = vmatpush.bf16.msra.mxu0 %v5531
        %7174 = vmatpush.bf16.msra.mxu0 %v5523
        %7175 = vmatpush.bf16.msra.mxu0 %v5515
        %7176 = vmatpush.bf16.msra.mxu0 %v5507
        %7177 = vmatpush.bf16.msra.mxu0 %v5499
        %7178 = vmatmul.bf16.gmra.mxu0 %v1638
        %v7179 = vpop.f32.mrf.mxu0
        %v7180 = vadd.f32 %v7166, %v7179
        %v7181 = vpop.f32.mrf.mxu0
        %v7182 = vadd.f32 %v7168, %v7181
        %7183 = vdwg.mxu0
        %7184 = vmatpush.bf16.msra.mxu0 %v5619
        %7185 = vmatpush.bf16.msra.mxu0 %v5611
        %7186 = vmatpush.bf16.msra.mxu0 %v5603
        %7187 = vmatpush.bf16.msra.mxu0 %v5595
        %7188 = vmatpush.bf16.msra.mxu0 %v5587
        %7189 = vmatpush.bf16.msra.mxu0 %v5579
        %7190 = vmatpush.bf16.msra.mxu0 %v5571
        %7191 = vmatpush.bf16.msra.mxu0 %v5563
        %7192 = vmatmul.bf16.gmra.mxu0 %v1639
        %v7193 = vpop.f32.mrf.mxu0
        %v7194 = vadd.f32 %v7180, %v7193
        %v7195 = vpop.f32.mrf.mxu0
        %v7196 = vadd.f32 %v7182, %v7195
        %7197 = vdwg.mxu0
        %7198 = vmatpush.bf16.msra.mxu0 %v5683
        %7199 = vmatpush.bf16.msra.mxu0 %v5675
        %7200 = vmatpush.bf16.msra.mxu0 %v5667
        %7201 = vmatpush.bf16.msra.mxu0 %v5659
        %7202 = vmatpush.bf16.msra.mxu0 %v5651
        %7203 = vmatpush.bf16.msra.mxu0 %v5643
        %7204 = vmatpush.bf16.msra.mxu0 %v5635
        %7205 = vmatpush.bf16.msra.mxu0 %v5627
        %7206 = vmatmul.bf16.gmra.mxu0 %v1640
        %v7207 = vpop.f32.mrf.mxu0
        %v7208 = vadd.f32 %v7194, %v7207
        %v7209 = vpop.f32.mrf.mxu0
        %v7210 = vadd.f32 %v7196, %v7209
        %7211 = vdwg.mxu0
        %7212 = vmatpush.bf16.msra.mxu0 %v5747
        %7213 = vmatpush.bf16.msra.mxu0 %v5739
        %7214 = vmatpush.bf16.msra.mxu0 %v5731
        %7215 = vmatpush.bf16.msra.mxu0 %v5723
        %7216 = vmatpush.bf16.msra.mxu0 %v5715
        %7217 = vmatpush.bf16.msra.mxu0 %v5707
        %7218 = vmatpush.bf16.msra.mxu0 %v5699
        %7219 = vmatpush.bf16.msra.mxu0 %v5691
        %7220 = vmatmul.bf16.gmra.mxu0 %v1641
        %v7221 = vpop.f32.mrf.mxu0
        %v7222 = vadd.f32 %v7208, %v7221
        %v7223 = vpop.f32.mrf.mxu0
        %v7224 = vadd.f32 %v7210, %v7223
        %7225 = vdwg.mxu0
        %7226 = vmatpush.bf16.msra.mxu0 %v4788
        %7227 = vmatpush.bf16.msra.mxu0 %v4780
        %7228 = vmatpush.bf16.msra.mxu0 %v4772
        %7229 = vmatpush.bf16.msra.mxu0 %v4764
        %7230 = vmatpush.bf16.msra.mxu0 %v4756
        %7231 = vmatpush.bf16.msra.mxu0 %v4748
        %7232 = vmatpush.bf16.msra.mxu0 %v4740
        %7233 = vmatpush.bf16.msra.mxu0 %v4732
        %7234 = vmatmul.bf16.gmra.mxu0 %v1626
        %v7235 = vpop.f32.mrf.mxu0
        %v7236 = vadd.f32 0.0, %v7235
        %v7237 = vpop.f32.mrf.mxu0
        %v7238 = vadd.f32 0.0, %v7237
        %7239 = vdwg.mxu0
        %7240 = vmatpush.bf16.msra.mxu0 %v4852
        %7241 = vmatpush.bf16.msra.mxu0 %v4844
        %7242 = vmatpush.bf16.msra.mxu0 %v4836
        %7243 = vmatpush.bf16.msra.mxu0 %v4828
        %7244 = vmatpush.bf16.msra.mxu0 %v4820
        %7245 = vmatpush.bf16.msra.mxu0 %v4812
        %7246 = vmatpush.bf16.msra.mxu0 %v4804
        %7247 = vmatpush.bf16.msra.mxu0 %v4796
        %7248 = vmatmul.bf16.gmra.mxu0 %v1627
        %v7249 = vpop.f32.mrf.mxu0
        %v7250 = vadd.f32 %v7236, %v7249
        %v7251 = vpop.f32.mrf.mxu0
        %v7252 = vadd.f32 %v7238, %v7251
        %7253 = vdwg.mxu0
        %7254 = vmatpush.bf16.msra.mxu0 %v4916
        %7255 = vmatpush.bf16.msra.mxu0 %v4908
        %7256 = vmatpush.bf16.msra.mxu0 %v4900
        %7257 = vmatpush.bf16.msra.mxu0 %v4892
        %7258 = vmatpush.bf16.msra.mxu0 %v4884
        %7259 = vmatpush.bf16.msra.mxu0 %v4876
        %7260 = vmatpush.bf16.msra.mxu0 %v4868
        %7261 = vmatpush.bf16.msra.mxu0 %v4860
        %7262 = vmatmul.bf16.gmra.mxu0 %v1628
        %v7263 = vpop.f32.mrf.mxu0
        %v7264 = vadd.f32 %v7250, %v7263
        %v7265 = vpop.f32.mrf.mxu0
        %v7266 = vadd.f32 %v7252, %v7265
        %7267 = vdwg.mxu0
        %7268 = vmatpush.bf16.msra.mxu0 %v4980
        %7269 = vmatpush.bf16.msra.mxu0 %v4972
        %7270 = vmatpush.bf16.msra.mxu0 %v4964
        %7271 = vmatpush.bf16.msra.mxu0 %v4956
        %7272 = vmatpush.bf16.msra.mxu0 %v4948
        %7273 = vmatpush.bf16.msra.mxu0 %v4940
        %7274 = vmatpush.bf16.msra.mxu0 %v4932
        %7275 = vmatpush.bf16.msra.mxu0 %v4924
        %7276 = vmatmul.bf16.gmra.mxu0 %v1629
        %v7277 = vpop.f32.mrf.mxu0
        %v7278 = vadd.f32 %v7264, %v7277
        %v7279 = vpop.f32.mrf.mxu0
        %v7280 = vadd.f32 %v7266, %v7279
        %7281 = vdwg.mxu0
        %7282 = vmatpush.bf16.msra.mxu0 %v5044
        %7283 = vmatpush.bf16.msra.mxu0 %v5036
        %7284 = vmatpush.bf16.msra.mxu0 %v5028
        %7285 = vmatpush.bf16.msra.mxu0 %v5020
        %7286 = vmatpush.bf16.msra.mxu0 %v5012
        %7287 = vmatpush.bf16.msra.mxu0 %v5004
        %7288 = vmatpush.bf16.msra.mxu0 %v4996
        %7289 = vmatpush.bf16.msra.mxu0 %v4988
        %7290 = vmatmul.bf16.gmra.mxu0 %v1630
        %v7291 = vpop.f32.mrf.mxu0
        %v7292 = vadd.f32 %v7278, %v7291
        %v7293 = vpop.f32.mrf.mxu0
        %v7294 = vadd.f32 %v7280, %v7293
        %7295 = vdwg.mxu0
        %7296 = vmatpush.bf16.msra.mxu0 %v5108
        %7297 = vmatpush.bf16.msra.mxu0 %v5100
        %7298 = vmatpush.bf16.msra.mxu0 %v5092
        %7299 = vmatpush.bf16.msra.mxu0 %v5084
        %7300 = vmatpush.bf16.msra.mxu0 %v5076
        %7301 = vmatpush.bf16.msra.mxu0 %v5068
        %7302 = vmatpush.bf16.msra.mxu0 %v5060
        %7303 = vmatpush.bf16.msra.mxu0 %v5052
        %7304 = vmatmul.bf16.gmra.mxu0 %v1631
        %v7305 = vpop.f32.mrf.mxu0
        %v7306 = vadd.f32 %v7292, %v7305
        %v7307 = vpop.f32.mrf.mxu0
        %v7308 = vadd.f32 %v7294, %v7307
        %7309 = vdwg.mxu0
        %7310 = vmatpush.bf16.msra.mxu0 %v5172
        %7311 = vmatpush.bf16.msra.mxu0 %v5164
        %7312 = vmatpush.bf16.msra.mxu0 %v5156
        %7313 = vmatpush.bf16.msra.mxu0 %v5148
        %7314 = vmatpush.bf16.msra.mxu0 %v5140
        %7315 = vmatpush.bf16.msra.mxu0 %v5132
        %7316 = vmatpush.bf16.msra.mxu0 %v5124
        %7317 = vmatpush.bf16.msra.mxu0 %v5116
        %7318 = vmatmul.bf16.gmra.mxu0 %v1632
        %v7319 = vpop.f32.mrf.mxu0
        %v7320 = vadd.f32 %v7306, %v7319
        %v7321 = vpop.f32.mrf.mxu0
        %v7322 = vadd.f32 %v7308, %v7321
        %7323 = vdwg.mxu0
        %7324 = vmatpush.bf16.msra.mxu0 %v5236
        %7325 = vmatpush.bf16.msra.mxu0 %v5228
        %7326 = vmatpush.bf16.msra.mxu0 %v5220
        %7327 = vmatpush.bf16.msra.mxu0 %v5212
        %7328 = vmatpush.bf16.msra.mxu0 %v5204
        %7329 = vmatpush.bf16.msra.mxu0 %v5196
        %7330 = vmatpush.bf16.msra.mxu0 %v5188
        %7331 = vmatpush.bf16.msra.mxu0 %v5180
        %7332 = vmatmul.bf16.gmra.mxu0 %v1633
        %v7333 = vpop.f32.mrf.mxu0
        %v7334 = vadd.f32 %v7320, %v7333
        %v7335 = vpop.f32.mrf.mxu0
        %v7336 = vadd.f32 %v7322, %v7335
        %7337 = vdwg.mxu0
        %7338 = vmatpush.bf16.msra.mxu0 %v5300
        %7339 = vmatpush.bf16.msra.mxu0 %v5292
        %7340 = vmatpush.bf16.msra.mxu0 %v5284
        %7341 = vmatpush.bf16.msra.mxu0 %v5276
        %7342 = vmatpush.bf16.msra.mxu0 %v5268
        %7343 = vmatpush.bf16.msra.mxu0 %v5260
        %7344 = vmatpush.bf16.msra.mxu0 %v5252
        %7345 = vmatpush.bf16.msra.mxu0 %v5244
        %7346 = vmatmul.bf16.gmra.mxu0 %v1634
        %v7347 = vpop.f32.mrf.mxu0
        %v7348 = vadd.f32 %v7334, %v7347
        %v7349 = vpop.f32.mrf.mxu0
        %v7350 = vadd.f32 %v7336, %v7349
        %7351 = vdwg.mxu0
        %7352 = vmatpush.bf16.msra.mxu0 %v5364
        %7353 = vmatpush.bf16.msra.mxu0 %v5356
        %7354 = vmatpush.bf16.msra.mxu0 %v5348
        %7355 = vmatpush.bf16.msra.mxu0 %v5340
        %7356 = vmatpush.bf16.msra.mxu0 %v5332
        %7357 = vmatpush.bf16.msra.mxu0 %v5324
        %7358 = vmatpush.bf16.msra.mxu0 %v5316
        %7359 = vmatpush.bf16.msra.mxu0 %v5308
        %7360 = vmatmul.bf16.gmra.mxu0 %v1635
        %v7361 = vpop.f32.mrf.mxu0
        %v7362 = vadd.f32 %v7348, %v7361
        %v7363 = vpop.f32.mrf.mxu0
        %v7364 = vadd.f32 %v7350, %v7363
        %7365 = vdwg.mxu0
        %7366 = vmatpush.bf16.msra.mxu0 %v5428
        %7367 = vmatpush.bf16.msra.mxu0 %v5420
        %7368 = vmatpush.bf16.msra.mxu0 %v5412
        %7369 = vmatpush.bf16.msra.mxu0 %v5404
        %7370 = vmatpush.bf16.msra.mxu0 %v5396
        %7371 = vmatpush.bf16.msra.mxu0 %v5388
        %7372 = vmatpush.bf16.msra.mxu0 %v5380
        %7373 = vmatpush.bf16.msra.mxu0 %v5372
        %7374 = vmatmul.bf16.gmra.mxu0 %v1636
        %v7375 = vpop.f32.mrf.mxu0
        %v7376 = vadd.f32 %v7362, %v7375
        %v7377 = vpop.f32.mrf.mxu0
        %v7378 = vadd.f32 %v7364, %v7377
        %7379 = vdwg.mxu0
        %7380 = vmatpush.bf16.msra.mxu0 %v5492
        %7381 = vmatpush.bf16.msra.mxu0 %v5484
        %7382 = vmatpush.bf16.msra.mxu0 %v5476
        %7383 = vmatpush.bf16.msra.mxu0 %v5468
        %7384 = vmatpush.bf16.msra.mxu0 %v5460
        %7385 = vmatpush.bf16.msra.mxu0 %v5452
        %7386 = vmatpush.bf16.msra.mxu0 %v5444
        %7387 = vmatpush.bf16.msra.mxu0 %v5436
        %7388 = vmatmul.bf16.gmra.mxu0 %v1637
        %v7389 = vpop.f32.mrf.mxu0
        %v7390 = vadd.f32 %v7376, %v7389
        %v7391 = vpop.f32.mrf.mxu0
        %v7392 = vadd.f32 %v7378, %v7391
        %7393 = vdwg.mxu0
        %7394 = vmatpush.bf16.msra.mxu0 %v5556
        %7395 = vmatpush.bf16.msra.mxu0 %v5548
        %7396 = vmatpush.bf16.msra.mxu0 %v5540
        %7397 = vmatpush.bf16.msra.mxu0 %v5532
        %7398 = vmatpush.bf16.msra.mxu0 %v5524
        %7399 = vmatpush.bf16.msra.mxu0 %v5516
        %7400 = vmatpush.bf16.msra.mxu0 %v5508
        %7401 = vmatpush.bf16.msra.mxu0 %v5500
        %7402 = vmatmul.bf16.gmra.mxu0 %v1638
        %v7403 = vpop.f32.mrf.mxu0
        %v7404 = vadd.f32 %v7390, %v7403
        %v7405 = vpop.f32.mrf.mxu0
        %v7406 = vadd.f32 %v7392, %v7405
        %7407 = vdwg.mxu0
        %7408 = vmatpush.bf16.msra.mxu0 %v5620
        %7409 = vmatpush.bf16.msra.mxu0 %v5612
        %7410 = vmatpush.bf16.msra.mxu0 %v5604
        %7411 = vmatpush.bf16.msra.mxu0 %v5596
        %7412 = vmatpush.bf16.msra.mxu0 %v5588
        %7413 = vmatpush.bf16.msra.mxu0 %v5580
        %7414 = vmatpush.bf16.msra.mxu0 %v5572
        %7415 = vmatpush.bf16.msra.mxu0 %v5564
        %7416 = vmatmul.bf16.gmra.mxu0 %v1639
        %v7417 = vpop.f32.mrf.mxu0
        %v7418 = vadd.f32 %v7404, %v7417
        %v7419 = vpop.f32.mrf.mxu0
        %v7420 = vadd.f32 %v7406, %v7419
        %7421 = vdwg.mxu0
        %7422 = vmatpush.bf16.msra.mxu0 %v5684
        %7423 = vmatpush.bf16.msra.mxu0 %v5676
        %7424 = vmatpush.bf16.msra.mxu0 %v5668
        %7425 = vmatpush.bf16.msra.mxu0 %v5660
        %7426 = vmatpush.bf16.msra.mxu0 %v5652
        %7427 = vmatpush.bf16.msra.mxu0 %v5644
        %7428 = vmatpush.bf16.msra.mxu0 %v5636
        %7429 = vmatpush.bf16.msra.mxu0 %v5628
        %7430 = vmatmul.bf16.gmra.mxu0 %v1640
        %v7431 = vpop.f32.mrf.mxu0
        %v7432 = vadd.f32 %v7418, %v7431
        %v7433 = vpop.f32.mrf.mxu0
        %v7434 = vadd.f32 %v7420, %v7433
        %7435 = vdwg.mxu0
        %7436 = vmatpush.bf16.msra.mxu0 %v5748
        %7437 = vmatpush.bf16.msra.mxu0 %v5740
        %7438 = vmatpush.bf16.msra.mxu0 %v5732
        %7439 = vmatpush.bf16.msra.mxu0 %v5724
        %7440 = vmatpush.bf16.msra.mxu0 %v5716
        %7441 = vmatpush.bf16.msra.mxu0 %v5708
        %7442 = vmatpush.bf16.msra.mxu0 %v5700
        %7443 = vmatpush.bf16.msra.mxu0 %v5692
        %7444 = vmatmul.bf16.gmra.mxu0 %v1641
        %v7445 = vpop.f32.mrf.mxu0
        %v7446 = vadd.f32 %v7432, %v7445
        %v7447 = vpop.f32.mrf.mxu0
        %v7448 = vadd.f32 %v7434, %v7447
        %7449 = vdwg.mxu0
        %7450 = vmatpush.bf16.msra.mxu0 %v4789
        %7451 = vmatpush.bf16.msra.mxu0 %v4781
        %7452 = vmatpush.bf16.msra.mxu0 %v4773
        %7453 = vmatpush.bf16.msra.mxu0 %v4765
        %7454 = vmatpush.bf16.msra.mxu0 %v4757
        %7455 = vmatpush.bf16.msra.mxu0 %v4749
        %7456 = vmatpush.bf16.msra.mxu0 %v4741
        %7457 = vmatpush.bf16.msra.mxu0 %v4733
        %7458 = vmatmul.bf16.gmra.mxu0 %v1626
        %v7459 = vpop.f32.mrf.mxu0
        %v7460 = vadd.f32 0.0, %v7459
        %v7461 = vpop.f32.mrf.mxu0
        %v7462 = vadd.f32 0.0, %v7461
        %7463 = vdwg.mxu0
        %7464 = vmatpush.bf16.msra.mxu0 %v4853
        %7465 = vmatpush.bf16.msra.mxu0 %v4845
        %7466 = vmatpush.bf16.msra.mxu0 %v4837
        %7467 = vmatpush.bf16.msra.mxu0 %v4829
        %7468 = vmatpush.bf16.msra.mxu0 %v4821
        %7469 = vmatpush.bf16.msra.mxu0 %v4813
        %7470 = vmatpush.bf16.msra.mxu0 %v4805
        %7471 = vmatpush.bf16.msra.mxu0 %v4797
        %7472 = vmatmul.bf16.gmra.mxu0 %v1627
        %v7473 = vpop.f32.mrf.mxu0
        %v7474 = vadd.f32 %v7460, %v7473
        %v7475 = vpop.f32.mrf.mxu0
        %v7476 = vadd.f32 %v7462, %v7475
        %7477 = vdwg.mxu0
        %7478 = vmatpush.bf16.msra.mxu0 %v4917
        %7479 = vmatpush.bf16.msra.mxu0 %v4909
        %7480 = vmatpush.bf16.msra.mxu0 %v4901
        %7481 = vmatpush.bf16.msra.mxu0 %v4893
        %7482 = vmatpush.bf16.msra.mxu0 %v4885
        %7483 = vmatpush.bf16.msra.mxu0 %v4877
        %7484 = vmatpush.bf16.msra.mxu0 %v4869
        %7485 = vmatpush.bf16.msra.mxu0 %v4861
        %7486 = vmatmul.bf16.gmra.mxu0 %v1628
        %v7487 = vpop.f32.mrf.mxu0
        %v7488 = vadd.f32 %v7474, %v7487
        %v7489 = vpop.f32.mrf.mxu0
        %v7490 = vadd.f32 %v7476, %v7489
        %7491 = vdwg.mxu0
        %7492 = vmatpush.bf16.msra.mxu0 %v4981
        %7493 = vmatpush.bf16.msra.mxu0 %v4973
        %7494 = vmatpush.bf16.msra.mxu0 %v4965
        %7495 = vmatpush.bf16.msra.mxu0 %v4957
        %7496 = vmatpush.bf16.msra.mxu0 %v4949
        %7497 = vmatpush.bf16.msra.mxu0 %v4941
        %7498 = vmatpush.bf16.msra.mxu0 %v4933
        %7499 = vmatpush.bf16.msra.mxu0 %v4925
        %7500 = vmatmul.bf16.gmra.mxu0 %v1629
        %v7501 = vpop.f32.mrf.mxu0
        %v7502 = vadd.f32 %v7488, %v7501
        %v7503 = vpop.f32.mrf.mxu0
        %v7504 = vadd.f32 %v7490, %v7503
        %7505 = vdwg.mxu0
        %7506 = vmatpush.bf16.msra.mxu0 %v5045
        %7507 = vmatpush.bf16.msra.mxu0 %v5037
        %7508 = vmatpush.bf16.msra.mxu0 %v5029
        %7509 = vmatpush.bf16.msra.mxu0 %v5021
        %7510 = vmatpush.bf16.msra.mxu0 %v5013
        %7511 = vmatpush.bf16.msra.mxu0 %v5005
        %7512 = vmatpush.bf16.msra.mxu0 %v4997
        %7513 = vmatpush.bf16.msra.mxu0 %v4989
        %7514 = vmatmul.bf16.gmra.mxu0 %v1630
        %v7515 = vpop.f32.mrf.mxu0
        %v7516 = vadd.f32 %v7502, %v7515
        %v7517 = vpop.f32.mrf.mxu0
        %v7518 = vadd.f32 %v7504, %v7517
        %7519 = vdwg.mxu0
        %7520 = vmatpush.bf16.msra.mxu0 %v5109
        %7521 = vmatpush.bf16.msra.mxu0 %v5101
        %7522 = vmatpush.bf16.msra.mxu0 %v5093
        %7523 = vmatpush.bf16.msra.mxu0 %v5085
        %7524 = vmatpush.bf16.msra.mxu0 %v5077
        %7525 = vmatpush.bf16.msra.mxu0 %v5069
        %7526 = vmatpush.bf16.msra.mxu0 %v5061
        %7527 = vmatpush.bf16.msra.mxu0 %v5053
        %7528 = vmatmul.bf16.gmra.mxu0 %v1631
        %v7529 = vpop.f32.mrf.mxu0
        %v7530 = vadd.f32 %v7516, %v7529
        %v7531 = vpop.f32.mrf.mxu0
        %v7532 = vadd.f32 %v7518, %v7531
        %7533 = vdwg.mxu0
        %7534 = vmatpush.bf16.msra.mxu0 %v5173
        %7535 = vmatpush.bf16.msra.mxu0 %v5165
        %7536 = vmatpush.bf16.msra.mxu0 %v5157
        %7537 = vmatpush.bf16.msra.mxu0 %v5149
        %7538 = vmatpush.bf16.msra.mxu0 %v5141
        %7539 = vmatpush.bf16.msra.mxu0 %v5133
        %7540 = vmatpush.bf16.msra.mxu0 %v5125
        %7541 = vmatpush.bf16.msra.mxu0 %v5117
        %7542 = vmatmul.bf16.gmra.mxu0 %v1632
        %v7543 = vpop.f32.mrf.mxu0
        %v7544 = vadd.f32 %v7530, %v7543
        %v7545 = vpop.f32.mrf.mxu0
        %v7546 = vadd.f32 %v7532, %v7545
        %7547 = vdwg.mxu0
        %7548 = vmatpush.bf16.msra.mxu0 %v5237
        %7549 = vmatpush.bf16.msra.mxu0 %v5229
        %7550 = vmatpush.bf16.msra.mxu0 %v5221
        %7551 = vmatpush.bf16.msra.mxu0 %v5213
        %7552 = vmatpush.bf16.msra.mxu0 %v5205
        %7553 = vmatpush.bf16.msra.mxu0 %v5197
        %7554 = vmatpush.bf16.msra.mxu0 %v5189
        %7555 = vmatpush.bf16.msra.mxu0 %v5181
        %7556 = vmatmul.bf16.gmra.mxu0 %v1633
        %v7557 = vpop.f32.mrf.mxu0
        %v7558 = vadd.f32 %v7544, %v7557
        %v7559 = vpop.f32.mrf.mxu0
        %v7560 = vadd.f32 %v7546, %v7559
        %7561 = vdwg.mxu0
        %7562 = vmatpush.bf16.msra.mxu0 %v5301
        %7563 = vmatpush.bf16.msra.mxu0 %v5293
        %7564 = vmatpush.bf16.msra.mxu0 %v5285
        %7565 = vmatpush.bf16.msra.mxu0 %v5277
        %7566 = vmatpush.bf16.msra.mxu0 %v5269
        %7567 = vmatpush.bf16.msra.mxu0 %v5261
        %7568 = vmatpush.bf16.msra.mxu0 %v5253
        %7569 = vmatpush.bf16.msra.mxu0 %v5245
        %7570 = vmatmul.bf16.gmra.mxu0 %v1634
        %v7571 = vpop.f32.mrf.mxu0
        %v7572 = vadd.f32 %v7558, %v7571
        %v7573 = vpop.f32.mrf.mxu0
        %v7574 = vadd.f32 %v7560, %v7573
        %7575 = vdwg.mxu0
        %7576 = vmatpush.bf16.msra.mxu0 %v5365
        %7577 = vmatpush.bf16.msra.mxu0 %v5357
        %7578 = vmatpush.bf16.msra.mxu0 %v5349
        %7579 = vmatpush.bf16.msra.mxu0 %v5341
        %7580 = vmatpush.bf16.msra.mxu0 %v5333
        %7581 = vmatpush.bf16.msra.mxu0 %v5325
        %7582 = vmatpush.bf16.msra.mxu0 %v5317
        %7583 = vmatpush.bf16.msra.mxu0 %v5309
        %7584 = vmatmul.bf16.gmra.mxu0 %v1635
        %v7585 = vpop.f32.mrf.mxu0
        %v7586 = vadd.f32 %v7572, %v7585
        %v7587 = vpop.f32.mrf.mxu0
        %v7588 = vadd.f32 %v7574, %v7587
        %7589 = vdwg.mxu0
        %7590 = vmatpush.bf16.msra.mxu0 %v5429
        %7591 = vmatpush.bf16.msra.mxu0 %v5421
        %7592 = vmatpush.bf16.msra.mxu0 %v5413
        %7593 = vmatpush.bf16.msra.mxu0 %v5405
        %7594 = vmatpush.bf16.msra.mxu0 %v5397
        %7595 = vmatpush.bf16.msra.mxu0 %v5389
        %7596 = vmatpush.bf16.msra.mxu0 %v5381
        %7597 = vmatpush.bf16.msra.mxu0 %v5373
        %7598 = vmatmul.bf16.gmra.mxu0 %v1636
        %v7599 = vpop.f32.mrf.mxu0
        %v7600 = vadd.f32 %v7586, %v7599
        %v7601 = vpop.f32.mrf.mxu0
        %v7602 = vadd.f32 %v7588, %v7601
        %7603 = vdwg.mxu0
        %7604 = vmatpush.bf16.msra.mxu0 %v5493
        %7605 = vmatpush.bf16.msra.mxu0 %v5485
        %7606 = vmatpush.bf16.msra.mxu0 %v5477
        %7607 = vmatpush.bf16.msra.mxu0 %v5469
        %7608 = vmatpush.bf16.msra.mxu0 %v5461
        %7609 = vmatpush.bf16.msra.mxu0 %v5453
        %7610 = vmatpush.bf16.msra.mxu0 %v5445
        %7611 = vmatpush.bf16.msra.mxu0 %v5437
        %7612 = vmatmul.bf16.gmra.mxu0 %v1637
        %v7613 = vpop.f32.mrf.mxu0
        %v7614 = vadd.f32 %v7600, %v7613
        %v7615 = vpop.f32.mrf.mxu0
        %v7616 = vadd.f32 %v7602, %v7615
        %7617 = vdwg.mxu0
        %7618 = vmatpush.bf16.msra.mxu0 %v5557
        %7619 = vmatpush.bf16.msra.mxu0 %v5549
        %7620 = vmatpush.bf16.msra.mxu0 %v5541
        %7621 = vmatpush.bf16.msra.mxu0 %v5533
        %7622 = vmatpush.bf16.msra.mxu0 %v5525
        %7623 = vmatpush.bf16.msra.mxu0 %v5517
        %7624 = vmatpush.bf16.msra.mxu0 %v5509
        %7625 = vmatpush.bf16.msra.mxu0 %v5501
        %7626 = vmatmul.bf16.gmra.mxu0 %v1638
        %v7627 = vpop.f32.mrf.mxu0
        %v7628 = vadd.f32 %v7614, %v7627
        %v7629 = vpop.f32.mrf.mxu0
        %v7630 = vadd.f32 %v7616, %v7629
        %7631 = vdwg.mxu0
        %7632 = vmatpush.bf16.msra.mxu0 %v5621
        %7633 = vmatpush.bf16.msra.mxu0 %v5613
        %7634 = vmatpush.bf16.msra.mxu0 %v5605
        %7635 = vmatpush.bf16.msra.mxu0 %v5597
        %7636 = vmatpush.bf16.msra.mxu0 %v5589
        %7637 = vmatpush.bf16.msra.mxu0 %v5581
        %7638 = vmatpush.bf16.msra.mxu0 %v5573
        %7639 = vmatpush.bf16.msra.mxu0 %v5565
        %7640 = vmatmul.bf16.gmra.mxu0 %v1639
        %v7641 = vpop.f32.mrf.mxu0
        %v7642 = vadd.f32 %v7628, %v7641
        %v7643 = vpop.f32.mrf.mxu0
        %v7644 = vadd.f32 %v7630, %v7643
        %7645 = vdwg.mxu0
        %7646 = vmatpush.bf16.msra.mxu0 %v5685
        %7647 = vmatpush.bf16.msra.mxu0 %v5677
        %7648 = vmatpush.bf16.msra.mxu0 %v5669
        %7649 = vmatpush.bf16.msra.mxu0 %v5661
        %7650 = vmatpush.bf16.msra.mxu0 %v5653
        %7651 = vmatpush.bf16.msra.mxu0 %v5645
        %7652 = vmatpush.bf16.msra.mxu0 %v5637
        %7653 = vmatpush.bf16.msra.mxu0 %v5629
        %7654 = vmatmul.bf16.gmra.mxu0 %v1640
        %v7655 = vpop.f32.mrf.mxu0
        %v7656 = vadd.f32 %v7642, %v7655
        %v7657 = vpop.f32.mrf.mxu0
        %v7658 = vadd.f32 %v7644, %v7657
        %7659 = vdwg.mxu0
        %7660 = vmatpush.bf16.msra.mxu0 %v5749
        %7661 = vmatpush.bf16.msra.mxu0 %v5741
        %7662 = vmatpush.bf16.msra.mxu0 %v5733
        %7663 = vmatpush.bf16.msra.mxu0 %v5725
        %7664 = vmatpush.bf16.msra.mxu0 %v5717
        %7665 = vmatpush.bf16.msra.mxu0 %v5709
        %7666 = vmatpush.bf16.msra.mxu0 %v5701
        %7667 = vmatpush.bf16.msra.mxu0 %v5693
        %7668 = vmatmul.bf16.gmra.mxu0 %v1641
        %v7669 = vpop.f32.mrf.mxu0
        %v7670 = vadd.f32 %v7656, %v7669
        %v7671 = vpop.f32.mrf.mxu0
        %v7672 = vadd.f32 %v7658, %v7671
        %7673 = vdwg.mxu0
        %7674 = vmatpush.bf16.msra.mxu0 %v4790
        %7675 = vmatpush.bf16.msra.mxu0 %v4782
        %7676 = vmatpush.bf16.msra.mxu0 %v4774
        %7677 = vmatpush.bf16.msra.mxu0 %v4766
        %7678 = vmatpush.bf16.msra.mxu0 %v4758
        %7679 = vmatpush.bf16.msra.mxu0 %v4750
        %7680 = vmatpush.bf16.msra.mxu0 %v4742
        %7681 = vmatpush.bf16.msra.mxu0 %v4734
        %7682 = vmatmul.bf16.gmra.mxu0 %v1626
        %v7683 = vpop.f32.mrf.mxu0
        %v7684 = vadd.f32 0.0, %v7683
        %v7685 = vpop.f32.mrf.mxu0
        %v7686 = vadd.f32 0.0, %v7685
        %7687 = vdwg.mxu0
        %7688 = vmatpush.bf16.msra.mxu0 %v4854
        %7689 = vmatpush.bf16.msra.mxu0 %v4846
        %7690 = vmatpush.bf16.msra.mxu0 %v4838
        %7691 = vmatpush.bf16.msra.mxu0 %v4830
        %7692 = vmatpush.bf16.msra.mxu0 %v4822
        %7693 = vmatpush.bf16.msra.mxu0 %v4814
        %7694 = vmatpush.bf16.msra.mxu0 %v4806
        %7695 = vmatpush.bf16.msra.mxu0 %v4798
        %7696 = vmatmul.bf16.gmra.mxu0 %v1627
        %v7697 = vpop.f32.mrf.mxu0
        %v7698 = vadd.f32 %v7684, %v7697
        %v7699 = vpop.f32.mrf.mxu0
        %v7700 = vadd.f32 %v7686, %v7699
        %7701 = vdwg.mxu0
        %7702 = vmatpush.bf16.msra.mxu0 %v4918
        %7703 = vmatpush.bf16.msra.mxu0 %v4910
        %7704 = vmatpush.bf16.msra.mxu0 %v4902
        %7705 = vmatpush.bf16.msra.mxu0 %v4894
        %7706 = vmatpush.bf16.msra.mxu0 %v4886
        %7707 = vmatpush.bf16.msra.mxu0 %v4878
        %7708 = vmatpush.bf16.msra.mxu0 %v4870
        %7709 = vmatpush.bf16.msra.mxu0 %v4862
        %7710 = vmatmul.bf16.gmra.mxu0 %v1628
        %v7711 = vpop.f32.mrf.mxu0
        %v7712 = vadd.f32 %v7698, %v7711
        %v7713 = vpop.f32.mrf.mxu0
        %v7714 = vadd.f32 %v7700, %v7713
        %7715 = vdwg.mxu0
        %7716 = vmatpush.bf16.msra.mxu0 %v4982
        %7717 = vmatpush.bf16.msra.mxu0 %v4974
        %7718 = vmatpush.bf16.msra.mxu0 %v4966
        %7719 = vmatpush.bf16.msra.mxu0 %v4958
        %7720 = vmatpush.bf16.msra.mxu0 %v4950
        %7721 = vmatpush.bf16.msra.mxu0 %v4942
        %7722 = vmatpush.bf16.msra.mxu0 %v4934
        %7723 = vmatpush.bf16.msra.mxu0 %v4926
        %7724 = vmatmul.bf16.gmra.mxu0 %v1629
        %v7725 = vpop.f32.mrf.mxu0
        %v7726 = vadd.f32 %v7712, %v7725
        %v7727 = vpop.f32.mrf.mxu0
        %v7728 = vadd.f32 %v7714, %v7727
        %7729 = vdwg.mxu0
        %7730 = vmatpush.bf16.msra.mxu0 %v5046
        %7731 = vmatpush.bf16.msra.mxu0 %v5038
        %7732 = vmatpush.bf16.msra.mxu0 %v5030
        %7733 = vmatpush.bf16.msra.mxu0 %v5022
        %7734 = vmatpush.bf16.msra.mxu0 %v5014
        %7735 = vmatpush.bf16.msra.mxu0 %v5006
        %7736 = vmatpush.bf16.msra.mxu0 %v4998
        %7737 = vmatpush.bf16.msra.mxu0 %v4990
        %7738 = vmatmul.bf16.gmra.mxu0 %v1630
        %v7739 = vpop.f32.mrf.mxu0
        %v7740 = vadd.f32 %v7726, %v7739
        %v7741 = vpop.f32.mrf.mxu0
        %v7742 = vadd.f32 %v7728, %v7741
        %7743 = vdwg.mxu0
        %7744 = vmatpush.bf16.msra.mxu0 %v5110
        %7745 = vmatpush.bf16.msra.mxu0 %v5102
        %7746 = vmatpush.bf16.msra.mxu0 %v5094
        %7747 = vmatpush.bf16.msra.mxu0 %v5086
        %7748 = vmatpush.bf16.msra.mxu0 %v5078
        %7749 = vmatpush.bf16.msra.mxu0 %v5070
        %7750 = vmatpush.bf16.msra.mxu0 %v5062
        %7751 = vmatpush.bf16.msra.mxu0 %v5054
        %7752 = vmatmul.bf16.gmra.mxu0 %v1631
        %v7753 = vpop.f32.mrf.mxu0
        %v7754 = vadd.f32 %v7740, %v7753
        %v7755 = vpop.f32.mrf.mxu0
        %v7756 = vadd.f32 %v7742, %v7755
        %7757 = vdwg.mxu0
        %7758 = vmatpush.bf16.msra.mxu0 %v5174
        %7759 = vmatpush.bf16.msra.mxu0 %v5166
        %7760 = vmatpush.bf16.msra.mxu0 %v5158
        %7761 = vmatpush.bf16.msra.mxu0 %v5150
        %7762 = vmatpush.bf16.msra.mxu0 %v5142
        %7763 = vmatpush.bf16.msra.mxu0 %v5134
        %7764 = vmatpush.bf16.msra.mxu0 %v5126
        %7765 = vmatpush.bf16.msra.mxu0 %v5118
        %7766 = vmatmul.bf16.gmra.mxu0 %v1632
        %v7767 = vpop.f32.mrf.mxu0
        %v7768 = vadd.f32 %v7754, %v7767
        %v7769 = vpop.f32.mrf.mxu0
        %v7770 = vadd.f32 %v7756, %v7769
        %7771 = vdwg.mxu0
        %7772 = vmatpush.bf16.msra.mxu0 %v5238
        %7773 = vmatpush.bf16.msra.mxu0 %v5230
        %7774 = vmatpush.bf16.msra.mxu0 %v5222
        %7775 = vmatpush.bf16.msra.mxu0 %v5214
        %7776 = vmatpush.bf16.msra.mxu0 %v5206
        %7777 = vmatpush.bf16.msra.mxu0 %v5198
        %7778 = vmatpush.bf16.msra.mxu0 %v5190
        %7779 = vmatpush.bf16.msra.mxu0 %v5182
        %7780 = vmatmul.bf16.gmra.mxu0 %v1633
        %v7781 = vpop.f32.mrf.mxu0
        %v7782 = vadd.f32 %v7768, %v7781
        %v7783 = vpop.f32.mrf.mxu0
        %v7784 = vadd.f32 %v7770, %v7783
        %7785 = vdwg.mxu0
        %7786 = vmatpush.bf16.msra.mxu0 %v5302
        %7787 = vmatpush.bf16.msra.mxu0 %v5294
        %7788 = vmatpush.bf16.msra.mxu0 %v5286
        %7789 = vmatpush.bf16.msra.mxu0 %v5278
        %7790 = vmatpush.bf16.msra.mxu0 %v5270
        %7791 = vmatpush.bf16.msra.mxu0 %v5262
        %7792 = vmatpush.bf16.msra.mxu0 %v5254
        %7793 = vmatpush.bf16.msra.mxu0 %v5246
        %7794 = vmatmul.bf16.gmra.mxu0 %v1634
        %v7795 = vpop.f32.mrf.mxu0
        %v7796 = vadd.f32 %v7782, %v7795
        %v7797 = vpop.f32.mrf.mxu0
        %v7798 = vadd.f32 %v7784, %v7797
        %7799 = vdwg.mxu0
        %7800 = vmatpush.bf16.msra.mxu0 %v5366
        %7801 = vmatpush.bf16.msra.mxu0 %v5358
        %7802 = vmatpush.bf16.msra.mxu0 %v5350
        %7803 = vmatpush.bf16.msra.mxu0 %v5342
        %7804 = vmatpush.bf16.msra.mxu0 %v5334
        %7805 = vmatpush.bf16.msra.mxu0 %v5326
        %7806 = vmatpush.bf16.msra.mxu0 %v5318
        %7807 = vmatpush.bf16.msra.mxu0 %v5310
        %7808 = vmatmul.bf16.gmra.mxu0 %v1635
        %v7809 = vpop.f32.mrf.mxu0
        %v7810 = vadd.f32 %v7796, %v7809
        %v7811 = vpop.f32.mrf.mxu0
        %v7812 = vadd.f32 %v7798, %v7811
        %7813 = vdwg.mxu0
        %7814 = vmatpush.bf16.msra.mxu0 %v5430
        %7815 = vmatpush.bf16.msra.mxu0 %v5422
        %7816 = vmatpush.bf16.msra.mxu0 %v5414
        %7817 = vmatpush.bf16.msra.mxu0 %v5406
        %7818 = vmatpush.bf16.msra.mxu0 %v5398
        %7819 = vmatpush.bf16.msra.mxu0 %v5390
        %7820 = vmatpush.bf16.msra.mxu0 %v5382
        %7821 = vmatpush.bf16.msra.mxu0 %v5374
        %7822 = vmatmul.bf16.gmra.mxu0 %v1636
        %v7823 = vpop.f32.mrf.mxu0
        %v7824 = vadd.f32 %v7810, %v7823
        %v7825 = vpop.f32.mrf.mxu0
        %v7826 = vadd.f32 %v7812, %v7825
        %7827 = vdwg.mxu0
        %7828 = vmatpush.bf16.msra.mxu0 %v5494
        %7829 = vmatpush.bf16.msra.mxu0 %v5486
        %7830 = vmatpush.bf16.msra.mxu0 %v5478
        %7831 = vmatpush.bf16.msra.mxu0 %v5470
        %7832 = vmatpush.bf16.msra.mxu0 %v5462
        %7833 = vmatpush.bf16.msra.mxu0 %v5454
        %7834 = vmatpush.bf16.msra.mxu0 %v5446
        %7835 = vmatpush.bf16.msra.mxu0 %v5438
        %7836 = vmatmul.bf16.gmra.mxu0 %v1637
        %v7837 = vpop.f32.mrf.mxu0
        %v7838 = vadd.f32 %v7824, %v7837
        %v7839 = vpop.f32.mrf.mxu0
        %v7840 = vadd.f32 %v7826, %v7839
        %7841 = vdwg.mxu0
        %7842 = vmatpush.bf16.msra.mxu0 %v5558
        %7843 = vmatpush.bf16.msra.mxu0 %v5550
        %7844 = vmatpush.bf16.msra.mxu0 %v5542
        %7845 = vmatpush.bf16.msra.mxu0 %v5534
        %7846 = vmatpush.bf16.msra.mxu0 %v5526
        %7847 = vmatpush.bf16.msra.mxu0 %v5518
        %7848 = vmatpush.bf16.msra.mxu0 %v5510
        %7849 = vmatpush.bf16.msra.mxu0 %v5502
        %7850 = vmatmul.bf16.gmra.mxu0 %v1638
        %v7851 = vpop.f32.mrf.mxu0
        %v7852 = vadd.f32 %v7838, %v7851
        %v7853 = vpop.f32.mrf.mxu0
        %v7854 = vadd.f32 %v7840, %v7853
        %7855 = vdwg.mxu0
        %7856 = vmatpush.bf16.msra.mxu0 %v5622
        %7857 = vmatpush.bf16.msra.mxu0 %v5614
        %7858 = vmatpush.bf16.msra.mxu0 %v5606
        %7859 = vmatpush.bf16.msra.mxu0 %v5598
        %7860 = vmatpush.bf16.msra.mxu0 %v5590
        %7861 = vmatpush.bf16.msra.mxu0 %v5582
        %7862 = vmatpush.bf16.msra.mxu0 %v5574
        %7863 = vmatpush.bf16.msra.mxu0 %v5566
        %7864 = vmatmul.bf16.gmra.mxu0 %v1639
        %v7865 = vpop.f32.mrf.mxu0
        %v7866 = vadd.f32 %v7852, %v7865
        %v7867 = vpop.f32.mrf.mxu0
        %v7868 = vadd.f32 %v7854, %v7867
        %7869 = vdwg.mxu0
        %7870 = vmatpush.bf16.msra.mxu0 %v5686
        %7871 = vmatpush.bf16.msra.mxu0 %v5678
        %7872 = vmatpush.bf16.msra.mxu0 %v5670
        %7873 = vmatpush.bf16.msra.mxu0 %v5662
        %7874 = vmatpush.bf16.msra.mxu0 %v5654
        %7875 = vmatpush.bf16.msra.mxu0 %v5646
        %7876 = vmatpush.bf16.msra.mxu0 %v5638
        %7877 = vmatpush.bf16.msra.mxu0 %v5630
        %7878 = vmatmul.bf16.gmra.mxu0 %v1640
        %v7879 = vpop.f32.mrf.mxu0
        %v7880 = vadd.f32 %v7866, %v7879
        %v7881 = vpop.f32.mrf.mxu0
        %v7882 = vadd.f32 %v7868, %v7881
        %7883 = vdwg.mxu0
        %7884 = vmatpush.bf16.msra.mxu0 %v5750
        %7885 = vmatpush.bf16.msra.mxu0 %v5742
        %7886 = vmatpush.bf16.msra.mxu0 %v5734
        %7887 = vmatpush.bf16.msra.mxu0 %v5726
        %7888 = vmatpush.bf16.msra.mxu0 %v5718
        %7889 = vmatpush.bf16.msra.mxu0 %v5710
        %7890 = vmatpush.bf16.msra.mxu0 %v5702
        %7891 = vmatpush.bf16.msra.mxu0 %v5694
        %7892 = vmatmul.bf16.gmra.mxu0 %v1641
        %v7893 = vpop.f32.mrf.mxu0
        %v7894 = vadd.f32 %v7880, %v7893
        %v7895 = vpop.f32.mrf.mxu0
        %v7896 = vadd.f32 %v7882, %v7895
        %7897 = vdwg.mxu0
        %7898 = vmatpush.bf16.msra.mxu0 %v4791
        %7899 = vmatpush.bf16.msra.mxu0 %v4783
        %7900 = vmatpush.bf16.msra.mxu0 %v4775
        %7901 = vmatpush.bf16.msra.mxu0 %v4767
        %7902 = vmatpush.bf16.msra.mxu0 %v4759
        %7903 = vmatpush.bf16.msra.mxu0 %v4751
        %7904 = vmatpush.bf16.msra.mxu0 %v4743
        %7905 = vmatpush.bf16.msra.mxu0 %v4735
        %7906 = vmatmul.bf16.gmra.mxu0 %v1626
        %v7907 = vpop.f32.mrf.mxu0
        %v7908 = vadd.f32 0.0, %v7907
        %v7909 = vpop.f32.mrf.mxu0
        %v7910 = vadd.f32 0.0, %v7909
        %7911 = vdwg.mxu0
        %7912 = vmatpush.bf16.msra.mxu0 %v4855
        %7913 = vmatpush.bf16.msra.mxu0 %v4847
        %7914 = vmatpush.bf16.msra.mxu0 %v4839
        %7915 = vmatpush.bf16.msra.mxu0 %v4831
        %7916 = vmatpush.bf16.msra.mxu0 %v4823
        %7917 = vmatpush.bf16.msra.mxu0 %v4815
        %7918 = vmatpush.bf16.msra.mxu0 %v4807
        %7919 = vmatpush.bf16.msra.mxu0 %v4799
        %7920 = vmatmul.bf16.gmra.mxu0 %v1627
        %v7921 = vpop.f32.mrf.mxu0
        %v7922 = vadd.f32 %v7908, %v7921
        %v7923 = vpop.f32.mrf.mxu0
        %v7924 = vadd.f32 %v7910, %v7923
        %7925 = vdwg.mxu0
        %7926 = vmatpush.bf16.msra.mxu0 %v4919
        %7927 = vmatpush.bf16.msra.mxu0 %v4911
        %7928 = vmatpush.bf16.msra.mxu0 %v4903
        %7929 = vmatpush.bf16.msra.mxu0 %v4895
        %7930 = vmatpush.bf16.msra.mxu0 %v4887
        %7931 = vmatpush.bf16.msra.mxu0 %v4879
        %7932 = vmatpush.bf16.msra.mxu0 %v4871
        %7933 = vmatpush.bf16.msra.mxu0 %v4863
        %7934 = vmatmul.bf16.gmra.mxu0 %v1628
        %v7935 = vpop.f32.mrf.mxu0
        %v7936 = vadd.f32 %v7922, %v7935
        %v7937 = vpop.f32.mrf.mxu0
        %v7938 = vadd.f32 %v7924, %v7937
        %7939 = vdwg.mxu0
        %7940 = vmatpush.bf16.msra.mxu0 %v4983
        %7941 = vmatpush.bf16.msra.mxu0 %v4975
        %7942 = vmatpush.bf16.msra.mxu0 %v4967
        %7943 = vmatpush.bf16.msra.mxu0 %v4959
        %7944 = vmatpush.bf16.msra.mxu0 %v4951
        %7945 = vmatpush.bf16.msra.mxu0 %v4943
        %7946 = vmatpush.bf16.msra.mxu0 %v4935
        %7947 = vmatpush.bf16.msra.mxu0 %v4927
        %7948 = vmatmul.bf16.gmra.mxu0 %v1629
        %v7949 = vpop.f32.mrf.mxu0
        %v7950 = vadd.f32 %v7936, %v7949
        %v7951 = vpop.f32.mrf.mxu0
        %v7952 = vadd.f32 %v7938, %v7951
        %7953 = vdwg.mxu0
        %7954 = vmatpush.bf16.msra.mxu0 %v5047
        %7955 = vmatpush.bf16.msra.mxu0 %v5039
        %7956 = vmatpush.bf16.msra.mxu0 %v5031
        %7957 = vmatpush.bf16.msra.mxu0 %v5023
        %7958 = vmatpush.bf16.msra.mxu0 %v5015
        %7959 = vmatpush.bf16.msra.mxu0 %v5007
        %7960 = vmatpush.bf16.msra.mxu0 %v4999
        %7961 = vmatpush.bf16.msra.mxu0 %v4991
        %7962 = vmatmul.bf16.gmra.mxu0 %v1630
        %v7963 = vpop.f32.mrf.mxu0
        %v7964 = vadd.f32 %v7950, %v7963
        %v7965 = vpop.f32.mrf.mxu0
        %v7966 = vadd.f32 %v7952, %v7965
        %7967 = vdwg.mxu0
        %7968 = vmatpush.bf16.msra.mxu0 %v5111
        %7969 = vmatpush.bf16.msra.mxu0 %v5103
        %7970 = vmatpush.bf16.msra.mxu0 %v5095
        %7971 = vmatpush.bf16.msra.mxu0 %v5087
        %7972 = vmatpush.bf16.msra.mxu0 %v5079
        %7973 = vmatpush.bf16.msra.mxu0 %v5071
        %7974 = vmatpush.bf16.msra.mxu0 %v5063
        %7975 = vmatpush.bf16.msra.mxu0 %v5055
        %7976 = vmatmul.bf16.gmra.mxu0 %v1631
        %v7977 = vpop.f32.mrf.mxu0
        %v7978 = vadd.f32 %v7964, %v7977
        %v7979 = vpop.f32.mrf.mxu0
        %v7980 = vadd.f32 %v7966, %v7979
        %7981 = vdwg.mxu0
        %7982 = vmatpush.bf16.msra.mxu0 %v5175
        %7983 = vmatpush.bf16.msra.mxu0 %v5167
        %7984 = vmatpush.bf16.msra.mxu0 %v5159
        %7985 = vmatpush.bf16.msra.mxu0 %v5151
        %7986 = vmatpush.bf16.msra.mxu0 %v5143
        %7987 = vmatpush.bf16.msra.mxu0 %v5135
        %7988 = vmatpush.bf16.msra.mxu0 %v5127
        %7989 = vmatpush.bf16.msra.mxu0 %v5119
        %7990 = vmatmul.bf16.gmra.mxu0 %v1632
        %v7991 = vpop.f32.mrf.mxu0
        %v7992 = vadd.f32 %v7978, %v7991
        %v7993 = vpop.f32.mrf.mxu0
        %v7994 = vadd.f32 %v7980, %v7993
        %7995 = vdwg.mxu0
        %7996 = vmatpush.bf16.msra.mxu0 %v5239
        %7997 = vmatpush.bf16.msra.mxu0 %v5231
        %7998 = vmatpush.bf16.msra.mxu0 %v5223
        %7999 = vmatpush.bf16.msra.mxu0 %v5215
        %8000 = vmatpush.bf16.msra.mxu0 %v5207
        %8001 = vmatpush.bf16.msra.mxu0 %v5199
        %8002 = vmatpush.bf16.msra.mxu0 %v5191
        %8003 = vmatpush.bf16.msra.mxu0 %v5183
        %8004 = vmatmul.bf16.gmra.mxu0 %v1633
        %v8005 = vpop.f32.mrf.mxu0
        %v8006 = vadd.f32 %v7992, %v8005
        %v8007 = vpop.f32.mrf.mxu0
        %v8008 = vadd.f32 %v7994, %v8007
        %8009 = vdwg.mxu0
        %8010 = vmatpush.bf16.msra.mxu0 %v5303
        %8011 = vmatpush.bf16.msra.mxu0 %v5295
        %8012 = vmatpush.bf16.msra.mxu0 %v5287
        %8013 = vmatpush.bf16.msra.mxu0 %v5279
        %8014 = vmatpush.bf16.msra.mxu0 %v5271
        %8015 = vmatpush.bf16.msra.mxu0 %v5263
        %8016 = vmatpush.bf16.msra.mxu0 %v5255
        %8017 = vmatpush.bf16.msra.mxu0 %v5247
        %8018 = vmatmul.bf16.gmra.mxu0 %v1634
        %v8019 = vpop.f32.mrf.mxu0
        %v8020 = vadd.f32 %v8006, %v8019
        %v8021 = vpop.f32.mrf.mxu0
        %v8022 = vadd.f32 %v8008, %v8021
        %8023 = vdwg.mxu0
        %8024 = vmatpush.bf16.msra.mxu0 %v5367
        %8025 = vmatpush.bf16.msra.mxu0 %v5359
        %8026 = vmatpush.bf16.msra.mxu0 %v5351
        %8027 = vmatpush.bf16.msra.mxu0 %v5343
        %8028 = vmatpush.bf16.msra.mxu0 %v5335
        %8029 = vmatpush.bf16.msra.mxu0 %v5327
        %8030 = vmatpush.bf16.msra.mxu0 %v5319
        %8031 = vmatpush.bf16.msra.mxu0 %v5311
        %8032 = vmatmul.bf16.gmra.mxu0 %v1635
        %v8033 = vpop.f32.mrf.mxu0
        %v8034 = vadd.f32 %v8020, %v8033
        %v8035 = vpop.f32.mrf.mxu0
        %v8036 = vadd.f32 %v8022, %v8035
        %8037 = vdwg.mxu0
        %8038 = vmatpush.bf16.msra.mxu0 %v5431
        %8039 = vmatpush.bf16.msra.mxu0 %v5423
        %8040 = vmatpush.bf16.msra.mxu0 %v5415
        %8041 = vmatpush.bf16.msra.mxu0 %v5407
        %8042 = vmatpush.bf16.msra.mxu0 %v5399
        %8043 = vmatpush.bf16.msra.mxu0 %v5391
        %8044 = vmatpush.bf16.msra.mxu0 %v5383
        %8045 = vmatpush.bf16.msra.mxu0 %v5375
        %8046 = vmatmul.bf16.gmra.mxu0 %v1636
        %v8047 = vpop.f32.mrf.mxu0
        %v8048 = vadd.f32 %v8034, %v8047
        %v8049 = vpop.f32.mrf.mxu0
        %v8050 = vadd.f32 %v8036, %v8049
        %8051 = vdwg.mxu0
        %8052 = vmatpush.bf16.msra.mxu0 %v5495
        %8053 = vmatpush.bf16.msra.mxu0 %v5487
        %8054 = vmatpush.bf16.msra.mxu0 %v5479
        %8055 = vmatpush.bf16.msra.mxu0 %v5471
        %8056 = vmatpush.bf16.msra.mxu0 %v5463
        %8057 = vmatpush.bf16.msra.mxu0 %v5455
        %8058 = vmatpush.bf16.msra.mxu0 %v5447
        %8059 = vmatpush.bf16.msra.mxu0 %v5439
        %8060 = vmatmul.bf16.gmra.mxu0 %v1637
        %v8061 = vpop.f32.mrf.mxu0
        %v8062 = vadd.f32 %v8048, %v8061
        %v8063 = vpop.f32.mrf.mxu0
        %v8064 = vadd.f32 %v8050, %v8063
        %8065 = vdwg.mxu0
        %8066 = vmatpush.bf16.msra.mxu0 %v5559
        %8067 = vmatpush.bf16.msra.mxu0 %v5551
        %8068 = vmatpush.bf16.msra.mxu0 %v5543
        %8069 = vmatpush.bf16.msra.mxu0 %v5535
        %8070 = vmatpush.bf16.msra.mxu0 %v5527
        %8071 = vmatpush.bf16.msra.mxu0 %v5519
        %8072 = vmatpush.bf16.msra.mxu0 %v5511
        %8073 = vmatpush.bf16.msra.mxu0 %v5503
        %8074 = vmatmul.bf16.gmra.mxu0 %v1638
        %v8075 = vpop.f32.mrf.mxu0
        %v8076 = vadd.f32 %v8062, %v8075
        %v8077 = vpop.f32.mrf.mxu0
        %v8078 = vadd.f32 %v8064, %v8077
        %8079 = vdwg.mxu0
        %8080 = vmatpush.bf16.msra.mxu0 %v5623
        %8081 = vmatpush.bf16.msra.mxu0 %v5615
        %8082 = vmatpush.bf16.msra.mxu0 %v5607
        %8083 = vmatpush.bf16.msra.mxu0 %v5599
        %8084 = vmatpush.bf16.msra.mxu0 %v5591
        %8085 = vmatpush.bf16.msra.mxu0 %v5583
        %8086 = vmatpush.bf16.msra.mxu0 %v5575
        %8087 = vmatpush.bf16.msra.mxu0 %v5567
        %8088 = vmatmul.bf16.gmra.mxu0 %v1639
        %v8089 = vpop.f32.mrf.mxu0
        %v8090 = vadd.f32 %v8076, %v8089
        %v8091 = vpop.f32.mrf.mxu0
        %v8092 = vadd.f32 %v8078, %v8091
        %8093 = vdwg.mxu0
        %8094 = vmatpush.bf16.msra.mxu0 %v5687
        %8095 = vmatpush.bf16.msra.mxu0 %v5679
        %8096 = vmatpush.bf16.msra.mxu0 %v5671
        %8097 = vmatpush.bf16.msra.mxu0 %v5663
        %8098 = vmatpush.bf16.msra.mxu0 %v5655
        %8099 = vmatpush.bf16.msra.mxu0 %v5647
        %8100 = vmatpush.bf16.msra.mxu0 %v5639
        %8101 = vmatpush.bf16.msra.mxu0 %v5631
        %8102 = vmatmul.bf16.gmra.mxu0 %v1640
        %v8103 = vpop.f32.mrf.mxu0
        %v8104 = vadd.f32 %v8090, %v8103
        %v8105 = vpop.f32.mrf.mxu0
        %v8106 = vadd.f32 %v8092, %v8105
        %8107 = vdwg.mxu0
        %8108 = vmatpush.bf16.msra.mxu0 %v5751
        %8109 = vmatpush.bf16.msra.mxu0 %v5743
        %8110 = vmatpush.bf16.msra.mxu0 %v5735
        %8111 = vmatpush.bf16.msra.mxu0 %v5727
        %8112 = vmatpush.bf16.msra.mxu0 %v5719
        %8113 = vmatpush.bf16.msra.mxu0 %v5711
        %8114 = vmatpush.bf16.msra.mxu0 %v5703
        %8115 = vmatpush.bf16.msra.mxu0 %v5695
        %8116 = vmatmul.bf16.gmra.mxu0 %v1641
        %v8117 = vpop.f32.mrf.mxu0
        %v8118 = vadd.f32 %v8104, %v8117
        %v8119 = vpop.f32.mrf.mxu0
        %v8120 = vadd.f32 %v8106, %v8119
        %8121 = vdwg.mxu0
        %8122 = vmatpush.bf16.msra.mxu0 %v4792
        %8123 = vmatpush.bf16.msra.mxu0 %v4784
        %8124 = vmatpush.bf16.msra.mxu0 %v4776
        %8125 = vmatpush.bf16.msra.mxu0 %v4768
        %8126 = vmatpush.bf16.msra.mxu0 %v4760
        %8127 = vmatpush.bf16.msra.mxu0 %v4752
        %8128 = vmatpush.bf16.msra.mxu0 %v4744
        %8129 = vmatpush.bf16.msra.mxu0 %v4736
        %8130 = vmatmul.bf16.gmra.mxu0 %v1626
        %v8131 = vpop.f32.mrf.mxu0
        %v8132 = vadd.f32 0.0, %v8131
        %v8133 = vpop.f32.mrf.mxu0
        %v8134 = vadd.f32 0.0, %v8133
        %8135 = vdwg.mxu0
        %8136 = vmatpush.bf16.msra.mxu0 %v4856
        %8137 = vmatpush.bf16.msra.mxu0 %v4848
        %8138 = vmatpush.bf16.msra.mxu0 %v4840
        %8139 = vmatpush.bf16.msra.mxu0 %v4832
        %8140 = vmatpush.bf16.msra.mxu0 %v4824
        %8141 = vmatpush.bf16.msra.mxu0 %v4816
        %8142 = vmatpush.bf16.msra.mxu0 %v4808
        %8143 = vmatpush.bf16.msra.mxu0 %v4800
        %8144 = vmatmul.bf16.gmra.mxu0 %v1627
        %v8145 = vpop.f32.mrf.mxu0
        %v8146 = vadd.f32 %v8132, %v8145
        %v8147 = vpop.f32.mrf.mxu0
        %v8148 = vadd.f32 %v8134, %v8147
        %8149 = vdwg.mxu0
        %8150 = vmatpush.bf16.msra.mxu0 %v4920
        %8151 = vmatpush.bf16.msra.mxu0 %v4912
        %8152 = vmatpush.bf16.msra.mxu0 %v4904
        %8153 = vmatpush.bf16.msra.mxu0 %v4896
        %8154 = vmatpush.bf16.msra.mxu0 %v4888
        %8155 = vmatpush.bf16.msra.mxu0 %v4880
        %8156 = vmatpush.bf16.msra.mxu0 %v4872
        %8157 = vmatpush.bf16.msra.mxu0 %v4864
        %8158 = vmatmul.bf16.gmra.mxu0 %v1628
        %v8159 = vpop.f32.mrf.mxu0
        %v8160 = vadd.f32 %v8146, %v8159
        %v8161 = vpop.f32.mrf.mxu0
        %v8162 = vadd.f32 %v8148, %v8161
        %8163 = vdwg.mxu0
        %8164 = vmatpush.bf16.msra.mxu0 %v4984
        %8165 = vmatpush.bf16.msra.mxu0 %v4976
        %8166 = vmatpush.bf16.msra.mxu0 %v4968
        %8167 = vmatpush.bf16.msra.mxu0 %v4960
        %8168 = vmatpush.bf16.msra.mxu0 %v4952
        %8169 = vmatpush.bf16.msra.mxu0 %v4944
        %8170 = vmatpush.bf16.msra.mxu0 %v4936
        %8171 = vmatpush.bf16.msra.mxu0 %v4928
        %8172 = vmatmul.bf16.gmra.mxu0 %v1629
        %v8173 = vpop.f32.mrf.mxu0
        %v8174 = vadd.f32 %v8160, %v8173
        %v8175 = vpop.f32.mrf.mxu0
        %v8176 = vadd.f32 %v8162, %v8175
        %8177 = vdwg.mxu0
        %8178 = vmatpush.bf16.msra.mxu0 %v5048
        %8179 = vmatpush.bf16.msra.mxu0 %v5040
        %8180 = vmatpush.bf16.msra.mxu0 %v5032
        %8181 = vmatpush.bf16.msra.mxu0 %v5024
        %8182 = vmatpush.bf16.msra.mxu0 %v5016
        %8183 = vmatpush.bf16.msra.mxu0 %v5008
        %8184 = vmatpush.bf16.msra.mxu0 %v5000
        %8185 = vmatpush.bf16.msra.mxu0 %v4992
        %8186 = vmatmul.bf16.gmra.mxu0 %v1630
        %v8187 = vpop.f32.mrf.mxu0
        %v8188 = vadd.f32 %v8174, %v8187
        %v8189 = vpop.f32.mrf.mxu0
        %v8190 = vadd.f32 %v8176, %v8189
        %8191 = vdwg.mxu0
        %8192 = vmatpush.bf16.msra.mxu0 %v5112
        %8193 = vmatpush.bf16.msra.mxu0 %v5104
        %8194 = vmatpush.bf16.msra.mxu0 %v5096
        %8195 = vmatpush.bf16.msra.mxu0 %v5088
        %8196 = vmatpush.bf16.msra.mxu0 %v5080
        %8197 = vmatpush.bf16.msra.mxu0 %v5072
        %8198 = vmatpush.bf16.msra.mxu0 %v5064
        %8199 = vmatpush.bf16.msra.mxu0 %v5056
        %8200 = vmatmul.bf16.gmra.mxu0 %v1631
        %v8201 = vpop.f32.mrf.mxu0
        %v8202 = vadd.f32 %v8188, %v8201
        %v8203 = vpop.f32.mrf.mxu0
        %v8204 = vadd.f32 %v8190, %v8203
        %8205 = vdwg.mxu0
        %8206 = vmatpush.bf16.msra.mxu0 %v5176
        %8207 = vmatpush.bf16.msra.mxu0 %v5168
        %8208 = vmatpush.bf16.msra.mxu0 %v5160
        %8209 = vmatpush.bf16.msra.mxu0 %v5152
        %8210 = vmatpush.bf16.msra.mxu0 %v5144
        %8211 = vmatpush.bf16.msra.mxu0 %v5136
        %8212 = vmatpush.bf16.msra.mxu0 %v5128
        %8213 = vmatpush.bf16.msra.mxu0 %v5120
        %8214 = vmatmul.bf16.gmra.mxu0 %v1632
        %v8215 = vpop.f32.mrf.mxu0
        %v8216 = vadd.f32 %v8202, %v8215
        %v8217 = vpop.f32.mrf.mxu0
        %v8218 = vadd.f32 %v8204, %v8217
        %8219 = vdwg.mxu0
        %8220 = vmatpush.bf16.msra.mxu0 %v5240
        %8221 = vmatpush.bf16.msra.mxu0 %v5232
        %8222 = vmatpush.bf16.msra.mxu0 %v5224
        %8223 = vmatpush.bf16.msra.mxu0 %v5216
        %8224 = vmatpush.bf16.msra.mxu0 %v5208
        %8225 = vmatpush.bf16.msra.mxu0 %v5200
        %8226 = vmatpush.bf16.msra.mxu0 %v5192
        %8227 = vmatpush.bf16.msra.mxu0 %v5184
        %8228 = vmatmul.bf16.gmra.mxu0 %v1633
        %v8229 = vpop.f32.mrf.mxu0
        %v8230 = vadd.f32 %v8216, %v8229
        %v8231 = vpop.f32.mrf.mxu0
        %v8232 = vadd.f32 %v8218, %v8231
        %8233 = vdwg.mxu0
        %8234 = vmatpush.bf16.msra.mxu0 %v5304
        %8235 = vmatpush.bf16.msra.mxu0 %v5296
        %8236 = vmatpush.bf16.msra.mxu0 %v5288
        %8237 = vmatpush.bf16.msra.mxu0 %v5280
        %8238 = vmatpush.bf16.msra.mxu0 %v5272
        %8239 = vmatpush.bf16.msra.mxu0 %v5264
        %8240 = vmatpush.bf16.msra.mxu0 %v5256
        %8241 = vmatpush.bf16.msra.mxu0 %v5248
        %8242 = vmatmul.bf16.gmra.mxu0 %v1634
        %v8243 = vpop.f32.mrf.mxu0
        %v8244 = vadd.f32 %v8230, %v8243
        %v8245 = vpop.f32.mrf.mxu0
        %v8246 = vadd.f32 %v8232, %v8245
        %8247 = vdwg.mxu0
        %8248 = vmatpush.bf16.msra.mxu0 %v5368
        %8249 = vmatpush.bf16.msra.mxu0 %v5360
        %8250 = vmatpush.bf16.msra.mxu0 %v5352
        %8251 = vmatpush.bf16.msra.mxu0 %v5344
        %8252 = vmatpush.bf16.msra.mxu0 %v5336
        %8253 = vmatpush.bf16.msra.mxu0 %v5328
        %8254 = vmatpush.bf16.msra.mxu0 %v5320
        %8255 = vmatpush.bf16.msra.mxu0 %v5312
        %8256 = vmatmul.bf16.gmra.mxu0 %v1635
        %v8257 = vpop.f32.mrf.mxu0
        %v8258 = vadd.f32 %v8244, %v8257
        %v8259 = vpop.f32.mrf.mxu0
        %v8260 = vadd.f32 %v8246, %v8259
        %8261 = vdwg.mxu0
        %8262 = vmatpush.bf16.msra.mxu0 %v5432
        %8263 = vmatpush.bf16.msra.mxu0 %v5424
        %8264 = vmatpush.bf16.msra.mxu0 %v5416
        %8265 = vmatpush.bf16.msra.mxu0 %v5408
        %8266 = vmatpush.bf16.msra.mxu0 %v5400
        %8267 = vmatpush.bf16.msra.mxu0 %v5392
        %8268 = vmatpush.bf16.msra.mxu0 %v5384
        %8269 = vmatpush.bf16.msra.mxu0 %v5376
        %8270 = vmatmul.bf16.gmra.mxu0 %v1636
        %v8271 = vpop.f32.mrf.mxu0
        %v8272 = vadd.f32 %v8258, %v8271
        %v8273 = vpop.f32.mrf.mxu0
        %v8274 = vadd.f32 %v8260, %v8273
        %8275 = vdwg.mxu0
        %8276 = vmatpush.bf16.msra.mxu0 %v5496
        %8277 = vmatpush.bf16.msra.mxu0 %v5488
        %8278 = vmatpush.bf16.msra.mxu0 %v5480
        %8279 = vmatpush.bf16.msra.mxu0 %v5472
        %8280 = vmatpush.bf16.msra.mxu0 %v5464
        %8281 = vmatpush.bf16.msra.mxu0 %v5456
        %8282 = vmatpush.bf16.msra.mxu0 %v5448
        %8283 = vmatpush.bf16.msra.mxu0 %v5440
        %8284 = vmatmul.bf16.gmra.mxu0 %v1637
        %v8285 = vpop.f32.mrf.mxu0
        %v8286 = vadd.f32 %v8272, %v8285
        %v8287 = vpop.f32.mrf.mxu0
        %v8288 = vadd.f32 %v8274, %v8287
        %8289 = vdwg.mxu0
        %8290 = vmatpush.bf16.msra.mxu0 %v5560
        %8291 = vmatpush.bf16.msra.mxu0 %v5552
        %8292 = vmatpush.bf16.msra.mxu0 %v5544
        %8293 = vmatpush.bf16.msra.mxu0 %v5536
        %8294 = vmatpush.bf16.msra.mxu0 %v5528
        %8295 = vmatpush.bf16.msra.mxu0 %v5520
        %8296 = vmatpush.bf16.msra.mxu0 %v5512
        %8297 = vmatpush.bf16.msra.mxu0 %v5504
        %8298 = vmatmul.bf16.gmra.mxu0 %v1638
        %v8299 = vpop.f32.mrf.mxu0
        %v8300 = vadd.f32 %v8286, %v8299
        %v8301 = vpop.f32.mrf.mxu0
        %v8302 = vadd.f32 %v8288, %v8301
        %8303 = vdwg.mxu0
        %8304 = vmatpush.bf16.msra.mxu0 %v5624
        %8305 = vmatpush.bf16.msra.mxu0 %v5616
        %8306 = vmatpush.bf16.msra.mxu0 %v5608
        %8307 = vmatpush.bf16.msra.mxu0 %v5600
        %8308 = vmatpush.bf16.msra.mxu0 %v5592
        %8309 = vmatpush.bf16.msra.mxu0 %v5584
        %8310 = vmatpush.bf16.msra.mxu0 %v5576
        %8311 = vmatpush.bf16.msra.mxu0 %v5568
        %8312 = vmatmul.bf16.gmra.mxu0 %v1639
        %v8313 = vpop.f32.mrf.mxu0
        %v8314 = vadd.f32 %v8300, %v8313
        %v8315 = vpop.f32.mrf.mxu0
        %v8316 = vadd.f32 %v8302, %v8315
        %8317 = vdwg.mxu0
        %8318 = vmatpush.bf16.msra.mxu0 %v5688
        %8319 = vmatpush.bf16.msra.mxu0 %v5680
        %8320 = vmatpush.bf16.msra.mxu0 %v5672
        %8321 = vmatpush.bf16.msra.mxu0 %v5664
        %8322 = vmatpush.bf16.msra.mxu0 %v5656
        %8323 = vmatpush.bf16.msra.mxu0 %v5648
        %8324 = vmatpush.bf16.msra.mxu0 %v5640
        %8325 = vmatpush.bf16.msra.mxu0 %v5632
        %8326 = vmatmul.bf16.gmra.mxu0 %v1640
        %v8327 = vpop.f32.mrf.mxu0
        %v8328 = vadd.f32 %v8314, %v8327
        %v8329 = vpop.f32.mrf.mxu0
        %v8330 = vadd.f32 %v8316, %v8329
        %8331 = vdwg.mxu0
        %8332 = vmatpush.bf16.msra.mxu0 %v5752
        %8333 = vmatpush.bf16.msra.mxu0 %v5744
        %8334 = vmatpush.bf16.msra.mxu0 %v5736
        %8335 = vmatpush.bf16.msra.mxu0 %v5728
        %8336 = vmatpush.bf16.msra.mxu0 %v5720
        %8337 = vmatpush.bf16.msra.mxu0 %v5712
        %8338 = vmatpush.bf16.msra.mxu0 %v5704
        %8339 = vmatpush.bf16.msra.mxu0 %v5696
        %8340 = vmatmul.bf16.gmra.mxu0 %v1641
        %v8341 = vpop.f32.mrf.mxu0
        %v8342 = vadd.f32 %v8328, %v8341
        %v8343 = vpop.f32.mrf.mxu0
        %v8344 = vadd.f32 %v8330, %v8343
        %8345 = vdwg.mxu0
        %8346 = vmatpush.bf16.msra.mxu0 %v4793
        %8347 = vmatpush.bf16.msra.mxu0 %v4785
        %8348 = vmatpush.bf16.msra.mxu0 %v4777
        %8349 = vmatpush.bf16.msra.mxu0 %v4769
        %8350 = vmatpush.bf16.msra.mxu0 %v4761
        %8351 = vmatpush.bf16.msra.mxu0 %v4753
        %8352 = vmatpush.bf16.msra.mxu0 %v4745
        %8353 = vmatpush.bf16.msra.mxu0 %v4737
        %8354 = vmatmul.bf16.gmra.mxu0 %v1626
        %v8355 = vpop.f32.mrf.mxu0
        %v8356 = vadd.f32 0.0, %v8355
        %v8357 = vpop.f32.mrf.mxu0
        %v8358 = vadd.f32 0.0, %v8357
        %8359 = vdwg.mxu0
        %8360 = vmatpush.bf16.msra.mxu0 %v4857
        %8361 = vmatpush.bf16.msra.mxu0 %v4849
        %8362 = vmatpush.bf16.msra.mxu0 %v4841
        %8363 = vmatpush.bf16.msra.mxu0 %v4833
        %8364 = vmatpush.bf16.msra.mxu0 %v4825
        %8365 = vmatpush.bf16.msra.mxu0 %v4817
        %8366 = vmatpush.bf16.msra.mxu0 %v4809
        %8367 = vmatpush.bf16.msra.mxu0 %v4801
        %8368 = vmatmul.bf16.gmra.mxu0 %v1627
        %v8369 = vpop.f32.mrf.mxu0
        %v8370 = vadd.f32 %v8356, %v8369
        %v8371 = vpop.f32.mrf.mxu0
        %v8372 = vadd.f32 %v8358, %v8371
        %8373 = vdwg.mxu0
        %8374 = vmatpush.bf16.msra.mxu0 %v4921
        %8375 = vmatpush.bf16.msra.mxu0 %v4913
        %8376 = vmatpush.bf16.msra.mxu0 %v4905
        %8377 = vmatpush.bf16.msra.mxu0 %v4897
        %8378 = vmatpush.bf16.msra.mxu0 %v4889
        %8379 = vmatpush.bf16.msra.mxu0 %v4881
        %8380 = vmatpush.bf16.msra.mxu0 %v4873
        %8381 = vmatpush.bf16.msra.mxu0 %v4865
        %8382 = vmatmul.bf16.gmra.mxu0 %v1628
        %v8383 = vpop.f32.mrf.mxu0
        %v8384 = vadd.f32 %v8370, %v8383
        %v8385 = vpop.f32.mrf.mxu0
        %v8386 = vadd.f32 %v8372, %v8385
        %8387 = vdwg.mxu0
        %8388 = vmatpush.bf16.msra.mxu0 %v4985
        %8389 = vmatpush.bf16.msra.mxu0 %v4977
        %8390 = vmatpush.bf16.msra.mxu0 %v4969
        %8391 = vmatpush.bf16.msra.mxu0 %v4961
        %8392 = vmatpush.bf16.msra.mxu0 %v4953
        %8393 = vmatpush.bf16.msra.mxu0 %v4945
        %8394 = vmatpush.bf16.msra.mxu0 %v4937
        %8395 = vmatpush.bf16.msra.mxu0 %v4929
        %8396 = vmatmul.bf16.gmra.mxu0 %v1629
        %v8397 = vpop.f32.mrf.mxu0
        %v8398 = vadd.f32 %v8384, %v8397
        %v8399 = vpop.f32.mrf.mxu0
        %v8400 = vadd.f32 %v8386, %v8399
        %8401 = vdwg.mxu0
        %8402 = vmatpush.bf16.msra.mxu0 %v5049
        %8403 = vmatpush.bf16.msra.mxu0 %v5041
        %8404 = vmatpush.bf16.msra.mxu0 %v5033
        %8405 = vmatpush.bf16.msra.mxu0 %v5025
        %8406 = vmatpush.bf16.msra.mxu0 %v5017
        %8407 = vmatpush.bf16.msra.mxu0 %v5009
        %8408 = vmatpush.bf16.msra.mxu0 %v5001
        %8409 = vmatpush.bf16.msra.mxu0 %v4993
        %8410 = vmatmul.bf16.gmra.mxu0 %v1630
        %v8411 = vpop.f32.mrf.mxu0
        %v8412 = vadd.f32 %v8398, %v8411
        %v8413 = vpop.f32.mrf.mxu0
        %v8414 = vadd.f32 %v8400, %v8413
        %8415 = vdwg.mxu0
        %8416 = vmatpush.bf16.msra.mxu0 %v5113
        %8417 = vmatpush.bf16.msra.mxu0 %v5105
        %8418 = vmatpush.bf16.msra.mxu0 %v5097
        %8419 = vmatpush.bf16.msra.mxu0 %v5089
        %8420 = vmatpush.bf16.msra.mxu0 %v5081
        %8421 = vmatpush.bf16.msra.mxu0 %v5073
        %8422 = vmatpush.bf16.msra.mxu0 %v5065
        %8423 = vmatpush.bf16.msra.mxu0 %v5057
        %8424 = vmatmul.bf16.gmra.mxu0 %v1631
        %v8425 = vpop.f32.mrf.mxu0
        %v8426 = vadd.f32 %v8412, %v8425
        %v8427 = vpop.f32.mrf.mxu0
        %v8428 = vadd.f32 %v8414, %v8427
        %8429 = vdwg.mxu0
        %8430 = vmatpush.bf16.msra.mxu0 %v5177
        %8431 = vmatpush.bf16.msra.mxu0 %v5169
        %8432 = vmatpush.bf16.msra.mxu0 %v5161
        %8433 = vmatpush.bf16.msra.mxu0 %v5153
        %8434 = vmatpush.bf16.msra.mxu0 %v5145
        %8435 = vmatpush.bf16.msra.mxu0 %v5137
        %8436 = vmatpush.bf16.msra.mxu0 %v5129
        %8437 = vmatpush.bf16.msra.mxu0 %v5121
        %8438 = vmatmul.bf16.gmra.mxu0 %v1632
        %v8439 = vpop.f32.mrf.mxu0
        %v8440 = vadd.f32 %v8426, %v8439
        %v8441 = vpop.f32.mrf.mxu0
        %v8442 = vadd.f32 %v8428, %v8441
        %8443 = vdwg.mxu0
        %8444 = vmatpush.bf16.msra.mxu0 %v5241
        %8445 = vmatpush.bf16.msra.mxu0 %v5233
        %8446 = vmatpush.bf16.msra.mxu0 %v5225
        %8447 = vmatpush.bf16.msra.mxu0 %v5217
        %8448 = vmatpush.bf16.msra.mxu0 %v5209
        %8449 = vmatpush.bf16.msra.mxu0 %v5201
        %8450 = vmatpush.bf16.msra.mxu0 %v5193
        %8451 = vmatpush.bf16.msra.mxu0 %v5185
        %8452 = vmatmul.bf16.gmra.mxu0 %v1633
        %v8453 = vpop.f32.mrf.mxu0
        %v8454 = vadd.f32 %v8440, %v8453
        %v8455 = vpop.f32.mrf.mxu0
        %v8456 = vadd.f32 %v8442, %v8455
        %8457 = vdwg.mxu0
        %8458 = vmatpush.bf16.msra.mxu0 %v5305
        %8459 = vmatpush.bf16.msra.mxu0 %v5297
        %8460 = vmatpush.bf16.msra.mxu0 %v5289
        %8461 = vmatpush.bf16.msra.mxu0 %v5281
        %8462 = vmatpush.bf16.msra.mxu0 %v5273
        %8463 = vmatpush.bf16.msra.mxu0 %v5265
        %8464 = vmatpush.bf16.msra.mxu0 %v5257
        %8465 = vmatpush.bf16.msra.mxu0 %v5249
        %8466 = vmatmul.bf16.gmra.mxu0 %v1634
        %v8467 = vpop.f32.mrf.mxu0
        %v8468 = vadd.f32 %v8454, %v8467
        %v8469 = vpop.f32.mrf.mxu0
        %v8470 = vadd.f32 %v8456, %v8469
        %8471 = vdwg.mxu0
        %8472 = vmatpush.bf16.msra.mxu0 %v5369
        %8473 = vmatpush.bf16.msra.mxu0 %v5361
        %8474 = vmatpush.bf16.msra.mxu0 %v5353
        %8475 = vmatpush.bf16.msra.mxu0 %v5345
        %8476 = vmatpush.bf16.msra.mxu0 %v5337
        %8477 = vmatpush.bf16.msra.mxu0 %v5329
        %8478 = vmatpush.bf16.msra.mxu0 %v5321
        %8479 = vmatpush.bf16.msra.mxu0 %v5313
        %8480 = vmatmul.bf16.gmra.mxu0 %v1635
        %v8481 = vpop.f32.mrf.mxu0
        %v8482 = vadd.f32 %v8468, %v8481
        %v8483 = vpop.f32.mrf.mxu0
        %v8484 = vadd.f32 %v8470, %v8483
        %8485 = vdwg.mxu0
        %8486 = vmatpush.bf16.msra.mxu0 %v5433
        %8487 = vmatpush.bf16.msra.mxu0 %v5425
        %8488 = vmatpush.bf16.msra.mxu0 %v5417
        %8489 = vmatpush.bf16.msra.mxu0 %v5409
        %8490 = vmatpush.bf16.msra.mxu0 %v5401
        %8491 = vmatpush.bf16.msra.mxu0 %v5393
        %8492 = vmatpush.bf16.msra.mxu0 %v5385
        %8493 = vmatpush.bf16.msra.mxu0 %v5377
        %8494 = vmatmul.bf16.gmra.mxu0 %v1636
        %v8495 = vpop.f32.mrf.mxu0
        %v8496 = vadd.f32 %v8482, %v8495
        %v8497 = vpop.f32.mrf.mxu0
        %v8498 = vadd.f32 %v8484, %v8497
        %8499 = vdwg.mxu0
        %8500 = vmatpush.bf16.msra.mxu0 %v5497
        %8501 = vmatpush.bf16.msra.mxu0 %v5489
        %8502 = vmatpush.bf16.msra.mxu0 %v5481
        %8503 = vmatpush.bf16.msra.mxu0 %v5473
        %8504 = vmatpush.bf16.msra.mxu0 %v5465
        %8505 = vmatpush.bf16.msra.mxu0 %v5457
        %8506 = vmatpush.bf16.msra.mxu0 %v5449
        %8507 = vmatpush.bf16.msra.mxu0 %v5441
        %8508 = vmatmul.bf16.gmra.mxu0 %v1637
        %v8509 = vpop.f32.mrf.mxu0
        %v8510 = vadd.f32 %v8496, %v8509
        %v8511 = vpop.f32.mrf.mxu0
        %v8512 = vadd.f32 %v8498, %v8511
        %8513 = vdwg.mxu0
        %8514 = vmatpush.bf16.msra.mxu0 %v5561
        %8515 = vmatpush.bf16.msra.mxu0 %v5553
        %8516 = vmatpush.bf16.msra.mxu0 %v5545
        %8517 = vmatpush.bf16.msra.mxu0 %v5537
        %8518 = vmatpush.bf16.msra.mxu0 %v5529
        %8519 = vmatpush.bf16.msra.mxu0 %v5521
        %8520 = vmatpush.bf16.msra.mxu0 %v5513
        %8521 = vmatpush.bf16.msra.mxu0 %v5505
        %8522 = vmatmul.bf16.gmra.mxu0 %v1638
        %v8523 = vpop.f32.mrf.mxu0
        %v8524 = vadd.f32 %v8510, %v8523
        %v8525 = vpop.f32.mrf.mxu0
        %v8526 = vadd.f32 %v8512, %v8525
        %8527 = vdwg.mxu0
        %8528 = vmatpush.bf16.msra.mxu0 %v5625
        %8529 = vmatpush.bf16.msra.mxu0 %v5617
        %8530 = vmatpush.bf16.msra.mxu0 %v5609
        %8531 = vmatpush.bf16.msra.mxu0 %v5601
        %8532 = vmatpush.bf16.msra.mxu0 %v5593
        %8533 = vmatpush.bf16.msra.mxu0 %v5585
        %8534 = vmatpush.bf16.msra.mxu0 %v5577
        %8535 = vmatpush.bf16.msra.mxu0 %v5569
        %8536 = vmatmul.bf16.gmra.mxu0 %v1639
        %v8537 = vpop.f32.mrf.mxu0
        %v8538 = vadd.f32 %v8524, %v8537
        %v8539 = vpop.f32.mrf.mxu0
        %v8540 = vadd.f32 %v8526, %v8539
        %8541 = vdwg.mxu0
        %8542 = vmatpush.bf16.msra.mxu0 %v5689
        %8543 = vmatpush.bf16.msra.mxu0 %v5681
        %8544 = vmatpush.bf16.msra.mxu0 %v5673
        %8545 = vmatpush.bf16.msra.mxu0 %v5665
        %8546 = vmatpush.bf16.msra.mxu0 %v5657
        %8547 = vmatpush.bf16.msra.mxu0 %v5649
        %8548 = vmatpush.bf16.msra.mxu0 %v5641
        %8549 = vmatpush.bf16.msra.mxu0 %v5633
        %8550 = vmatmul.bf16.gmra.mxu0 %v1640
        %v8551 = vpop.f32.mrf.mxu0
        %v8552 = vadd.f32 %v8538, %v8551
        %v8553 = vpop.f32.mrf.mxu0
        %v8554 = vadd.f32 %v8540, %v8553
        %8555 = vdwg.mxu0
        %8556 = vmatpush.bf16.msra.mxu0 %v5753
        %8557 = vmatpush.bf16.msra.mxu0 %v5745
        %8558 = vmatpush.bf16.msra.mxu0 %v5737
        %8559 = vmatpush.bf16.msra.mxu0 %v5729
        %8560 = vmatpush.bf16.msra.mxu0 %v5721
        %8561 = vmatpush.bf16.msra.mxu0 %v5713
        %8562 = vmatpush.bf16.msra.mxu0 %v5705
        %8563 = vmatpush.bf16.msra.mxu0 %v5697
        %8564 = vmatmul.bf16.gmra.mxu0 %v1641
        %v8565 = vpop.f32.mrf.mxu0
        %v8566 = vadd.f32 %v8552, %v8565
        %v8567 = vpop.f32.mrf.mxu0
        %v8568 = vadd.f32 %v8554, %v8567
        %8569 = vdwg.mxu0
        %v8570 = vadd.f32 %v522, %v6998
        %v8571 = vadd.f32 %v523, %v7222
        %v8572 = vadd.f32 %v524, %v7446
        %v8573 = vadd.f32 %v525, %v7670
        %v8574 = vadd.f32 %v526, %v7894
        %v8575 = vadd.f32 %v527, %v8118
        %v8576 = vadd.f32 %v528, %v8342
        %v8577 = vadd.f32 %v529, %v8566
        %v8578 = vadd.f32 %v530, %v7000
        %v8579 = vadd.f32 %v531, %v7224
        %v8580 = vadd.f32 %v532, %v7448
        %v8581 = vadd.f32 %v533, %v7672
        %v8582 = vadd.f32 %v534, %v7896
        %v8583 = vadd.f32 %v535, %v8120
        %v8584 = vadd.f32 %v536, %v8344
        %v8585 = vadd.f32 %v537, %v8568
        %8586 = vst [vmem:[#allocation2] sm:$0xff] %v8570
        %8587 = vst [vmem:[#allocation2 + $0x8] sm:$0xff] %v8571
        %8588 = vst [vmem:[#allocation2 + $0x10] sm:$0xff] %v8572
        %8589 = vst [vmem:[#allocation2 + $0x18] sm:$0xff] %v8573
        %8590 = vst [vmem:[#allocation2 + $0x20] sm:$0xff] %v8574
        %8591 = vst [vmem:[#allocation2 + $0x28] sm:$0xff] %v8575
        %8592 = vst [vmem:[#allocation2 + $0x30] sm:$0xff] %v8576
        %8593 = vst [vmem:[#allocation2 + $0x38] sm:$0xff] %v8577
        %8594 = vst [vmem:[#allocation2 + $0x40] sm:$0xff] %v8578
        %8595 = vst [vmem:[#allocation2 + $0x48] sm:$0xff] %v8579
        %8596 = vst [vmem:[#allocation2 + $0x50] sm:$0xff] %v8580
        %8597 = vst [vmem:[#allocation2 + $0x58] sm:$0xff] %v8581
        %8598 = vst [vmem:[#allocation2 + $0x60] sm:$0xff] %v8582
        %8599 = vst [vmem:[#allocation2 + $0x68] sm:$0xff] %v8583
        %8600 = vst [vmem:[#allocation2 + $0x70] sm:$0xff] %v8584
        %8601 = vst [vmem:[#allocation2 + $0x78] sm:$0xff] %v8585
        %p8602 = scmp.eq.s32.totalorder %s35, 1
        // Predicated region
        $region93: #{tpu_custom_call.1} parent=55 // pred_check
          %p8603 = pneg %p8602
        $region94: #{tpu_custom_call.1} parent=55 // pred_check_branch
          %8605 = sbr.rel (%p8603) target = $region96
        $region95: #{tpu_custom_call.1} parent=55 // pred_region
          %v8606 = vld [vmem:[#allocation2] sm:$0xff]
          %v8607 = vld [vmem:[#allocation2 + $0x8] sm:$0xff]
          %v8608 = vld [vmem:[#allocation2 + $0x10] sm:$0xff]
          %v8609 = vld [vmem:[#allocation2 + $0x18] sm:$0xff]
          %v8610 = vld [vmem:[#allocation2 + $0x20] sm:$0xff]
          %v8611 = vld [vmem:[#allocation2 + $0x28] sm:$0xff]
          %v8612 = vld [vmem:[#allocation2 + $0x30] sm:$0xff]
          %v8613 = vld [vmem:[#allocation2 + $0x38] sm:$0xff]
          %v8614 = vld [vmem:[#allocation2 + $0x40] sm:$0xff]
          %v8615 = vld [vmem:[#allocation2 + $0x48] sm:$0xff]
          %v8616 = vld [vmem:[#allocation2 + $0x50] sm:$0xff]
          %v8617 = vld [vmem:[#allocation2 + $0x58] sm:$0xff]
          %v8618 = vld [vmem:[#allocation2 + $0x60] sm:$0xff]
          %v8619 = vld [vmem:[#allocation2 + $0x68] sm:$0xff]
          %v8620 = vld [vmem:[#allocation2 + $0x70] sm:$0xff]
          %v8621 = vld [vmem:[#allocation2 + $0x78] sm:$0xff]
          %v8622 = vld [vmem:[#allocation8] sm:$0xff]
          %v8624 = vperm.slane %v8622, 0
          %v8625 = vperm.slane %v8622, 1
          %v8626 = vperm.slane %v8622, 2
          %v8627 = vperm.slane %v8622, 3
          %v8628 = vperm.slane %v8622, 4
          %v8629 = vperm.slane %v8622, 5
          %v8630 = vperm.slane %v8622, 6
          %v8631 = vperm.slane %v8622, 7
          %v8640 = vadd.f32 %v8606, %v8624
          %v8641 = vadd.f32 %v8607, %v8625
          %v8642 = vadd.f32 %v8608, %v8626
          %v8643 = vadd.f32 %v8609, %v8627
          %v8644 = vadd.f32 %v8610, %v8628
          %v8645 = vadd.f32 %v8611, %v8629
          %v8646 = vadd.f32 %v8612, %v8630
          %v8647 = vadd.f32 %v8613, %v8631
          %v8648 = vadd.f32 %v8614, %v8624
          %v8649 = vadd.f32 %v8615, %v8625
          %v8650 = vadd.f32 %v8616, %v8626
          %v8651 = vadd.f32 %v8617, %v8627
          %v8652 = vadd.f32 %v8618, %v8628
          %v8653 = vadd.f32 %v8619, %v8629
          %v8654 = vadd.f32 %v8620, %v8630
          %v8655 = vadd.f32 %v8621, %v8631
          %v8656 = vmax.f32 %v8640, 0.0
          %v8657 = vmax.f32 %v8641, 0.0
          %v8658 = vmax.f32 %v8642, 0.0
          %v8659 = vmax.f32 %v8643, 0.0
          %v8660 = vmax.f32 %v8644, 0.0
          %v8661 = vmax.f32 %v8645, 0.0
          %v8662 = vmax.f32 %v8646, 0.0
          %v8663 = vmax.f32 %v8647, 0.0
          %v8664 = vmax.f32 %v8648, 0.0
          %v8665 = vmax.f32 %v8649, 0.0
          %v8666 = vmax.f32 %v8650, 0.0
          %v8667 = vmax.f32 %v8651, 0.0
          %v8668 = vmax.f32 %v8652, 0.0
          %v8669 = vmax.f32 %v8653, 0.0
          %v8670 = vmax.f32 %v8654, 0.0
          %v8671 = vmax.f32 %v8655, 0.0
          %v8672 = vpack.c.bf16 %v8664, %v8656
          %v8673 = vpack.c.bf16 %v8665, %v8657
          %v8674 = vpack.c.bf16 %v8666, %v8658
          %v8675 = vpack.c.bf16 %v8667, %v8659
          %v8676 = vpack.c.bf16 %v8668, %v8660
          %v8677 = vpack.c.bf16 %v8669, %v8661
          %v8678 = vpack.c.bf16 %v8670, %v8662
          %v8679 = vpack.c.bf16 %v8671, %v8663
          %v8680 = vld [vmem:[#allocation9] sm:$0xff]
          %v8681 = vld [vmem:[#allocation9 + $0x8] sm:$0xff]
          %v8682 = vld [vmem:[#allocation9 + $0x10] sm:$0xff]
          %v8683 = vld [vmem:[#allocation9 + $0x18] sm:$0xff]
          %v8684 = vld [vmem:[#allocation9 + $0x20] sm:$0xff]
          %v8685 = vld [vmem:[#allocation9 + $0x28] sm:$0xff]
          %v8686 = vld [vmem:[#allocation9 + $0x30] sm:$0xff]
          %v8687 = vld [vmem:[#allocation9 + $0x38] sm:$0xff]
          %v8688 = vld [vmem:[#allocation9 + $0x40] sm:$0xff]
          %v8689 = vld [vmem:[#allocation9 + $0x48] sm:$0xff]
          %v8690 = vld [vmem:[#allocation9 + $0x50] sm:$0xff]
          %v8691 = vld [vmem:[#allocation9 + $0x58] sm:$0xff]
          %v8692 = vld [vmem:[#allocation9 + $0x60] sm:$0xff]
          %v8693 = vld [vmem:[#allocation9 + $0x68] sm:$0xff]
          %v8694 = vld [vmem:[#allocation9 + $0x70] sm:$0xff]
          %v8695 = vld [vmem:[#allocation9 + $0x78] sm:$0xff]
          %v8696 = vld [vmem:[#allocation9 + $0x80] sm:$0xff]
          %v8697 = vld [vmem:[#allocation9 + $0x88] sm:$0xff]
          %v8698 = vld [vmem:[#allocation9 + $0x90] sm:$0xff]
          %v8699 = vld [vmem:[#allocation9 + $0x98] sm:$0xff]
          %v8700 = vld [vmem:[#allocation9 + $0xa0] sm:$0xff]
          %v8701 = vld [vmem:[#allocation9 + $0xa8] sm:$0xff]
          %v8702 = vld [vmem:[#allocation9 + $0xb0] sm:$0xff]
          %v8703 = vld [vmem:[#allocation9 + $0xb8] sm:$0xff]
          %v8704 = vld [vmem:[#allocation9 + $0xc0] sm:$0xff]
          %v8705 = vld [vmem:[#allocation9 + $0xc8] sm:$0xff]
          %v8706 = vld [vmem:[#allocation9 + $0xd0] sm:$0xff]
          %v8707 = vld [vmem:[#allocation9 + $0xd8] sm:$0xff]
          %v8708 = vld [vmem:[#allocation9 + $0xe0] sm:$0xff]
          %v8709 = vld [vmem:[#allocation9 + $0xe8] sm:$0xff]
          %v8710 = vld [vmem:[#allocation9 + $0xf0] sm:$0xff]
          %v8711 = vld [vmem:[#allocation9 + $0xf8] sm:$0xff]
          %v8712 = vld [vmem:[#allocation9 + $0x100] sm:$0xff]
          %v8713 = vld [vmem:[#allocation9 + $0x108] sm:$0xff]
          %v8714 = vld [vmem:[#allocation9 + $0x110] sm:$0xff]
          %v8715 = vld [vmem:[#allocation9 + $0x118] sm:$0xff]
          %v8716 = vld [vmem:[#allocation9 + $0x120] sm:$0xff]
          %v8717 = vld [vmem:[#allocation9 + $0x128] sm:$0xff]
          %v8718 = vld [vmem:[#allocation9 + $0x130] sm:$0xff]
          %v8719 = vld [vmem:[#allocation9 + $0x138] sm:$0xff]
          %v8720 = vld [vmem:[#allocation9 + $0x140] sm:$0xff]
          %v8721 = vld [vmem:[#allocation9 + $0x148] sm:$0xff]
          %v8722 = vld [vmem:[#allocation9 + $0x150] sm:$0xff]
          %v8723 = vld [vmem:[#allocation9 + $0x158] sm:$0xff]
          %v8724 = vld [vmem:[#allocation9 + $0x160] sm:$0xff]
          %v8725 = vld [vmem:[#allocation9 + $0x168] sm:$0xff]
          %v8726 = vld [vmem:[#allocation9 + $0x170] sm:$0xff]
          %v8727 = vld [vmem:[#allocation9 + $0x178] sm:$0xff]
          %v8728 = vld [vmem:[#allocation9 + $0x180] sm:$0xff]
          %v8729 = vld [vmem:[#allocation9 + $0x188] sm:$0xff]
          %v8730 = vld [vmem:[#allocation9 + $0x190] sm:$0xff]
          %v8731 = vld [vmem:[#allocation9 + $0x198] sm:$0xff]
          %v8732 = vld [vmem:[#allocation9 + $0x1a0] sm:$0xff]
          %v8733 = vld [vmem:[#allocation9 + $0x1a8] sm:$0xff]
          %v8734 = vld [vmem:[#allocation9 + $0x1b0] sm:$0xff]
          %v8735 = vld [vmem:[#allocation9 + $0x1b8] sm:$0xff]
          %v8736 = vld [vmem:[#allocation9 + $0x1c0] sm:$0xff]
          %v8737 = vld [vmem:[#allocation9 + $0x1c8] sm:$0xff]
          %v8738 = vld [vmem:[#allocation9 + $0x1d0] sm:$0xff]
          %v8739 = vld [vmem:[#allocation9 + $0x1d8] sm:$0xff]
          %v8740 = vld [vmem:[#allocation9 + $0x1e0] sm:$0xff]
          %v8741 = vld [vmem:[#allocation9 + $0x1e8] sm:$0xff]
          %v8742 = vld [vmem:[#allocation9 + $0x1f0] sm:$0xff]
          %v8743 = vld [vmem:[#allocation9 + $0x1f8] sm:$0xff]
          %v8744 = vld [vmem:[#allocation9 + $0x200] sm:$0xff]
          %v8745 = vld [vmem:[#allocation9 + $0x208] sm:$0xff]
          %v8746 = vld [vmem:[#allocation9 + $0x210] sm:$0xff]
          %v8747 = vld [vmem:[#allocation9 + $0x218] sm:$0xff]
          %v8748 = vld [vmem:[#allocation9 + $0x220] sm:$0xff]
          %v8749 = vld [vmem:[#allocation9 + $0x228] sm:$0xff]
          %v8750 = vld [vmem:[#allocation9 + $0x230] sm:$0xff]
          %v8751 = vld [vmem:[#allocation9 + $0x238] sm:$0xff]
          %v8752 = vld [vmem:[#allocation9 + $0x240] sm:$0xff]
          %v8753 = vld [vmem:[#allocation9 + $0x248] sm:$0xff]
          %v8754 = vld [vmem:[#allocation9 + $0x250] sm:$0xff]
          %v8755 = vld [vmem:[#allocation9 + $0x258] sm:$0xff]
          %v8756 = vld [vmem:[#allocation9 + $0x260] sm:$0xff]
          %v8757 = vld [vmem:[#allocation9 + $0x268] sm:$0xff]
          %v8758 = vld [vmem:[#allocation9 + $0x270] sm:$0xff]
          %v8759 = vld [vmem:[#allocation9 + $0x278] sm:$0xff]
          %v8760 = vld [vmem:[#allocation9 + $0x280] sm:$0xff]
          %v8761 = vld [vmem:[#allocation9 + $0x288] sm:$0xff]
          %v8762 = vld [vmem:[#allocation9 + $0x290] sm:$0xff]
          %v8763 = vld [vmem:[#allocation9 + $0x298] sm:$0xff]
          %v8764 = vld [vmem:[#allocation9 + $0x2a0] sm:$0xff]
          %v8765 = vld [vmem:[#allocation9 + $0x2a8] sm:$0xff]
          %v8766 = vld [vmem:[#allocation9 + $0x2b0] sm:$0xff]
          %v8767 = vld [vmem:[#allocation9 + $0x2b8] sm:$0xff]
          %v8768 = vld [vmem:[#allocation9 + $0x2c0] sm:$0xff]
          %v8769 = vld [vmem:[#allocation9 + $0x2c8] sm:$0xff]
          %v8770 = vld [vmem:[#allocation9 + $0x2d0] sm:$0xff]
          %v8771 = vld [vmem:[#allocation9 + $0x2d8] sm:$0xff]
          %v8772 = vld [vmem:[#allocation9 + $0x2e0] sm:$0xff]
          %v8773 = vld [vmem:[#allocation9 + $0x2e8] sm:$0xff]
          %v8774 = vld [vmem:[#allocation9 + $0x2f0] sm:$0xff]
          %v8775 = vld [vmem:[#allocation9 + $0x2f8] sm:$0xff]
          %v8776 = vld [vmem:[#allocation9 + $0x300] sm:$0xff]
          %v8777 = vld [vmem:[#allocation9 + $0x308] sm:$0xff]
          %v8778 = vld [vmem:[#allocation9 + $0x310] sm:$0xff]
          %v8779 = vld [vmem:[#allocation9 + $0x318] sm:$0xff]
          %v8780 = vld [vmem:[#allocation9 + $0x320] sm:$0xff]
          %v8781 = vld [vmem:[#allocation9 + $0x328] sm:$0xff]
          %v8782 = vld [vmem:[#allocation9 + $0x330] sm:$0xff]
          %v8783 = vld [vmem:[#allocation9 + $0x338] sm:$0xff]
          %v8784 = vld [vmem:[#allocation9 + $0x340] sm:$0xff]
          %v8785 = vld [vmem:[#allocation9 + $0x348] sm:$0xff]
          %v8786 = vld [vmem:[#allocation9 + $0x350] sm:$0xff]
          %v8787 = vld [vmem:[#allocation9 + $0x358] sm:$0xff]
          %v8788 = vld [vmem:[#allocation9 + $0x360] sm:$0xff]
          %v8789 = vld [vmem:[#allocation9 + $0x368] sm:$0xff]
          %v8790 = vld [vmem:[#allocation9 + $0x370] sm:$0xff]
          %v8791 = vld [vmem:[#allocation9 + $0x378] sm:$0xff]
          %v8792 = vld [vmem:[#allocation9 + $0x380] sm:$0xff]
          %v8793 = vld [vmem:[#allocation9 + $0x388] sm:$0xff]
          %v8794 = vld [vmem:[#allocation9 + $0x390] sm:$0xff]
          %v8795 = vld [vmem:[#allocation9 + $0x398] sm:$0xff]
          %v8796 = vld [vmem:[#allocation9 + $0x3a0] sm:$0xff]
          %v8797 = vld [vmem:[#allocation9 + $0x3a8] sm:$0xff]
          %v8798 = vld [vmem:[#allocation9 + $0x3b0] sm:$0xff]
          %v8799 = vld [vmem:[#allocation9 + $0x3b8] sm:$0xff]
          %v8800 = vld [vmem:[#allocation9 + $0x3c0] sm:$0xff]
          %v8801 = vld [vmem:[#allocation9 + $0x3c8] sm:$0xff]
          %v8802 = vld [vmem:[#allocation9 + $0x3d0] sm:$0xff]
          %v8803 = vld [vmem:[#allocation9 + $0x3d8] sm:$0xff]
          %v8804 = vld [vmem:[#allocation9 + $0x3e0] sm:$0xff]
          %v8805 = vld [vmem:[#allocation9 + $0x3e8] sm:$0xff]
          %v8806 = vld [vmem:[#allocation9 + $0x3f0] sm:$0xff]
          %v8807 = vld [vmem:[#allocation9 + $0x3f8] sm:$0xff]
          %v8808 = vld [vmem:[#allocation11] sm:$0x3]
          %v8810 = vperm.slane %v8808, 0
          %v8811 = vperm.slane %v8808, 1
          %v8942 = vunpack.c.l.b16 %v8680
          %v8943 = vunpack.c.h.b16 %v8680
          %v8944 = vunpack.c.l.b16 %v8681
          %v8945 = vunpack.c.h.b16 %v8681
          %v8946 = vunpack.c.l.b16 %v8682
          %v8947 = vunpack.c.h.b16 %v8682
          %v8948 = vunpack.c.l.b16 %v8683
          %v8949 = vunpack.c.h.b16 %v8683
          %v8950 = vunpack.c.l.b16 %v8684
          %v8951 = vunpack.c.h.b16 %v8684
          %v8952 = vunpack.c.l.b16 %v8685
          %v8953 = vunpack.c.h.b16 %v8685
          %v8954 = vunpack.c.l.b16 %v8686
          %v8955 = vunpack.c.h.b16 %v8686
          %v8956 = vunpack.c.l.b16 %v8687
          %v8957 = vunpack.c.h.b16 %v8687
          %v8958 = vunpack.c.l.b16 %v8688
          %v8959 = vunpack.c.h.b16 %v8688
          %v8960 = vunpack.c.l.b16 %v8689
          %v8961 = vunpack.c.h.b16 %v8689
          %v8962 = vunpack.c.l.b16 %v8690
          %v8963 = vunpack.c.h.b16 %v8690
          %v8964 = vunpack.c.l.b16 %v8691
          %v8965 = vunpack.c.h.b16 %v8691
          %v8966 = vunpack.c.l.b16 %v8692
          %v8967 = vunpack.c.h.b16 %v8692
          %v8968 = vunpack.c.l.b16 %v8693
          %v8969 = vunpack.c.h.b16 %v8693
          %v8970 = vunpack.c.l.b16 %v8694
          %v8971 = vunpack.c.h.b16 %v8694
          %v8972 = vunpack.c.l.b16 %v8695
          %v8973 = vunpack.c.h.b16 %v8695
          %v8974 = vunpack.c.l.b16 %v8696
          %v8975 = vunpack.c.h.b16 %v8696
          %v8976 = vunpack.c.l.b16 %v8697
          %v8977 = vunpack.c.h.b16 %v8697
          %v8978 = vunpack.c.l.b16 %v8698
          %v8979 = vunpack.c.h.b16 %v8698
          %v8980 = vunpack.c.l.b16 %v8699
          %v8981 = vunpack.c.h.b16 %v8699
          %v8982 = vunpack.c.l.b16 %v8700
          %v8983 = vunpack.c.h.b16 %v8700
          %v8984 = vunpack.c.l.b16 %v8701
          %v8985 = vunpack.c.h.b16 %v8701
          %v8986 = vunpack.c.l.b16 %v8702
          %v8987 = vunpack.c.h.b16 %v8702
          %v8988 = vunpack.c.l.b16 %v8703
          %v8989 = vunpack.c.h.b16 %v8703
          %v8990 = vunpack.c.l.b16 %v8704
          %v8991 = vunpack.c.h.b16 %v8704
          %v8992 = vunpack.c.l.b16 %v8705
          %v8993 = vunpack.c.h.b16 %v8705
          %v8994 = vunpack.c.l.b16 %v8706
          %v8995 = vunpack.c.h.b16 %v8706
          %v8996 = vunpack.c.l.b16 %v8707
          %v8997 = vunpack.c.h.b16 %v8707
          %v8998 = vunpack.c.l.b16 %v8708
          %v8999 = vunpack.c.h.b16 %v8708
          %v9000 = vunpack.c.l.b16 %v8709
          %v9001 = vunpack.c.h.b16 %v8709
          %v9002 = vunpack.c.l.b16 %v8710
          %v9003 = vunpack.c.h.b16 %v8710
          %v9004 = vunpack.c.l.b16 %v8711
          %v9005 = vunpack.c.h.b16 %v8711
          %v9006 = vunpack.c.l.b16 %v8712
          %v9007 = vunpack.c.h.b16 %v8712
          %v9008 = vunpack.c.l.b16 %v8713
          %v9009 = vunpack.c.h.b16 %v8713
          %v9010 = vunpack.c.l.b16 %v8714
          %v9011 = vunpack.c.h.b16 %v8714
          %v9012 = vunpack.c.l.b16 %v8715
          %v9013 = vunpack.c.h.b16 %v8715
          %v9014 = vunpack.c.l.b16 %v8716
          %v9015 = vunpack.c.h.b16 %v8716
          %v9016 = vunpack.c.l.b16 %v8717
          %v9017 = vunpack.c.h.b16 %v8717
          %v9018 = vunpack.c.l.b16 %v8718
          %v9019 = vunpack.c.h.b16 %v8718
          %v9020 = vunpack.c.l.b16 %v8719
          %v9021 = vunpack.c.h.b16 %v8719
          %v9022 = vunpack.c.l.b16 %v8720
          %v9023 = vunpack.c.h.b16 %v8720
          %v9024 = vunpack.c.l.b16 %v8721
          %v9025 = vunpack.c.h.b16 %v8721
          %v9026 = vunpack.c.l.b16 %v8722
          %v9027 = vunpack.c.h.b16 %v8722
          %v9028 = vunpack.c.l.b16 %v8723
          %v9029 = vunpack.c.h.b16 %v8723
          %v9030 = vunpack.c.l.b16 %v8724
          %v9031 = vunpack.c.h.b16 %v8724
          %v9032 = vunpack.c.l.b16 %v8725
          %v9033 = vunpack.c.h.b16 %v8725
          %v9034 = vunpack.c.l.b16 %v8726
          %v9035 = vunpack.c.h.b16 %v8726
          %v9036 = vunpack.c.l.b16 %v8727
          %v9037 = vunpack.c.h.b16 %v8727
          %v9038 = vunpack.c.l.b16 %v8728
          %v9039 = vunpack.c.h.b16 %v8728
          %v9040 = vunpack.c.l.b16 %v8729
          %v9041 = vunpack.c.h.b16 %v8729
          %v9042 = vunpack.c.l.b16 %v8730
          %v9043 = vunpack.c.h.b16 %v8730
          %v9044 = vunpack.c.l.b16 %v8731
          %v9045 = vunpack.c.h.b16 %v8731
          %v9046 = vunpack.c.l.b16 %v8732
          %v9047 = vunpack.c.h.b16 %v8732
          %v9048 = vunpack.c.l.b16 %v8733
          %v9049 = vunpack.c.h.b16 %v8733
          %v9050 = vunpack.c.l.b16 %v8734
          %v9051 = vunpack.c.h.b16 %v8734
          %v9052 = vunpack.c.l.b16 %v8735
          %v9053 = vunpack.c.h.b16 %v8735
          %v9054 = vunpack.c.l.b16 %v8736
          %v9055 = vunpack.c.h.b16 %v8736
          %v9056 = vunpack.c.l.b16 %v8737
          %v9057 = vunpack.c.h.b16 %v8737
          %v9058 = vunpack.c.l.b16 %v8738
          %v9059 = vunpack.c.h.b16 %v8738
          %v9060 = vunpack.c.l.b16 %v8739
          %v9061 = vunpack.c.h.b16 %v8739
          %v9062 = vunpack.c.l.b16 %v8740
          %v9063 = vunpack.c.h.b16 %v8740
          %v9064 = vunpack.c.l.b16 %v8741
          %v9065 = vunpack.c.h.b16 %v8741
          %v9066 = vunpack.c.l.b16 %v8742
          %v9067 = vunpack.c.h.b16 %v8742
          %v9068 = vunpack.c.l.b16 %v8743
          %v9069 = vunpack.c.h.b16 %v8743
          %v9070 = vunpack.c.l.b16 %v8744
          %v9071 = vunpack.c.h.b16 %v8744
          %v9072 = vunpack.c.l.b16 %v8745
          %v9073 = vunpack.c.h.b16 %v8745
          %v9074 = vunpack.c.l.b16 %v8746
          %v9075 = vunpack.c.h.b16 %v8746
          %v9076 = vunpack.c.l.b16 %v8747
          %v9077 = vunpack.c.h.b16 %v8747
          %v9078 = vunpack.c.l.b16 %v8748
          %v9079 = vunpack.c.h.b16 %v8748
          %v9080 = vunpack.c.l.b16 %v8749
          %v9081 = vunpack.c.h.b16 %v8749
          %v9082 = vunpack.c.l.b16 %v8750
          %v9083 = vunpack.c.h.b16 %v8750
          %v9084 = vunpack.c.l.b16 %v8751
          %v9085 = vunpack.c.h.b16 %v8751
          %v9086 = vunpack.c.l.b16 %v8752
          %v9087 = vunpack.c.h.b16 %v8752
          %v9088 = vunpack.c.l.b16 %v8753
          %v9089 = vunpack.c.h.b16 %v8753
          %v9090 = vunpack.c.l.b16 %v8754
          %v9091 = vunpack.c.h.b16 %v8754
          %v9092 = vunpack.c.l.b16 %v8755
          %v9093 = vunpack.c.h.b16 %v8755
          %v9094 = vunpack.c.l.b16 %v8756
          %v9095 = vunpack.c.h.b16 %v8756
          %v9096 = vunpack.c.l.b16 %v8757
          %v9097 = vunpack.c.h.b16 %v8757
          %v9098 = vunpack.c.l.b16 %v8758
          %v9099 = vunpack.c.h.b16 %v8758
          %v9100 = vunpack.c.l.b16 %v8759
          %v9101 = vunpack.c.h.b16 %v8759
          %v9102 = vunpack.c.l.b16 %v8760
          %v9103 = vunpack.c.h.b16 %v8760
          %v9104 = vunpack.c.l.b16 %v8761
          %v9105 = vunpack.c.h.b16 %v8761
          %v9106 = vunpack.c.l.b16 %v8762
          %v9107 = vunpack.c.h.b16 %v8762
          %v9108 = vunpack.c.l.b16 %v8763
          %v9109 = vunpack.c.h.b16 %v8763
          %v9110 = vunpack.c.l.b16 %v8764
          %v9111 = vunpack.c.h.b16 %v8764
          %v9112 = vunpack.c.l.b16 %v8765
          %v9113 = vunpack.c.h.b16 %v8765
          %v9114 = vunpack.c.l.b16 %v8766
          %v9115 = vunpack.c.h.b16 %v8766
          %v9116 = vunpack.c.l.b16 %v8767
          %v9117 = vunpack.c.h.b16 %v8767
          %v9118 = vunpack.c.l.b16 %v8768
          %v9119 = vunpack.c.h.b16 %v8768
          %v9120 = vunpack.c.l.b16 %v8769
          %v9121 = vunpack.c.h.b16 %v8769
          %v9122 = vunpack.c.l.b16 %v8770
          %v9123 = vunpack.c.h.b16 %v8770
          %v9124 = vunpack.c.l.b16 %v8771
          %v9125 = vunpack.c.h.b16 %v8771
          %v9126 = vunpack.c.l.b16 %v8772
          %v9127 = vunpack.c.h.b16 %v8772
          %v9128 = vunpack.c.l.b16 %v8773
          %v9129 = vunpack.c.h.b16 %v8773
          %v9130 = vunpack.c.l.b16 %v8774
          %v9131 = vunpack.c.h.b16 %v8774
          %v9132 = vunpack.c.l.b16 %v8775
          %v9133 = vunpack.c.h.b16 %v8775
          %v9134 = vunpack.c.l.b16 %v8776
          %v9135 = vunpack.c.h.b16 %v8776
          %v9136 = vunpack.c.l.b16 %v8777
          %v9137 = vunpack.c.h.b16 %v8777
          %v9138 = vunpack.c.l.b16 %v8778
          %v9139 = vunpack.c.h.b16 %v8778
          %v9140 = vunpack.c.l.b16 %v8779
          %v9141 = vunpack.c.h.b16 %v8779
          %v9142 = vunpack.c.l.b16 %v8780
          %v9143 = vunpack.c.h.b16 %v8780
          %v9144 = vunpack.c.l.b16 %v8781
          %v9145 = vunpack.c.h.b16 %v8781
          %v9146 = vunpack.c.l.b16 %v8782
          %v9147 = vunpack.c.h.b16 %v8782
          %v9148 = vunpack.c.l.b16 %v8783
          %v9149 = vunpack.c.h.b16 %v8783
          %v9150 = vunpack.c.l.b16 %v8784
          %v9151 = vunpack.c.h.b16 %v8784
          %v9152 = vunpack.c.l.b16 %v8785
          %v9153 = vunpack.c.h.b16 %v8785
          %v9154 = vunpack.c.l.b16 %v8786
          %v9155 = vunpack.c.h.b16 %v8786
          %v9156 = vunpack.c.l.b16 %v8787
          %v9157 = vunpack.c.h.b16 %v8787
          %v9158 = vunpack.c.l.b16 %v8788
          %v9159 = vunpack.c.h.b16 %v8788
          %v9160 = vunpack.c.l.b16 %v8789
          %v9161 = vunpack.c.h.b16 %v8789
          %v9162 = vunpack.c.l.b16 %v8790
          %v9163 = vunpack.c.h.b16 %v8790
          %v9164 = vunpack.c.l.b16 %v8791
          %v9165 = vunpack.c.h.b16 %v8791
          %v9166 = vunpack.c.l.b16 %v8792
          %v9167 = vunpack.c.h.b16 %v8792
          %v9168 = vunpack.c.l.b16 %v8793
          %v9169 = vunpack.c.h.b16 %v8793
          %v9170 = vunpack.c.l.b16 %v8794
          %v9171 = vunpack.c.h.b16 %v8794
          %v9172 = vunpack.c.l.b16 %v8795
          %v9173 = vunpack.c.h.b16 %v8795
          %v9174 = vunpack.c.l.b16 %v8796
          %v9175 = vunpack.c.h.b16 %v8796
          %v9176 = vunpack.c.l.b16 %v8797
          %v9177 = vunpack.c.h.b16 %v8797
          %v9178 = vunpack.c.l.b16 %v8798
          %v9179 = vunpack.c.h.b16 %v8798
          %v9180 = vunpack.c.l.b16 %v8799
          %v9181 = vunpack.c.h.b16 %v8799
          %v9182 = vunpack.c.l.b16 %v8800
          %v9183 = vunpack.c.h.b16 %v8800
          %v9184 = vunpack.c.l.b16 %v8801
          %v9185 = vunpack.c.h.b16 %v8801
          %v9186 = vunpack.c.l.b16 %v8802
          %v9187 = vunpack.c.h.b16 %v8802
          %v9188 = vunpack.c.l.b16 %v8803
          %v9189 = vunpack.c.h.b16 %v8803
          %v9190 = vunpack.c.l.b16 %v8804
          %v9191 = vunpack.c.h.b16 %v8804
          %v9192 = vunpack.c.l.b16 %v8805
          %v9193 = vunpack.c.h.b16 %v8805
          %v9194 = vunpack.c.l.b16 %v8806
          %v9195 = vunpack.c.h.b16 %v8806
          %v9196 = vunpack.c.l.b16 %v8807
          %v9197 = vunpack.c.h.b16 %v8807
          %v9198 = vpack.c.b16 %v8944, %v8942
          %v9199 = vpack.c.b16 %v8945, %v8943
          %v9200 = vpack.c.b16 %v8948, %v8946
          %v9201 = vpack.c.b16 %v8949, %v8947
          %v9202 = vpack.c.b16 %v8952, %v8950
          %v9203 = vpack.c.b16 %v8953, %v8951
          %v9204 = vpack.c.b16 %v8956, %v8954
          %v9205 = vpack.c.b16 %v8957, %v8955
          %v9206 = vpack.c.b16 %v8960, %v8958
          %v9207 = vpack.c.b16 %v8961, %v8959
          %v9208 = vpack.c.b16 %v8964, %v8962
          %v9209 = vpack.c.b16 %v8965, %v8963
          %v9210 = vpack.c.b16 %v8968, %v8966
          %v9211 = vpack.c.b16 %v8969, %v8967
          %v9212 = vpack.c.b16 %v8972, %v8970
          %v9213 = vpack.c.b16 %v8973, %v8971
          %v9214 = vpack.c.b16 %v8976, %v8974
          %v9215 = vpack.c.b16 %v8977, %v8975
          %v9216 = vpack.c.b16 %v8980, %v8978
          %v9217 = vpack.c.b16 %v8981, %v8979
          %v9218 = vpack.c.b16 %v8984, %v8982
          %v9219 = vpack.c.b16 %v8985, %v8983
          %v9220 = vpack.c.b16 %v8988, %v8986
          %v9221 = vpack.c.b16 %v8989, %v8987
          %v9222 = vpack.c.b16 %v8992, %v8990
          %v9223 = vpack.c.b16 %v8993, %v8991
          %v9224 = vpack.c.b16 %v8996, %v8994
          %v9225 = vpack.c.b16 %v8997, %v8995
          %v9226 = vpack.c.b16 %v9000, %v8998
          %v9227 = vpack.c.b16 %v9001, %v8999
          %v9228 = vpack.c.b16 %v9004, %v9002
          %v9229 = vpack.c.b16 %v9005, %v9003
          %v9230 = vpack.c.b16 %v9008, %v9006
          %v9231 = vpack.c.b16 %v9009, %v9007
          %v9232 = vpack.c.b16 %v9012, %v9010
          %v9233 = vpack.c.b16 %v9013, %v9011
          %v9234 = vpack.c.b16 %v9016, %v9014
          %v9235 = vpack.c.b16 %v9017, %v9015
          %v9236 = vpack.c.b16 %v9020, %v9018
          %v9237 = vpack.c.b16 %v9021, %v9019
          %v9238 = vpack.c.b16 %v9024, %v9022
          %v9239 = vpack.c.b16 %v9025, %v9023
          %v9240 = vpack.c.b16 %v9028, %v9026
          %v9241 = vpack.c.b16 %v9029, %v9027
          %v9242 = vpack.c.b16 %v9032, %v9030
          %v9243 = vpack.c.b16 %v9033, %v9031
          %v9244 = vpack.c.b16 %v9036, %v9034
          %v9245 = vpack.c.b16 %v9037, %v9035
          %v9246 = vpack.c.b16 %v9040, %v9038
          %v9247 = vpack.c.b16 %v9041, %v9039
          %v9248 = vpack.c.b16 %v9044, %v9042
          %v9249 = vpack.c.b16 %v9045, %v9043
          %v9250 = vpack.c.b16 %v9048, %v9046
          %v9251 = vpack.c.b16 %v9049, %v9047
          %v9252 = vpack.c.b16 %v9052, %v9050
          %v9253 = vpack.c.b16 %v9053, %v9051
          %v9254 = vpack.c.b16 %v9056, %v9054
          %v9255 = vpack.c.b16 %v9057, %v9055
          %v9256 = vpack.c.b16 %v9060, %v9058
          %v9257 = vpack.c.b16 %v9061, %v9059
          %v9258 = vpack.c.b16 %v9064, %v9062
          %v9259 = vpack.c.b16 %v9065, %v9063
          %v9260 = vpack.c.b16 %v9068, %v9066
          %v9261 = vpack.c.b16 %v9069, %v9067
          %v9262 = vpack.c.b16 %v9072, %v9070
          %v9263 = vpack.c.b16 %v9073, %v9071
          %v9264 = vpack.c.b16 %v9076, %v9074
          %v9265 = vpack.c.b16 %v9077, %v9075
          %v9266 = vpack.c.b16 %v9080, %v9078
          %v9267 = vpack.c.b16 %v9081, %v9079
          %v9268 = vpack.c.b16 %v9084, %v9082
          %v9269 = vpack.c.b16 %v9085, %v9083
          %v9270 = vpack.c.b16 %v9088, %v9086
          %v9271 = vpack.c.b16 %v9089, %v9087
          %v9272 = vpack.c.b16 %v9092, %v9090
          %v9273 = vpack.c.b16 %v9093, %v9091
          %v9274 = vpack.c.b16 %v9096, %v9094
          %v9275 = vpack.c.b16 %v9097, %v9095
          %v9276 = vpack.c.b16 %v9100, %v9098
          %v9277 = vpack.c.b16 %v9101, %v9099
          %v9278 = vpack.c.b16 %v9104, %v9102
          %v9279 = vpack.c.b16 %v9105, %v9103
          %v9280 = vpack.c.b16 %v9108, %v9106
          %v9281 = vpack.c.b16 %v9109, %v9107
          %v9282 = vpack.c.b16 %v9112, %v9110
          %v9283 = vpack.c.b16 %v9113, %v9111
          %v9284 = vpack.c.b16 %v9116, %v9114
          %v9285 = vpack.c.b16 %v9117, %v9115
          %v9286 = vpack.c.b16 %v9120, %v9118
          %v9287 = vpack.c.b16 %v9121, %v9119
          %v9288 = vpack.c.b16 %v9124, %v9122
          %v9289 = vpack.c.b16 %v9125, %v9123
          %v9290 = vpack.c.b16 %v9128, %v9126
          %v9291 = vpack.c.b16 %v9129, %v9127
          %v9292 = vpack.c.b16 %v9132, %v9130
          %v9293 = vpack.c.b16 %v9133, %v9131
          %v9294 = vpack.c.b16 %v9136, %v9134
          %v9295 = vpack.c.b16 %v9137, %v9135
          %v9296 = vpack.c.b16 %v9140, %v9138
          %v9297 = vpack.c.b16 %v9141, %v9139
          %v9298 = vpack.c.b16 %v9144, %v9142
          %v9299 = vpack.c.b16 %v9145, %v9143
          %v9300 = vpack.c.b16 %v9148, %v9146
          %v9301 = vpack.c.b16 %v9149, %v9147
          %v9302 = vpack.c.b16 %v9152, %v9150
          %v9303 = vpack.c.b16 %v9153, %v9151
          %v9304 = vpack.c.b16 %v9156, %v9154
          %v9305 = vpack.c.b16 %v9157, %v9155
          %v9306 = vpack.c.b16 %v9160, %v9158
          %v9307 = vpack.c.b16 %v9161, %v9159
          %v9308 = vpack.c.b16 %v9164, %v9162
          %v9309 = vpack.c.b16 %v9165, %v9163
          %v9310 = vpack.c.b16 %v9168, %v9166
          %v9311 = vpack.c.b16 %v9169, %v9167
          %v9312 = vpack.c.b16 %v9172, %v9170
          %v9313 = vpack.c.b16 %v9173, %v9171
          %v9314 = vpack.c.b16 %v9176, %v9174
          %v9315 = vpack.c.b16 %v9177, %v9175
          %v9316 = vpack.c.b16 %v9180, %v9178
          %v9317 = vpack.c.b16 %v9181, %v9179
          %v9318 = vpack.c.b16 %v9184, %v9182
          %v9319 = vpack.c.b16 %v9185, %v9183
          %v9320 = vpack.c.b16 %v9188, %v9186
          %v9321 = vpack.c.b16 %v9189, %v9187
          %v9322 = vpack.c.b16 %v9192, %v9190
          %v9323 = vpack.c.b16 %v9193, %v9191
          %v9324 = vpack.c.b16 %v9196, %v9194
          %v9325 = vpack.c.b16 %v9197, %v9195
          %9454 = vmatpush.bf16.msra.mxu0 %v9212
          %9455 = vmatpush.bf16.msra.mxu0 %v9210
          %9456 = vmatpush.bf16.msra.mxu0 %v9208
          %9457 = vmatpush.bf16.msra.mxu0 %v9206
          %9458 = vmatpush.bf16.msra.mxu0 %v9204
          %9459 = vmatpush.bf16.msra.mxu0 %v9202
          %9460 = vmatpush.bf16.msra.mxu0 %v9200
          %9461 = vmatpush.bf16.msra.mxu0 %v9198
          %9462 = vmatmul.bf16.gmra.mxu0 %v8672
          %v9463 = vpop.f32.mrf.mxu0
          %v9464 = vadd.f32 %v8810, %v9463
          %v9465 = vpop.f32.mrf.mxu0
          %v9466 = vadd.f32 %v8810, %v9465
          %9467 = vdwg.mxu0
          %9468 = vmatpush.bf16.msra.mxu0 %v9228
          %9469 = vmatpush.bf16.msra.mxu0 %v9226
          %9470 = vmatpush.bf16.msra.mxu0 %v9224
          %9471 = vmatpush.bf16.msra.mxu0 %v9222
          %9472 = vmatpush.bf16.msra.mxu0 %v9220
          %9473 = vmatpush.bf16.msra.mxu0 %v9218
          %9474 = vmatpush.bf16.msra.mxu0 %v9216
          %9475 = vmatpush.bf16.msra.mxu0 %v9214
          %9476 = vmatmul.bf16.gmra.mxu0 %v8673
          %v9477 = vpop.f32.mrf.mxu0
          %v9478 = vadd.f32 %v9464, %v9477
          %v9479 = vpop.f32.mrf.mxu0
          %v9480 = vadd.f32 %v9466, %v9479
          %9481 = vdwg.mxu0
          %9482 = vmatpush.bf16.msra.mxu0 %v9244
          %9483 = vmatpush.bf16.msra.mxu0 %v9242
          %9484 = vmatpush.bf16.msra.mxu0 %v9240
          %9485 = vmatpush.bf16.msra.mxu0 %v9238
          %9486 = vmatpush.bf16.msra.mxu0 %v9236
          %9487 = vmatpush.bf16.msra.mxu0 %v9234
          %9488 = vmatpush.bf16.msra.mxu0 %v9232
          %9489 = vmatpush.bf16.msra.mxu0 %v9230
          %9490 = vmatmul.bf16.gmra.mxu0 %v8674
          %v9491 = vpop.f32.mrf.mxu0
          %v9492 = vadd.f32 %v9478, %v9491
          %v9493 = vpop.f32.mrf.mxu0
          %v9494 = vadd.f32 %v9480, %v9493
          %9495 = vdwg.mxu0
          %9496 = vmatpush.bf16.msra.mxu0 %v9260
          %9497 = vmatpush.bf16.msra.mxu0 %v9258
          %9498 = vmatpush.bf16.msra.mxu0 %v9256
          %9499 = vmatpush.bf16.msra.mxu0 %v9254
          %9500 = vmatpush.bf16.msra.mxu0 %v9252
          %9501 = vmatpush.bf16.msra.mxu0 %v9250
          %9502 = vmatpush.bf16.msra.mxu0 %v9248
          %9503 = vmatpush.bf16.msra.mxu0 %v9246
          %9504 = vmatmul.bf16.gmra.mxu0 %v8675
          %v9505 = vpop.f32.mrf.mxu0
          %v9506 = vadd.f32 %v9492, %v9505
          %v9507 = vpop.f32.mrf.mxu0
          %v9508 = vadd.f32 %v9494, %v9507
          %9509 = vdwg.mxu0
          %9510 = vmatpush.bf16.msra.mxu0 %v9276
          %9511 = vmatpush.bf16.msra.mxu0 %v9274
          %9512 = vmatpush.bf16.msra.mxu0 %v9272
          %9513 = vmatpush.bf16.msra.mxu0 %v9270
          %9514 = vmatpush.bf16.msra.mxu0 %v9268
          %9515 = vmatpush.bf16.msra.mxu0 %v9266
          %9516 = vmatpush.bf16.msra.mxu0 %v9264
          %9517 = vmatpush.bf16.msra.mxu0 %v9262
          %9518 = vmatmul.bf16.gmra.mxu0 %v8676
          %v9519 = vpop.f32.mrf.mxu0
          %v9520 = vadd.f32 %v9506, %v9519
          %v9521 = vpop.f32.mrf.mxu0
          %v9522 = vadd.f32 %v9508, %v9521
          %9523 = vdwg.mxu0
          %9524 = vmatpush.bf16.msra.mxu0 %v9292
          %9525 = vmatpush.bf16.msra.mxu0 %v9290
          %9526 = vmatpush.bf16.msra.mxu0 %v9288
          %9527 = vmatpush.bf16.msra.mxu0 %v9286
          %9528 = vmatpush.bf16.msra.mxu0 %v9284
          %9529 = vmatpush.bf16.msra.mxu0 %v9282
          %9530 = vmatpush.bf16.msra.mxu0 %v9280
          %9531 = vmatpush.bf16.msra.mxu0 %v9278
          %9532 = vmatmul.bf16.gmra.mxu0 %v8677
          %v9533 = vpop.f32.mrf.mxu0
          %v9534 = vadd.f32 %v9520, %v9533
          %v9535 = vpop.f32.mrf.mxu0
          %v9536 = vadd.f32 %v9522, %v9535
          %9537 = vdwg.mxu0
          %9538 = vmatpush.bf16.msra.mxu0 %v9308
          %9539 = vmatpush.bf16.msra.mxu0 %v9306
          %9540 = vmatpush.bf16.msra.mxu0 %v9304
          %9541 = vmatpush.bf16.msra.mxu0 %v9302
          %9542 = vmatpush.bf16.msra.mxu0 %v9300
          %9543 = vmatpush.bf16.msra.mxu0 %v9298
          %9544 = vmatpush.bf16.msra.mxu0 %v9296
          %9545 = vmatpush.bf16.msra.mxu0 %v9294
          %9546 = vmatmul.bf16.gmra.mxu0 %v8678
          %v9547 = vpop.f32.mrf.mxu0
          %v9548 = vadd.f32 %v9534, %v9547
          %v9549 = vpop.f32.mrf.mxu0
          %v9550 = vadd.f32 %v9536, %v9549
          %9551 = vdwg.mxu0
          %9552 = vmatpush.bf16.msra.mxu0 %v9324
          %9553 = vmatpush.bf16.msra.mxu0 %v9322
          %9554 = vmatpush.bf16.msra.mxu0 %v9320
          %9555 = vmatpush.bf16.msra.mxu0 %v9318
          %9556 = vmatpush.bf16.msra.mxu0 %v9316
          %9557 = vmatpush.bf16.msra.mxu0 %v9314
          %9558 = vmatpush.bf16.msra.mxu0 %v9312
          %9559 = vmatpush.bf16.msra.mxu0 %v9310
          %9560 = vmatmul.bf16.gmra.mxu0 %v8679
          %v9561 = vpop.f32.mrf.mxu0
          %v9562 = vadd.f32 %v9548, %v9561
          %v9563 = vpop.f32.mrf.mxu0
          %v9564 = vadd.f32 %v9550, %v9563
          %9565 = vdwg.mxu0
          %9566 = vmatpush.bf16.msra.mxu0 %v9213
          %9567 = vmatpush.bf16.msra.mxu0 %v9211
          %9568 = vmatpush.bf16.msra.mxu0 %v9209
          %9569 = vmatpush.bf16.msra.mxu0 %v9207
          %9570 = vmatpush.bf16.msra.mxu0 %v9205
          %9571 = vmatpush.bf16.msra.mxu0 %v9203
          %9572 = vmatpush.bf16.msra.mxu0 %v9201
          %9573 = vmatpush.bf16.msra.mxu0 %v9199
          %9574 = vmatmul.bf16.gmra.mxu0 %v8672
          %v9575 = vpop.f32.mrf.mxu0
          %v9576 = vadd.f32 %v8811, %v9575
          %v9577 = vpop.f32.mrf.mxu0
          %v9578 = vadd.f32 %v8811, %v9577
          %9579 = vdwg.mxu0
          %9580 = vmatpush.bf16.msra.mxu0 %v9229
          %9581 = vmatpush.bf16.msra.mxu0 %v9227
          %9582 = vmatpush.bf16.msra.mxu0 %v9225
          %9583 = vmatpush.bf16.msra.mxu0 %v9223
          %9584 = vmatpush.bf16.msra.mxu0 %v9221
          %9585 = vmatpush.bf16.msra.mxu0 %v9219
          %9586 = vmatpush.bf16.msra.mxu0 %v9217
          %9587 = vmatpush.bf16.msra.mxu0 %v9215
          %9588 = vmatmul.bf16.gmra.mxu0 %v8673
          %v9589 = vpop.f32.mrf.mxu0
          %v9590 = vadd.f32 %v9576, %v9589
          %v9591 = vpop.f32.mrf.mxu0
          %v9592 = vadd.f32 %v9578, %v9591
          %9593 = vdwg.mxu0
          %9594 = vmatpush.bf16.msra.mxu0 %v9245
          %9595 = vmatpush.bf16.msra.mxu0 %v9243
          %9596 = vmatpush.bf16.msra.mxu0 %v9241
          %9597 = vmatpush.bf16.msra.mxu0 %v9239
          %9598 = vmatpush.bf16.msra.mxu0 %v9237
          %9599 = vmatpush.bf16.msra.mxu0 %v9235
          %9600 = vmatpush.bf16.msra.mxu0 %v9233
          %9601 = vmatpush.bf16.msra.mxu0 %v9231
          %9602 = vmatmul.bf16.gmra.mxu0 %v8674
          %v9603 = vpop.f32.mrf.mxu0
          %v9604 = vadd.f32 %v9590, %v9603
          %v9605 = vpop.f32.mrf.mxu0
          %v9606 = vadd.f32 %v9592, %v9605
          %9607 = vdwg.mxu0
          %9608 = vmatpush.bf16.msra.mxu0 %v9261
          %9609 = vmatpush.bf16.msra.mxu0 %v9259
          %9610 = vmatpush.bf16.msra.mxu0 %v9257
          %9611 = vmatpush.bf16.msra.mxu0 %v9255
          %9612 = vmatpush.bf16.msra.mxu0 %v9253
          %9613 = vmatpush.bf16.msra.mxu0 %v9251
          %9614 = vmatpush.bf16.msra.mxu0 %v9249
          %9615 = vmatpush.bf16.msra.mxu0 %v9247
          %9616 = vmatmul.bf16.gmra.mxu0 %v8675
          %v9617 = vpop.f32.mrf.mxu0
          %v9618 = vadd.f32 %v9604, %v9617
          %v9619 = vpop.f32.mrf.mxu0
          %v9620 = vadd.f32 %v9606, %v9619
          %9621 = vdwg.mxu0
          %9622 = vmatpush.bf16.msra.mxu0 %v9277
          %9623 = vmatpush.bf16.msra.mxu0 %v9275
          %9624 = vmatpush.bf16.msra.mxu0 %v9273
          %9625 = vmatpush.bf16.msra.mxu0 %v9271
          %9626 = vmatpush.bf16.msra.mxu0 %v9269
          %9627 = vmatpush.bf16.msra.mxu0 %v9267
          %9628 = vmatpush.bf16.msra.mxu0 %v9265
          %9629 = vmatpush.bf16.msra.mxu0 %v9263
          %9630 = vmatmul.bf16.gmra.mxu0 %v8676
          %v9631 = vpop.f32.mrf.mxu0
          %v9632 = vadd.f32 %v9618, %v9631
          %v9633 = vpop.f32.mrf.mxu0
          %v9634 = vadd.f32 %v9620, %v9633
          %9635 = vdwg.mxu0
          %9636 = vmatpush.bf16.msra.mxu0 %v9293
          %9637 = vmatpush.bf16.msra.mxu0 %v9291
          %9638 = vmatpush.bf16.msra.mxu0 %v9289
          %9639 = vmatpush.bf16.msra.mxu0 %v9287
          %9640 = vmatpush.bf16.msra.mxu0 %v9285
          %9641 = vmatpush.bf16.msra.mxu0 %v9283
          %9642 = vmatpush.bf16.msra.mxu0 %v9281
          %9643 = vmatpush.bf16.msra.mxu0 %v9279
          %9644 = vmatmul.bf16.gmra.mxu0 %v8677
          %v9645 = vpop.f32.mrf.mxu0
          %v9646 = vadd.f32 %v9632, %v9645
          %v9647 = vpop.f32.mrf.mxu0
          %v9648 = vadd.f32 %v9634, %v9647
          %9649 = vdwg.mxu0
          %9650 = vmatpush.bf16.msra.mxu0 %v9309
          %9651 = vmatpush.bf16.msra.mxu0 %v9307
          %9652 = vmatpush.bf16.msra.mxu0 %v9305
          %9653 = vmatpush.bf16.msra.mxu0 %v9303
          %9654 = vmatpush.bf16.msra.mxu0 %v9301
          %9655 = vmatpush.bf16.msra.mxu0 %v9299
          %9656 = vmatpush.bf16.msra.mxu0 %v9297
          %9657 = vmatpush.bf16.msra.mxu0 %v9295
          %9658 = vmatmul.bf16.gmra.mxu0 %v8678
          %v9659 = vpop.f32.mrf.mxu0
          %v9660 = vadd.f32 %v9646, %v9659
          %v9661 = vpop.f32.mrf.mxu0
          %v9662 = vadd.f32 %v9648, %v9661
          %9663 = vdwg.mxu0
          %9664 = vmatpush.bf16.msra.mxu0 %v9325
          %9665 = vmatpush.bf16.msra.mxu0 %v9323
          %9666 = vmatpush.bf16.msra.mxu0 %v9321
          %9667 = vmatpush.bf16.msra.mxu0 %v9319
          %9668 = vmatpush.bf16.msra.mxu0 %v9317
          %9669 = vmatpush.bf16.msra.mxu0 %v9315
          %9670 = vmatpush.bf16.msra.mxu0 %v9313
          %9671 = vmatpush.bf16.msra.mxu0 %v9311
          %9672 = vmatmul.bf16.gmra.mxu0 %v8679
          %v9673 = vpop.f32.mrf.mxu0
          %v9674 = vadd.f32 %v9660, %v9673
          %v9675 = vpop.f32.mrf.mxu0
          %v9676 = vadd.f32 %v9662, %v9675
          %9677 = vdwg.mxu0
          %v9678 = vmax.f32 %v9562, 0.0
          %v9679 = vmax.f32 %v9674, 0.0
          %v9680 = vmax.f32 %v9564, 0.0
          %v9681 = vmax.f32 %v9676, 0.0
          %v9682 = vpack.c.bf16 %v9680, %v9678
          %v9683 = vpack.c.bf16 %v9681, %v9679
          %v9684 = vld [vmem:[%s5] sm:$0xf]
          %v9685 = vld [vmem:[%s5 + $0x4] sm:$0xf]
          %v9686 = vld [vmem:[%s5 + $0x8] sm:$0xf]
          %v9687 = vld [vmem:[%s5 + $0xc] sm:$0xf]
          %v9688 = vld [vmem:[%s5 + $0x10] sm:$0xf]
          %v9689 = vld [vmem:[%s5 + $0x14] sm:$0xf]
          %v9690 = vld [vmem:[%s5 + $0x18] sm:$0xf]
          %v9691 = vld [vmem:[%s5 + $0x1c] sm:$0xf]
          %v9692 = vld [vmem:[%s5 + $0x20] sm:$0xf]
          %v9693 = vld [vmem:[%s5 + $0x24] sm:$0xf]
          %v9694 = vld [vmem:[%s5 + $0x28] sm:$0xf]
          %v9695 = vld [vmem:[%s5 + $0x2c] sm:$0xf]
          %v9696 = vld [vmem:[%s5 + $0x30] sm:$0xf]
          %v9697 = vld [vmem:[%s5 + $0x34] sm:$0xf]
          %v9698 = vld [vmem:[%s5 + $0x38] sm:$0xf]
          %v9699 = vld [vmem:[%s5 + $0x3c] sm:$0xf]
          %v9700 = vld [vmem:[%s5 + $0x40] sm:$0xf]
          %v9701 = vld [vmem:[%s5 + $0x44] sm:$0xf]
          %v9702 = vld [vmem:[%s5 + $0x48] sm:$0xf]
          %v9703 = vld [vmem:[%s5 + $0x4c] sm:$0xf]
          %v9704 = vld [vmem:[%s5 + $0x50] sm:$0xf]
          %v9705 = vld [vmem:[%s5 + $0x54] sm:$0xf]
          %v9706 = vld [vmem:[%s5 + $0x58] sm:$0xf]
          %v9707 = vld [vmem:[%s5 + $0x5c] sm:$0xf]
          %v9708 = vld [vmem:[%s5 + $0x60] sm:$0xf]
          %v9709 = vld [vmem:[%s5 + $0x64] sm:$0xf]
          %v9710 = vld [vmem:[%s5 + $0x68] sm:$0xf]
          %v9711 = vld [vmem:[%s5 + $0x6c] sm:$0xf]
          %v9712 = vld [vmem:[%s5 + $0x70] sm:$0xf]
          %v9713 = vld [vmem:[%s5 + $0x74] sm:$0xf]
          %v9714 = vld [vmem:[%s5 + $0x78] sm:$0xf]
          %v9715 = vld [vmem:[%s5 + $0x7c] sm:$0xf]
          %v9716 = vld [vmem:[#allocation12] sm:$0x1]
          %v9718 = vperm.slane %v9716, 0
          %v9752 = vunpack.c.l.b16 %v9684
          %v9753 = vunpack.c.l.b16 %v9685
          %v9754 = vunpack.c.l.b16 %v9686
          %v9755 = vunpack.c.l.b16 %v9687
          %v9756 = vunpack.c.l.b16 %v9688
          %v9757 = vunpack.c.l.b16 %v9689
          %v9758 = vunpack.c.l.b16 %v9690
          %v9759 = vunpack.c.l.b16 %v9691
          %v9760 = vunpack.c.l.b16 %v9692
          %v9761 = vunpack.c.l.b16 %v9693
          %v9762 = vunpack.c.l.b16 %v9694
          %v9763 = vunpack.c.l.b16 %v9695
          %v9764 = vunpack.c.l.b16 %v9696
          %v9765 = vunpack.c.l.b16 %v9697
          %v9766 = vunpack.c.l.b16 %v9698
          %v9767 = vunpack.c.l.b16 %v9699
          %v9768 = vunpack.c.l.b16 %v9700
          %v9769 = vunpack.c.l.b16 %v9701
          %v9770 = vunpack.c.l.b16 %v9702
          %v9771 = vunpack.c.l.b16 %v9703
          %v9772 = vunpack.c.l.b16 %v9704
          %v9773 = vunpack.c.l.b16 %v9705
          %v9774 = vunpack.c.l.b16 %v9706
          %v9775 = vunpack.c.l.b16 %v9707
          %v9776 = vunpack.c.l.b16 %v9708
          %v9777 = vunpack.c.l.b16 %v9709
          %v9778 = vunpack.c.l.b16 %v9710
          %v9779 = vunpack.c.l.b16 %v9711
          %v9780 = vunpack.c.l.b16 %v9712
          %v9781 = vunpack.c.l.b16 %v9713
          %v9782 = vunpack.c.l.b16 %v9714
          %v9783 = vunpack.c.l.b16 %v9715
          %v9784 = vpack.c.b16 %v9753, %v9752
          %v9785 = vpack.c.b16 %v9755, %v9754
          %v9786 = vpack.c.b16 %v9757, %v9756
          %v9787 = vpack.c.b16 %v9759, %v9758
          %v9788 = vpack.c.b16 %v9761, %v9760
          %v9789 = vpack.c.b16 %v9763, %v9762
          %v9790 = vpack.c.b16 %v9765, %v9764
          %v9791 = vpack.c.b16 %v9767, %v9766
          %v9792 = vpack.c.b16 %v9769, %v9768
          %v9793 = vpack.c.b16 %v9771, %v9770
          %v9794 = vpack.c.b16 %v9773, %v9772
          %v9795 = vpack.c.b16 %v9775, %v9774
          %v9796 = vpack.c.b16 %v9777, %v9776
          %v9797 = vpack.c.b16 %v9779, %v9778
          %v9798 = vpack.c.b16 %v9781, %v9780
          %v9799 = vpack.c.b16 %v9783, %v9782
          %9816 = vmatpush.bf16.msra.mxu0 %v9791
          %9817 = vmatpush.bf16.msra.mxu0 %v9790
          %9818 = vmatpush.bf16.msra.mxu0 %v9789
          %9819 = vmatpush.bf16.msra.mxu0 %v9788
          %9820 = vmatpush.bf16.msra.mxu0 %v9787
          %9821 = vmatpush.bf16.msra.mxu0 %v9786
          %9822 = vmatpush.bf16.msra.mxu0 %v9785
          %9823 = vmatpush.bf16.msra.mxu0 %v9784
          %9824 = vmatmul.bf16.gmra.mxu0 %v9682
          %v9825 = vpop.f32.mrf.mxu0
          %v9826 = vadd.f32 %v9718, %v9825
          %v9827 = vpop.f32.mrf.mxu0
          %v9828 = vadd.f32 %v9718, %v9827
          %9829 = vdwg.mxu0
          %9830 = vmatpush.bf16.msra.mxu0 %v9799
          %9831 = vmatpush.bf16.msra.mxu0 %v9798
          %9832 = vmatpush.bf16.msra.mxu0 %v9797
          %9833 = vmatpush.bf16.msra.mxu0 %v9796
          %9834 = vmatpush.bf16.msra.mxu0 %v9795
          %9835 = vmatpush.bf16.msra.mxu0 %v9794
          %9836 = vmatpush.bf16.msra.mxu0 %v9793
          %9837 = vmatpush.bf16.msra.mxu0 %v9792
          %9838 = vmatmul.bf16.gmra.mxu0 %v9683
          %v9839 = vpop.f32.mrf.mxu0
          %v9840 = vadd.f32 %v9826, %v9839
          %v9841 = vpop.f32.mrf.mxu0
          %v9842 = vadd.f32 %v9828, %v9841
          %9843 = vdwg.mxu0
          %v9844 = vmax.f32 %v9840, 0.0
          %v9845 = vmax.f32 %v9842, 0.0
          %v9846 = vpack.c.bf16 %v9845, %v9844
          %v9847 = vld [vmem:[#allocation14] sm:$0xf]
          %v9848 = vld [vmem:[#allocation14 + $0x4] sm:$0xf]
          %v9849 = vld [vmem:[#allocation14 + $0x8] sm:$0xf]
          %v9850 = vld [vmem:[#allocation14 + $0xc] sm:$0xf]
          %v9851 = vld [vmem:[#allocation14 + $0x10] sm:$0xf]
          %v9852 = vld [vmem:[#allocation14 + $0x14] sm:$0xf]
          %v9853 = vld [vmem:[#allocation14 + $0x18] sm:$0xf]
          %v9854 = vld [vmem:[#allocation14 + $0x1c] sm:$0xf]
          %v9855 = vld [vmem:[#allocation15] sm:$0x1]
          %v9857 = vperm.slane %v9855, 0
          %v9867 = vunpack.c.l.b16 %v9847
          %v9868 = vunpack.c.l.b16 %v9848
          %v9869 = vunpack.c.l.b16 %v9849
          %v9870 = vunpack.c.l.b16 %v9850
          %v9871 = vunpack.c.l.b16 %v9851
          %v9872 = vunpack.c.l.b16 %v9852
          %v9873 = vunpack.c.l.b16 %v9853
          %v9874 = vunpack.c.l.b16 %v9854
          %v9875 = vpack.c.b16 %v9868, %v9867
          %v9876 = vpack.c.b16 %v9870, %v9869
          %v9877 = vpack.c.b16 %v9872, %v9871
          %v9878 = vpack.c.b16 %v9874, %v9873
          %vm9883 = vcmask 523264
          %v9885 = vsel %vm9883, %v9846, 0
          %9887 = vmatpush.bf16.msra.mxu0 0
          %9888 = vmatpush.bf16.msra.mxu0 0
          %9889 = vmatpush.bf16.msra.mxu0 0
          %9890 = vmatpush.bf16.msra.mxu0 0
          %9891 = vmatpush.bf16.msra.mxu0 %v9878
          %9892 = vmatpush.bf16.msra.mxu0 %v9877
          %9893 = vmatpush.bf16.msra.mxu0 %v9876
          %9894 = vmatpush.bf16.msra.mxu0 %v9875
          %9895 = vmatmul.bf16.gmra.mxu0 %v9885
          %v9896 = vpop.f32.mrf.mxu0
          %v9897 = vadd.f32 %v9857, %v9896
          %v9898 = vpop.f32.mrf.mxu0
          %v9899 = vadd.f32 %v9857, %v9898
          %9900 = vdwg.mxu0
          %9901 = vst [vmem:[#allocation17] sm:$0xff] %v9897
          %9902 = vst [vmem:[#allocation17 + $0x8] sm:$0xff] %v9899
        $region96: #{tpu_custom_call.1} parent=55 // pred_fallthru
          _
        // Predicated region
        $region97: #{tpu_custom_call.1} parent=55 // pred_check
          %p9903 = pneg %p261
        $region98: #{tpu_custom_call.1} parent=55 // pred_check_branch
          %9905 = sbr.rel (%p9903) target = $region100
        $region99: #{tpu_custom_call.1} parent=55 // pred_region
          %s9906 = smul.u32 2, %s34
          %9908 = vsyncadd [#allocation5], 0
          %s9909 = smul.addr %s9906, 8
          %s9910 = scalar_lea.hbm %s9, %s9909
          %s9911 = sshll.u32 [#allocation17], 4
          %s9912 = int_to_ptr.vmem [resolvable:$true] %s9911
          %s9913 = sshll.u32 %s9910, 4
          %s9914 = int_to_ptr.hbm [resolvable:$true] %s9913
          %9919 = dma.vmem_to_hbm [thread:$0]  %s9912, 256, %s9914, [#allocation5], 128, 128, 8
        $region100: #{tpu_custom_call.1} parent=55 // pred_fallthru
          _
        // Predicated region
        $region101: #{tpu_custom_call.1} parent=55 // pred_check
          %p9920 = pneg %p261
        $region102: #{tpu_custom_call.1} parent=55 // pred_check_branch
          %9922 = sbr.rel (%p9920) target = $region104
        $region103: #{tpu_custom_call.1} parent=55 // pred_region
          %9924 = dma.done [#allocation5], 256
        $region104: #{tpu_custom_call.1} parent=55 // pred_fallthru
          _
      $region56: #{tpu_custom_call.1} parent=5 // pred_fallthru
        _
      %p9925 = scmp.le.s32.totalorder 2, %s25
      // Predicated region
      $region105: #{tpu_custom_call.1} parent=5 // pred_check
        %p9926 = pneg %p9925
      $region106: #{tpu_custom_call.1} parent=5 // pred_check_branch
        %9928 = sbr.rel (%p9926) target = $region108
      $region107: #{tpu_custom_call.1} parent=5 // pred_region
        %s9929 = ssub.s32 %s25, 2
      $region108: #{tpu_custom_call.1} parent=5 // pred_fallthru
        _
    $region6: #{tpu_custom_call.1} parent=1 // loop_footer
      %s29 = sadd.s32 1, %s25
    $region7: #{tpu_custom_call.1} parent=1 // loop_footer_branch
      %24 = sbr.rel target = $region3
    $region8: #{tpu_custom_call.1} parent=1 // loop_exit
      _
    %9930 = vsyncpa [#allocation4], 1
    %s9931 = scalar_lea.sflag [#allocation4], 1
    %9932 = vsyncpa %s9931, 1
    %9933 = vsyncpa [#allocation7], 1
    %s9934 = scalar_lea.sflag [#allocation7], 1
    %9935 = vsyncpa %s9934, 1
    %9936 = vsyncpa [#allocation10], 1
    %9937 = vsyncpa [#allocation13], 1
    %9938 = vsyncpa [#allocation16], 1
    %9939 = vsyncpa [#allocation5], 1
    %s9940 = scalar_lea.sflag [#allocation5], 1
    %9941 = vsyncpa %s9940, 1

</llo_original>
